<compile_context>
chip_gen: v7x
topology: tpu7x:2x2x1
jax: 0.10.0
libtpu: 0.0.40
codegen_flags: <defaults>
</compile_context>

<pallas_src>
import jax
import jax.numpy as jnp
from jax.experimental import pallas as pl
from jax.experimental.pallas import tpu as pltpu

BLUE_FIRST_UNITS = 512
BLUE_HIDDEN_UNITS = 512
BLUE_INPUT_DIM = 12
BLUE_OUTPUT_DIM = 12
NUM_HIDDEN_LAYERS_BLUE = 5

D_IN = BLUE_INPUT_DIM * 2      # 24
D_OUT = BLUE_OUTPUT_DIM * 2    # 24
PAD = 128                      # lane-padded output feature dim
MAX_TB = 1024                  # max batch-tile rows


def _round_up(x, m):
    return ((x + m - 1) // m) * m


def _mlp_kernel(x_ref, wf_ref, bf_ref, wh_ref, bh_ref, wo_ref, bo_ref, o_ref):
    """Whole MLP on one (tb, ...) batch tile; weights are VMEM-resident."""
    # Layer 0: (tb,24)bf16 @ (24,512)bf16 -> f32 acc (single-pass MXU path).
    acc = jnp.dot(x_ref[...].astype(jnp.bfloat16), wf_ref[...],
                  preferred_element_type=jnp.float32)
    # bf16 epilogue: cast the accumulator once, then packed bf16 bias + ReLU.
    h = jnp.maximum(acc.astype(jnp.bfloat16) + bf_ref[...], 0)

    # 5 hidden layers, fully on the bf16 MXU/VPU fast path.
    for i in range(NUM_HIDDEN_LAYERS_BLUE):
        acc = jnp.dot(h, wh_ref[i], preferred_element_type=jnp.float32)
        h = jnp.maximum(acc.astype(jnp.bfloat16) + bh_ref[i], 0)

    # Output layer: f32 epilogue (single bias add + sigmoid), lane-dense store.
    y = jnp.dot(h, wo_ref[...], preferred_element_type=jnp.float32) + bo_ref[...]
    o_ref[...] = jax.nn.sigmoid(y)


def _pick_batch_tile(batch):
    """Batch tile that (a) caps at MAX_TB rows, (b) gives >=2 grid steps
    whenever possible (keeps both v7x TensorCores busy), and (c) minimizes
    padding waste (e.g. B=300 -> two 152-row tiles, not one 512-row pad)."""
    b_aligned = _round_up(max(batch, 1), 8)
    n_tiles = 1 if b_aligned <= 8 else max(2, pl.cdiv(b_aligned, MAX_TB))
    tb = _round_up(pl.cdiv(b_aligned, n_tiles), 8)
    b_pad = _round_up(b_aligned, tb)
    return tb, b_pad


def _weight_spec(block_shape, single_buffer):
    """Constant block index across the grid -> weights stay VMEM-resident."""
    index_map = lambda i: tuple(0 for _ in block_shape)
    if single_buffer:
        # No point double-buffering a block whose index never changes: saves
        # ~2.7 MiB VMEM and one redundant startup prefetch.
        return pl.BlockSpec(block_shape, index_map,
                            pipeline_mode=pl.Buffered(1))
    return pl.BlockSpec(block_shape, index_map)


def _forward(x, params, *, single_buffer_weights):
    B = x.shape[0]
    wf, bf, wh, bh, wo, bo = params

    tb, b_pad = _pick_batch_tile(B)
    if b_pad != B:
        x = jnp.pad(x, ((0, b_pad - B), (0, 0)))
    grid = (b_pad // tb,)

    flops = 2 * b_pad * (D_IN * BLUE_FIRST_UNITS
                         + NUM_HIDDEN_LAYERS_BLUE * BLUE_HIDDEN_UNITS ** 2
                         + BLUE_HIDDEN_UNITS * PAD)
    bytes_accessed = (wf.size * 2 + bf.size * 2 + wh.size * 2 + bh.size * 2
                      + wo.size * 2 + bo.size * 4
                      + b_pad * D_IN * 4 + b_pad * PAD * 4)

    ws = lambda shape: _weight_spec(shape, single_buffer_weights)

    out_pad = pl.pallas_call(
        _mlp_kernel,
        out_shape=jax.ShapeDtypeStruct((b_pad, PAD), jnp.float32),
        grid=grid,
        in_specs=[
            # Activations advance with the grid index.
            pl.BlockSpec((tb, D_IN), lambda i: (i, 0)),
            # Weights/biases: constant block index -> VMEM-resident.
            ws((D_IN, BLUE_FIRST_UNITS)),
            ws((1, BLUE_FIRST_UNITS)),
            ws((NUM_HIDDEN_LAYERS_BLUE, BLUE_HIDDEN_UNITS, BLUE_HIDDEN_UNITS)),
            ws((NUM_HIDDEN_LAYERS_BLUE, 1, BLUE_HIDDEN_UNITS)),
            ws((BLUE_HIDDEN_UNITS, PAD)),
            ws((1, PAD)),
        ],
        out_specs=pl.BlockSpec((tb, PAD), lambda i: (i, 0)),
        compiler_params=pltpu.CompilerParams(
            dimension_semantics=("parallel",),
            vmem_limit_bytes=32 << 20,
        ),
        cost_estimate=pl.CostEstimate(
            flops=flops,
            transcendentals=b_pad * PAD,
            bytes_accessed=bytes_accessed,
        ),
    )(x, wf, bf, wh, bh, wo, bo)

    return out_pad[:B, :D_OUT]


def blue_model_forward(x, params):
    """x: (B, 24) float32 -> (B, 24) float32 in [0, 1]."""
    # TODO(synk): for repeated tiny-batch inference, amortize the ~2.8 MiB
    # per-call weight DMA by batching calls (startup DMA dominates there).
    try:
        out = _forward(x, params, single_buffer_weights=True)
        return jax.block_until_ready(out)
    except Exception:
        # Fallback for jax versions without BlockSpec(pipeline_mode=...):
        # default double-buffered weight specs (costs ~2.7 MiB extra VMEM).
        out = _forward(x, params, single_buffer_weights=False)
        return jax.block_until_ready(out)


def init_params(key):
    """Deterministic synthetic parameters (PyTorch-like uniform fan-in init)."""
    keys = jax.random.split(key, 4 + 2 * NUM_HIDDEN_LAYERS_BLUE)
    k = iter(keys)

    def uinit(kk, shape, fan_in):
        bound = 1.0 / jnp.sqrt(fan_in)
        return jax.random.uniform(kk, shape, jnp.float32, -bound, bound)

    # First layer (24, 512): bf16 weights/bias (bf16 MXU + bf16 epilogue).
    w_first = uinit(next(k), (D_IN, BLUE_FIRST_UNITS), D_IN).astype(jnp.bfloat16)
    b_first = uinit(next(k), (1, BLUE_FIRST_UNITS), D_IN).astype(jnp.bfloat16)

    # Hidden layers stacked: (5,512,512) bf16 weights, (5,1,512) bf16 biases.
    w_hidden = jnp.stack(
        [uinit(next(k), (BLUE_HIDDEN_UNITS, BLUE_HIDDEN_UNITS), BLUE_HIDDEN_UNITS)
         for _ in range(NUM_HIDDEN_LAYERS_BLUE)]).astype(jnp.bfloat16)
    b_hidden = jnp.stack(
        [uinit(next(k), (1, BLUE_HIDDEN_UNITS), BLUE_HIDDEN_UNITS)
         for _ in range(NUM_HIDDEN_LAYERS_BLUE)]).astype(jnp.bfloat16)

    # Output layer: true (512, 24) column-padded to (512, 128); bf16 weights,
    # f32 bias (final epilogue stays f32 for output accuracy).
    w_out_true = uinit(next(k), (BLUE_HIDDEN_UNITS, D_OUT), BLUE_HIDDEN_UNITS)
    w_out = jnp.zeros((BLUE_HIDDEN_UNITS, PAD), jnp.float32).at[:, :D_OUT].set(
        w_out_true).astype(jnp.bfloat16)
    b_out_true = uinit(next(k), (1, D_OUT), BLUE_HIDDEN_UNITS)
    b_out = jnp.zeros((1, PAD), jnp.float32).at[:, :D_OUT].set(b_out_true)

    return (w_first, b_first, w_hidden, b_hidden, w_out, b_out)


def reference_forward(x, params):
    """Pure-JAX fp32 reference (same math as the PyTorch module)."""
    wf, bf, wh, bh, wo, bo = params
    h = jnp.maximum(x @ wf.astype(jnp.float32) + bf.astype(jnp.float32), 0.0)
    for i in range(NUM_HIDDEN_LAYERS_BLUE):
        h = jnp.maximum(
            h @ wh[i].astype(jnp.float32) + bh[i].astype(jnp.float32), 0.0)
    y = jax.nn.sigmoid(h @ wo.astype(jnp.float32) + bo)
    return y[:, :D_OUT]


if __name__ == "__main__":
    key = jax.random.PRNGKey(0)
    k_param, k_x = jax.random.split(key)

    params = init_params(k_param)
    B = 20  # small batch; exercises row padding and a 2-step ("parallel") grid
    x = jax.random.normal(k_x, (B, D_IN), jnp.float32)

    out = blue_model_forward(x, params)
    out = jax.block_until_ready(out)

    ref = reference_forward(x, params)
    assert out.shape == (B, D_OUT), out.shape
    # bf16 weights + bf16 activation chain -> small, bounded delta vs fp32 ref.
    err = float(jnp.max(jnp.abs(out - ref)))
    assert jnp.allclose(out, ref, atol=3e-2, rtol=3e-2), (
        f"mismatch vs reference: max abs err = {err}")

    print("KERNEL_OK")
</pallas_src>

<mosaic_0001>
module attributes {stable_mosaic.version = 11 : i64} {
  func.func @_mlp_kernel(%arg0: i32, %arg1: memref<16x24xf32, #tpu.memory_space<vmem>>, %arg2: memref<24x512xbf16, #tpu.memory_space<vmem>>, %arg3: memref<1x512xbf16, #tpu.memory_space<vmem>>, %arg4: memref<5x512x512xbf16, #tpu.memory_space<vmem>>, %arg5: memref<5x1x512xbf16, #tpu.memory_space<vmem>>, %arg6: memref<512x128xbf16, #tpu.memory_space<vmem>>, %arg7: memref<1x128xf32, #tpu.memory_space<vmem>>, %arg8: memref<16x128xf32, #tpu.memory_space<vmem>>) attributes {dimension_semantics = [#tpu.dimension_semantics<parallel>], iteration_bounds = array<i64: 2>, scalar_prefetch = 0 : i64, scratch_operands = 0 : i64, tpu.core_type = #tpu.core_type<tc>, window_params = [{transform_indices = @transform_0, window_bounds = array<i64: 16, 24>}, {pipeline_mode = #tpu.pipeline_mode<synchronous>, transform_indices = @transform_1, window_bounds = array<i64: 24, 512>}, {pipeline_mode = #tpu.pipeline_mode<synchronous>, transform_indices = @transform_2, window_bounds = array<i64: 1, 512>}, {pipeline_mode = #tpu.pipeline_mode<synchronous>, transform_indices = @transform_3, window_bounds = array<i64: 5, 512, 512>}, {pipeline_mode = #tpu.pipeline_mode<synchronous>, transform_indices = @transform_4, window_bounds = array<i64: 5, 1, 512>}, {pipeline_mode = #tpu.pipeline_mode<synchronous>, transform_indices = @transform_5, window_bounds = array<i64: 512, 128>}, {pipeline_mode = #tpu.pipeline_mode<synchronous>, transform_indices = @transform_6, window_bounds = array<i64: 1, 128>}, {transform_indices = @transform_7, window_bounds = array<i64: 16, 128>}]} {
    %c0 = arith.constant 0 : index
    %c0_0 = arith.constant 0 : index
    %0 = vector.load %arg1[%c0, %c0_0] : memref<16x24xf32, #tpu.memory_space<vmem>>, vector<16x24xf32>
    %1 = arith.truncf %0 : vector<16x24xf32> to vector<16x24xbf16>
    %c0_1 = arith.constant 0 : index
    %c0_2 = arith.constant 0 : index
    %2 = vector.load %arg2[%c0_1, %c0_2] : memref<24x512xbf16, #tpu.memory_space<vmem>>, vector<24x512xbf16>
    %cst = arith.constant dense<0.000000e+00> : vector<16x512xf32>
    %3 = tpu.matmul %1, %2, %cst {dimension_numbers = #tpu.dot_dimension_numbers<[1], [0], [0], [1], [0, 0, 1, 1], [], []>} : vector<16x24xbf16>, vector<24x512xbf16>, vector<16x512xf32> -> vector<16x512xf32>
    %4 = arith.truncf %3 : vector<16x512xf32> to vector<16x512xbf16>
    %c0_3 = arith.constant 0 : index
    %c0_4 = arith.constant 0 : index
    %5 = vector.load %arg3[%c0_3, %c0_4] : memref<1x512xbf16, #tpu.memory_space<vmem>>, vector<1x512xbf16>
    %6 = vector.broadcast %5 : vector<1x512xbf16> to vector<16x512xbf16>
    %7 = arith.addf %4, %6 : vector<16x512xbf16>
    %cst_5 = arith.constant 0.000000e+00 : bf16
    %8 = vector.broadcast %cst_5 : bf16 to vector<16x512xbf16>
    %9 = arith.maximumf %7, %8 : vector<16x512xbf16>
    %c0_6 = arith.constant 0 : index
    %c0_7 = arith.constant 0 : index
    %c0_8 = arith.constant 0 : index
    %10 = vector.load %arg4[%c0_6, %c0_7, %c0_8] : memref<5x512x512xbf16, #tpu.memory_space<vmem>>, vector<1x512x512xbf16>
    %11 = vector.shape_cast %10 : vector<1x512x512xbf16> to vector<512x512xbf16>
    %cst_9 = arith.constant dense<0.000000e+00> : vector<16x512xf32>
    %12 = tpu.matmul %9, %11, %cst_9 {dimension_numbers = #tpu.dot_dimension_numbers<[1], [0], [0], [1], [0, 0, 1, 1], [], []>} : vector<16x512xbf16>, vector<512x512xbf16>, vector<16x512xf32> -> vector<16x512xf32>
    %13 = arith.truncf %12 : vector<16x512xf32> to vector<16x512xbf16>
    %c0_10 = arith.constant 0 : index
    %c0_11 = arith.constant 0 : index
    %c0_12 = arith.constant 0 : index
    %14 = vector.load %arg5[%c0_10, %c0_11, %c0_12] : memref<5x1x512xbf16, #tpu.memory_space<vmem>>, vector<1x1x512xbf16>
    %15 = vector.shape_cast %14 : vector<1x1x512xbf16> to vector<1x512xbf16>
    %16 = vector.broadcast %15 : vector<1x512xbf16> to vector<16x512xbf16>
    %17 = arith.addf %13, %16 : vector<16x512xbf16>
    %cst_13 = arith.constant 0.000000e+00 : bf16
    %18 = vector.broadcast %cst_13 : bf16 to vector<16x512xbf16>
    %19 = arith.maximumf %17, %18 : vector<16x512xbf16>
    %c1 = arith.constant 1 : index
    %c0_14 = arith.constant 0 : index
    %c0_15 = arith.constant 0 : index
    %20 = vector.load %arg4[%c1, %c0_14, %c0_15] : memref<5x512x512xbf16, #tpu.memory_space<vmem>>, vector<1x512x512xbf16>
    %21 = vector.shape_cast %20 : vector<1x512x512xbf16> to vector<512x512xbf16>
    %cst_16 = arith.constant dense<0.000000e+00> : vector<16x512xf32>
    %22 = tpu.matmul %19, %21, %cst_16 {dimension_numbers = #tpu.dot_dimension_numbers<[1], [0], [0], [1], [0, 0, 1, 1], [], []>} : vector<16x512xbf16>, vector<512x512xbf16>, vector<16x512xf32> -> vector<16x512xf32>
    %23 = arith.truncf %22 : vector<16x512xf32> to vector<16x512xbf16>
    %c1_17 = arith.constant 1 : index
    %c0_18 = arith.constant 0 : index
    %c0_19 = arith.constant 0 : index
    %24 = vector.load %arg5[%c1_17, %c0_18, %c0_19] : memref<5x1x512xbf16, #tpu.memory_space<vmem>>, vector<1x1x512xbf16>
    %25 = vector.shape_cast %24 : vector<1x1x512xbf16> to vector<1x512xbf16>
    %26 = vector.broadcast %25 : vector<1x512xbf16> to vector<16x512xbf16>
    %27 = arith.addf %23, %26 : vector<16x512xbf16>
    %cst_20 = arith.constant 0.000000e+00 : bf16
    %28 = vector.broadcast %cst_20 : bf16 to vector<16x512xbf16>
    %29 = arith.maximumf %27, %28 : vector<16x512xbf16>
    %c2 = arith.constant 2 : index
    %c0_21 = arith.constant 0 : index
    %c0_22 = arith.constant 0 : index
    %30 = vector.load %arg4[%c2, %c0_21, %c0_22] : memref<5x512x512xbf16, #tpu.memory_space<vmem>>, vector<1x512x512xbf16>
    %31 = vector.shape_cast %30 : vector<1x512x512xbf16> to vector<512x512xbf16>
    %cst_23 = arith.constant dense<0.000000e+00> : vector<16x512xf32>
    %32 = tpu.matmul %29, %31, %cst_23 {dimension_numbers = #tpu.dot_dimension_numbers<[1], [0], [0], [1], [0, 0, 1, 1], [], []>} : vector<16x512xbf16>, vector<512x512xbf16>, vector<16x512xf32> -> vector<16x512xf32>
    %33 = arith.truncf %32 : vector<16x512xf32> to vector<16x512xbf16>
    %c2_24 = arith.constant 2 : index
    %c0_25 = arith.constant 0 : index
    %c0_26 = arith.constant 0 : index
    %34 = vector.load %arg5[%c2_24, %c0_25, %c0_26] : memref<5x1x512xbf16, #tpu.memory_space<vmem>>, vector<1x1x512xbf16>
    %35 = vector.shape_cast %34 : vector<1x1x512xbf16> to vector<1x512xbf16>
    %36 = vector.broadcast %35 : vector<1x512xbf16> to vector<16x512xbf16>
    %37 = arith.addf %33, %36 : vector<16x512xbf16>
    %cst_27 = arith.constant 0.000000e+00 : bf16
    %38 = vector.broadcast %cst_27 : bf16 to vector<16x512xbf16>
    %39 = arith.maximumf %37, %38 : vector<16x512xbf16>
    %c3 = arith.constant 3 : index
    %c0_28 = arith.constant 0 : index
    %c0_29 = arith.constant 0 : index
    %40 = vector.load %arg4[%c3, %c0_28, %c0_29] : memref<5x512x512xbf16, #tpu.memory_space<vmem>>, vector<1x512x512xbf16>
    %41 = vector.shape_cast %40 : vector<1x512x512xbf16> to vector<512x512xbf16>
    %cst_30 = arith.constant dense<0.000000e+00> : vector<16x512xf32>
    %42 = tpu.matmul %39, %41, %cst_30 {dimension_numbers = #tpu.dot_dimension_numbers<[1], [0], [0], [1], [0, 0, 1, 1], [], []>} : vector<16x512xbf16>, vector<512x512xbf16>, vector<16x512xf32> -> vector<16x512xf32>
    %43 = arith.truncf %42 : vector<16x512xf32> to vector<16x512xbf16>
    %c3_31 = arith.constant 3 : index
    %c0_32 = arith.constant 0 : index
    %c0_33 = arith.constant 0 : index
    %44 = vector.load %arg5[%c3_31, %c0_32, %c0_33] : memref<5x1x512xbf16, #tpu.memory_space<vmem>>, vector<1x1x512xbf16>
    %45 = vector.shape_cast %44 : vector<1x1x512xbf16> to vector<1x512xbf16>
    %46 = vector.broadcast %45 : vector<1x512xbf16> to vector<16x512xbf16>
    %47 = arith.addf %43, %46 : vector<16x512xbf16>
    %cst_34 = arith.constant 0.000000e+00 : bf16
    %48 = vector.broadcast %cst_34 : bf16 to vector<16x512xbf16>
    %49 = arith.maximumf %47, %48 : vector<16x512xbf16>
    %c4 = arith.constant 4 : index
    %c0_35 = arith.constant 0 : index
    %c0_36 = arith.constant 0 : index
    %50 = vector.load %arg4[%c4, %c0_35, %c0_36] : memref<5x512x512xbf16, #tpu.memory_space<vmem>>, vector<1x512x512xbf16>
    %51 = vector.shape_cast %50 : vector<1x512x512xbf16> to vector<512x512xbf16>
    %cst_37 = arith.constant dense<0.000000e+00> : vector<16x512xf32>
    %52 = tpu.matmul %49, %51, %cst_37 {dimension_numbers = #tpu.dot_dimension_numbers<[1], [0], [0], [1], [0, 0, 1, 1], [], []>} : vector<16x512xbf16>, vector<512x512xbf16>, vector<16x512xf32> -> vector<16x512xf32>
    %53 = arith.truncf %52 : vector<16x512xf32> to vector<16x512xbf16>
    %c4_38 = arith.constant 4 : index
    %c0_39 = arith.constant 0 : index
    %c0_40 = arith.constant 0 : index
    %54 = vector.load %arg5[%c4_38, %c0_39, %c0_40] : memref<5x1x512xbf16, #tpu.memory_space<vmem>>, vector<1x1x512xbf16>
    %55 = vector.shape_cast %54 : vector<1x1x512xbf16> to vector<1x512xbf16>
    %56 = vector.broadcast %55 : vector<1x512xbf16> to vector<16x512xbf16>
    %57 = arith.addf %53, %56 : vector<16x512xbf16>
    %cst_41 = arith.constant 0.000000e+00 : bf16
    %58 = vector.broadcast %cst_41 : bf16 to vector<16x512xbf16>
    %59 = arith.maximumf %57, %58 : vector<16x512xbf16>
    %c0_42 = arith.constant 0 : index
    %c0_43 = arith.constant 0 : index
    %60 = vector.load %arg6[%c0_42, %c0_43] : memref<512x128xbf16, #tpu.memory_space<vmem>>, vector<512x128xbf16>
    %cst_44 = arith.constant dense<0.000000e+00> : vector<16x128xf32>
    %61 = tpu.matmul %59, %60, %cst_44 {dimension_numbers = #tpu.dot_dimension_numbers<[1], [0], [0], [1], [0, 0, 1, 1], [], []>} : vector<16x512xbf16>, vector<512x128xbf16>, vector<16x128xf32> -> vector<16x128xf32>
    %c0_45 = arith.constant 0 : index
    %c0_46 = arith.constant 0 : index
    %62 = vector.load %arg7[%c0_45, %c0_46] : memref<1x128xf32, #tpu.memory_space<vmem>>, vector<1x128xf32>
    %63 = vector.broadcast %62 : vector<1x128xf32> to vector<16x128xf32>
    %64 = arith.addf %61, %63 : vector<16x128xf32>
    %65 = arith.negf %64 : vector<16x128xf32>
    %66 = math.exp %65 : vector<16x128xf32>
    %cst_47 = arith.constant 1.000000e+00 : f32
    %67 = vector.broadcast %cst_47 : f32 to vector<16x128xf32>
    %68 = arith.addf %67, %66 : vector<16x128xf32>
    %69 = arith.divf %67, %68 : vector<16x128xf32>
    %c0_48 = arith.constant 0 : index
    %c0_49 = arith.constant 0 : index
    %70 = vector.load %arg8[%c0_48, %c0_49] : memref<16x128xf32, #tpu.memory_space<vmem>>, vector<16x128xf32>
    tpu.vector_store %arg8[%c0_48, %c0_49], %69 {strides = array<i32>} : memref<16x128xf32, #tpu.memory_space<vmem>>, vector<16x128xf32>,
    return
  }
  func.func @transform_0(%arg0: i32) -> (i32, i32) {
    %c0_i32 = arith.constant 0 : i32
    %c0_i32_0 = arith.constant 0 : i32
    return %arg0, %c0_i32 : i32, i32
  }
  func.func @transform_1(%arg0: i32) -> (i32, i32) {
    %c0_i32 = arith.constant 0 : i32
    %c0_i32_0 = arith.constant 0 : i32
    %c0_i32_1 = arith.constant 0 : i32
    return %c0_i32, %c0_i32_0 : i32, i32
  }
  func.func @transform_2(%arg0: i32) -> (i32, i32) {
    %c0_i32 = arith.constant 0 : i32
    %c0_i32_0 = arith.constant 0 : i32
    %c0_i32_1 = arith.constant 0 : i32
    return %c0_i32, %c0_i32_0 : i32, i32
  }
  func.func @transform_3(%arg0: i32) -> (i32, i32, i32) {
    %c0_i32 = arith.constant 0 : i32
    %c0_i32_0 = arith.constant 0 : i32
    %c0_i32_1 = arith.constant 0 : i32
    %c0_i32_2 = arith.constant 0 : i32
    return %c0_i32, %c0_i32_0, %c0_i32_1 : i32, i32, i32
  }
  func.func @transform_4(%arg0: i32) -> (i32, i32, i32) {
    %c0_i32 = arith.constant 0 : i32
    %c0_i32_0 = arith.constant 0 : i32
    %c0_i32_1 = arith.constant 0 : i32
    %c0_i32_2 = arith.constant 0 : i32
    return %c0_i32, %c0_i32_0, %c0_i32_1 : i32, i32, i32
  }
  func.func @transform_5(%arg0: i32) -> (i32, i32) {
    %c0_i32 = arith.constant 0 : i32
    %c0_i32_0 = arith.constant 0 : i32
    %c0_i32_1 = arith.constant 0 : i32
    return %c0_i32, %c0_i32_0 : i32, i32
  }
  func.func @transform_6(%arg0: i32) -> (i32, i32) {
    %c0_i32 = arith.constant 0 : i32
    %c0_i32_0 = arith.constant 0 : i32
    %c0_i32_1 = arith.constant 0 : i32
    return %c0_i32, %c0_i32_0 : i32, i32
  }
  func.func @transform_7(%arg0: i32) -> (i32, i32) {
    %c0_i32 = arith.constant 0 : i32
    %c0_i32_0 = arith.constant 0 : i32
    return %arg0, %c0_i32 : i32, i32
  }
}

module attributes {stable_mosaic.version = 11 : i64} {
  func.func @_mlp_kernel(%arg0: i32, %arg1: memref<16x24xf32, #tpu.memory_space<vmem>>, %arg2: memref<24x512xbf16, #tpu.memory_space<vmem>>, %arg3: memref<1x512xbf16, #tpu.memory_space<vmem>>, %arg4: memref<5x512x512xbf16, #tpu.memory_space<vmem>>, %arg5: memref<5x1x512xbf16, #tpu.memory_space<vmem>>, %arg6: memref<512x128xbf16, #tpu.memory_space<vmem>>, %arg7: memref<1x128xf32, #tpu.memory_space<vmem>>, %arg8: memref<16x128xf32, #tpu.memory_space<vmem>>) attributes {dimension_semantics = [#tpu.dimension_semantics<parallel>], iteration_bounds = array<i64: 2>, scalar_prefetch = 0 : i64, scratch_operands = 0 : i64, tpu.core_type = #tpu.core_type<tc>, window_params = [{transform_indices = @transform_0, window_bounds = array<i64: 16, 24>}, {pipeline_mode = #tpu.pipeline_mode<synchronous>, transform_indices = @transform_1, window_bounds = array<i64: 24, 512>}, {pipeline_mode = #tpu.pipeline_mode<synchronous>, transform_indices = @transform_2, window_bounds = array<i64: 1, 512>}, {pipeline_mode = #tpu.pipeline_mode<synchronous>, transform_indices = @transform_3, window_bounds = array<i64: 5, 512, 512>}, {pipeline_mode = #tpu.pipeline_mode<synchronous>, transform_indices = @transform_4, window_bounds = array<i64: 5, 1, 512>}, {pipeline_mode = #tpu.pipeline_mode<synchronous>, transform_indices = @transform_5, window_bounds = array<i64: 512, 128>}, {pipeline_mode = #tpu.pipeline_mode<synchronous>, transform_indices = @transform_6, window_bounds = array<i64: 1, 128>}, {transform_indices = @transform_7, window_bounds = array<i64: 16, 128>}]} {
    %c0 = arith.constant 0 : index
    %c0_0 = arith.constant 0 : index
    %0 = vector.load %arg1[%c0, %c0_0] : memref<16x24xf32, #tpu.memory_space<vmem>>, vector<16x24xf32>
    %1 = arith.truncf %0 : vector<16x24xf32> to vector<16x24xbf16>
    %c0_1 = arith.constant 0 : index
    %c0_2 = arith.constant 0 : index
    %2 = vector.load %arg2[%c0_1, %c0_2] : memref<24x512xbf16, #tpu.memory_space<vmem>>, vector<24x512xbf16>
    %cst = arith.constant dense<0.000000e+00> : vector<16x512xf32>
    %3 = tpu.matmul %1, %2, %cst {dimension_numbers = #tpu.dot_dimension_numbers<[1], [0], [0], [1], [0, 0, 1, 1], [], []>} : vector<16x24xbf16>, vector<24x512xbf16>, vector<16x512xf32> -> vector<16x512xf32>
    %4 = arith.truncf %3 : vector<16x512xf32> to vector<16x512xbf16>
    %c0_3 = arith.constant 0 : index
    %c0_4 = arith.constant 0 : index
    %5 = vector.load %arg3[%c0_3, %c0_4] : memref<1x512xbf16, #tpu.memory_space<vmem>>, vector<1x512xbf16>
    %6 = vector.broadcast %5 : vector<1x512xbf16> to vector<16x512xbf16>
    %7 = arith.addf %4, %6 : vector<16x512xbf16>
    %cst_5 = arith.constant 0.000000e+00 : bf16
    %8 = vector.broadcast %cst_5 : bf16 to vector<16x512xbf16>
    %9 = arith.maximumf %7, %8 : vector<16x512xbf16>
    %c0_6 = arith.constant 0 : index
    %c0_7 = arith.constant 0 : index
    %c0_8 = arith.constant 0 : index
    %10 = vector.load %arg4[%c0_6, %c0_7, %c0_8] : memref<5x512x512xbf16, #tpu.memory_space<vmem>>, vector<1x512x512xbf16>
    %11 = vector.shape_cast %10 : vector<1x512x512xbf16> to vector<512x512xbf16>
    %cst_9 = arith.constant dense<0.000000e+00> : vector<16x512xf32>
    %12 = tpu.matmul %9, %11, %cst_9 {dimension_numbers = #tpu.dot_dimension_numbers<[1], [0], [0], [1], [0, 0, 1, 1], [], []>} : vector<16x512xbf16>, vector<512x512xbf16>, vector<16x512xf32> -> vector<16x512xf32>
    %13 = arith.truncf %12 : vector<16x512xf32> to vector<16x512xbf16>
    %c0_10 = arith.constant 0 : index
    %c0_11 = arith.constant 0 : index
    %c0_12 = arith.constant 0 : index
    %14 = vector.load %arg5[%c0_10, %c0_11, %c0_12] : memref<5x1x512xbf16, #tpu.memory_space<vmem>>, vector<1x1x512xbf16>
    %15 = vector.shape_cast %14 : vector<1x1x512xbf16> to vector<1x512xbf16>
    %16 = vector.broadcast %15 : vector<1x512xbf16> to vector<16x512xbf16>
    %17 = arith.addf %13, %16 : vector<16x512xbf16>
    %cst_13 = arith.constant 0.000000e+00 : bf16
    %18 = vector.broadcast %cst_13 : bf16 to vector<16x512xbf16>
    %19 = arith.maximumf %17, %18 : vector<16x512xbf16>
    %c1 = arith.constant 1 : index
    %c0_14 = arith.constant 0 : index
    %c0_15 = arith.constant 0 : index
    %20 = vector.load %arg4[%c1, %c0_14, %c0_15] : memref<5x512x512xbf16, #tpu.memory_space<vmem>>, vector<1x512x512xbf16>
    %21 = vector.shape_cast %20 : vector<1x512x512xbf16> to vector<512x512xbf16>
    %cst_16 = arith.constant dense<0.000000e+00> : vector<16x512xf32>
    %22 = tpu.matmul %19, %21, %cst_16 {dimension_numbers = #tpu.dot_dimension_numbers<[1], [0], [0], [1], [0, 0, 1, 1], [], []>} : vector<16x512xbf16>, vector<512x512xbf16>, vector<16x512xf32> -> vector<16x512xf32>
    %23 = arith.truncf %22 : vector<16x512xf32> to vector<16x512xbf16>
    %c1_17 = arith.constant 1 : index
    %c0_18 = arith.constant 0 : index
    %c0_19 = arith.constant 0 : index
    %24 = vector.load %arg5[%c1_17, %c0_18, %c0_19] : memref<5x1x512xbf16, #tpu.memory_space<vmem>>, vector<1x1x512xbf16>
    %25 = vector.shape_cast %24 : vector<1x1x512xbf16> to vector<1x512xbf16>
    %26 = vector.broadcast %25 : vector<1x512xbf16> to vector<16x512xbf16>
    %27 = arith.addf %23, %26 : vector<16x512xbf16>
    %cst_20 = arith.constant 0.000000e+00 : bf16
    %28 = vector.broadcast %cst_20 : bf16 to vector<16x512xbf16>
    %29 = arith.maximumf %27, %28 : vector<16x512xbf16>
    %c2 = arith.constant 2 : index
    %c0_21 = arith.constant 0 : index
    %c0_22 = arith.constant 0 : index
    %30 = vector.load %arg4[%c2, %c0_21, %c0_22] : memref<5x512x512xbf16, #tpu.memory_space<vmem>>, vector<1x512x512xbf16>
    %31 = vector.shape_cast %30 : vector<1x512x512xbf16> to vector<512x512xbf16>
    %cst_23 = arith.constant dense<0.000000e+00> : vector<16x512xf32>
    %32 = tpu.matmul %29, %31, %cst_23 {dimension_numbers = #tpu.dot_dimension_numbers<[1], [0], [0], [1], [0, 0, 1, 1], [], []>} : vector<16x512xbf16>, vector<512x512xbf16>, vector<16x512xf32> -> vector<16x512xf32>
    %33 = arith.truncf %32 : vector<16x512xf32> to vector<16x512xbf16>
    %c2_24 = arith.constant 2 : index
    %c0_25 = arith.constant 0 : index
    %c0_26 = arith.constant 0 : index
    %34 = vector.load %arg5[%c2_24, %c0_25, %c0_26] : memref<5x1x512xbf16, #tpu.memory_space<vmem>>, vector<1x1x512xbf16>
    %35 = vector.shape_cast %34 : vector<1x1x512xbf16> to vector<1x512xbf16>
    %36 = vector.broadcast %35 : vector<1x512xbf16> to vector<16x512xbf16>
    %37 = arith.addf %33, %36 : vector<16x512xbf16>
    %cst_27 = arith.constant 0.000000e+00 : bf16
    %38 = vector.broadcast %cst_27 : bf16 to vector<16x512xbf16>
    %39 = arith.maximumf %37, %38 : vector<16x512xbf16>
    %c3 = arith.constant 3 : index
    %c0_28 = arith.constant 0 : index
    %c0_29 = arith.constant 0 : index
    %40 = vector.load %arg4[%c3, %c0_28, %c0_29] : memref<5x512x512xbf16, #tpu.memory_space<vmem>>, vector<1x512x512xbf16>
    %41 = vector.shape_cast %40 : vector<1x512x512xbf16> to vector<512x512xbf16>
    %cst_30 = arith.constant dense<0.000000e+00> : vector<16x512xf32>
    %42 = tpu.matmul %39, %41, %cst_30 {dimension_numbers = #tpu.dot_dimension_numbers<[1], [0], [0], [1], [0, 0, 1, 1], [], []>} : vector<16x512xbf16>, vector<512x512xbf16>, vector<16x512xf32> -> vector<16x512xf32>
    %43 = arith.truncf %42 : vector<16x512xf32> to vector<16x512xbf16>
    %c3_31 = arith.constant 3 : index
    %c0_32 = arith.constant 0 : index
    %c0_33 = arith.constant 0 : index
    %44 = vector.load %arg5[%c3_31, %c0_32, %c0_33] : memref<5x1x512xbf16, #tpu.memory_space<vmem>>, vector<1x1x512xbf16>
    %45 = vector.shape_cast %44 : vector<1x1x512xbf16> to vector<1x512xbf16>
    %46 = vector.broadcast %45 : vector<1x512xbf16> to vector<16x512xbf16>
    %47 = arith.addf %43, %46 : vector<16x512xbf16>
    %cst_34 = arith.constant 0.000000e+00 : bf16
    %48 = vector.broadcast %cst_34 : bf16 to vector<16x512xbf16>
    %49 = arith.maximumf %47, %48 : vector<16x512xbf16>
    %c4 = arith.constant 4 : index
    %c0_35 = arith.constant 0 : index
    %c0_36 = arith.constant 0 : index
    %50 = vector.load %arg4[%c4, %c0_35, %c0_36] : memref<5x512x512xbf16, #tpu.memory_space<vmem>>, vector<1x512x512xbf16>
    %51 = vector.shape_cast %50 : vector<1x512x512xbf16> to vector<512x512xbf16>
    %cst_37 = arith.constant dense<0.000000e+00> : vector<16x512xf32>
    %52 = tpu.matmul %49, %51, %cst_37 {dimension_numbers = #tpu.dot_dimension_numbers<[1], [0], [0], [1], [0, 0, 1, 1], [], []>} : vector<16x512xbf16>, vector<512x512xbf16>, vector<16x512xf32> -> vector<16x512xf32>
    %53 = arith.truncf %52 : vector<16x512xf32> to vector<16x512xbf16>
    %c4_38 = arith.constant 4 : index
    %c0_39 = arith.constant 0 : index
    %c0_40 = arith.constant 0 : index
    %54 = vector.load %arg5[%c4_38, %c0_39, %c0_40] : memref<5x1x512xbf16, #tpu.memory_space<vmem>>, vector<1x1x512xbf16>
    %55 = vector.shape_cast %54 : vector<1x1x512xbf16> to vector<1x512xbf16>
    %56 = vector.broadcast %55 : vector<1x512xbf16> to vector<16x512xbf16>
    %57 = arith.addf %53, %56 : vector<16x512xbf16>
    %cst_41 = arith.constant 0.000000e+00 : bf16
    %58 = vector.broadcast %cst_41 : bf16 to vector<16x512xbf16>
    %59 = arith.maximumf %57, %58 : vector<16x512xbf16>
    %c0_42 = arith.constant 0 : index
    %c0_43 = arith.constant 0 : index
    %60 = vector.load %arg6[%c0_42, %c0_43] : memref<512x128xbf16, #tpu.memory_space<vmem>>, vector<512x128xbf16>
    %cst_44 = arith.constant dense<0.000000e+00> : vector<16x128xf32>
    %61 = tpu.matmul %59, %60, %cst_44 {dimension_numbers = #tpu.dot_dimension_numbers<[1], [0], [0], [1], [0, 0, 1, 1], [], []>} : vector<16x512xbf16>, vector<512x128xbf16>, vector<16x128xf32> -> vector<16x128xf32>
    %c0_45 = arith.constant 0 : index
    %c0_46 = arith.constant 0 : index
    %62 = vector.load %arg7[%c0_45, %c0_46] : memref<1x128xf32, #tpu.memory_space<vmem>>, vector<1x128xf32>
    %63 = vector.broadcast %62 : vector<1x128xf32> to vector<16x128xf32>
    %64 = arith.addf %61, %63 : vector<16x128xf32>
    %65 = arith.negf %64 : vector<16x128xf32>
    %66 = math.exp %65 : vector<16x128xf32>
    %cst_47 = arith.constant 1.000000e+00 : f32
    %67 = vector.broadcast %cst_47 : f32 to vector<16x128xf32>
    %68 = arith.addf %67, %66 : vector<16x128xf32>
    %69 = arith.divf %67, %68 : vector<16x128xf32>
    %c0_48 = arith.constant 0 : index
    %c0_49 = arith.constant 0 : index
    %70 = vector.load %arg8[%c0_48, %c0_49] : memref<16x128xf32, #tpu.memory_space<vmem>>, vector<16x128xf32>
    tpu.vector_store %arg8[%c0_48, %c0_49], %69 {strides = array<i32>} : memref<16x128xf32, #tpu.memory_space<vmem>>, vector<16x128xf32>,
    return
  }
  func.func @transform_0(%arg0: i32) -> (i32, i32) {
    %c0_i32 = arith.constant 0 : i32
    %c0_i32_0 = arith.constant 0 : i32
    return %arg0, %c0_i32 : i32, i32
  }
  func.func @transform_1(%arg0: i32) -> (i32, i32) {
    %c0_i32 = arith.constant 0 : i32
    %c0_i32_0 = arith.constant 0 : i32
    %c0_i32_1 = arith.constant 0 : i32
    return %c0_i32, %c0_i32_0 : i32, i32
  }
  func.func @transform_2(%arg0: i32) -> (i32, i32) {
    %c0_i32 = arith.constant 0 : i32
    %c0_i32_0 = arith.constant 0 : i32
    %c0_i32_1 = arith.constant 0 : i32
    return %c0_i32, %c0_i32_0 : i32, i32
  }
  func.func @transform_3(%arg0: i32) -> (i32, i32, i32) {
    %c0_i32 = arith.constant 0 : i32
    %c0_i32_0 = arith.constant 0 : i32
    %c0_i32_1 = arith.constant 0 : i32
    %c0_i32_2 = arith.constant 0 : i32
    return %c0_i32, %c0_i32_0, %c0_i32_1 : i32, i32, i32
  }
  func.func @transform_4(%arg0: i32) -> (i32, i32, i32) {
    %c0_i32 = arith.constant 0 : i32
    %c0_i32_0 = arith.constant 0 : i32
    %c0_i32_1 = arith.constant 0 : i32
    %c0_i32_2 = arith.constant 0 : i32
    return %c0_i32, %c0_i32_0, %c0_i32_1 : i32, i32, i32
  }
  func.func @transform_5(%arg0: i32) -> (i32, i32) {
    %c0_i32 = arith.constant 0 : i32
    %c0_i32_0 = arith.constant 0 : i32
    %c0_i32_1 = arith.constant 0 : i32
    return %c0_i32, %c0_i32_0 : i32, i32
  }
  func.func @transform_6(%arg0: i32) -> (i32, i32) {
    %c0_i32 = arith.constant 0 : i32
    %c0_i32_0 = arith.constant 0 : i32
    %c0_i32_1 = arith.constant 0 : i32
    return %c0_i32, %c0_i32_0 : i32, i32
  }
  func.func @transform_7(%arg0: i32) -> (i32, i32) {
    %c0_i32 = arith.constant 0 : i32
    %c0_i32_0 = arith.constant 0 : i32
    return %arg0, %c0_i32 : i32, i32
  }
}

</mosaic_0001>

<llo_original>
// kernel: tpu_custom_call.1
$region0: #{tpu_custom_call.1}
  #allocation0 [shape = 'u32[]', space=smem, size = 0x4, offset = 0x4, fixed_abs, tag = 'smem constant byte address 0x4 - core index']
  #allocation1 [shape = 'u32[144,128]{1,0:T(1,128)}', space=vmem, size = 0x12000, scoped, tag = 'internal scratch']
  %s0 = inlined_call_operand.vmem [shape: f32[32,24], index: 0, kind: input, shape index: {}]
  %s1 = inlined_call_operand.hbm [shape: bf16[24,512], index: 1, kind: input, shape index: {}]
  %s2 = inlined_call_operand.hbm [shape: bf16[1,512], index: 2, kind: input, shape index: {}]
  %s3 = inlined_call_operand.hbm [shape: bf16[5,512,512], index: 3, kind: input, shape index: {}]
  %s4 = inlined_call_operand.vmem [shape: bf16[5,1,512], index: 4, kind: input, shape index: {}]
  %s5 = inlined_call_operand.hbm [shape: bf16[512,128], index: 5, kind: input, shape index: {}]
  %s6 = inlined_call_operand.hbm [shape: f32[1,128], index: 6, kind: input, shape index: {}]
  %s7 = inlined_call_operand.hbm [shape: f32[32,128], index: 7, kind: output, shape index: {}]
  %s8 = sld [smem:[#allocation0]]
  $region81: #{tpu_custom_call.1} parent=0
    _
  %s10 = ssub.s32 1, %s8
  %s11 = scalar_select 0, %s10, %s8
  $region1: #{tpu_custom_call.1} parent=0
    #allocation2 [shape = 'u8[24576]{0}', space=vmem, size = 0x6000, scoped, tag = 'input window, operand 1, single buffered']
    #allocation3 [shape = 's32[2]{0}', space=sflag, size = 0x8, scoped, tag = 'scoped memory for tpu_custom_call.1']
    #allocation4 [shape = 's32[2]{0}', space=sflag, size = 0x8, scoped, tag = 'scoped memory for tpu_custom_call.1']
    #allocation5 [shape = 'u8[2048]{0}', space=vmem, size = 0x800, scoped, tag = 'input window, operand 2, single buffered']
    #allocation6 [shape = 's32[1]{0}', space=sflag, size = 0x4, scoped, tag = 'scoped memory for tpu_custom_call.1']
    #allocation7 [shape = 'u8[2621440]{0}', space=vmem, size = 0x280000, scoped, tag = 'input window, operand 3, single buffered']
    #allocation8 [shape = 'u8[131072]{0}', space=vmem, size = 0x20000, scoped, tag = 'input window, operand 5, single buffered']
    #allocation9 [shape = 's32[1]{0}', space=sflag, size = 0x4, scoped, tag = 'scoped memory for tpu_custom_call.1']
    #allocation10 [shape = 'u8[512]{0}', space=vmem, size = 0x400, scoped, tag = 'input window, operand 6, single buffered']
    #allocation11 [shape = 'u8[16384]{0}', space=vmem, size = 0x4000, scoped, tag = 'output window, operand 0']
    %12 = vsyncpa [#allocation3], 0
    %13 = vsyncpa [#allocation6], 0
    %14 = vsyncpa [#allocation9], 0
    %15 = vsyncpa [#allocation4], 0
    %s16 = scalar_lea.sflag [#allocation4], 1
    %17 = vsyncpa %s16, 0
    loop: start=0, step=1, limit=4
    $region2: #{tpu_custom_call.1} parent=1 // loop_pre_header
      _
    $region3: #{tpu_custom_call.1} parent=1 // loop_header
      %s19 = sphi 0, %s23
      %p20 = scmp.ge.s32.totalorder %s19, 4
      %s29 = sphi 0, %s31
      %s32 = sphi 0, %s29
      %s33 = sphi 0, %s32
      %s49 = sphi 0, %s33
      %s53 = sphi 0, %s53
      %s55 = sphi 0, %s53
      %s56 = sphi 0, %s55
      %s70 = sphi 0, %s56
      %s74 = sphi 0, %s74
      %s76 = sphi 0, %s74
      %s77 = sphi 0, %s76
      %s91 = sphi 0, %s77
      %s95 = sphi 0, %s95
      %s97 = sphi 0, %s95
      %s98 = sphi 0, %s97
      %s112 = sphi 0, %s98
      %s116 = sphi 0, %s116
      %s118 = sphi 0, %s116
      %s119 = sphi 0, %s118
      %s133 = sphi 0, %s119
      %s137 = sphi 0, %s137
      %s139 = sphi 0, %s137
      %s140 = sphi 0, %s139
      %s154 = sphi 0, %s140
      %s158 = sphi 0, %s158
      %s160 = sphi 0, %s158
      %s161 = sphi 0, %s160
      %s175 = sphi 0, %s161
      %s181 = sphi 0, %s183
      %s184 = sphi 0, %s181
      %s185 = sphi 0, %s184
      %s201 = sphi 0, %s185
    $region4: #{tpu_custom_call.1} parent=1 // loop_header_branch
      %22 = sbr.rel (%p20) target = $region8
    $region5: #{tpu_custom_call.1} parent=1 // loop_body
      %s24 = ssub.s32 %s19, 1
      %s25 = ssub.s32 %s19, 2
      %s26 = sadd.s32 %s19, 1
      %s27 = ssub.s32 %s19, %s26
      %p28 = scmp.eq.s32.totalorder %s27, 0
      %s30 = sadd.s32 %s29, 1
      %s31 = scalar_select %p28, %s29, %s30
      %p34 = pneg %p28
      %p35 = scmp.eq.s32.totalorder %s19, 1
      %p36 = por %p34, %p35
      %p37 = scmp.ne.s32.totalorder %s29, %s32
      %p38 = scmp.eq.s32.totalorder %s19, 0
      %p39 = por %p37, %p38
      %p40 = scmp.ne.s32.totalorder %s29, %s32
      %p41 = scmp.eq.s32.totalorder %s24, 1
      %p42 = por %p40, %p41
      %p43 = scmp.ne.s32.totalorder %s32, %s33
      %p44 = scmp.eq.s32.totalorder %s24, 0
      %p45 = por %p43, %p44
      %p46 = scmp.ne.s32.totalorder %s32, %s33
      %p47 = scmp.eq.s32.totalorder %s25, 1
      %p48 = por %p46, %p47
      %p50 = scmp.ne.s32.totalorder %s33, %s49
      %p51 = scmp.eq.s32.totalorder %s25, 0
      %p52 = por %p50, %p51
      %s54 = sadd.s32 %s53, 1
      %p57 = scmp.eq.s32.totalorder %s19, 1
      %p58 = scmp.ne.s32.totalorder %s53, %s55
      %p59 = scmp.eq.s32.totalorder %s19, 0
      %p60 = por %p58, %p59
      %p61 = scmp.ne.s32.totalorder %s53, %s55
      %p62 = scmp.eq.s32.totalorder %s24, 1
      %p63 = por %p61, %p62
      %p64 = scmp.ne.s32.totalorder %s55, %s56
      %p65 = scmp.eq.s32.totalorder %s24, 0
      %p66 = por %p64, %p65
      %p67 = scmp.ne.s32.totalorder %s55, %s56
      %p68 = scmp.eq.s32.totalorder %s25, 1
      %p69 = por %p67, %p68
      %p71 = scmp.ne.s32.totalorder %s56, %s70
      %p72 = scmp.eq.s32.totalorder %s25, 0
      %p73 = por %p71, %p72
      %s75 = sadd.s32 %s74, 1
      %p78 = scmp.eq.s32.totalorder %s19, 1
      %p79 = scmp.ne.s32.totalorder %s74, %s76
      %p80 = scmp.eq.s32.totalorder %s19, 0
      %p81 = por %p79, %p80
      %p82 = scmp.ne.s32.totalorder %s74, %s76
      %p83 = scmp.eq.s32.totalorder %s24, 1
      %p84 = por %p82, %p83
      %p85 = scmp.ne.s32.totalorder %s76, %s77
      %p86 = scmp.eq.s32.totalorder %s24, 0
      %p87 = por %p85, %p86
      %p88 = scmp.ne.s32.totalorder %s76, %s77
      %p89 = scmp.eq.s32.totalorder %s25, 1
      %p90 = por %p88, %p89
      %p92 = scmp.ne.s32.totalorder %s77, %s91
      %p93 = scmp.eq.s32.totalorder %s25, 0
      %p94 = por %p92, %p93
      %s96 = sadd.s32 %s95, 1
      %p99 = scmp.eq.s32.totalorder %s19, 1
      %p100 = scmp.ne.s32.totalorder %s95, %s97
      %p101 = scmp.eq.s32.totalorder %s19, 0
      %p102 = por %p100, %p101
      %p103 = scmp.ne.s32.totalorder %s95, %s97
      %p104 = scmp.eq.s32.totalorder %s24, 1
      %p105 = por %p103, %p104
      %p106 = scmp.ne.s32.totalorder %s97, %s98
      %p107 = scmp.eq.s32.totalorder %s24, 0
      %p108 = por %p106, %p107
      %p109 = scmp.ne.s32.totalorder %s97, %s98
      %p110 = scmp.eq.s32.totalorder %s25, 1
      %p111 = por %p109, %p110
      %p113 = scmp.ne.s32.totalorder %s98, %s112
      %p114 = scmp.eq.s32.totalorder %s25, 0
      %p115 = por %p113, %p114
      %s117 = sadd.s32 %s116, 1
      %p120 = scmp.eq.s32.totalorder %s19, 1
      %p121 = scmp.ne.s32.totalorder %s116, %s118
      %p122 = scmp.eq.s32.totalorder %s19, 0
      %p123 = por %p121, %p122
      %p124 = scmp.ne.s32.totalorder %s116, %s118
      %p125 = scmp.eq.s32.totalorder %s24, 1
      %p126 = por %p124, %p125
      %p127 = scmp.ne.s32.totalorder %s118, %s119
      %p128 = scmp.eq.s32.totalorder %s24, 0
      %p129 = por %p127, %p128
      %p130 = scmp.ne.s32.totalorder %s118, %s119
      %p131 = scmp.eq.s32.totalorder %s25, 1
      %p132 = por %p130, %p131
      %p134 = scmp.ne.s32.totalorder %s119, %s133
      %p135 = scmp.eq.s32.totalorder %s25, 0
      %p136 = por %p134, %p135
      %s138 = sadd.s32 %s137, 1
      %p141 = scmp.eq.s32.totalorder %s19, 1
      %p142 = scmp.ne.s32.totalorder %s137, %s139
      %p143 = scmp.eq.s32.totalorder %s19, 0
      %p144 = por %p142, %p143
      %p145 = scmp.ne.s32.totalorder %s137, %s139
      %p146 = scmp.eq.s32.totalorder %s24, 1
      %p147 = por %p145, %p146
      %p148 = scmp.ne.s32.totalorder %s139, %s140
      %p149 = scmp.eq.s32.totalorder %s24, 0
      %p150 = por %p148, %p149
      %p151 = scmp.ne.s32.totalorder %s139, %s140
      %p152 = scmp.eq.s32.totalorder %s25, 1
      %p153 = por %p151, %p152
      %p155 = scmp.ne.s32.totalorder %s140, %s154
      %p156 = scmp.eq.s32.totalorder %s25, 0
      %p157 = por %p155, %p156
      %s159 = sadd.s32 %s158, 1
      %p162 = scmp.eq.s32.totalorder %s19, 1
      %p163 = scmp.ne.s32.totalorder %s158, %s160
      %p164 = scmp.eq.s32.totalorder %s19, 0
      %p165 = por %p163, %p164
      %p166 = scmp.ne.s32.totalorder %s158, %s160
      %p167 = scmp.eq.s32.totalorder %s24, 1
      %p168 = por %p166, %p167
      %p169 = scmp.ne.s32.totalorder %s160, %s161
      %p170 = scmp.eq.s32.totalorder %s24, 0
      %p171 = por %p169, %p170
      %p172 = scmp.ne.s32.totalorder %s160, %s161
      %p173 = scmp.eq.s32.totalorder %s25, 1
      %p174 = por %p172, %p173
      %p176 = scmp.ne.s32.totalorder %s161, %s175
      %p177 = scmp.eq.s32.totalorder %s25, 0
      %p178 = por %p176, %p177
      %s179 = ssub.s32 %s19, %s26
      %p180 = scmp.eq.s32.totalorder %s179, 0
      %s182 = sadd.s32 %s181, 1
      %s183 = scalar_select %p180, %s181, %s182
      %p186 = pneg %p180
      %p187 = scmp.eq.s32.totalorder %s19, 1
      %p188 = por %p186, %p187
      %p189 = scmp.ne.s32.totalorder %s181, %s184
      %p190 = scmp.eq.s32.totalorder %s19, 0
      %p191 = por %p189, %p190
      %p192 = scmp.ne.s32.totalorder %s181, %s184
      %p193 = scmp.eq.s32.totalorder %s24, 1
      %p194 = por %p192, %p193
      %p195 = scmp.ne.s32.totalorder %s184, %s185
      %p196 = scmp.eq.s32.totalorder %s24, 0
      %p197 = por %p195, %p196
      %p198 = scmp.ne.s32.totalorder %s184, %s185
      %p199 = scmp.eq.s32.totalorder %s25, 1
      %p200 = por %p198, %p199
      %p202 = scmp.ne.s32.totalorder %s185, %s201
      %p203 = scmp.eq.s32.totalorder %s25, 0
      %p204 = por %p202, %p203
      %p205 = scmp.le.s32.totalorder 1, %s19
      %p206 = scmp.lt.s32.totalorder %s19, 3
      %p207 = pnand %p205, %p206
      %p208 = pneg %p207
      // Predicated region
      $region9: #{tpu_custom_call.1} parent=5 // pred_check
        _
      $region10: #{tpu_custom_call.1} parent=5 // pred_check_branch
        %210 = sbr.rel (%p207) target = $region12
      $region11: #{tpu_custom_call.1} parent=5 // pred_region
        %s211 = ssub.s32 %s19, 1
        // Predicated region
        $region13: #{tpu_custom_call.1} parent=11 // pred_check
          %p212 = pneg %p66
        $region14: #{tpu_custom_call.1} parent=11 // pred_check_branch
          %214 = sbr.rel (%p212) target = $region16
        $region15: #{tpu_custom_call.1} parent=11 // pred_region
          %s216 = ssub.s32 768, 768
          %217 = vsyncadd [#allocation3], %s216
          %s218 = sshll.u32 [#allocation2], 4
          %s219 = int_to_ptr.vmem [resolvable:$true] %s218
          %224 = dma.hbm_to_vmem [thread:$0]  %s1, 768, %s219, [#allocation3], 256, 256, 16
        $region16: #{tpu_custom_call.1} parent=11 // pred_fallthru
          _
        // Predicated region
        $region17: #{tpu_custom_call.1} parent=11 // pred_check
          %p225 = pneg %p87
        $region18: #{tpu_custom_call.1} parent=11 // pred_check_branch
          %227 = sbr.rel (%p225) target = $region20
        $region19: #{tpu_custom_call.1} parent=11 // pred_region
          %s229 = ssub.s32 64, 64
          %230 = vsyncadd [#allocation6], %s229
          %s232 = sshll.u32 [#allocation5], 4
          %s233 = int_to_ptr.vmem [resolvable:$true] %s232
          %235 = dma.hbm_to_vmem [thread:$0]  %s2, 64, %s233, [#allocation6]
        $region20: #{tpu_custom_call.1} parent=11 // pred_fallthru
          _
        // Predicated region
        $region21: #{tpu_custom_call.1} parent=11 // pred_check
          %p236 = pneg %p108
        $region22: #{tpu_custom_call.1} parent=11 // pred_check_branch
          %238 = sbr.rel (%p236) target = $region24
        $region23: #{tpu_custom_call.1} parent=11 // pred_region
          %s240 = ssub.s32 81920, 81920
          %241 = vsyncadd [#allocation6], %s240
          %s242 = sshll.u32 [#allocation7], 4
          %s243 = int_to_ptr.vmem [resolvable:$true] %s242
          %248 = dma.hbm_to_vmem [thread:$0]  %s3, 81920, %s243, [#allocation6], 256, 256, 16
        $region24: #{tpu_custom_call.1} parent=11 // pred_fallthru
          _
        // Predicated region
        $region25: #{tpu_custom_call.1} parent=11 // pred_check
          %p249 = pneg %p129
        $region26: #{tpu_custom_call.1} parent=11 // pred_check_branch
          %251 = sbr.rel (%p249) target = $region28
        $region27: #{tpu_custom_call.1} parent=11 // pred_region
          _
        $region28: #{tpu_custom_call.1} parent=11 // pred_fallthru
          _
        // Predicated region
        $region29: #{tpu_custom_call.1} parent=11 // pred_check
          %p252 = pneg %p150
        $region30: #{tpu_custom_call.1} parent=11 // pred_check_branch
          %254 = sbr.rel (%p252) target = $region32
        $region31: #{tpu_custom_call.1} parent=11 // pred_region
          %s256 = ssub.s32 4096, 4096
          %257 = vsyncadd [#allocation9], %s256
          %s258 = sshll.u32 [#allocation8], 4
          %s259 = int_to_ptr.vmem [resolvable:$true] %s258
          %264 = dma.hbm_to_vmem [thread:$0]  %s5, 4096, %s259, [#allocation9], 64, 64, 4
        $region32: #{tpu_custom_call.1} parent=11 // pred_fallthru
          _
        // Predicated region
        $region33: #{tpu_custom_call.1} parent=11 // pred_check
          %p265 = pneg %p171
        $region34: #{tpu_custom_call.1} parent=11 // pred_check_branch
          %267 = sbr.rel (%p265) target = $region36
        $region35: #{tpu_custom_call.1} parent=11 // pred_region
          %s269 = ssub.s32 16, 16
          %270 = vsyncadd [#allocation9], %s269
          %s272 = sshll.u32 [#allocation10], 4
          %s273 = int_to_ptr.vmem [resolvable:$true] %s272
          %275 = dma.hbm_to_vmem [thread:$0]  %s6, 16, %s273, [#allocation9]
        $region36: #{tpu_custom_call.1} parent=11 // pred_fallthru
          _
      $region12: #{tpu_custom_call.1} parent=5 // pred_fallthru
        _
      %p276 = scmp.lt.s32.totalorder %s19, 2
      // Predicated region
      $region37: #{tpu_custom_call.1} parent=5 // pred_check
        %p277 = pneg %p276
      $region38: #{tpu_custom_call.1} parent=5 // pred_check_branch
        %279 = sbr.rel (%p277) target = $region40
      $region39: #{tpu_custom_call.1} parent=5 // pred_region
        // Predicated region
        $region41: #{tpu_custom_call.1} parent=39 // pred_check
          %p280 = pneg %p39
        $region42: #{tpu_custom_call.1} parent=39 // pred_check_branch
          %282 = sbr.rel (%p280) target = $region44
        $region43: #{tpu_custom_call.1} parent=39 // pred_region
          %s283 = smul.u32 2, %s19
          %p284 = scmp.lt.s32.totalorder %s283, 3
          %s285 = scalar_select %p284, %s283, 3
          %s286 = smul.addr %s285, 8
          %s287 = scalar_lea.vmem %s0, %s286
          %s288 = smul.u32 2, %s19
        $region44: #{tpu_custom_call.1} parent=39 // pred_fallthru
          _
      $region40: #{tpu_custom_call.1} parent=5 // pred_fallthru
        _
      %p289 = scmp.le.s32.totalorder 1, %s19
      %p290 = scmp.lt.s32.totalorder %s19, 3
      %p291 = pnand %p289, %p290
      %p292 = pneg %p291
      // Predicated region
      $region45: #{tpu_custom_call.1} parent=5 // pred_check
        _
      $region46: #{tpu_custom_call.1} parent=5 // pred_check_branch
        %294 = sbr.rel (%p291) target = $region48
      $region47: #{tpu_custom_call.1} parent=5 // pred_region
        %s295 = ssub.s32 %s19, 1
        // Predicated region
        $region49: #{tpu_custom_call.1} parent=47 // pred_check
          %p296 = pneg %p66
        $region50: #{tpu_custom_call.1} parent=47 // pred_check_branch
          %298 = sbr.rel (%p296) target = $region52
        $region51: #{tpu_custom_call.1} parent=47 // pred_region
          %299 = dma.done [#allocation3], 768
        $region52: #{tpu_custom_call.1} parent=47 // pred_fallthru
          _
        // Predicated region
        $region53: #{tpu_custom_call.1} parent=47 // pred_check
          %p300 = pneg %p87
        $region54: #{tpu_custom_call.1} parent=47 // pred_check_branch
          %302 = sbr.rel (%p300) target = $region56
        $region55: #{tpu_custom_call.1} parent=47 // pred_region
          %303 = dma.done [#allocation6], 64
        $region56: #{tpu_custom_call.1} parent=47 // pred_fallthru
          _
        // Predicated region
        $region57: #{tpu_custom_call.1} parent=47 // pred_check
          %p304 = pneg %p108
        $region58: #{tpu_custom_call.1} parent=47 // pred_check_branch
          %306 = sbr.rel (%p304) target = $region60
        $region59: #{tpu_custom_call.1} parent=47 // pred_region
          %307 = dma.done [#allocation6], 81920
        $region60: #{tpu_custom_call.1} parent=47 // pred_fallthru
          _
        // Predicated region
        $region61: #{tpu_custom_call.1} parent=47 // pred_check
          %p308 = pneg %p150
        $region62: #{tpu_custom_call.1} parent=47 // pred_check_branch
          %310 = sbr.rel (%p308) target = $region64
        $region63: #{tpu_custom_call.1} parent=47 // pred_region
          %311 = dma.done [#allocation9], 4096
        $region64: #{tpu_custom_call.1} parent=47 // pred_fallthru
          _
        // Predicated region
        $region65: #{tpu_custom_call.1} parent=47 // pred_check
          %p312 = pneg %p171
        $region66: #{tpu_custom_call.1} parent=47 // pred_check_branch
          %314 = sbr.rel (%p312) target = $region68
        $region67: #{tpu_custom_call.1} parent=47 // pred_region
          %315 = dma.done [#allocation9], 16
        $region68: #{tpu_custom_call.1} parent=47 // pred_fallthru
          _
        %s316 = smul.u32 2, %s24
        %p317 = scmp.lt.s32.totalorder %s316, 3
        %s318 = scalar_select %p317, %s316, 3
        %s319 = smul.addr %s318, 8
        %s320 = scalar_lea.vmem %s0, %s319
        %p321 = pneg %p45
        %p322 = pneg %p42
        %p323 = pneg %p66
        %p324 = pneg %p63
        %p325 = pneg %p87
        %p326 = pneg %p84
        %p327 = pneg %p108
        %p328 = pneg %p105
        %p329 = pneg %p129
        %p330 = pneg %p126
        %p331 = pneg %p150
        %p332 = pneg %p147
        %p333 = pneg %p171
        %p334 = pneg %p168
        %p335 = pneg %p197
        %p336 = pneg %p194
        %s337 = sand.u32 %s184, 1
        %s338 = scalar_lea.sflag [#allocation4], %s337
        %s339 = sand.u32 %s184, 1
        %s340 = smul.addr %s339, 16
        %s341 = scalar_lea.vmem [#allocation11], %s340
        %s342 = smul.u32 2, %s24
        %p343 = scmp.lt.s32.totalorder %s342, 3
        %s344 = scalar_select %p343, %s342, 3
        %s345 = smul.addr %s344, 8
        %s346 = scalar_lea.vmem %s0, %s345
        %s347 = smul.u32 2, %s24
        %s348 = smul.u32 2, %s24
        %v350 = vld [vmem:[%s346] sm:$0xff]
        %v351 = vld [vmem:[%s346 + $0x8] sm:$0xff]
        %v352 = vpack.c.bf16 %v351, %v350
        %v353 = vld [vmem:[#allocation2] sm:$0xff]
        %v354 = vld [vmem:[#allocation2 + $0x8] sm:$0xff]
        %v355 = vld [vmem:[#allocation2 + $0x10] sm:$0xff]
        %v356 = vld [vmem:[#allocation2 + $0x18] sm:$0xff]
        %v357 = vld [vmem:[#allocation2 + $0x20] sm:$0xff]
        %v358 = vld [vmem:[#allocation2 + $0x28] sm:$0xff]
        %v365 = vunpack.c.l.b16 %v353
        %v366 = vunpack.c.h.b16 %v353
        %v367 = vunpack.c.l.b16 %v354
        %v368 = vunpack.c.h.b16 %v354
        %v369 = vunpack.c.l.b16 %v355
        %v370 = vunpack.c.h.b16 %v355
        %v371 = vunpack.c.l.b16 %v356
        %v372 = vunpack.c.h.b16 %v356
        %v373 = vunpack.c.l.b16 %v357
        %v374 = vunpack.c.h.b16 %v357
        %v375 = vunpack.c.l.b16 %v358
        %v376 = vunpack.c.h.b16 %v358
        %v377 = vpack.c.b16 %v369, %v365
        %v378 = vpack.c.b16 %v370, %v366
        %v379 = vpack.c.b16 %v371, %v367
        %v380 = vpack.c.b16 %v372, %v368
        %v381 = vpack.c.b16 %v373, %v373
        %v382 = vpack.c.b16 %v374, %v374
        %v383 = vpack.c.b16 %v375, %v375
        %v384 = vpack.c.b16 %v376, %v376
        %vm389 = vcmask 195584
        %v391 = vsel %vm389, %v352, 0
        %vm393 = vcmask 1043456
        %v395 = vsel %vm393, %v381, 0
        %v398 = vsel %vm393, %v382, 0
        %v401 = vsel %vm393, %v383, 0
        %v404 = vsel %vm393, %v384, 0
        %406 = vmatprep.subr.bf16.mxu0 %v378
        %407 = vmatpush1.bf16.msra.mxu0 %v377
        %408 = vmatprep.subr.bf16.mxu0 %v398
        %409 = vmatpush1.bf16.msra.mxu0 %v395
        %410 = vmatprep.subr.bf16.mxu0 0
        %411 = vmatpush1.bf16.msra.mxu0 0
        %412 = vmatprep.subr.bf16.mxu0 0
        %413 = vmatpush1.bf16.msra.mxu0 0
        %414 = vmatprep.subr.bf16.mxu0 0
        %415 = vmatpush1.bf16.msra.mxu0 0
        %416 = vmatprep.subr.bf16.mxu0 0
        %417 = vmatpush1.bf16.msra.mxu0 0
        %418 = vmatprep.subr.bf16.mxu0 0
        %419 = vmatpush1.bf16.msra.mxu0 0
        %420 = vmatprep.subr.bf16.mxu0 0
        %421 = vmatpush1.bf16.msra.mxu0 0
        %422 = vmatprep.subr.bf16.mxu0 0
        %423 = vmatpush1.bf16.msra.mxu0 0
        %424 = vmatprep.subr.bf16.mxu0 0
        %425 = vmatpush1.bf16.msra.mxu0 0
        %426 = vmatprep.subr.bf16.mxu0 0
        %427 = vmatpush1.bf16.msra.mxu0 0
        %428 = vmatprep.subr.bf16.mxu0 0
        %429 = vmatpush1.bf16.msra.mxu0 0
        %430 = vmatprep.subr.bf16.mxu0 0
        %431 = vmatpush1.bf16.msra.mxu0 0
        %432 = vmatprep.subr.bf16.mxu0 0
        %433 = vmatpush1.bf16.msra.mxu0 0
        %434 = vmatprep.subr.bf16.mxu0 0
        %435 = vmatpush1.bf16.msra.mxu0 0
        %436 = vmatprep.subr.bf16.mxu0 0
        %437 = vmatpush1.bf16.msra.mxu0 0
        %438 = vmatprep.mubr.bf16.mxu0 0
        %439 = vmatmul.mubr.bf16.gmra.mrb[0].mxu0 %v391
        %v440 = vpop.f32.mrb[0].mxu0
        %v441 = vadd.f32 0.0, %v440
        %v442 = vpop.f32.mrb[0].mxu0
        %v443 = vadd.f32 0.0, %v442
        %v444 = vpop.f32.mrb[0].mxu0
        %v445 = vadd.f32 0.0, %v444
        %v446 = vpop.f32.mrb[0].mxu0
        %v447 = vadd.f32 0.0, %v446
        %448 = vdwg.mxu0
        %449 = vmatprep.subr.bf16.mxu0 %v380
        %450 = vmatpush1.bf16.msra.mxu0 %v379
        %451 = vmatprep.subr.bf16.mxu0 %v404
        %452 = vmatpush1.bf16.msra.mxu0 %v401
        %453 = vmatprep.subr.bf16.mxu0 0
        %454 = vmatpush1.bf16.msra.mxu0 0
        %455 = vmatprep.subr.bf16.mxu0 0
        %456 = vmatpush1.bf16.msra.mxu0 0
        %457 = vmatprep.subr.bf16.mxu0 0
        %458 = vmatpush1.bf16.msra.mxu0 0
        %459 = vmatprep.subr.bf16.mxu0 0
        %460 = vmatpush1.bf16.msra.mxu0 0
        %461 = vmatprep.subr.bf16.mxu0 0
        %462 = vmatpush1.bf16.msra.mxu0 0
        %463 = vmatprep.subr.bf16.mxu0 0
        %464 = vmatpush1.bf16.msra.mxu0 0
        %465 = vmatprep.subr.bf16.mxu0 0
        %466 = vmatpush1.bf16.msra.mxu0 0
        %467 = vmatprep.subr.bf16.mxu0 0
        %468 = vmatpush1.bf16.msra.mxu0 0
        %469 = vmatprep.subr.bf16.mxu0 0
        %470 = vmatpush1.bf16.msra.mxu0 0
        %471 = vmatprep.subr.bf16.mxu0 0
        %472 = vmatpush1.bf16.msra.mxu0 0
        %473 = vmatprep.subr.bf16.mxu0 0
        %474 = vmatpush1.bf16.msra.mxu0 0
        %475 = vmatprep.subr.bf16.mxu0 0
        %476 = vmatpush1.bf16.msra.mxu0 0
        %477 = vmatprep.subr.bf16.mxu0 0
        %478 = vmatpush1.bf16.msra.mxu0 0
        %479 = vmatprep.subr.bf16.mxu0 0
        %480 = vmatpush1.bf16.msra.mxu0 0
        %481 = vmatprep.mubr.bf16.mxu0 0
        %482 = vmatmul.mubr.bf16.gmra.mrb[0].mxu0 %v391
        %v483 = vpop.f32.mrb[0].mxu0
        %v484 = vadd.f32 0.0, %v483
        %v485 = vpop.f32.mrb[0].mxu0
        %v486 = vadd.f32 0.0, %v485
        %v487 = vpop.f32.mrb[0].mxu0
        %v488 = vadd.f32 0.0, %v487
        %v489 = vpop.f32.mrb[0].mxu0
        %v490 = vadd.f32 0.0, %v489
        %491 = vdwg.mxu0
        %v492 = vpack.c.bf16 %v445, %v441
        %v493 = vpack.c.bf16 %v447, %v443
        %v494 = vpack.c.bf16 %v488, %v484
        %v495 = vpack.c.bf16 %v490, %v486
        %v496 = vld [vmem:[#allocation5] sm:$0xf]
        %v499 = vunpack.c.l.s4 1966171168
        %v500 = vunpack.c.0.s8 %v499
        %v501 = vlaneseq
        %v502 = vshrl.u32 %v501, 7
        %v503 = vsub.s32 %v500, %v502
        %v504 = vrot.slane %v496, %v503
        %v505 = vcombine.high %v504, %v504
        %v507 = vunpack.c.l.s4 1966171168
        %v508 = vunpack.c.0.s8 %v507
        %v509 = vlaneseq
        %v510 = vshrl.u32 %v509, 7
        %v511 = vsub.s32 %v508, %v510
        %v512 = vrot.slane %v504, %v511
        %v514 = vunpack.c.l.s4 1966171168
        %v515 = vunpack.c.0.s8 %v514
        %v516 = vlaneseq
        %v517 = vshrl.u32 %v516, 7
        %v518 = vsub.s32 %v515, %v517
        %v519 = vrot.slane %v505, %v518
        %v520 = vcombine.high %v512, %v512
        %v521 = vcombine.high %v519, %v519
        %v523 = vpack.i.b16 %v512, %v512
        %v525 = vlaneseq
        %v526 = vshrl.u32 %v525, 7
        %v527 = vsub.s32 0, %v526
        %v528 = vrot.slane %v523, %v527
        %v530 = vpack.i.b16 %v519, %v519
        %v532 = vlaneseq
        %v533 = vshrl.u32 %v532, 7
        %v534 = vsub.s32 0, %v533
        %v535 = vrot.slane %v530, %v534
        %v537 = vpack.i.b16 %v520, %v520
        %v539 = vlaneseq
        %v540 = vshrl.u32 %v539, 7
        %v541 = vsub.s32 0, %v540
        %v542 = vrot.slane %v537, %v541
        %v544 = vpack.i.b16 %v521, %v521
        %v546 = vlaneseq
        %v547 = vshrl.u32 %v546, 7
        %v548 = vsub.s32 0, %v547
        %v549 = vrot.slane %v544, %v548
        %v550 = vadd.bf16 %v492, %v528
        %v551 = vadd.bf16 %v493, %v535
        %v552 = vadd.bf16 %v494, %v542
        %v553 = vadd.bf16 %v495, %v549
        %v554 = vmax.bf16 %v550, 0
        %v555 = vmax.bf16 %v551, 0
        %v556 = vmax.bf16 %v552, 0
        %v557 = vmax.bf16 %v553, 0
        %v558 = vld [vmem:[#allocation7] sm:$0xff]
        %v559 = vld [vmem:[#allocation7 + $0x8] sm:$0xff]
        %v560 = vld [vmem:[#allocation7 + $0x10] sm:$0xff]
        %v561 = vld [vmem:[#allocation7 + $0x18] sm:$0xff]
        %v562 = vld [vmem:[#allocation7 + $0x20] sm:$0xff]
        %v563 = vld [vmem:[#allocation7 + $0x28] sm:$0xff]
        %v564 = vld [vmem:[#allocation7 + $0x30] sm:$0xff]
        %v565 = vld [vmem:[#allocation7 + $0x38] sm:$0xff]
        %v566 = vld [vmem:[#allocation7 + $0x40] sm:$0xff]
        %v567 = vld [vmem:[#allocation7 + $0x48] sm:$0xff]
        %v568 = vld [vmem:[#allocation7 + $0x50] sm:$0xff]
        %v569 = vld [vmem:[#allocation7 + $0x58] sm:$0xff]
        %v570 = vld [vmem:[#allocation7 + $0x60] sm:$0xff]
        %v571 = vld [vmem:[#allocation7 + $0x68] sm:$0xff]
        %v572 = vld [vmem:[#allocation7 + $0x70] sm:$0xff]
        %v573 = vld [vmem:[#allocation7 + $0x78] sm:$0xff]
        %v574 = vld [vmem:[#allocation7 + $0x80] sm:$0xff]
        %v575 = vld [vmem:[#allocation7 + $0x88] sm:$0xff]
        %v576 = vld [vmem:[#allocation7 + $0x90] sm:$0xff]
        %v577 = vld [vmem:[#allocation7 + $0x98] sm:$0xff]
        %v578 = vld [vmem:[#allocation7 + $0xa0] sm:$0xff]
        %v579 = vld [vmem:[#allocation7 + $0xa8] sm:$0xff]
        %v580 = vld [vmem:[#allocation7 + $0xb0] sm:$0xff]
        %v581 = vld [vmem:[#allocation7 + $0xb8] sm:$0xff]
        %v582 = vld [vmem:[#allocation7 + $0xc0] sm:$0xff]
        %v583 = vld [vmem:[#allocation7 + $0xc8] sm:$0xff]
        %v584 = vld [vmem:[#allocation7 + $0xd0] sm:$0xff]
        %v585 = vld [vmem:[#allocation7 + $0xd8] sm:$0xff]
        %v586 = vld [vmem:[#allocation7 + $0xe0] sm:$0xff]
        %v587 = vld [vmem:[#allocation7 + $0xe8] sm:$0xff]
        %v588 = vld [vmem:[#allocation7 + $0xf0] sm:$0xff]
        %v589 = vld [vmem:[#allocation7 + $0xf8] sm:$0xff]
        %v590 = vld [vmem:[#allocation7 + $0x100] sm:$0xff]
        %v591 = vld [vmem:[#allocation7 + $0x108] sm:$0xff]
        %v592 = vld [vmem:[#allocation7 + $0x110] sm:$0xff]
        %v593 = vld [vmem:[#allocation7 + $0x118] sm:$0xff]
        %v594 = vld [vmem:[#allocation7 + $0x120] sm:$0xff]
        %v595 = vld [vmem:[#allocation7 + $0x128] sm:$0xff]
        %v596 = vld [vmem:[#allocation7 + $0x130] sm:$0xff]
        %v597 = vld [vmem:[#allocation7 + $0x138] sm:$0xff]
        %v598 = vld [vmem:[#allocation7 + $0x140] sm:$0xff]
        %v599 = vld [vmem:[#allocation7 + $0x148] sm:$0xff]
        %v600 = vld [vmem:[#allocation7 + $0x150] sm:$0xff]
        %v601 = vld [vmem:[#allocation7 + $0x158] sm:$0xff]
        %v602 = vld [vmem:[#allocation7 + $0x160] sm:$0xff]
        %v603 = vld [vmem:[#allocation7 + $0x168] sm:$0xff]
        %v604 = vld [vmem:[#allocation7 + $0x170] sm:$0xff]
        %v605 = vld [vmem:[#allocation7 + $0x178] sm:$0xff]
        %v606 = vld [vmem:[#allocation7 + $0x180] sm:$0xff]
        %v607 = vld [vmem:[#allocation7 + $0x188] sm:$0xff]
        %v608 = vld [vmem:[#allocation7 + $0x190] sm:$0xff]
        %v609 = vld [vmem:[#allocation7 + $0x198] sm:$0xff]
        %v610 = vld [vmem:[#allocation7 + $0x1a0] sm:$0xff]
        %v611 = vld [vmem:[#allocation7 + $0x1a8] sm:$0xff]
        %v612 = vld [vmem:[#allocation7 + $0x1b0] sm:$0xff]
        %v613 = vld [vmem:[#allocation7 + $0x1b8] sm:$0xff]
        %v614 = vld [vmem:[#allocation7 + $0x1c0] sm:$0xff]
        %v615 = vld [vmem:[#allocation7 + $0x1c8] sm:$0xff]
        %v616 = vld [vmem:[#allocation7 + $0x1d0] sm:$0xff]
        %v617 = vld [vmem:[#allocation7 + $0x1d8] sm:$0xff]
        %v618 = vld [vmem:[#allocation7 + $0x1e0] sm:$0xff]
        %v619 = vld [vmem:[#allocation7 + $0x1e8] sm:$0xff]
        %v620 = vld [vmem:[#allocation7 + $0x1f0] sm:$0xff]
        %v621 = vld [vmem:[#allocation7 + $0x1f8] sm:$0xff]
        %v622 = vld [vmem:[#allocation7 + $0x200] sm:$0xff]
        %v623 = vld [vmem:[#allocation7 + $0x208] sm:$0xff]
        %v624 = vld [vmem:[#allocation7 + $0x210] sm:$0xff]
        %v625 = vld [vmem:[#allocation7 + $0x218] sm:$0xff]
        %v626 = vld [vmem:[#allocation7 + $0x220] sm:$0xff]
        %v627 = vld [vmem:[#allocation7 + $0x228] sm:$0xff]
        %v628 = vld [vmem:[#allocation7 + $0x230] sm:$0xff]
        %v629 = vld [vmem:[#allocation7 + $0x238] sm:$0xff]
        %v630 = vld [vmem:[#allocation7 + $0x240] sm:$0xff]
        %v631 = vld [vmem:[#allocation7 + $0x248] sm:$0xff]
        %v632 = vld [vmem:[#allocation7 + $0x250] sm:$0xff]
        %v633 = vld [vmem:[#allocation7 + $0x258] sm:$0xff]
        %v634 = vld [vmem:[#allocation7 + $0x260] sm:$0xff]
        %v635 = vld [vmem:[#allocation7 + $0x268] sm:$0xff]
        %v636 = vld [vmem:[#allocation7 + $0x270] sm:$0xff]
        %v637 = vld [vmem:[#allocation7 + $0x278] sm:$0xff]
        %v638 = vld [vmem:[#allocation7 + $0x280] sm:$0xff]
        %v639 = vld [vmem:[#allocation7 + $0x288] sm:$0xff]
        %v640 = vld [vmem:[#allocation7 + $0x290] sm:$0xff]
        %v641 = vld [vmem:[#allocation7 + $0x298] sm:$0xff]
        %v642 = vld [vmem:[#allocation7 + $0x2a0] sm:$0xff]
        %v643 = vld [vmem:[#allocation7 + $0x2a8] sm:$0xff]
        %v644 = vld [vmem:[#allocation7 + $0x2b0] sm:$0xff]
        %v645 = vld [vmem:[#allocation7 + $0x2b8] sm:$0xff]
        %v646 = vld [vmem:[#allocation7 + $0x2c0] sm:$0xff]
        %v647 = vld [vmem:[#allocation7 + $0x2c8] sm:$0xff]
        %v648 = vld [vmem:[#allocation7 + $0x2d0] sm:$0xff]
        %v649 = vld [vmem:[#allocation7 + $0x2d8] sm:$0xff]
        %v650 = vld [vmem:[#allocation7 + $0x2e0] sm:$0xff]
        %v651 = vld [vmem:[#allocation7 + $0x2e8] sm:$0xff]
        %v652 = vld [vmem:[#allocation7 + $0x2f0] sm:$0xff]
        %v653 = vld [vmem:[#allocation7 + $0x2f8] sm:$0xff]
        %v654 = vld [vmem:[#allocation7 + $0x300] sm:$0xff]
        %v655 = vld [vmem:[#allocation7 + $0x308] sm:$0xff]
        %v656 = vld [vmem:[#allocation7 + $0x310] sm:$0xff]
        %v657 = vld [vmem:[#allocation7 + $0x318] sm:$0xff]
        %v658 = vld [vmem:[#allocation7 + $0x320] sm:$0xff]
        %v659 = vld [vmem:[#allocation7 + $0x328] sm:$0xff]
        %v660 = vld [vmem:[#allocation7 + $0x330] sm:$0xff]
        %v661 = vld [vmem:[#allocation7 + $0x338] sm:$0xff]
        %v662 = vld [vmem:[#allocation7 + $0x340] sm:$0xff]
        %v663 = vld [vmem:[#allocation7 + $0x348] sm:$0xff]
        %v664 = vld [vmem:[#allocation7 + $0x350] sm:$0xff]
        %v665 = vld [vmem:[#allocation7 + $0x358] sm:$0xff]
        %v666 = vld [vmem:[#allocation7 + $0x360] sm:$0xff]
        %v667 = vld [vmem:[#allocation7 + $0x368] sm:$0xff]
        %v668 = vld [vmem:[#allocation7 + $0x370] sm:$0xff]
        %v669 = vld [vmem:[#allocation7 + $0x378] sm:$0xff]
        %v670 = vld [vmem:[#allocation7 + $0x380] sm:$0xff]
        %v671 = vld [vmem:[#allocation7 + $0x388] sm:$0xff]
        %v672 = vld [vmem:[#allocation7 + $0x390] sm:$0xff]
        %v673 = vld [vmem:[#allocation7 + $0x398] sm:$0xff]
        %v674 = vld [vmem:[#allocation7 + $0x3a0] sm:$0xff]
        %v675 = vld [vmem:[#allocation7 + $0x3a8] sm:$0xff]
        %v676 = vld [vmem:[#allocation7 + $0x3b0] sm:$0xff]
        %v677 = vld [vmem:[#allocation7 + $0x3b8] sm:$0xff]
        %v678 = vld [vmem:[#allocation7 + $0x3c0] sm:$0xff]
        %v679 = vld [vmem:[#allocation7 + $0x3c8] sm:$0xff]
        %v680 = vld [vmem:[#allocation7 + $0x3d0] sm:$0xff]
        %v681 = vld [vmem:[#allocation7 + $0x3d8] sm:$0xff]
        %v682 = vld [vmem:[#allocation7 + $0x3e0] sm:$0xff]
        %v683 = vld [vmem:[#allocation7 + $0x3e8] sm:$0xff]
        %v684 = vld [vmem:[#allocation7 + $0x3f0] sm:$0xff]
        %v685 = vld [vmem:[#allocation7 + $0x3f8] sm:$0xff]
        %v814 = vunpack.c.l.b16 %v558
        %v815 = vunpack.c.h.b16 %v558
        %v816 = vunpack.c.l.b16 %v559
        %v817 = vunpack.c.h.b16 %v559
        %v818 = vunpack.c.l.b16 %v560
        %v819 = vunpack.c.h.b16 %v560
        %v820 = vunpack.c.l.b16 %v561
        %v821 = vunpack.c.h.b16 %v561
        %v822 = vunpack.c.l.b16 %v562
        %v823 = vunpack.c.h.b16 %v562
        %v824 = vunpack.c.l.b16 %v563
        %v825 = vunpack.c.h.b16 %v563
        %v826 = vunpack.c.l.b16 %v564
        %v827 = vunpack.c.h.b16 %v564
        %v828 = vunpack.c.l.b16 %v565
        %v829 = vunpack.c.h.b16 %v565
        %v830 = vunpack.c.l.b16 %v566
        %v831 = vunpack.c.h.b16 %v566
        %v832 = vunpack.c.l.b16 %v567
        %v833 = vunpack.c.h.b16 %v567
        %v834 = vunpack.c.l.b16 %v568
        %v835 = vunpack.c.h.b16 %v568
        %v836 = vunpack.c.l.b16 %v569
        %v837 = vunpack.c.h.b16 %v569
        %v838 = vunpack.c.l.b16 %v570
        %v839 = vunpack.c.h.b16 %v570
        %v840 = vunpack.c.l.b16 %v571
        %v841 = vunpack.c.h.b16 %v571
        %v842 = vunpack.c.l.b16 %v572
        %v843 = vunpack.c.h.b16 %v572
        %v844 = vunpack.c.l.b16 %v573
        %v845 = vunpack.c.h.b16 %v573
        %v846 = vunpack.c.l.b16 %v574
        %v847 = vunpack.c.h.b16 %v574
        %v848 = vunpack.c.l.b16 %v575
        %v849 = vunpack.c.h.b16 %v575
        %v850 = vunpack.c.l.b16 %v576
        %v851 = vunpack.c.h.b16 %v576
        %v852 = vunpack.c.l.b16 %v577
        %v853 = vunpack.c.h.b16 %v577
        %v854 = vunpack.c.l.b16 %v578
        %v855 = vunpack.c.h.b16 %v578
        %v856 = vunpack.c.l.b16 %v579
        %v857 = vunpack.c.h.b16 %v579
        %v858 = vunpack.c.l.b16 %v580
        %v859 = vunpack.c.h.b16 %v580
        %v860 = vunpack.c.l.b16 %v581
        %v861 = vunpack.c.h.b16 %v581
        %v862 = vunpack.c.l.b16 %v582
        %v863 = vunpack.c.h.b16 %v582
        %v864 = vunpack.c.l.b16 %v583
        %v865 = vunpack.c.h.b16 %v583
        %v866 = vunpack.c.l.b16 %v584
        %v867 = vunpack.c.h.b16 %v584
        %v868 = vunpack.c.l.b16 %v585
        %v869 = vunpack.c.h.b16 %v585
        %v870 = vunpack.c.l.b16 %v586
        %v871 = vunpack.c.h.b16 %v586
        %v872 = vunpack.c.l.b16 %v587
        %v873 = vunpack.c.h.b16 %v587
        %v874 = vunpack.c.l.b16 %v588
        %v875 = vunpack.c.h.b16 %v588
        %v876 = vunpack.c.l.b16 %v589
        %v877 = vunpack.c.h.b16 %v589
        %v878 = vunpack.c.l.b16 %v590
        %v879 = vunpack.c.h.b16 %v590
        %v880 = vunpack.c.l.b16 %v591
        %v881 = vunpack.c.h.b16 %v591
        %v882 = vunpack.c.l.b16 %v592
        %v883 = vunpack.c.h.b16 %v592
        %v884 = vunpack.c.l.b16 %v593
        %v885 = vunpack.c.h.b16 %v593
        %v886 = vunpack.c.l.b16 %v594
        %v887 = vunpack.c.h.b16 %v594
        %v888 = vunpack.c.l.b16 %v595
        %v889 = vunpack.c.h.b16 %v595
        %v890 = vunpack.c.l.b16 %v596
        %v891 = vunpack.c.h.b16 %v596
        %v892 = vunpack.c.l.b16 %v597
        %v893 = vunpack.c.h.b16 %v597
        %v894 = vunpack.c.l.b16 %v598
        %v895 = vunpack.c.h.b16 %v598
        %v896 = vunpack.c.l.b16 %v599
        %v897 = vunpack.c.h.b16 %v599
        %v898 = vunpack.c.l.b16 %v600
        %v899 = vunpack.c.h.b16 %v600
        %v900 = vunpack.c.l.b16 %v601
        %v901 = vunpack.c.h.b16 %v601
        %v902 = vunpack.c.l.b16 %v602
        %v903 = vunpack.c.h.b16 %v602
        %v904 = vunpack.c.l.b16 %v603
        %v905 = vunpack.c.h.b16 %v603
        %v906 = vunpack.c.l.b16 %v604
        %v907 = vunpack.c.h.b16 %v604
        %v908 = vunpack.c.l.b16 %v605
        %v909 = vunpack.c.h.b16 %v605
        %v910 = vunpack.c.l.b16 %v606
        %v911 = vunpack.c.h.b16 %v606
        %v912 = vunpack.c.l.b16 %v607
        %v913 = vunpack.c.h.b16 %v607
        %v914 = vunpack.c.l.b16 %v608
        %v915 = vunpack.c.h.b16 %v608
        %v916 = vunpack.c.l.b16 %v609
        %v917 = vunpack.c.h.b16 %v609
        %v918 = vunpack.c.l.b16 %v610
        %v919 = vunpack.c.h.b16 %v610
        %v920 = vunpack.c.l.b16 %v611
        %v921 = vunpack.c.h.b16 %v611
        %v922 = vunpack.c.l.b16 %v612
        %v923 = vunpack.c.h.b16 %v612
        %v924 = vunpack.c.l.b16 %v613
        %v925 = vunpack.c.h.b16 %v613
        %v926 = vunpack.c.l.b16 %v614
        %v927 = vunpack.c.h.b16 %v614
        %v928 = vunpack.c.l.b16 %v615
        %v929 = vunpack.c.h.b16 %v615
        %v930 = vunpack.c.l.b16 %v616
        %v931 = vunpack.c.h.b16 %v616
        %v932 = vunpack.c.l.b16 %v617
        %v933 = vunpack.c.h.b16 %v617
        %v934 = vunpack.c.l.b16 %v618
        %v935 = vunpack.c.h.b16 %v618
        %v936 = vunpack.c.l.b16 %v619
        %v937 = vunpack.c.h.b16 %v619
        %v938 = vunpack.c.l.b16 %v620
        %v939 = vunpack.c.h.b16 %v620
        %v940 = vunpack.c.l.b16 %v621
        %v941 = vunpack.c.h.b16 %v621
        %v942 = vunpack.c.l.b16 %v622
        %v943 = vunpack.c.h.b16 %v622
        %v944 = vunpack.c.l.b16 %v623
        %v945 = vunpack.c.h.b16 %v623
        %v946 = vunpack.c.l.b16 %v624
        %v947 = vunpack.c.h.b16 %v624
        %v948 = vunpack.c.l.b16 %v625
        %v949 = vunpack.c.h.b16 %v625
        %v950 = vunpack.c.l.b16 %v626
        %v951 = vunpack.c.h.b16 %v626
        %v952 = vunpack.c.l.b16 %v627
        %v953 = vunpack.c.h.b16 %v627
        %v954 = vunpack.c.l.b16 %v628
        %v955 = vunpack.c.h.b16 %v628
        %v956 = vunpack.c.l.b16 %v629
        %v957 = vunpack.c.h.b16 %v629
        %v958 = vunpack.c.l.b16 %v630
        %v959 = vunpack.c.h.b16 %v630
        %v960 = vunpack.c.l.b16 %v631
        %v961 = vunpack.c.h.b16 %v631
        %v962 = vunpack.c.l.b16 %v632
        %v963 = vunpack.c.h.b16 %v632
        %v964 = vunpack.c.l.b16 %v633
        %v965 = vunpack.c.h.b16 %v633
        %v966 = vunpack.c.l.b16 %v634
        %v967 = vunpack.c.h.b16 %v634
        %v968 = vunpack.c.l.b16 %v635
        %v969 = vunpack.c.h.b16 %v635
        %v970 = vunpack.c.l.b16 %v636
        %v971 = vunpack.c.h.b16 %v636
        %v972 = vunpack.c.l.b16 %v637
        %v973 = vunpack.c.h.b16 %v637
        %v974 = vunpack.c.l.b16 %v638
        %v975 = vunpack.c.h.b16 %v638
        %v976 = vunpack.c.l.b16 %v639
        %v977 = vunpack.c.h.b16 %v639
        %v978 = vunpack.c.l.b16 %v640
        %v979 = vunpack.c.h.b16 %v640
        %v980 = vunpack.c.l.b16 %v641
        %v981 = vunpack.c.h.b16 %v641
        %v982 = vunpack.c.l.b16 %v642
        %v983 = vunpack.c.h.b16 %v642
        %v984 = vunpack.c.l.b16 %v643
        %v985 = vunpack.c.h.b16 %v643
        %v986 = vunpack.c.l.b16 %v644
        %v987 = vunpack.c.h.b16 %v644
        %v988 = vunpack.c.l.b16 %v645
        %v989 = vunpack.c.h.b16 %v645
        %v990 = vunpack.c.l.b16 %v646
        %v991 = vunpack.c.h.b16 %v646
        %v992 = vunpack.c.l.b16 %v647
        %v993 = vunpack.c.h.b16 %v647
        %v994 = vunpack.c.l.b16 %v648
        %v995 = vunpack.c.h.b16 %v648
        %v996 = vunpack.c.l.b16 %v649
        %v997 = vunpack.c.h.b16 %v649
        %v998 = vunpack.c.l.b16 %v650
        %v999 = vunpack.c.h.b16 %v650
        %v1000 = vunpack.c.l.b16 %v651
        %v1001 = vunpack.c.h.b16 %v651
        %v1002 = vunpack.c.l.b16 %v652
        %v1003 = vunpack.c.h.b16 %v652
        %v1004 = vunpack.c.l.b16 %v653
        %v1005 = vunpack.c.h.b16 %v653
        %v1006 = vunpack.c.l.b16 %v654
        %v1007 = vunpack.c.h.b16 %v654
        %v1008 = vunpack.c.l.b16 %v655
        %v1009 = vunpack.c.h.b16 %v655
        %v1010 = vunpack.c.l.b16 %v656
        %v1011 = vunpack.c.h.b16 %v656
        %v1012 = vunpack.c.l.b16 %v657
        %v1013 = vunpack.c.h.b16 %v657
        %v1014 = vunpack.c.l.b16 %v658
        %v1015 = vunpack.c.h.b16 %v658
        %v1016 = vunpack.c.l.b16 %v659
        %v1017 = vunpack.c.h.b16 %v659
        %v1018 = vunpack.c.l.b16 %v660
        %v1019 = vunpack.c.h.b16 %v660
        %v1020 = vunpack.c.l.b16 %v661
        %v1021 = vunpack.c.h.b16 %v661
        %v1022 = vunpack.c.l.b16 %v662
        %v1023 = vunpack.c.h.b16 %v662
        %v1024 = vunpack.c.l.b16 %v663
        %v1025 = vunpack.c.h.b16 %v663
        %v1026 = vunpack.c.l.b16 %v664
        %v1027 = vunpack.c.h.b16 %v664
        %v1028 = vunpack.c.l.b16 %v665
        %v1029 = vunpack.c.h.b16 %v665
        %v1030 = vunpack.c.l.b16 %v666
        %v1031 = vunpack.c.h.b16 %v666
        %v1032 = vunpack.c.l.b16 %v667
        %v1033 = vunpack.c.h.b16 %v667
        %v1034 = vunpack.c.l.b16 %v668
        %v1035 = vunpack.c.h.b16 %v668
        %v1036 = vunpack.c.l.b16 %v669
        %v1037 = vunpack.c.h.b16 %v669
        %v1038 = vunpack.c.l.b16 %v670
        %v1039 = vunpack.c.h.b16 %v670
        %v1040 = vunpack.c.l.b16 %v671
        %v1041 = vunpack.c.h.b16 %v671
        %v1042 = vunpack.c.l.b16 %v672
        %v1043 = vunpack.c.h.b16 %v672
        %v1044 = vunpack.c.l.b16 %v673
        %v1045 = vunpack.c.h.b16 %v673
        %v1046 = vunpack.c.l.b16 %v674
        %v1047 = vunpack.c.h.b16 %v674
        %v1048 = vunpack.c.l.b16 %v675
        %v1049 = vunpack.c.h.b16 %v675
        %v1050 = vunpack.c.l.b16 %v676
        %v1051 = vunpack.c.h.b16 %v676
        %v1052 = vunpack.c.l.b16 %v677
        %v1053 = vunpack.c.h.b16 %v677
        %v1054 = vunpack.c.l.b16 %v678
        %v1055 = vunpack.c.h.b16 %v678
        %v1056 = vunpack.c.l.b16 %v679
        %v1057 = vunpack.c.h.b16 %v679
        %v1058 = vunpack.c.l.b16 %v680
        %v1059 = vunpack.c.h.b16 %v680
        %v1060 = vunpack.c.l.b16 %v681
        %v1061 = vunpack.c.h.b16 %v681
        %v1062 = vunpack.c.l.b16 %v682
        %v1063 = vunpack.c.h.b16 %v682
        %v1064 = vunpack.c.l.b16 %v683
        %v1065 = vunpack.c.h.b16 %v683
        %v1066 = vunpack.c.l.b16 %v684
        %v1067 = vunpack.c.h.b16 %v684
        %v1068 = vunpack.c.l.b16 %v685
        %v1069 = vunpack.c.h.b16 %v685
        %v1070 = vpack.c.b16 %v818, %v814
        %v1071 = vpack.c.b16 %v819, %v815
        %v1072 = vpack.c.b16 %v820, %v816
        %v1073 = vpack.c.b16 %v821, %v817
        %v1074 = vpack.c.b16 %v826, %v822
        %v1075 = vpack.c.b16 %v827, %v823
        %v1076 = vpack.c.b16 %v828, %v824
        %v1077 = vpack.c.b16 %v829, %v825
        %v1078 = vpack.c.b16 %v834, %v830
        %v1079 = vpack.c.b16 %v835, %v831
        %v1080 = vpack.c.b16 %v836, %v832
        %v1081 = vpack.c.b16 %v837, %v833
        %v1082 = vpack.c.b16 %v842, %v838
        %v1083 = vpack.c.b16 %v843, %v839
        %v1084 = vpack.c.b16 %v844, %v840
        %v1085 = vpack.c.b16 %v845, %v841
        %v1086 = vpack.c.b16 %v850, %v846
        %v1087 = vpack.c.b16 %v851, %v847
        %v1088 = vpack.c.b16 %v852, %v848
        %v1089 = vpack.c.b16 %v853, %v849
        %v1090 = vpack.c.b16 %v858, %v854
        %v1091 = vpack.c.b16 %v859, %v855
        %v1092 = vpack.c.b16 %v860, %v856
        %v1093 = vpack.c.b16 %v861, %v857
        %v1094 = vpack.c.b16 %v866, %v862
        %v1095 = vpack.c.b16 %v867, %v863
        %v1096 = vpack.c.b16 %v868, %v864
        %v1097 = vpack.c.b16 %v869, %v865
        %v1098 = vpack.c.b16 %v874, %v870
        %v1099 = vpack.c.b16 %v875, %v871
        %v1100 = vpack.c.b16 %v876, %v872
        %v1101 = vpack.c.b16 %v877, %v873
        %v1102 = vpack.c.b16 %v882, %v878
        %v1103 = vpack.c.b16 %v883, %v879
        %v1104 = vpack.c.b16 %v884, %v880
        %v1105 = vpack.c.b16 %v885, %v881
        %v1106 = vpack.c.b16 %v890, %v886
        %v1107 = vpack.c.b16 %v891, %v887
        %v1108 = vpack.c.b16 %v892, %v888
        %v1109 = vpack.c.b16 %v893, %v889
        %v1110 = vpack.c.b16 %v898, %v894
        %v1111 = vpack.c.b16 %v899, %v895
        %v1112 = vpack.c.b16 %v900, %v896
        %v1113 = vpack.c.b16 %v901, %v897
        %v1114 = vpack.c.b16 %v906, %v902
        %v1115 = vpack.c.b16 %v907, %v903
        %v1116 = vpack.c.b16 %v908, %v904
        %v1117 = vpack.c.b16 %v909, %v905
        %v1118 = vpack.c.b16 %v914, %v910
        %v1119 = vpack.c.b16 %v915, %v911
        %v1120 = vpack.c.b16 %v916, %v912
        %v1121 = vpack.c.b16 %v917, %v913
        %v1122 = vpack.c.b16 %v922, %v918
        %v1123 = vpack.c.b16 %v923, %v919
        %v1124 = vpack.c.b16 %v924, %v920
        %v1125 = vpack.c.b16 %v925, %v921
        %v1126 = vpack.c.b16 %v930, %v926
        %v1127 = vpack.c.b16 %v931, %v927
        %v1128 = vpack.c.b16 %v932, %v928
        %v1129 = vpack.c.b16 %v933, %v929
        %v1130 = vpack.c.b16 %v938, %v934
        %v1131 = vpack.c.b16 %v939, %v935
        %v1132 = vpack.c.b16 %v940, %v936
        %v1133 = vpack.c.b16 %v941, %v937
        %v1134 = vpack.c.b16 %v946, %v942
        %v1135 = vpack.c.b16 %v947, %v943
        %v1136 = vpack.c.b16 %v948, %v944
        %v1137 = vpack.c.b16 %v949, %v945
        %v1138 = vpack.c.b16 %v954, %v950
        %v1139 = vpack.c.b16 %v955, %v951
        %v1140 = vpack.c.b16 %v956, %v952
        %v1141 = vpack.c.b16 %v957, %v953
        %v1142 = vpack.c.b16 %v962, %v958
        %v1143 = vpack.c.b16 %v963, %v959
        %v1144 = vpack.c.b16 %v964, %v960
        %v1145 = vpack.c.b16 %v965, %v961
        %v1146 = vpack.c.b16 %v970, %v966
        %v1147 = vpack.c.b16 %v971, %v967
        %v1148 = vpack.c.b16 %v972, %v968
        %v1149 = vpack.c.b16 %v973, %v969
        %v1150 = vpack.c.b16 %v978, %v974
        %v1151 = vpack.c.b16 %v979, %v975
        %v1152 = vpack.c.b16 %v980, %v976
        %v1153 = vpack.c.b16 %v981, %v977
        %v1154 = vpack.c.b16 %v986, %v982
        %v1155 = vpack.c.b16 %v987, %v983
        %v1156 = vpack.c.b16 %v988, %v984
        %v1157 = vpack.c.b16 %v989, %v985
        %v1158 = vpack.c.b16 %v994, %v990
        %v1159 = vpack.c.b16 %v995, %v991
        %v1160 = vpack.c.b16 %v996, %v992
        %v1161 = vpack.c.b16 %v997, %v993
        %v1162 = vpack.c.b16 %v1002, %v998
        %v1163 = vpack.c.b16 %v1003, %v999
        %v1164 = vpack.c.b16 %v1004, %v1000
        %v1165 = vpack.c.b16 %v1005, %v1001
        %v1166 = vpack.c.b16 %v1010, %v1006
        %v1167 = vpack.c.b16 %v1011, %v1007
        %v1168 = vpack.c.b16 %v1012, %v1008
        %v1169 = vpack.c.b16 %v1013, %v1009
        %v1170 = vpack.c.b16 %v1018, %v1014
        %v1171 = vpack.c.b16 %v1019, %v1015
        %v1172 = vpack.c.b16 %v1020, %v1016
        %v1173 = vpack.c.b16 %v1021, %v1017
        %v1174 = vpack.c.b16 %v1026, %v1022
        %v1175 = vpack.c.b16 %v1027, %v1023
        %v1176 = vpack.c.b16 %v1028, %v1024
        %v1177 = vpack.c.b16 %v1029, %v1025
        %v1178 = vpack.c.b16 %v1034, %v1030
        %v1179 = vpack.c.b16 %v1035, %v1031
        %v1180 = vpack.c.b16 %v1036, %v1032
        %v1181 = vpack.c.b16 %v1037, %v1033
        %v1182 = vpack.c.b16 %v1042, %v1038
        %v1183 = vpack.c.b16 %v1043, %v1039
        %v1184 = vpack.c.b16 %v1044, %v1040
        %v1185 = vpack.c.b16 %v1045, %v1041
        %v1186 = vpack.c.b16 %v1050, %v1046
        %v1187 = vpack.c.b16 %v1051, %v1047
        %v1188 = vpack.c.b16 %v1052, %v1048
        %v1189 = vpack.c.b16 %v1053, %v1049
        %v1190 = vpack.c.b16 %v1058, %v1054
        %v1191 = vpack.c.b16 %v1059, %v1055
        %v1192 = vpack.c.b16 %v1060, %v1056
        %v1193 = vpack.c.b16 %v1061, %v1057
        %v1194 = vpack.c.b16 %v1066, %v1062
        %v1195 = vpack.c.b16 %v1067, %v1063
        %v1196 = vpack.c.b16 %v1068, %v1064
        %v1197 = vpack.c.b16 %v1069, %v1065
        %1326 = vmatprep.subr.bf16.mxu0 %v1071
        %1327 = vmatpush1.bf16.msra.mxu0 %v1070
        %1328 = vmatprep.subr.bf16.mxu0 %v1075
        %1329 = vmatpush1.bf16.msra.mxu0 %v1074
        %1330 = vmatprep.subr.bf16.mxu0 %v1079
        %1331 = vmatpush1.bf16.msra.mxu0 %v1078
        %1332 = vmatprep.subr.bf16.mxu0 %v1083
        %1333 = vmatpush1.bf16.msra.mxu0 %v1082
        %1334 = vmatprep.subr.bf16.mxu0 %v1087
        %1335 = vmatpush1.bf16.msra.mxu0 %v1086
        %1336 = vmatprep.subr.bf16.mxu0 %v1091
        %1337 = vmatpush1.bf16.msra.mxu0 %v1090
        %1338 = vmatprep.subr.bf16.mxu0 %v1095
        %1339 = vmatpush1.bf16.msra.mxu0 %v1094
        %1340 = vmatprep.subr.bf16.mxu0 %v1099
        %1341 = vmatpush1.bf16.msra.mxu0 %v1098
        %1342 = vmatprep.subr.bf16.mxu0 %v1103
        %1343 = vmatpush1.bf16.msra.mxu0 %v1102
        %1344 = vmatprep.subr.bf16.mxu0 %v1107
        %1345 = vmatpush1.bf16.msra.mxu0 %v1106
        %1346 = vmatprep.subr.bf16.mxu0 %v1111
        %1347 = vmatpush1.bf16.msra.mxu0 %v1110
        %1348 = vmatprep.subr.bf16.mxu0 %v1115
        %1349 = vmatpush1.bf16.msra.mxu0 %v1114
        %1350 = vmatprep.subr.bf16.mxu0 %v1119
        %1351 = vmatpush1.bf16.msra.mxu0 %v1118
        %1352 = vmatprep.subr.bf16.mxu0 %v1123
        %1353 = vmatpush1.bf16.msra.mxu0 %v1122
        %1354 = vmatprep.subr.bf16.mxu0 %v1127
        %1355 = vmatpush1.bf16.msra.mxu0 %v1126
        %1356 = vmatprep.subr.bf16.mxu0 %v1131
        %1357 = vmatpush1.bf16.msra.mxu0 %v1130
        %1358 = vmatprep.mubr.bf16.mxu0 %v555
        %1359 = vmatmul.mubr.bf16.gmra.mrb[0].mxu0 %v554
        %v1360 = vpop.f32.mrb[0].mxu0
        %v1361 = vadd.f32 0.0, %v1360
        %v1362 = vpop.f32.mrb[0].mxu0
        %v1363 = vadd.f32 0.0, %v1362
        %v1364 = vpop.f32.mrb[0].mxu0
        %v1365 = vadd.f32 0.0, %v1364
        %v1366 = vpop.f32.mrb[0].mxu0
        %v1367 = vadd.f32 0.0, %v1366
        %1368 = vdwg.mxu0
        %1369 = vmatprep.subr.bf16.mxu0 %v1135
        %1370 = vmatpush1.bf16.msra.mxu0 %v1134
        %1371 = vmatprep.subr.bf16.mxu0 %v1139
        %1372 = vmatpush1.bf16.msra.mxu0 %v1138
        %1373 = vmatprep.subr.bf16.mxu0 %v1143
        %1374 = vmatpush1.bf16.msra.mxu0 %v1142
        %1375 = vmatprep.subr.bf16.mxu0 %v1147
        %1376 = vmatpush1.bf16.msra.mxu0 %v1146
        %1377 = vmatprep.subr.bf16.mxu0 %v1151
        %1378 = vmatpush1.bf16.msra.mxu0 %v1150
        %1379 = vmatprep.subr.bf16.mxu0 %v1155
        %1380 = vmatpush1.bf16.msra.mxu0 %v1154
        %1381 = vmatprep.subr.bf16.mxu0 %v1159
        %1382 = vmatpush1.bf16.msra.mxu0 %v1158
        %1383 = vmatprep.subr.bf16.mxu0 %v1163
        %1384 = vmatpush1.bf16.msra.mxu0 %v1162
        %1385 = vmatprep.subr.bf16.mxu0 %v1167
        %1386 = vmatpush1.bf16.msra.mxu0 %v1166
        %1387 = vmatprep.subr.bf16.mxu0 %v1171
        %1388 = vmatpush1.bf16.msra.mxu0 %v1170
        %1389 = vmatprep.subr.bf16.mxu0 %v1175
        %1390 = vmatpush1.bf16.msra.mxu0 %v1174
        %1391 = vmatprep.subr.bf16.mxu0 %v1179
        %1392 = vmatpush1.bf16.msra.mxu0 %v1178
        %1393 = vmatprep.subr.bf16.mxu0 %v1183
        %1394 = vmatpush1.bf16.msra.mxu0 %v1182
        %1395 = vmatprep.subr.bf16.mxu0 %v1187
        %1396 = vmatpush1.bf16.msra.mxu0 %v1186
        %1397 = vmatprep.subr.bf16.mxu0 %v1191
        %1398 = vmatpush1.bf16.msra.mxu0 %v1190
        %1399 = vmatprep.subr.bf16.mxu0 %v1195
        %1400 = vmatpush1.bf16.msra.mxu0 %v1194
        %1401 = vmatprep.mubr.bf16.mxu0 %v557
        %1402 = vmatmul.mubr.bf16.gmra.mrb[0].mxu0 %v556
        %v1403 = vpop.f32.mrb[0].mxu0
        %v1404 = vadd.f32 %v1361, %v1403
        %v1405 = vpop.f32.mrb[0].mxu0
        %v1406 = vadd.f32 %v1363, %v1405
        %v1407 = vpop.f32.mrb[0].mxu0
        %v1408 = vadd.f32 %v1365, %v1407
        %v1409 = vpop.f32.mrb[0].mxu0
        %v1410 = vadd.f32 %v1367, %v1409
        %1411 = vdwg.mxu0
        %1412 = vmatprep.subr.bf16.mxu0 %v1073
        %1413 = vmatpush1.bf16.msra.mxu0 %v1072
        %1414 = vmatprep.subr.bf16.mxu0 %v1077
        %1415 = vmatpush1.bf16.msra.mxu0 %v1076
        %1416 = vmatprep.subr.bf16.mxu0 %v1081
        %1417 = vmatpush1.bf16.msra.mxu0 %v1080
        %1418 = vmatprep.subr.bf16.mxu0 %v1085
        %1419 = vmatpush1.bf16.msra.mxu0 %v1084
        %1420 = vmatprep.subr.bf16.mxu0 %v1089
        %1421 = vmatpush1.bf16.msra.mxu0 %v1088
        %1422 = vmatprep.subr.bf16.mxu0 %v1093
        %1423 = vmatpush1.bf16.msra.mxu0 %v1092
        %1424 = vmatprep.subr.bf16.mxu0 %v1097
        %1425 = vmatpush1.bf16.msra.mxu0 %v1096
        %1426 = vmatprep.subr.bf16.mxu0 %v1101
        %1427 = vmatpush1.bf16.msra.mxu0 %v1100
        %1428 = vmatprep.subr.bf16.mxu0 %v1105
        %1429 = vmatpush1.bf16.msra.mxu0 %v1104
        %1430 = vmatprep.subr.bf16.mxu0 %v1109
        %1431 = vmatpush1.bf16.msra.mxu0 %v1108
        %1432 = vmatprep.subr.bf16.mxu0 %v1113
        %1433 = vmatpush1.bf16.msra.mxu0 %v1112
        %1434 = vmatprep.subr.bf16.mxu0 %v1117
        %1435 = vmatpush1.bf16.msra.mxu0 %v1116
        %1436 = vmatprep.subr.bf16.mxu0 %v1121
        %1437 = vmatpush1.bf16.msra.mxu0 %v1120
        %1438 = vmatprep.subr.bf16.mxu0 %v1125
        %1439 = vmatpush1.bf16.msra.mxu0 %v1124
        %1440 = vmatprep.subr.bf16.mxu0 %v1129
        %1441 = vmatpush1.bf16.msra.mxu0 %v1128
        %1442 = vmatprep.subr.bf16.mxu0 %v1133
        %1443 = vmatpush1.bf16.msra.mxu0 %v1132
        %1444 = vmatprep.mubr.bf16.mxu0 %v555
        %1445 = vmatmul.mubr.bf16.gmra.mrb[0].mxu0 %v554
        %v1446 = vpop.f32.mrb[0].mxu0
        %v1447 = vadd.f32 0.0, %v1446
        %v1448 = vpop.f32.mrb[0].mxu0
        %v1449 = vadd.f32 0.0, %v1448
        %v1450 = vpop.f32.mrb[0].mxu0
        %v1451 = vadd.f32 0.0, %v1450
        %v1452 = vpop.f32.mrb[0].mxu0
        %v1453 = vadd.f32 0.0, %v1452
        %1454 = vdwg.mxu0
        %1455 = vmatprep.subr.bf16.mxu0 %v1137
        %1456 = vmatpush1.bf16.msra.mxu0 %v1136
        %1457 = vmatprep.subr.bf16.mxu0 %v1141
        %1458 = vmatpush1.bf16.msra.mxu0 %v1140
        %1459 = vmatprep.subr.bf16.mxu0 %v1145
        %1460 = vmatpush1.bf16.msra.mxu0 %v1144
        %1461 = vmatprep.subr.bf16.mxu0 %v1149
        %1462 = vmatpush1.bf16.msra.mxu0 %v1148
        %1463 = vmatprep.subr.bf16.mxu0 %v1153
        %1464 = vmatpush1.bf16.msra.mxu0 %v1152
        %1465 = vmatprep.subr.bf16.mxu0 %v1157
        %1466 = vmatpush1.bf16.msra.mxu0 %v1156
        %1467 = vmatprep.subr.bf16.mxu0 %v1161
        %1468 = vmatpush1.bf16.msra.mxu0 %v1160
        %1469 = vmatprep.subr.bf16.mxu0 %v1165
        %1470 = vmatpush1.bf16.msra.mxu0 %v1164
        %1471 = vmatprep.subr.bf16.mxu0 %v1169
        %1472 = vmatpush1.bf16.msra.mxu0 %v1168
        %1473 = vmatprep.subr.bf16.mxu0 %v1173
        %1474 = vmatpush1.bf16.msra.mxu0 %v1172
        %1475 = vmatprep.subr.bf16.mxu0 %v1177
        %1476 = vmatpush1.bf16.msra.mxu0 %v1176
        %1477 = vmatprep.subr.bf16.mxu0 %v1181
        %1478 = vmatpush1.bf16.msra.mxu0 %v1180
        %1479 = vmatprep.subr.bf16.mxu0 %v1185
        %1480 = vmatpush1.bf16.msra.mxu0 %v1184
        %1481 = vmatprep.subr.bf16.mxu0 %v1189
        %1482 = vmatpush1.bf16.msra.mxu0 %v1188
        %1483 = vmatprep.subr.bf16.mxu0 %v1193
        %1484 = vmatpush1.bf16.msra.mxu0 %v1192
        %1485 = vmatprep.subr.bf16.mxu0 %v1197
        %1486 = vmatpush1.bf16.msra.mxu0 %v1196
        %1487 = vmatprep.mubr.bf16.mxu0 %v557
        %1488 = vmatmul.mubr.bf16.gmra.mrb[0].mxu0 %v556
        %v1489 = vpop.f32.mrb[0].mxu0
        %v1490 = vadd.f32 %v1447, %v1489
        %v1491 = vpop.f32.mrb[0].mxu0
        %v1492 = vadd.f32 %v1449, %v1491
        %v1493 = vpop.f32.mrb[0].mxu0
        %v1494 = vadd.f32 %v1451, %v1493
        %v1495 = vpop.f32.mrb[0].mxu0
        %v1496 = vadd.f32 %v1453, %v1495
        %1497 = vdwg.mxu0
        %v1498 = vpack.c.bf16 %v1408, %v1404
        %v1499 = vpack.c.bf16 %v1410, %v1406
        %v1500 = vpack.c.bf16 %v1494, %v1490
        %v1501 = vpack.c.bf16 %v1496, %v1492
        %v1502 = vld [vmem:[%s4] sm:$0xf]
        %v1505 = vunpack.c.l.s4 1966171168
        %v1506 = vunpack.c.0.s8 %v1505
        %v1507 = vlaneseq
        %v1508 = vshrl.u32 %v1507, 7
        %v1509 = vsub.s32 %v1506, %v1508
        %v1510 = vrot.slane %v1502, %v1509
        %v1511 = vcombine.high %v1510, %v1510
        %v1513 = vunpack.c.l.s4 1966171168
        %v1514 = vunpack.c.0.s8 %v1513
        %v1515 = vlaneseq
        %v1516 = vshrl.u32 %v1515, 7
        %v1517 = vsub.s32 %v1514, %v1516
        %v1518 = vrot.slane %v1510, %v1517
        %v1520 = vunpack.c.l.s4 1966171168
        %v1521 = vunpack.c.0.s8 %v1520
        %v1522 = vlaneseq
        %v1523 = vshrl.u32 %v1522, 7
        %v1524 = vsub.s32 %v1521, %v1523
        %v1525 = vrot.slane %v1511, %v1524
        %v1526 = vcombine.high %v1518, %v1518
        %v1527 = vcombine.high %v1525, %v1525
        %v1529 = vpack.i.b16 %v1518, %v1518
        %v1531 = vlaneseq
        %v1532 = vshrl.u32 %v1531, 7
        %v1533 = vsub.s32 0, %v1532
        %v1534 = vrot.slane %v1529, %v1533
        %v1536 = vpack.i.b16 %v1525, %v1525
        %v1538 = vlaneseq
        %v1539 = vshrl.u32 %v1538, 7
        %v1540 = vsub.s32 0, %v1539
        %v1541 = vrot.slane %v1536, %v1540
        %v1543 = vpack.i.b16 %v1526, %v1526
        %v1545 = vlaneseq
        %v1546 = vshrl.u32 %v1545, 7
        %v1547 = vsub.s32 0, %v1546
        %v1548 = vrot.slane %v1543, %v1547
        %v1550 = vpack.i.b16 %v1527, %v1527
        %v1552 = vlaneseq
        %v1553 = vshrl.u32 %v1552, 7
        %v1554 = vsub.s32 0, %v1553
        %v1555 = vrot.slane %v1550, %v1554
        %v1556 = vadd.bf16 %v1498, %v1534
        %v1557 = vadd.bf16 %v1499, %v1541
        %v1558 = vadd.bf16 %v1500, %v1548
        %v1559 = vadd.bf16 %v1501, %v1555
        %v1560 = vmax.bf16 %v1556, 0
        %v1561 = vmax.bf16 %v1557, 0
        %v1562 = vmax.bf16 %v1558, 0
        %v1563 = vmax.bf16 %v1559, 0
        %s1564 = scalar_lea.vmem [#allocation7], 1024
        %v1565 = vld [vmem:[%s1564] sm:$0xff]
        %v1566 = vld [vmem:[%s1564 + $0x8] sm:$0xff]
        %v1567 = vld [vmem:[%s1564 + $0x10] sm:$0xff]
        %v1568 = vld [vmem:[%s1564 + $0x18] sm:$0xff]
        %v1569 = vld [vmem:[%s1564 + $0x20] sm:$0xff]
        %v1570 = vld [vmem:[%s1564 + $0x28] sm:$0xff]
        %v1571 = vld [vmem:[%s1564 + $0x30] sm:$0xff]
        %v1572 = vld [vmem:[%s1564 + $0x38] sm:$0xff]
        %v1573 = vld [vmem:[%s1564 + $0x40] sm:$0xff]
        %v1574 = vld [vmem:[%s1564 + $0x48] sm:$0xff]
        %v1575 = vld [vmem:[%s1564 + $0x50] sm:$0xff]
        %v1576 = vld [vmem:[%s1564 + $0x58] sm:$0xff]
        %v1577 = vld [vmem:[%s1564 + $0x60] sm:$0xff]
        %v1578 = vld [vmem:[%s1564 + $0x68] sm:$0xff]
        %v1579 = vld [vmem:[%s1564 + $0x70] sm:$0xff]
        %v1580 = vld [vmem:[%s1564 + $0x78] sm:$0xff]
        %v1581 = vld [vmem:[%s1564 + $0x80] sm:$0xff]
        %v1582 = vld [vmem:[%s1564 + $0x88] sm:$0xff]
        %v1583 = vld [vmem:[%s1564 + $0x90] sm:$0xff]
        %v1584 = vld [vmem:[%s1564 + $0x98] sm:$0xff]
        %v1585 = vld [vmem:[%s1564 + $0xa0] sm:$0xff]
        %v1586 = vld [vmem:[%s1564 + $0xa8] sm:$0xff]
        %v1587 = vld [vmem:[%s1564 + $0xb0] sm:$0xff]
        %v1588 = vld [vmem:[%s1564 + $0xb8] sm:$0xff]
        %v1589 = vld [vmem:[%s1564 + $0xc0] sm:$0xff]
        %v1590 = vld [vmem:[%s1564 + $0xc8] sm:$0xff]
        %v1591 = vld [vmem:[%s1564 + $0xd0] sm:$0xff]
        %v1592 = vld [vmem:[%s1564 + $0xd8] sm:$0xff]
        %v1593 = vld [vmem:[%s1564 + $0xe0] sm:$0xff]
        %v1594 = vld [vmem:[%s1564 + $0xe8] sm:$0xff]
        %v1595 = vld [vmem:[%s1564 + $0xf0] sm:$0xff]
        %v1596 = vld [vmem:[%s1564 + $0xf8] sm:$0xff]
        %v1597 = vld [vmem:[%s1564 + $0x100] sm:$0xff]
        %v1598 = vld [vmem:[%s1564 + $0x108] sm:$0xff]
        %v1599 = vld [vmem:[%s1564 + $0x110] sm:$0xff]
        %v1600 = vld [vmem:[%s1564 + $0x118] sm:$0xff]
        %v1601 = vld [vmem:[%s1564 + $0x120] sm:$0xff]
        %v1602 = vld [vmem:[%s1564 + $0x128] sm:$0xff]
        %v1603 = vld [vmem:[%s1564 + $0x130] sm:$0xff]
        %v1604 = vld [vmem:[%s1564 + $0x138] sm:$0xff]
        %v1605 = vld [vmem:[%s1564 + $0x140] sm:$0xff]
        %v1606 = vld [vmem:[%s1564 + $0x148] sm:$0xff]
        %v1607 = vld [vmem:[%s1564 + $0x150] sm:$0xff]
        %v1608 = vld [vmem:[%s1564 + $0x158] sm:$0xff]
        %v1609 = vld [vmem:[%s1564 + $0x160] sm:$0xff]
        %v1610 = vld [vmem:[%s1564 + $0x168] sm:$0xff]
        %v1611 = vld [vmem:[%s1564 + $0x170] sm:$0xff]
        %v1612 = vld [vmem:[%s1564 + $0x178] sm:$0xff]
        %v1613 = vld [vmem:[%s1564 + $0x180] sm:$0xff]
        %v1614 = vld [vmem:[%s1564 + $0x188] sm:$0xff]
        %v1615 = vld [vmem:[%s1564 + $0x190] sm:$0xff]
        %v1616 = vld [vmem:[%s1564 + $0x198] sm:$0xff]
        %v1617 = vld [vmem:[%s1564 + $0x1a0] sm:$0xff]
        %v1618 = vld [vmem:[%s1564 + $0x1a8] sm:$0xff]
        %v1619 = vld [vmem:[%s1564 + $0x1b0] sm:$0xff]
        %v1620 = vld [vmem:[%s1564 + $0x1b8] sm:$0xff]
        %v1621 = vld [vmem:[%s1564 + $0x1c0] sm:$0xff]
        %v1622 = vld [vmem:[%s1564 + $0x1c8] sm:$0xff]
        %v1623 = vld [vmem:[%s1564 + $0x1d0] sm:$0xff]
        %v1624 = vld [vmem:[%s1564 + $0x1d8] sm:$0xff]
        %v1625 = vld [vmem:[%s1564 + $0x1e0] sm:$0xff]
        %v1626 = vld [vmem:[%s1564 + $0x1e8] sm:$0xff]
        %v1627 = vld [vmem:[%s1564 + $0x1f0] sm:$0xff]
        %v1628 = vld [vmem:[%s1564 + $0x1f8] sm:$0xff]
        %v1629 = vld [vmem:[%s1564 + $0x200] sm:$0xff]
        %v1630 = vld [vmem:[%s1564 + $0x208] sm:$0xff]
        %v1631 = vld [vmem:[%s1564 + $0x210] sm:$0xff]
        %v1632 = vld [vmem:[%s1564 + $0x218] sm:$0xff]
        %v1633 = vld [vmem:[%s1564 + $0x220] sm:$0xff]
        %v1634 = vld [vmem:[%s1564 + $0x228] sm:$0xff]
        %v1635 = vld [vmem:[%s1564 + $0x230] sm:$0xff]
        %v1636 = vld [vmem:[%s1564 + $0x238] sm:$0xff]
        %v1637 = vld [vmem:[%s1564 + $0x240] sm:$0xff]
        %v1638 = vld [vmem:[%s1564 + $0x248] sm:$0xff]
        %v1639 = vld [vmem:[%s1564 + $0x250] sm:$0xff]
        %v1640 = vld [vmem:[%s1564 + $0x258] sm:$0xff]
        %v1641 = vld [vmem:[%s1564 + $0x260] sm:$0xff]
        %v1642 = vld [vmem:[%s1564 + $0x268] sm:$0xff]
        %v1643 = vld [vmem:[%s1564 + $0x270] sm:$0xff]
        %v1644 = vld [vmem:[%s1564 + $0x278] sm:$0xff]
        %v1645 = vld [vmem:[%s1564 + $0x280] sm:$0xff]
        %v1646 = vld [vmem:[%s1564 + $0x288] sm:$0xff]
        %v1647 = vld [vmem:[%s1564 + $0x290] sm:$0xff]
        %v1648 = vld [vmem:[%s1564 + $0x298] sm:$0xff]
        %v1649 = vld [vmem:[%s1564 + $0x2a0] sm:$0xff]
        %v1650 = vld [vmem:[%s1564 + $0x2a8] sm:$0xff]
        %v1651 = vld [vmem:[%s1564 + $0x2b0] sm:$0xff]
        %v1652 = vld [vmem:[%s1564 + $0x2b8] sm:$0xff]
        %v1653 = vld [vmem:[%s1564 + $0x2c0] sm:$0xff]
        %v1654 = vld [vmem:[%s1564 + $0x2c8] sm:$0xff]
        %v1655 = vld [vmem:[%s1564 + $0x2d0] sm:$0xff]
        %v1656 = vld [vmem:[%s1564 + $0x2d8] sm:$0xff]
        %v1657 = vld [vmem:[%s1564 + $0x2e0] sm:$0xff]
        %v1658 = vld [vmem:[%s1564 + $0x2e8] sm:$0xff]
        %v1659 = vld [vmem:[%s1564 + $0x2f0] sm:$0xff]
        %v1660 = vld [vmem:[%s1564 + $0x2f8] sm:$0xff]
        %v1661 = vld [vmem:[%s1564 + $0x300] sm:$0xff]
        %v1662 = vld [vmem:[%s1564 + $0x308] sm:$0xff]
        %v1663 = vld [vmem:[%s1564 + $0x310] sm:$0xff]
        %v1664 = vld [vmem:[%s1564 + $0x318] sm:$0xff]
        %v1665 = vld [vmem:[%s1564 + $0x320] sm:$0xff]
        %v1666 = vld [vmem:[%s1564 + $0x328] sm:$0xff]
        %v1667 = vld [vmem:[%s1564 + $0x330] sm:$0xff]
        %v1668 = vld [vmem:[%s1564 + $0x338] sm:$0xff]
        %v1669 = vld [vmem:[%s1564 + $0x340] sm:$0xff]
        %v1670 = vld [vmem:[%s1564 + $0x348] sm:$0xff]
        %v1671 = vld [vmem:[%s1564 + $0x350] sm:$0xff]
        %v1672 = vld [vmem:[%s1564 + $0x358] sm:$0xff]
        %v1673 = vld [vmem:[%s1564 + $0x360] sm:$0xff]
        %v1674 = vld [vmem:[%s1564 + $0x368] sm:$0xff]
        %v1675 = vld [vmem:[%s1564 + $0x370] sm:$0xff]
        %v1676 = vld [vmem:[%s1564 + $0x378] sm:$0xff]
        %v1677 = vld [vmem:[%s1564 + $0x380] sm:$0xff]
        %v1678 = vld [vmem:[%s1564 + $0x388] sm:$0xff]
        %v1679 = vld [vmem:[%s1564 + $0x390] sm:$0xff]
        %v1680 = vld [vmem:[%s1564 + $0x398] sm:$0xff]
        %v1681 = vld [vmem:[%s1564 + $0x3a0] sm:$0xff]
        %v1682 = vld [vmem:[%s1564 + $0x3a8] sm:$0xff]
        %v1683 = vld [vmem:[%s1564 + $0x3b0] sm:$0xff]
        %v1684 = vld [vmem:[%s1564 + $0x3b8] sm:$0xff]
        %v1685 = vld [vmem:[%s1564 + $0x3c0] sm:$0xff]
        %v1686 = vld [vmem:[%s1564 + $0x3c8] sm:$0xff]
        %v1687 = vld [vmem:[%s1564 + $0x3d0] sm:$0xff]
        %v1688 = vld [vmem:[%s1564 + $0x3d8] sm:$0xff]
        %v1689 = vld [vmem:[%s1564 + $0x3e0] sm:$0xff]
        %v1690 = vld [vmem:[%s1564 + $0x3e8] sm:$0xff]
        %v1691 = vld [vmem:[%s1564 + $0x3f0] sm:$0xff]
        %v1692 = vld [vmem:[%s1564 + $0x3f8] sm:$0xff]
        %v1821 = vunpack.c.l.b16 %v1565
        %v1822 = vunpack.c.h.b16 %v1565
        %v1823 = vunpack.c.l.b16 %v1566
        %v1824 = vunpack.c.h.b16 %v1566
        %v1825 = vunpack.c.l.b16 %v1567
        %v1826 = vunpack.c.h.b16 %v1567
        %v1827 = vunpack.c.l.b16 %v1568
        %v1828 = vunpack.c.h.b16 %v1568
        %v1829 = vunpack.c.l.b16 %v1569
        %v1830 = vunpack.c.h.b16 %v1569
        %v1831 = vunpack.c.l.b16 %v1570
        %v1832 = vunpack.c.h.b16 %v1570
        %v1833 = vunpack.c.l.b16 %v1571
        %v1834 = vunpack.c.h.b16 %v1571
        %v1835 = vunpack.c.l.b16 %v1572
        %v1836 = vunpack.c.h.b16 %v1572
        %v1837 = vunpack.c.l.b16 %v1573
        %v1838 = vunpack.c.h.b16 %v1573
        %v1839 = vunpack.c.l.b16 %v1574
        %v1840 = vunpack.c.h.b16 %v1574
        %v1841 = vunpack.c.l.b16 %v1575
        %v1842 = vunpack.c.h.b16 %v1575
        %v1843 = vunpack.c.l.b16 %v1576
        %v1844 = vunpack.c.h.b16 %v1576
        %v1845 = vunpack.c.l.b16 %v1577
        %v1846 = vunpack.c.h.b16 %v1577
        %v1847 = vunpack.c.l.b16 %v1578
        %v1848 = vunpack.c.h.b16 %v1578
        %v1849 = vunpack.c.l.b16 %v1579
        %v1850 = vunpack.c.h.b16 %v1579
        %v1851 = vunpack.c.l.b16 %v1580
        %v1852 = vunpack.c.h.b16 %v1580
        %v1853 = vunpack.c.l.b16 %v1581
        %v1854 = vunpack.c.h.b16 %v1581
        %v1855 = vunpack.c.l.b16 %v1582
        %v1856 = vunpack.c.h.b16 %v1582
        %v1857 = vunpack.c.l.b16 %v1583
        %v1858 = vunpack.c.h.b16 %v1583
        %v1859 = vunpack.c.l.b16 %v1584
        %v1860 = vunpack.c.h.b16 %v1584
        %v1861 = vunpack.c.l.b16 %v1585
        %v1862 = vunpack.c.h.b16 %v1585
        %v1863 = vunpack.c.l.b16 %v1586
        %v1864 = vunpack.c.h.b16 %v1586
        %v1865 = vunpack.c.l.b16 %v1587
        %v1866 = vunpack.c.h.b16 %v1587
        %v1867 = vunpack.c.l.b16 %v1588
        %v1868 = vunpack.c.h.b16 %v1588
        %v1869 = vunpack.c.l.b16 %v1589
        %v1870 = vunpack.c.h.b16 %v1589
        %v1871 = vunpack.c.l.b16 %v1590
        %v1872 = vunpack.c.h.b16 %v1590
        %v1873 = vunpack.c.l.b16 %v1591
        %v1874 = vunpack.c.h.b16 %v1591
        %v1875 = vunpack.c.l.b16 %v1592
        %v1876 = vunpack.c.h.b16 %v1592
        %v1877 = vunpack.c.l.b16 %v1593
        %v1878 = vunpack.c.h.b16 %v1593
        %v1879 = vunpack.c.l.b16 %v1594
        %v1880 = vunpack.c.h.b16 %v1594
        %v1881 = vunpack.c.l.b16 %v1595
        %v1882 = vunpack.c.h.b16 %v1595
        %v1883 = vunpack.c.l.b16 %v1596
        %v1884 = vunpack.c.h.b16 %v1596
        %v1885 = vunpack.c.l.b16 %v1597
        %v1886 = vunpack.c.h.b16 %v1597
        %v1887 = vunpack.c.l.b16 %v1598
        %v1888 = vunpack.c.h.b16 %v1598
        %v1889 = vunpack.c.l.b16 %v1599
        %v1890 = vunpack.c.h.b16 %v1599
        %v1891 = vunpack.c.l.b16 %v1600
        %v1892 = vunpack.c.h.b16 %v1600
        %v1893 = vunpack.c.l.b16 %v1601
        %v1894 = vunpack.c.h.b16 %v1601
        %v1895 = vunpack.c.l.b16 %v1602
        %v1896 = vunpack.c.h.b16 %v1602
        %v1897 = vunpack.c.l.b16 %v1603
        %v1898 = vunpack.c.h.b16 %v1603
        %v1899 = vunpack.c.l.b16 %v1604
        %v1900 = vunpack.c.h.b16 %v1604
        %v1901 = vunpack.c.l.b16 %v1605
        %v1902 = vunpack.c.h.b16 %v1605
        %v1903 = vunpack.c.l.b16 %v1606
        %v1904 = vunpack.c.h.b16 %v1606
        %v1905 = vunpack.c.l.b16 %v1607
        %v1906 = vunpack.c.h.b16 %v1607
        %v1907 = vunpack.c.l.b16 %v1608
        %v1908 = vunpack.c.h.b16 %v1608
        %v1909 = vunpack.c.l.b16 %v1609
        %v1910 = vunpack.c.h.b16 %v1609
        %v1911 = vunpack.c.l.b16 %v1610
        %v1912 = vunpack.c.h.b16 %v1610
        %v1913 = vunpack.c.l.b16 %v1611
        %v1914 = vunpack.c.h.b16 %v1611
        %v1915 = vunpack.c.l.b16 %v1612
        %v1916 = vunpack.c.h.b16 %v1612
        %v1917 = vunpack.c.l.b16 %v1613
        %v1918 = vunpack.c.h.b16 %v1613
        %v1919 = vunpack.c.l.b16 %v1614
        %v1920 = vunpack.c.h.b16 %v1614
        %v1921 = vunpack.c.l.b16 %v1615
        %v1922 = vunpack.c.h.b16 %v1615
        %v1923 = vunpack.c.l.b16 %v1616
        %v1924 = vunpack.c.h.b16 %v1616
        %v1925 = vunpack.c.l.b16 %v1617
        %v1926 = vunpack.c.h.b16 %v1617
        %v1927 = vunpack.c.l.b16 %v1618
        %v1928 = vunpack.c.h.b16 %v1618
        %v1929 = vunpack.c.l.b16 %v1619
        %v1930 = vunpack.c.h.b16 %v1619
        %v1931 = vunpack.c.l.b16 %v1620
        %v1932 = vunpack.c.h.b16 %v1620
        %v1933 = vunpack.c.l.b16 %v1621
        %v1934 = vunpack.c.h.b16 %v1621
        %v1935 = vunpack.c.l.b16 %v1622
        %v1936 = vunpack.c.h.b16 %v1622
        %v1937 = vunpack.c.l.b16 %v1623
        %v1938 = vunpack.c.h.b16 %v1623
        %v1939 = vunpack.c.l.b16 %v1624
        %v1940 = vunpack.c.h.b16 %v1624
        %v1941 = vunpack.c.l.b16 %v1625
        %v1942 = vunpack.c.h.b16 %v1625
        %v1943 = vunpack.c.l.b16 %v1626
        %v1944 = vunpack.c.h.b16 %v1626
        %v1945 = vunpack.c.l.b16 %v1627
        %v1946 = vunpack.c.h.b16 %v1627
        %v1947 = vunpack.c.l.b16 %v1628
        %v1948 = vunpack.c.h.b16 %v1628
        %v1949 = vunpack.c.l.b16 %v1629
        %v1950 = vunpack.c.h.b16 %v1629
        %v1951 = vunpack.c.l.b16 %v1630
        %v1952 = vunpack.c.h.b16 %v1630
        %v1953 = vunpack.c.l.b16 %v1631
        %v1954 = vunpack.c.h.b16 %v1631
        %v1955 = vunpack.c.l.b16 %v1632
        %v1956 = vunpack.c.h.b16 %v1632
        %v1957 = vunpack.c.l.b16 %v1633
        %v1958 = vunpack.c.h.b16 %v1633
        %v1959 = vunpack.c.l.b16 %v1634
        %v1960 = vunpack.c.h.b16 %v1634
        %v1961 = vunpack.c.l.b16 %v1635
        %v1962 = vunpack.c.h.b16 %v1635
        %v1963 = vunpack.c.l.b16 %v1636
        %v1964 = vunpack.c.h.b16 %v1636
        %v1965 = vunpack.c.l.b16 %v1637
        %v1966 = vunpack.c.h.b16 %v1637
        %v1967 = vunpack.c.l.b16 %v1638
        %v1968 = vunpack.c.h.b16 %v1638
        %v1969 = vunpack.c.l.b16 %v1639
        %v1970 = vunpack.c.h.b16 %v1639
        %v1971 = vunpack.c.l.b16 %v1640
        %v1972 = vunpack.c.h.b16 %v1640
        %v1973 = vunpack.c.l.b16 %v1641
        %v1974 = vunpack.c.h.b16 %v1641
        %v1975 = vunpack.c.l.b16 %v1642
        %v1976 = vunpack.c.h.b16 %v1642
        %v1977 = vunpack.c.l.b16 %v1643
        %v1978 = vunpack.c.h.b16 %v1643
        %v1979 = vunpack.c.l.b16 %v1644
        %v1980 = vunpack.c.h.b16 %v1644
        %v1981 = vunpack.c.l.b16 %v1645
        %v1982 = vunpack.c.h.b16 %v1645
        %v1983 = vunpack.c.l.b16 %v1646
        %v1984 = vunpack.c.h.b16 %v1646
        %v1985 = vunpack.c.l.b16 %v1647
        %v1986 = vunpack.c.h.b16 %v1647
        %v1987 = vunpack.c.l.b16 %v1648
        %v1988 = vunpack.c.h.b16 %v1648
        %v1989 = vunpack.c.l.b16 %v1649
        %v1990 = vunpack.c.h.b16 %v1649
        %v1991 = vunpack.c.l.b16 %v1650
        %v1992 = vunpack.c.h.b16 %v1650
        %v1993 = vunpack.c.l.b16 %v1651
        %v1994 = vunpack.c.h.b16 %v1651
        %v1995 = vunpack.c.l.b16 %v1652
        %v1996 = vunpack.c.h.b16 %v1652
        %v1997 = vunpack.c.l.b16 %v1653
        %v1998 = vunpack.c.h.b16 %v1653
        %v1999 = vunpack.c.l.b16 %v1654
        %v2000 = vunpack.c.h.b16 %v1654
        %v2001 = vunpack.c.l.b16 %v1655
        %v2002 = vunpack.c.h.b16 %v1655
        %v2003 = vunpack.c.l.b16 %v1656
        %v2004 = vunpack.c.h.b16 %v1656
        %v2005 = vunpack.c.l.b16 %v1657
        %v2006 = vunpack.c.h.b16 %v1657
        %v2007 = vunpack.c.l.b16 %v1658
        %v2008 = vunpack.c.h.b16 %v1658
        %v2009 = vunpack.c.l.b16 %v1659
        %v2010 = vunpack.c.h.b16 %v1659
        %v2011 = vunpack.c.l.b16 %v1660
        %v2012 = vunpack.c.h.b16 %v1660
        %v2013 = vunpack.c.l.b16 %v1661
        %v2014 = vunpack.c.h.b16 %v1661
        %v2015 = vunpack.c.l.b16 %v1662
        %v2016 = vunpack.c.h.b16 %v1662
        %v2017 = vunpack.c.l.b16 %v1663
        %v2018 = vunpack.c.h.b16 %v1663
        %v2019 = vunpack.c.l.b16 %v1664
        %v2020 = vunpack.c.h.b16 %v1664
        %v2021 = vunpack.c.l.b16 %v1665
        %v2022 = vunpack.c.h.b16 %v1665
        %v2023 = vunpack.c.l.b16 %v1666
        %v2024 = vunpack.c.h.b16 %v1666
        %v2025 = vunpack.c.l.b16 %v1667
        %v2026 = vunpack.c.h.b16 %v1667
        %v2027 = vunpack.c.l.b16 %v1668
        %v2028 = vunpack.c.h.b16 %v1668
        %v2029 = vunpack.c.l.b16 %v1669
        %v2030 = vunpack.c.h.b16 %v1669
        %v2031 = vunpack.c.l.b16 %v1670
        %v2032 = vunpack.c.h.b16 %v1670
        %v2033 = vunpack.c.l.b16 %v1671
        %v2034 = vunpack.c.h.b16 %v1671
        %v2035 = vunpack.c.l.b16 %v1672
        %v2036 = vunpack.c.h.b16 %v1672
        %v2037 = vunpack.c.l.b16 %v1673
        %v2038 = vunpack.c.h.b16 %v1673
        %v2039 = vunpack.c.l.b16 %v1674
        %v2040 = vunpack.c.h.b16 %v1674
        %v2041 = vunpack.c.l.b16 %v1675
        %v2042 = vunpack.c.h.b16 %v1675
        %v2043 = vunpack.c.l.b16 %v1676
        %v2044 = vunpack.c.h.b16 %v1676
        %v2045 = vunpack.c.l.b16 %v1677
        %v2046 = vunpack.c.h.b16 %v1677
        %v2047 = vunpack.c.l.b16 %v1678
        %v2048 = vunpack.c.h.b16 %v1678
        %v2049 = vunpack.c.l.b16 %v1679
        %v2050 = vunpack.c.h.b16 %v1679
        %v2051 = vunpack.c.l.b16 %v1680
        %v2052 = vunpack.c.h.b16 %v1680
        %v2053 = vunpack.c.l.b16 %v1681
        %v2054 = vunpack.c.h.b16 %v1681
        %v2055 = vunpack.c.l.b16 %v1682
        %v2056 = vunpack.c.h.b16 %v1682
        %v2057 = vunpack.c.l.b16 %v1683
        %v2058 = vunpack.c.h.b16 %v1683
        %v2059 = vunpack.c.l.b16 %v1684
        %v2060 = vunpack.c.h.b16 %v1684
        %v2061 = vunpack.c.l.b16 %v1685
        %v2062 = vunpack.c.h.b16 %v1685
        %v2063 = vunpack.c.l.b16 %v1686
        %v2064 = vunpack.c.h.b16 %v1686
        %v2065 = vunpack.c.l.b16 %v1687
        %v2066 = vunpack.c.h.b16 %v1687
        %v2067 = vunpack.c.l.b16 %v1688
        %v2068 = vunpack.c.h.b16 %v1688
        %v2069 = vunpack.c.l.b16 %v1689
        %v2070 = vunpack.c.h.b16 %v1689
        %v2071 = vunpack.c.l.b16 %v1690
        %v2072 = vunpack.c.h.b16 %v1690
        %v2073 = vunpack.c.l.b16 %v1691
        %v2074 = vunpack.c.h.b16 %v1691
        %v2075 = vunpack.c.l.b16 %v1692
        %v2076 = vunpack.c.h.b16 %v1692
        %v2077 = vpack.c.b16 %v1825, %v1821
        %v2078 = vpack.c.b16 %v1826, %v1822
        %v2079 = vpack.c.b16 %v1827, %v1823
        %v2080 = vpack.c.b16 %v1828, %v1824
        %v2081 = vpack.c.b16 %v1833, %v1829
        %v2082 = vpack.c.b16 %v1834, %v1830
        %v2083 = vpack.c.b16 %v1835, %v1831
        %v2084 = vpack.c.b16 %v1836, %v1832
        %v2085 = vpack.c.b16 %v1841, %v1837
        %v2086 = vpack.c.b16 %v1842, %v1838
        %v2087 = vpack.c.b16 %v1843, %v1839
        %v2088 = vpack.c.b16 %v1844, %v1840
        %v2089 = vpack.c.b16 %v1849, %v1845
        %v2090 = vpack.c.b16 %v1850, %v1846
        %v2091 = vpack.c.b16 %v1851, %v1847
        %v2092 = vpack.c.b16 %v1852, %v1848
        %v2093 = vpack.c.b16 %v1857, %v1853
        %v2094 = vpack.c.b16 %v1858, %v1854
        %v2095 = vpack.c.b16 %v1859, %v1855
        %v2096 = vpack.c.b16 %v1860, %v1856
        %v2097 = vpack.c.b16 %v1865, %v1861
        %v2098 = vpack.c.b16 %v1866, %v1862
        %v2099 = vpack.c.b16 %v1867, %v1863
        %v2100 = vpack.c.b16 %v1868, %v1864
        %v2101 = vpack.c.b16 %v1873, %v1869
        %v2102 = vpack.c.b16 %v1874, %v1870
        %v2103 = vpack.c.b16 %v1875, %v1871
        %v2104 = vpack.c.b16 %v1876, %v1872
        %v2105 = vpack.c.b16 %v1881, %v1877
        %v2106 = vpack.c.b16 %v1882, %v1878
        %v2107 = vpack.c.b16 %v1883, %v1879
        %v2108 = vpack.c.b16 %v1884, %v1880
        %v2109 = vpack.c.b16 %v1889, %v1885
        %v2110 = vpack.c.b16 %v1890, %v1886
        %v2111 = vpack.c.b16 %v1891, %v1887
        %v2112 = vpack.c.b16 %v1892, %v1888
        %v2113 = vpack.c.b16 %v1897, %v1893
        %v2114 = vpack.c.b16 %v1898, %v1894
        %v2115 = vpack.c.b16 %v1899, %v1895
        %v2116 = vpack.c.b16 %v1900, %v1896
        %v2117 = vpack.c.b16 %v1905, %v1901
        %v2118 = vpack.c.b16 %v1906, %v1902
        %v2119 = vpack.c.b16 %v1907, %v1903
        %v2120 = vpack.c.b16 %v1908, %v1904
        %v2121 = vpack.c.b16 %v1913, %v1909
        %v2122 = vpack.c.b16 %v1914, %v1910
        %v2123 = vpack.c.b16 %v1915, %v1911
        %v2124 = vpack.c.b16 %v1916, %v1912
        %v2125 = vpack.c.b16 %v1921, %v1917
        %v2126 = vpack.c.b16 %v1922, %v1918
        %v2127 = vpack.c.b16 %v1923, %v1919
        %v2128 = vpack.c.b16 %v1924, %v1920
        %v2129 = vpack.c.b16 %v1929, %v1925
        %v2130 = vpack.c.b16 %v1930, %v1926
        %v2131 = vpack.c.b16 %v1931, %v1927
        %v2132 = vpack.c.b16 %v1932, %v1928
        %v2133 = vpack.c.b16 %v1937, %v1933
        %v2134 = vpack.c.b16 %v1938, %v1934
        %v2135 = vpack.c.b16 %v1939, %v1935
        %v2136 = vpack.c.b16 %v1940, %v1936
        %v2137 = vpack.c.b16 %v1945, %v1941
        %v2138 = vpack.c.b16 %v1946, %v1942
        %v2139 = vpack.c.b16 %v1947, %v1943
        %v2140 = vpack.c.b16 %v1948, %v1944
        %v2141 = vpack.c.b16 %v1953, %v1949
        %v2142 = vpack.c.b16 %v1954, %v1950
        %v2143 = vpack.c.b16 %v1955, %v1951
        %v2144 = vpack.c.b16 %v1956, %v1952
        %v2145 = vpack.c.b16 %v1961, %v1957
        %v2146 = vpack.c.b16 %v1962, %v1958
        %v2147 = vpack.c.b16 %v1963, %v1959
        %v2148 = vpack.c.b16 %v1964, %v1960
        %v2149 = vpack.c.b16 %v1969, %v1965
        %v2150 = vpack.c.b16 %v1970, %v1966
        %v2151 = vpack.c.b16 %v1971, %v1967
        %v2152 = vpack.c.b16 %v1972, %v1968
        %v2153 = vpack.c.b16 %v1977, %v1973
        %v2154 = vpack.c.b16 %v1978, %v1974
        %v2155 = vpack.c.b16 %v1979, %v1975
        %v2156 = vpack.c.b16 %v1980, %v1976
        %v2157 = vpack.c.b16 %v1985, %v1981
        %v2158 = vpack.c.b16 %v1986, %v1982
        %v2159 = vpack.c.b16 %v1987, %v1983
        %v2160 = vpack.c.b16 %v1988, %v1984
        %v2161 = vpack.c.b16 %v1993, %v1989
        %v2162 = vpack.c.b16 %v1994, %v1990
        %v2163 = vpack.c.b16 %v1995, %v1991
        %v2164 = vpack.c.b16 %v1996, %v1992
        %v2165 = vpack.c.b16 %v2001, %v1997
        %v2166 = vpack.c.b16 %v2002, %v1998
        %v2167 = vpack.c.b16 %v2003, %v1999
        %v2168 = vpack.c.b16 %v2004, %v2000
        %v2169 = vpack.c.b16 %v2009, %v2005
        %v2170 = vpack.c.b16 %v2010, %v2006
        %v2171 = vpack.c.b16 %v2011, %v2007
        %v2172 = vpack.c.b16 %v2012, %v2008
        %v2173 = vpack.c.b16 %v2017, %v2013
        %v2174 = vpack.c.b16 %v2018, %v2014
        %v2175 = vpack.c.b16 %v2019, %v2015
        %v2176 = vpack.c.b16 %v2020, %v2016
        %v2177 = vpack.c.b16 %v2025, %v2021
        %v2178 = vpack.c.b16 %v2026, %v2022
        %v2179 = vpack.c.b16 %v2027, %v2023
        %v2180 = vpack.c.b16 %v2028, %v2024
        %v2181 = vpack.c.b16 %v2033, %v2029
        %v2182 = vpack.c.b16 %v2034, %v2030
        %v2183 = vpack.c.b16 %v2035, %v2031
        %v2184 = vpack.c.b16 %v2036, %v2032
        %v2185 = vpack.c.b16 %v2041, %v2037
        %v2186 = vpack.c.b16 %v2042, %v2038
        %v2187 = vpack.c.b16 %v2043, %v2039
        %v2188 = vpack.c.b16 %v2044, %v2040
        %v2189 = vpack.c.b16 %v2049, %v2045
        %v2190 = vpack.c.b16 %v2050, %v2046
        %v2191 = vpack.c.b16 %v2051, %v2047
        %v2192 = vpack.c.b16 %v2052, %v2048
        %v2193 = vpack.c.b16 %v2057, %v2053
        %v2194 = vpack.c.b16 %v2058, %v2054
        %v2195 = vpack.c.b16 %v2059, %v2055
        %v2196 = vpack.c.b16 %v2060, %v2056
        %v2197 = vpack.c.b16 %v2065, %v2061
        %v2198 = vpack.c.b16 %v2066, %v2062
        %v2199 = vpack.c.b16 %v2067, %v2063
        %v2200 = vpack.c.b16 %v2068, %v2064
        %v2201 = vpack.c.b16 %v2073, %v2069
        %v2202 = vpack.c.b16 %v2074, %v2070
        %v2203 = vpack.c.b16 %v2075, %v2071
        %v2204 = vpack.c.b16 %v2076, %v2072
        %2333 = vmatprep.subr.bf16.mxu0 %v2078
        %2334 = vmatpush1.bf16.msra.mxu0 %v2077
        %2335 = vmatprep.subr.bf16.mxu0 %v2082
        %2336 = vmatpush1.bf16.msra.mxu0 %v2081
        %2337 = vmatprep.subr.bf16.mxu0 %v2086
        %2338 = vmatpush1.bf16.msra.mxu0 %v2085
        %2339 = vmatprep.subr.bf16.mxu0 %v2090
        %2340 = vmatpush1.bf16.msra.mxu0 %v2089
        %2341 = vmatprep.subr.bf16.mxu0 %v2094
        %2342 = vmatpush1.bf16.msra.mxu0 %v2093
        %2343 = vmatprep.subr.bf16.mxu0 %v2098
        %2344 = vmatpush1.bf16.msra.mxu0 %v2097
        %2345 = vmatprep.subr.bf16.mxu0 %v2102
        %2346 = vmatpush1.bf16.msra.mxu0 %v2101
        %2347 = vmatprep.subr.bf16.mxu0 %v2106
        %2348 = vmatpush1.bf16.msra.mxu0 %v2105
        %2349 = vmatprep.subr.bf16.mxu0 %v2110
        %2350 = vmatpush1.bf16.msra.mxu0 %v2109
        %2351 = vmatprep.subr.bf16.mxu0 %v2114
        %2352 = vmatpush1.bf16.msra.mxu0 %v2113
        %2353 = vmatprep.subr.bf16.mxu0 %v2118
        %2354 = vmatpush1.bf16.msra.mxu0 %v2117
        %2355 = vmatprep.subr.bf16.mxu0 %v2122
        %2356 = vmatpush1.bf16.msra.mxu0 %v2121
        %2357 = vmatprep.subr.bf16.mxu0 %v2126
        %2358 = vmatpush1.bf16.msra.mxu0 %v2125
        %2359 = vmatprep.subr.bf16.mxu0 %v2130
        %2360 = vmatpush1.bf16.msra.mxu0 %v2129
        %2361 = vmatprep.subr.bf16.mxu0 %v2134
        %2362 = vmatpush1.bf16.msra.mxu0 %v2133
        %2363 = vmatprep.subr.bf16.mxu0 %v2138
        %2364 = vmatpush1.bf16.msra.mxu0 %v2137
        %2365 = vmatprep.mubr.bf16.mxu0 %v1561
        %2366 = vmatmul.mubr.bf16.gmra.mrb[0].mxu0 %v1560
        %v2367 = vpop.f32.mrb[0].mxu0
        %v2368 = vadd.f32 0.0, %v2367
        %v2369 = vpop.f32.mrb[0].mxu0
        %v2370 = vadd.f32 0.0, %v2369
        %v2371 = vpop.f32.mrb[0].mxu0
        %v2372 = vadd.f32 0.0, %v2371
        %v2373 = vpop.f32.mrb[0].mxu0
        %v2374 = vadd.f32 0.0, %v2373
        %2375 = vdwg.mxu0
        %2376 = vmatprep.subr.bf16.mxu0 %v2142
        %2377 = vmatpush1.bf16.msra.mxu0 %v2141
        %2378 = vmatprep.subr.bf16.mxu0 %v2146
        %2379 = vmatpush1.bf16.msra.mxu0 %v2145
        %2380 = vmatprep.subr.bf16.mxu0 %v2150
        %2381 = vmatpush1.bf16.msra.mxu0 %v2149
        %2382 = vmatprep.subr.bf16.mxu0 %v2154
        %2383 = vmatpush1.bf16.msra.mxu0 %v2153
        %2384 = vmatprep.subr.bf16.mxu0 %v2158
        %2385 = vmatpush1.bf16.msra.mxu0 %v2157
        %2386 = vmatprep.subr.bf16.mxu0 %v2162
        %2387 = vmatpush1.bf16.msra.mxu0 %v2161
        %2388 = vmatprep.subr.bf16.mxu0 %v2166
        %2389 = vmatpush1.bf16.msra.mxu0 %v2165
        %2390 = vmatprep.subr.bf16.mxu0 %v2170
        %2391 = vmatpush1.bf16.msra.mxu0 %v2169
        %2392 = vmatprep.subr.bf16.mxu0 %v2174
        %2393 = vmatpush1.bf16.msra.mxu0 %v2173
        %2394 = vmatprep.subr.bf16.mxu0 %v2178
        %2395 = vmatpush1.bf16.msra.mxu0 %v2177
        %2396 = vmatprep.subr.bf16.mxu0 %v2182
        %2397 = vmatpush1.bf16.msra.mxu0 %v2181
        %2398 = vmatprep.subr.bf16.mxu0 %v2186
        %2399 = vmatpush1.bf16.msra.mxu0 %v2185
        %2400 = vmatprep.subr.bf16.mxu0 %v2190
        %2401 = vmatpush1.bf16.msra.mxu0 %v2189
        %2402 = vmatprep.subr.bf16.mxu0 %v2194
        %2403 = vmatpush1.bf16.msra.mxu0 %v2193
        %2404 = vmatprep.subr.bf16.mxu0 %v2198
        %2405 = vmatpush1.bf16.msra.mxu0 %v2197
        %2406 = vmatprep.subr.bf16.mxu0 %v2202
        %2407 = vmatpush1.bf16.msra.mxu0 %v2201
        %2408 = vmatprep.mubr.bf16.mxu0 %v1563
        %2409 = vmatmul.mubr.bf16.gmra.mrb[0].mxu0 %v1562
        %v2410 = vpop.f32.mrb[0].mxu0
        %v2411 = vadd.f32 %v2368, %v2410
        %v2412 = vpop.f32.mrb[0].mxu0
        %v2413 = vadd.f32 %v2370, %v2412
        %v2414 = vpop.f32.mrb[0].mxu0
        %v2415 = vadd.f32 %v2372, %v2414
        %v2416 = vpop.f32.mrb[0].mxu0
        %v2417 = vadd.f32 %v2374, %v2416
        %2418 = vdwg.mxu0
        %2419 = vmatprep.subr.bf16.mxu0 %v2080
        %2420 = vmatpush1.bf16.msra.mxu0 %v2079
        %2421 = vmatprep.subr.bf16.mxu0 %v2084
        %2422 = vmatpush1.bf16.msra.mxu0 %v2083
        %2423 = vmatprep.subr.bf16.mxu0 %v2088
        %2424 = vmatpush1.bf16.msra.mxu0 %v2087
        %2425 = vmatprep.subr.bf16.mxu0 %v2092
        %2426 = vmatpush1.bf16.msra.mxu0 %v2091
        %2427 = vmatprep.subr.bf16.mxu0 %v2096
        %2428 = vmatpush1.bf16.msra.mxu0 %v2095
        %2429 = vmatprep.subr.bf16.mxu0 %v2100
        %2430 = vmatpush1.bf16.msra.mxu0 %v2099
        %2431 = vmatprep.subr.bf16.mxu0 %v2104
        %2432 = vmatpush1.bf16.msra.mxu0 %v2103
        %2433 = vmatprep.subr.bf16.mxu0 %v2108
        %2434 = vmatpush1.bf16.msra.mxu0 %v2107
        %2435 = vmatprep.subr.bf16.mxu0 %v2112
        %2436 = vmatpush1.bf16.msra.mxu0 %v2111
        %2437 = vmatprep.subr.bf16.mxu0 %v2116
        %2438 = vmatpush1.bf16.msra.mxu0 %v2115
        %2439 = vmatprep.subr.bf16.mxu0 %v2120
        %2440 = vmatpush1.bf16.msra.mxu0 %v2119
        %2441 = vmatprep.subr.bf16.mxu0 %v2124
        %2442 = vmatpush1.bf16.msra.mxu0 %v2123
        %2443 = vmatprep.subr.bf16.mxu0 %v2128
        %2444 = vmatpush1.bf16.msra.mxu0 %v2127
        %2445 = vmatprep.subr.bf16.mxu0 %v2132
        %2446 = vmatpush1.bf16.msra.mxu0 %v2131
        %2447 = vmatprep.subr.bf16.mxu0 %v2136
        %2448 = vmatpush1.bf16.msra.mxu0 %v2135
        %2449 = vmatprep.subr.bf16.mxu0 %v2140
        %2450 = vmatpush1.bf16.msra.mxu0 %v2139
        %2451 = vmatprep.mubr.bf16.mxu0 %v1561
        %2452 = vmatmul.mubr.bf16.gmra.mrb[0].mxu0 %v1560
        %v2453 = vpop.f32.mrb[0].mxu0
        %v2454 = vadd.f32 0.0, %v2453
        %v2455 = vpop.f32.mrb[0].mxu0
        %v2456 = vadd.f32 0.0, %v2455
        %v2457 = vpop.f32.mrb[0].mxu0
        %v2458 = vadd.f32 0.0, %v2457
        %v2459 = vpop.f32.mrb[0].mxu0
        %v2460 = vadd.f32 0.0, %v2459
        %2461 = vdwg.mxu0
        %2462 = vmatprep.subr.bf16.mxu0 %v2144
        %2463 = vmatpush1.bf16.msra.mxu0 %v2143
        %2464 = vmatprep.subr.bf16.mxu0 %v2148
        %2465 = vmatpush1.bf16.msra.mxu0 %v2147
        %2466 = vmatprep.subr.bf16.mxu0 %v2152
        %2467 = vmatpush1.bf16.msra.mxu0 %v2151
        %2468 = vmatprep.subr.bf16.mxu0 %v2156
        %2469 = vmatpush1.bf16.msra.mxu0 %v2155
        %2470 = vmatprep.subr.bf16.mxu0 %v2160
        %2471 = vmatpush1.bf16.msra.mxu0 %v2159
        %2472 = vmatprep.subr.bf16.mxu0 %v2164
        %2473 = vmatpush1.bf16.msra.mxu0 %v2163
        %2474 = vmatprep.subr.bf16.mxu0 %v2168
        %2475 = vmatpush1.bf16.msra.mxu0 %v2167
        %2476 = vmatprep.subr.bf16.mxu0 %v2172
        %2477 = vmatpush1.bf16.msra.mxu0 %v2171
        %2478 = vmatprep.subr.bf16.mxu0 %v2176
        %2479 = vmatpush1.bf16.msra.mxu0 %v2175
        %2480 = vmatprep.subr.bf16.mxu0 %v2180
        %2481 = vmatpush1.bf16.msra.mxu0 %v2179
        %2482 = vmatprep.subr.bf16.mxu0 %v2184
        %2483 = vmatpush1.bf16.msra.mxu0 %v2183
        %2484 = vmatprep.subr.bf16.mxu0 %v2188
        %2485 = vmatpush1.bf16.msra.mxu0 %v2187
        %2486 = vmatprep.subr.bf16.mxu0 %v2192
        %2487 = vmatpush1.bf16.msra.mxu0 %v2191
        %2488 = vmatprep.subr.bf16.mxu0 %v2196
        %2489 = vmatpush1.bf16.msra.mxu0 %v2195
        %2490 = vmatprep.subr.bf16.mxu0 %v2200
        %2491 = vmatpush1.bf16.msra.mxu0 %v2199
        %2492 = vmatprep.subr.bf16.mxu0 %v2204
        %2493 = vmatpush1.bf16.msra.mxu0 %v2203
        %2494 = vmatprep.mubr.bf16.mxu0 %v1563
        %2495 = vmatmul.mubr.bf16.gmra.mrb[0].mxu0 %v1562
        %v2496 = vpop.f32.mrb[0].mxu0
        %v2497 = vadd.f32 %v2454, %v2496
        %v2498 = vpop.f32.mrb[0].mxu0
        %v2499 = vadd.f32 %v2456, %v2498
        %v2500 = vpop.f32.mrb[0].mxu0
        %v2501 = vadd.f32 %v2458, %v2500
        %v2502 = vpop.f32.mrb[0].mxu0
        %v2503 = vadd.f32 %v2460, %v2502
        %2504 = vdwg.mxu0
        %v2505 = vpack.c.bf16 %v2415, %v2411
        %v2506 = vpack.c.bf16 %v2417, %v2413
        %v2507 = vpack.c.bf16 %v2501, %v2497
        %v2508 = vpack.c.bf16 %v2503, %v2499
        %s2509 = scalar_lea.vmem %s4, 4
        %v2510 = vld [vmem:[%s2509] sm:$0xf]
        %v2513 = vunpack.c.l.s4 1966171168
        %v2514 = vunpack.c.0.s8 %v2513
        %v2515 = vlaneseq
        %v2516 = vshrl.u32 %v2515, 7
        %v2517 = vsub.s32 %v2514, %v2516
        %v2518 = vrot.slane %v2510, %v2517
        %v2519 = vcombine.high %v2518, %v2518
        %v2521 = vunpack.c.l.s4 1966171168
        %v2522 = vunpack.c.0.s8 %v2521
        %v2523 = vlaneseq
        %v2524 = vshrl.u32 %v2523, 7
        %v2525 = vsub.s32 %v2522, %v2524
        %v2526 = vrot.slane %v2518, %v2525
        %v2528 = vunpack.c.l.s4 1966171168
        %v2529 = vunpack.c.0.s8 %v2528
        %v2530 = vlaneseq
        %v2531 = vshrl.u32 %v2530, 7
        %v2532 = vsub.s32 %v2529, %v2531
        %v2533 = vrot.slane %v2519, %v2532
        %v2534 = vcombine.high %v2526, %v2526
        %v2535 = vcombine.high %v2533, %v2533
        %v2537 = vpack.i.b16 %v2526, %v2526
        %v2539 = vlaneseq
        %v2540 = vshrl.u32 %v2539, 7
        %v2541 = vsub.s32 0, %v2540
        %v2542 = vrot.slane %v2537, %v2541
        %v2544 = vpack.i.b16 %v2533, %v2533
        %v2546 = vlaneseq
        %v2547 = vshrl.u32 %v2546, 7
        %v2548 = vsub.s32 0, %v2547
        %v2549 = vrot.slane %v2544, %v2548
        %v2551 = vpack.i.b16 %v2534, %v2534
        %v2553 = vlaneseq
        %v2554 = vshrl.u32 %v2553, 7
        %v2555 = vsub.s32 0, %v2554
        %v2556 = vrot.slane %v2551, %v2555
        %v2558 = vpack.i.b16 %v2535, %v2535
        %v2560 = vlaneseq
        %v2561 = vshrl.u32 %v2560, 7
        %v2562 = vsub.s32 0, %v2561
        %v2563 = vrot.slane %v2558, %v2562
        %v2564 = vadd.bf16 %v2505, %v2542
        %v2565 = vadd.bf16 %v2506, %v2549
        %v2566 = vadd.bf16 %v2507, %v2556
        %v2567 = vadd.bf16 %v2508, %v2563
        %v2568 = vmax.bf16 %v2564, 0
        %v2569 = vmax.bf16 %v2565, 0
        %v2570 = vmax.bf16 %v2566, 0
        %v2571 = vmax.bf16 %v2567, 0
        %s2572 = scalar_lea.vmem [#allocation7], 2048
        %v2573 = vld [vmem:[%s2572] sm:$0xff]
        %v2574 = vld [vmem:[%s2572 + $0x8] sm:$0xff]
        %v2575 = vld [vmem:[%s2572 + $0x10] sm:$0xff]
        %v2576 = vld [vmem:[%s2572 + $0x18] sm:$0xff]
        %v2577 = vld [vmem:[%s2572 + $0x20] sm:$0xff]
        %v2578 = vld [vmem:[%s2572 + $0x28] sm:$0xff]
        %v2579 = vld [vmem:[%s2572 + $0x30] sm:$0xff]
        %v2580 = vld [vmem:[%s2572 + $0x38] sm:$0xff]
        %v2581 = vld [vmem:[%s2572 + $0x40] sm:$0xff]
        %v2582 = vld [vmem:[%s2572 + $0x48] sm:$0xff]
        %v2583 = vld [vmem:[%s2572 + $0x50] sm:$0xff]
        %v2584 = vld [vmem:[%s2572 + $0x58] sm:$0xff]
        %v2585 = vld [vmem:[%s2572 + $0x60] sm:$0xff]
        %v2586 = vld [vmem:[%s2572 + $0x68] sm:$0xff]
        %v2587 = vld [vmem:[%s2572 + $0x70] sm:$0xff]
        %v2588 = vld [vmem:[%s2572 + $0x78] sm:$0xff]
        %v2589 = vld [vmem:[%s2572 + $0x80] sm:$0xff]
        %v2590 = vld [vmem:[%s2572 + $0x88] sm:$0xff]
        %v2591 = vld [vmem:[%s2572 + $0x90] sm:$0xff]
        %v2592 = vld [vmem:[%s2572 + $0x98] sm:$0xff]
        %v2593 = vld [vmem:[%s2572 + $0xa0] sm:$0xff]
        %v2594 = vld [vmem:[%s2572 + $0xa8] sm:$0xff]
        %v2595 = vld [vmem:[%s2572 + $0xb0] sm:$0xff]
        %v2596 = vld [vmem:[%s2572 + $0xb8] sm:$0xff]
        %v2597 = vld [vmem:[%s2572 + $0xc0] sm:$0xff]
        %v2598 = vld [vmem:[%s2572 + $0xc8] sm:$0xff]
        %v2599 = vld [vmem:[%s2572 + $0xd0] sm:$0xff]
        %v2600 = vld [vmem:[%s2572 + $0xd8] sm:$0xff]
        %v2601 = vld [vmem:[%s2572 + $0xe0] sm:$0xff]
        %v2602 = vld [vmem:[%s2572 + $0xe8] sm:$0xff]
        %v2603 = vld [vmem:[%s2572 + $0xf0] sm:$0xff]
        %v2604 = vld [vmem:[%s2572 + $0xf8] sm:$0xff]
        %v2605 = vld [vmem:[%s2572 + $0x100] sm:$0xff]
        %v2606 = vld [vmem:[%s2572 + $0x108] sm:$0xff]
        %v2607 = vld [vmem:[%s2572 + $0x110] sm:$0xff]
        %v2608 = vld [vmem:[%s2572 + $0x118] sm:$0xff]
        %v2609 = vld [vmem:[%s2572 + $0x120] sm:$0xff]
        %v2610 = vld [vmem:[%s2572 + $0x128] sm:$0xff]
        %v2611 = vld [vmem:[%s2572 + $0x130] sm:$0xff]
        %v2612 = vld [vmem:[%s2572 + $0x138] sm:$0xff]
        %v2613 = vld [vmem:[%s2572 + $0x140] sm:$0xff]
        %v2614 = vld [vmem:[%s2572 + $0x148] sm:$0xff]
        %v2615 = vld [vmem:[%s2572 + $0x150] sm:$0xff]
        %v2616 = vld [vmem:[%s2572 + $0x158] sm:$0xff]
        %v2617 = vld [vmem:[%s2572 + $0x160] sm:$0xff]
        %v2618 = vld [vmem:[%s2572 + $0x168] sm:$0xff]
        %v2619 = vld [vmem:[%s2572 + $0x170] sm:$0xff]
        %v2620 = vld [vmem:[%s2572 + $0x178] sm:$0xff]
        %v2621 = vld [vmem:[%s2572 + $0x180] sm:$0xff]
        %v2622 = vld [vmem:[%s2572 + $0x188] sm:$0xff]
        %v2623 = vld [vmem:[%s2572 + $0x190] sm:$0xff]
        %v2624 = vld [vmem:[%s2572 + $0x198] sm:$0xff]
        %v2625 = vld [vmem:[%s2572 + $0x1a0] sm:$0xff]
        %v2626 = vld [vmem:[%s2572 + $0x1a8] sm:$0xff]
        %v2627 = vld [vmem:[%s2572 + $0x1b0] sm:$0xff]
        %v2628 = vld [vmem:[%s2572 + $0x1b8] sm:$0xff]
        %v2629 = vld [vmem:[%s2572 + $0x1c0] sm:$0xff]
        %v2630 = vld [vmem:[%s2572 + $0x1c8] sm:$0xff]
        %v2631 = vld [vmem:[%s2572 + $0x1d0] sm:$0xff]
        %v2632 = vld [vmem:[%s2572 + $0x1d8] sm:$0xff]
        %v2633 = vld [vmem:[%s2572 + $0x1e0] sm:$0xff]
        %v2634 = vld [vmem:[%s2572 + $0x1e8] sm:$0xff]
        %v2635 = vld [vmem:[%s2572 + $0x1f0] sm:$0xff]
        %v2636 = vld [vmem:[%s2572 + $0x1f8] sm:$0xff]
        %v2637 = vld [vmem:[%s2572 + $0x200] sm:$0xff]
        %v2638 = vld [vmem:[%s2572 + $0x208] sm:$0xff]
        %v2639 = vld [vmem:[%s2572 + $0x210] sm:$0xff]
        %v2640 = vld [vmem:[%s2572 + $0x218] sm:$0xff]
        %v2641 = vld [vmem:[%s2572 + $0x220] sm:$0xff]
        %v2642 = vld [vmem:[%s2572 + $0x228] sm:$0xff]
        %v2643 = vld [vmem:[%s2572 + $0x230] sm:$0xff]
        %v2644 = vld [vmem:[%s2572 + $0x238] sm:$0xff]
        %v2645 = vld [vmem:[%s2572 + $0x240] sm:$0xff]
        %v2646 = vld [vmem:[%s2572 + $0x248] sm:$0xff]
        %v2647 = vld [vmem:[%s2572 + $0x250] sm:$0xff]
        %v2648 = vld [vmem:[%s2572 + $0x258] sm:$0xff]
        %v2649 = vld [vmem:[%s2572 + $0x260] sm:$0xff]
        %v2650 = vld [vmem:[%s2572 + $0x268] sm:$0xff]
        %v2651 = vld [vmem:[%s2572 + $0x270] sm:$0xff]
        %v2652 = vld [vmem:[%s2572 + $0x278] sm:$0xff]
        %v2653 = vld [vmem:[%s2572 + $0x280] sm:$0xff]
        %v2654 = vld [vmem:[%s2572 + $0x288] sm:$0xff]
        %v2655 = vld [vmem:[%s2572 + $0x290] sm:$0xff]
        %v2656 = vld [vmem:[%s2572 + $0x298] sm:$0xff]
        %v2657 = vld [vmem:[%s2572 + $0x2a0] sm:$0xff]
        %v2658 = vld [vmem:[%s2572 + $0x2a8] sm:$0xff]
        %v2659 = vld [vmem:[%s2572 + $0x2b0] sm:$0xff]
        %v2660 = vld [vmem:[%s2572 + $0x2b8] sm:$0xff]
        %v2661 = vld [vmem:[%s2572 + $0x2c0] sm:$0xff]
        %v2662 = vld [vmem:[%s2572 + $0x2c8] sm:$0xff]
        %v2663 = vld [vmem:[%s2572 + $0x2d0] sm:$0xff]
        %v2664 = vld [vmem:[%s2572 + $0x2d8] sm:$0xff]
        %v2665 = vld [vmem:[%s2572 + $0x2e0] sm:$0xff]
        %v2666 = vld [vmem:[%s2572 + $0x2e8] sm:$0xff]
        %v2667 = vld [vmem:[%s2572 + $0x2f0] sm:$0xff]
        %v2668 = vld [vmem:[%s2572 + $0x2f8] sm:$0xff]
        %v2669 = vld [vmem:[%s2572 + $0x300] sm:$0xff]
        %v2670 = vld [vmem:[%s2572 + $0x308] sm:$0xff]
        %v2671 = vld [vmem:[%s2572 + $0x310] sm:$0xff]
        %v2672 = vld [vmem:[%s2572 + $0x318] sm:$0xff]
        %v2673 = vld [vmem:[%s2572 + $0x320] sm:$0xff]
        %v2674 = vld [vmem:[%s2572 + $0x328] sm:$0xff]
        %v2675 = vld [vmem:[%s2572 + $0x330] sm:$0xff]
        %v2676 = vld [vmem:[%s2572 + $0x338] sm:$0xff]
        %v2677 = vld [vmem:[%s2572 + $0x340] sm:$0xff]
        %v2678 = vld [vmem:[%s2572 + $0x348] sm:$0xff]
        %v2679 = vld [vmem:[%s2572 + $0x350] sm:$0xff]
        %v2680 = vld [vmem:[%s2572 + $0x358] sm:$0xff]
        %v2681 = vld [vmem:[%s2572 + $0x360] sm:$0xff]
        %v2682 = vld [vmem:[%s2572 + $0x368] sm:$0xff]
        %v2683 = vld [vmem:[%s2572 + $0x370] sm:$0xff]
        %v2684 = vld [vmem:[%s2572 + $0x378] sm:$0xff]
        %v2685 = vld [vmem:[%s2572 + $0x380] sm:$0xff]
        %v2686 = vld [vmem:[%s2572 + $0x388] sm:$0xff]
        %v2687 = vld [vmem:[%s2572 + $0x390] sm:$0xff]
        %v2688 = vld [vmem:[%s2572 + $0x398] sm:$0xff]
        %v2689 = vld [vmem:[%s2572 + $0x3a0] sm:$0xff]
        %v2690 = vld [vmem:[%s2572 + $0x3a8] sm:$0xff]
        %v2691 = vld [vmem:[%s2572 + $0x3b0] sm:$0xff]
        %v2692 = vld [vmem:[%s2572 + $0x3b8] sm:$0xff]
        %v2693 = vld [vmem:[%s2572 + $0x3c0] sm:$0xff]
        %v2694 = vld [vmem:[%s2572 + $0x3c8] sm:$0xff]
        %v2695 = vld [vmem:[%s2572 + $0x3d0] sm:$0xff]
        %v2696 = vld [vmem:[%s2572 + $0x3d8] sm:$0xff]
        %v2697 = vld [vmem:[%s2572 + $0x3e0] sm:$0xff]
        %v2698 = vld [vmem:[%s2572 + $0x3e8] sm:$0xff]
        %v2699 = vld [vmem:[%s2572 + $0x3f0] sm:$0xff]
        %v2700 = vld [vmem:[%s2572 + $0x3f8] sm:$0xff]
        %v2829 = vunpack.c.l.b16 %v2573
        %v2830 = vunpack.c.h.b16 %v2573
        %v2831 = vunpack.c.l.b16 %v2574
        %v2832 = vunpack.c.h.b16 %v2574
        %v2833 = vunpack.c.l.b16 %v2575
        %v2834 = vunpack.c.h.b16 %v2575
        %v2835 = vunpack.c.l.b16 %v2576
        %v2836 = vunpack.c.h.b16 %v2576
        %v2837 = vunpack.c.l.b16 %v2577
        %v2838 = vunpack.c.h.b16 %v2577
        %v2839 = vunpack.c.l.b16 %v2578
        %v2840 = vunpack.c.h.b16 %v2578
        %v2841 = vunpack.c.l.b16 %v2579
        %v2842 = vunpack.c.h.b16 %v2579
        %v2843 = vunpack.c.l.b16 %v2580
        %v2844 = vunpack.c.h.b16 %v2580
        %v2845 = vunpack.c.l.b16 %v2581
        %v2846 = vunpack.c.h.b16 %v2581
        %v2847 = vunpack.c.l.b16 %v2582
        %v2848 = vunpack.c.h.b16 %v2582
        %v2849 = vunpack.c.l.b16 %v2583
        %v2850 = vunpack.c.h.b16 %v2583
        %v2851 = vunpack.c.l.b16 %v2584
        %v2852 = vunpack.c.h.b16 %v2584
        %v2853 = vunpack.c.l.b16 %v2585
        %v2854 = vunpack.c.h.b16 %v2585
        %v2855 = vunpack.c.l.b16 %v2586
        %v2856 = vunpack.c.h.b16 %v2586
        %v2857 = vunpack.c.l.b16 %v2587
        %v2858 = vunpack.c.h.b16 %v2587
        %v2859 = vunpack.c.l.b16 %v2588
        %v2860 = vunpack.c.h.b16 %v2588
        %v2861 = vunpack.c.l.b16 %v2589
        %v2862 = vunpack.c.h.b16 %v2589
        %v2863 = vunpack.c.l.b16 %v2590
        %v2864 = vunpack.c.h.b16 %v2590
        %v2865 = vunpack.c.l.b16 %v2591
        %v2866 = vunpack.c.h.b16 %v2591
        %v2867 = vunpack.c.l.b16 %v2592
        %v2868 = vunpack.c.h.b16 %v2592
        %v2869 = vunpack.c.l.b16 %v2593
        %v2870 = vunpack.c.h.b16 %v2593
        %v2871 = vunpack.c.l.b16 %v2594
        %v2872 = vunpack.c.h.b16 %v2594
        %v2873 = vunpack.c.l.b16 %v2595
        %v2874 = vunpack.c.h.b16 %v2595
        %v2875 = vunpack.c.l.b16 %v2596
        %v2876 = vunpack.c.h.b16 %v2596
        %v2877 = vunpack.c.l.b16 %v2597
        %v2878 = vunpack.c.h.b16 %v2597
        %v2879 = vunpack.c.l.b16 %v2598
        %v2880 = vunpack.c.h.b16 %v2598
        %v2881 = vunpack.c.l.b16 %v2599
        %v2882 = vunpack.c.h.b16 %v2599
        %v2883 = vunpack.c.l.b16 %v2600
        %v2884 = vunpack.c.h.b16 %v2600
        %v2885 = vunpack.c.l.b16 %v2601
        %v2886 = vunpack.c.h.b16 %v2601
        %v2887 = vunpack.c.l.b16 %v2602
        %v2888 = vunpack.c.h.b16 %v2602
        %v2889 = vunpack.c.l.b16 %v2603
        %v2890 = vunpack.c.h.b16 %v2603
        %v2891 = vunpack.c.l.b16 %v2604
        %v2892 = vunpack.c.h.b16 %v2604
        %v2893 = vunpack.c.l.b16 %v2605
        %v2894 = vunpack.c.h.b16 %v2605
        %v2895 = vunpack.c.l.b16 %v2606
        %v2896 = vunpack.c.h.b16 %v2606
        %v2897 = vunpack.c.l.b16 %v2607
        %v2898 = vunpack.c.h.b16 %v2607
        %v2899 = vunpack.c.l.b16 %v2608
        %v2900 = vunpack.c.h.b16 %v2608
        %v2901 = vunpack.c.l.b16 %v2609
        %v2902 = vunpack.c.h.b16 %v2609
        %v2903 = vunpack.c.l.b16 %v2610
        %v2904 = vunpack.c.h.b16 %v2610
        %v2905 = vunpack.c.l.b16 %v2611
        %v2906 = vunpack.c.h.b16 %v2611
        %v2907 = vunpack.c.l.b16 %v2612
        %v2908 = vunpack.c.h.b16 %v2612
        %v2909 = vunpack.c.l.b16 %v2613
        %v2910 = vunpack.c.h.b16 %v2613
        %v2911 = vunpack.c.l.b16 %v2614
        %v2912 = vunpack.c.h.b16 %v2614
        %v2913 = vunpack.c.l.b16 %v2615
        %v2914 = vunpack.c.h.b16 %v2615
        %v2915 = vunpack.c.l.b16 %v2616
        %v2916 = vunpack.c.h.b16 %v2616
        %v2917 = vunpack.c.l.b16 %v2617
        %v2918 = vunpack.c.h.b16 %v2617
        %v2919 = vunpack.c.l.b16 %v2618
        %v2920 = vunpack.c.h.b16 %v2618
        %v2921 = vunpack.c.l.b16 %v2619
        %v2922 = vunpack.c.h.b16 %v2619
        %v2923 = vunpack.c.l.b16 %v2620
        %v2924 = vunpack.c.h.b16 %v2620
        %v2925 = vunpack.c.l.b16 %v2621
        %v2926 = vunpack.c.h.b16 %v2621
        %v2927 = vunpack.c.l.b16 %v2622
        %v2928 = vunpack.c.h.b16 %v2622
        %v2929 = vunpack.c.l.b16 %v2623
        %v2930 = vunpack.c.h.b16 %v2623
        %v2931 = vunpack.c.l.b16 %v2624
        %v2932 = vunpack.c.h.b16 %v2624
        %v2933 = vunpack.c.l.b16 %v2625
        %v2934 = vunpack.c.h.b16 %v2625
        %v2935 = vunpack.c.l.b16 %v2626
        %v2936 = vunpack.c.h.b16 %v2626
        %v2937 = vunpack.c.l.b16 %v2627
        %v2938 = vunpack.c.h.b16 %v2627
        %v2939 = vunpack.c.l.b16 %v2628
        %v2940 = vunpack.c.h.b16 %v2628
        %v2941 = vunpack.c.l.b16 %v2629
        %v2942 = vunpack.c.h.b16 %v2629
        %v2943 = vunpack.c.l.b16 %v2630
        %v2944 = vunpack.c.h.b16 %v2630
        %v2945 = vunpack.c.l.b16 %v2631
        %v2946 = vunpack.c.h.b16 %v2631
        %v2947 = vunpack.c.l.b16 %v2632
        %v2948 = vunpack.c.h.b16 %v2632
        %v2949 = vunpack.c.l.b16 %v2633
        %v2950 = vunpack.c.h.b16 %v2633
        %v2951 = vunpack.c.l.b16 %v2634
        %v2952 = vunpack.c.h.b16 %v2634
        %v2953 = vunpack.c.l.b16 %v2635
        %v2954 = vunpack.c.h.b16 %v2635
        %v2955 = vunpack.c.l.b16 %v2636
        %v2956 = vunpack.c.h.b16 %v2636
        %v2957 = vunpack.c.l.b16 %v2637
        %v2958 = vunpack.c.h.b16 %v2637
        %v2959 = vunpack.c.l.b16 %v2638
        %v2960 = vunpack.c.h.b16 %v2638
        %v2961 = vunpack.c.l.b16 %v2639
        %v2962 = vunpack.c.h.b16 %v2639
        %v2963 = vunpack.c.l.b16 %v2640
        %v2964 = vunpack.c.h.b16 %v2640
        %v2965 = vunpack.c.l.b16 %v2641
        %v2966 = vunpack.c.h.b16 %v2641
        %v2967 = vunpack.c.l.b16 %v2642
        %v2968 = vunpack.c.h.b16 %v2642
        %v2969 = vunpack.c.l.b16 %v2643
        %v2970 = vunpack.c.h.b16 %v2643
        %v2971 = vunpack.c.l.b16 %v2644
        %v2972 = vunpack.c.h.b16 %v2644
        %v2973 = vunpack.c.l.b16 %v2645
        %v2974 = vunpack.c.h.b16 %v2645
        %v2975 = vunpack.c.l.b16 %v2646
        %v2976 = vunpack.c.h.b16 %v2646
        %v2977 = vunpack.c.l.b16 %v2647
        %v2978 = vunpack.c.h.b16 %v2647
        %v2979 = vunpack.c.l.b16 %v2648
        %v2980 = vunpack.c.h.b16 %v2648
        %v2981 = vunpack.c.l.b16 %v2649
        %v2982 = vunpack.c.h.b16 %v2649
        %v2983 = vunpack.c.l.b16 %v2650
        %v2984 = vunpack.c.h.b16 %v2650
        %v2985 = vunpack.c.l.b16 %v2651
        %v2986 = vunpack.c.h.b16 %v2651
        %v2987 = vunpack.c.l.b16 %v2652
        %v2988 = vunpack.c.h.b16 %v2652
        %v2989 = vunpack.c.l.b16 %v2653
        %v2990 = vunpack.c.h.b16 %v2653
        %v2991 = vunpack.c.l.b16 %v2654
        %v2992 = vunpack.c.h.b16 %v2654
        %v2993 = vunpack.c.l.b16 %v2655
        %v2994 = vunpack.c.h.b16 %v2655
        %v2995 = vunpack.c.l.b16 %v2656
        %v2996 = vunpack.c.h.b16 %v2656
        %v2997 = vunpack.c.l.b16 %v2657
        %v2998 = vunpack.c.h.b16 %v2657
        %v2999 = vunpack.c.l.b16 %v2658
        %v3000 = vunpack.c.h.b16 %v2658
        %v3001 = vunpack.c.l.b16 %v2659
        %v3002 = vunpack.c.h.b16 %v2659
        %v3003 = vunpack.c.l.b16 %v2660
        %v3004 = vunpack.c.h.b16 %v2660
        %v3005 = vunpack.c.l.b16 %v2661
        %v3006 = vunpack.c.h.b16 %v2661
        %v3007 = vunpack.c.l.b16 %v2662
        %v3008 = vunpack.c.h.b16 %v2662
        %v3009 = vunpack.c.l.b16 %v2663
        %v3010 = vunpack.c.h.b16 %v2663
        %v3011 = vunpack.c.l.b16 %v2664
        %v3012 = vunpack.c.h.b16 %v2664
        %v3013 = vunpack.c.l.b16 %v2665
        %v3014 = vunpack.c.h.b16 %v2665
        %v3015 = vunpack.c.l.b16 %v2666
        %v3016 = vunpack.c.h.b16 %v2666
        %v3017 = vunpack.c.l.b16 %v2667
        %v3018 = vunpack.c.h.b16 %v2667
        %v3019 = vunpack.c.l.b16 %v2668
        %v3020 = vunpack.c.h.b16 %v2668
        %v3021 = vunpack.c.l.b16 %v2669
        %v3022 = vunpack.c.h.b16 %v2669
        %v3023 = vunpack.c.l.b16 %v2670
        %v3024 = vunpack.c.h.b16 %v2670
        %v3025 = vunpack.c.l.b16 %v2671
        %v3026 = vunpack.c.h.b16 %v2671
        %v3027 = vunpack.c.l.b16 %v2672
        %v3028 = vunpack.c.h.b16 %v2672
        %v3029 = vunpack.c.l.b16 %v2673
        %v3030 = vunpack.c.h.b16 %v2673
        %v3031 = vunpack.c.l.b16 %v2674
        %v3032 = vunpack.c.h.b16 %v2674
        %v3033 = vunpack.c.l.b16 %v2675
        %v3034 = vunpack.c.h.b16 %v2675
        %v3035 = vunpack.c.l.b16 %v2676
        %v3036 = vunpack.c.h.b16 %v2676
        %v3037 = vunpack.c.l.b16 %v2677
        %v3038 = vunpack.c.h.b16 %v2677
        %v3039 = vunpack.c.l.b16 %v2678
        %v3040 = vunpack.c.h.b16 %v2678
        %v3041 = vunpack.c.l.b16 %v2679
        %v3042 = vunpack.c.h.b16 %v2679
        %v3043 = vunpack.c.l.b16 %v2680
        %v3044 = vunpack.c.h.b16 %v2680
        %v3045 = vunpack.c.l.b16 %v2681
        %v3046 = vunpack.c.h.b16 %v2681
        %v3047 = vunpack.c.l.b16 %v2682
        %v3048 = vunpack.c.h.b16 %v2682
        %v3049 = vunpack.c.l.b16 %v2683
        %v3050 = vunpack.c.h.b16 %v2683
        %v3051 = vunpack.c.l.b16 %v2684
        %v3052 = vunpack.c.h.b16 %v2684
        %v3053 = vunpack.c.l.b16 %v2685
        %v3054 = vunpack.c.h.b16 %v2685
        %v3055 = vunpack.c.l.b16 %v2686
        %v3056 = vunpack.c.h.b16 %v2686
        %v3057 = vunpack.c.l.b16 %v2687
        %v3058 = vunpack.c.h.b16 %v2687
        %v3059 = vunpack.c.l.b16 %v2688
        %v3060 = vunpack.c.h.b16 %v2688
        %v3061 = vunpack.c.l.b16 %v2689
        %v3062 = vunpack.c.h.b16 %v2689
        %v3063 = vunpack.c.l.b16 %v2690
        %v3064 = vunpack.c.h.b16 %v2690
        %v3065 = vunpack.c.l.b16 %v2691
        %v3066 = vunpack.c.h.b16 %v2691
        %v3067 = vunpack.c.l.b16 %v2692
        %v3068 = vunpack.c.h.b16 %v2692
        %v3069 = vunpack.c.l.b16 %v2693
        %v3070 = vunpack.c.h.b16 %v2693
        %v3071 = vunpack.c.l.b16 %v2694
        %v3072 = vunpack.c.h.b16 %v2694
        %v3073 = vunpack.c.l.b16 %v2695
        %v3074 = vunpack.c.h.b16 %v2695
        %v3075 = vunpack.c.l.b16 %v2696
        %v3076 = vunpack.c.h.b16 %v2696
        %v3077 = vunpack.c.l.b16 %v2697
        %v3078 = vunpack.c.h.b16 %v2697
        %v3079 = vunpack.c.l.b16 %v2698
        %v3080 = vunpack.c.h.b16 %v2698
        %v3081 = vunpack.c.l.b16 %v2699
        %v3082 = vunpack.c.h.b16 %v2699
        %v3083 = vunpack.c.l.b16 %v2700
        %v3084 = vunpack.c.h.b16 %v2700
        %v3085 = vpack.c.b16 %v2833, %v2829
        %v3086 = vpack.c.b16 %v2834, %v2830
        %v3087 = vpack.c.b16 %v2835, %v2831
        %v3088 = vpack.c.b16 %v2836, %v2832
        %v3089 = vpack.c.b16 %v2841, %v2837
        %v3090 = vpack.c.b16 %v2842, %v2838
        %v3091 = vpack.c.b16 %v2843, %v2839
        %v3092 = vpack.c.b16 %v2844, %v2840
        %v3093 = vpack.c.b16 %v2849, %v2845
        %v3094 = vpack.c.b16 %v2850, %v2846
        %v3095 = vpack.c.b16 %v2851, %v2847
        %v3096 = vpack.c.b16 %v2852, %v2848
        %v3097 = vpack.c.b16 %v2857, %v2853
        %v3098 = vpack.c.b16 %v2858, %v2854
        %v3099 = vpack.c.b16 %v2859, %v2855
        %v3100 = vpack.c.b16 %v2860, %v2856
        %v3101 = vpack.c.b16 %v2865, %v2861
        %v3102 = vpack.c.b16 %v2866, %v2862
        %v3103 = vpack.c.b16 %v2867, %v2863
        %v3104 = vpack.c.b16 %v2868, %v2864
        %v3105 = vpack.c.b16 %v2873, %v2869
        %v3106 = vpack.c.b16 %v2874, %v2870
        %v3107 = vpack.c.b16 %v2875, %v2871
        %v3108 = vpack.c.b16 %v2876, %v2872
        %v3109 = vpack.c.b16 %v2881, %v2877
        %v3110 = vpack.c.b16 %v2882, %v2878
        %v3111 = vpack.c.b16 %v2883, %v2879
        %v3112 = vpack.c.b16 %v2884, %v2880
        %v3113 = vpack.c.b16 %v2889, %v2885
        %v3114 = vpack.c.b16 %v2890, %v2886
        %v3115 = vpack.c.b16 %v2891, %v2887
        %v3116 = vpack.c.b16 %v2892, %v2888
        %v3117 = vpack.c.b16 %v2897, %v2893
        %v3118 = vpack.c.b16 %v2898, %v2894
        %v3119 = vpack.c.b16 %v2899, %v2895
        %v3120 = vpack.c.b16 %v2900, %v2896
        %v3121 = vpack.c.b16 %v2905, %v2901
        %v3122 = vpack.c.b16 %v2906, %v2902
        %v3123 = vpack.c.b16 %v2907, %v2903
        %v3124 = vpack.c.b16 %v2908, %v2904
        %v3125 = vpack.c.b16 %v2913, %v2909
        %v3126 = vpack.c.b16 %v2914, %v2910
        %v3127 = vpack.c.b16 %v2915, %v2911
        %v3128 = vpack.c.b16 %v2916, %v2912
        %v3129 = vpack.c.b16 %v2921, %v2917
        %v3130 = vpack.c.b16 %v2922, %v2918
        %v3131 = vpack.c.b16 %v2923, %v2919
        %v3132 = vpack.c.b16 %v2924, %v2920
        %v3133 = vpack.c.b16 %v2929, %v2925
        %v3134 = vpack.c.b16 %v2930, %v2926
        %v3135 = vpack.c.b16 %v2931, %v2927
        %v3136 = vpack.c.b16 %v2932, %v2928
        %v3137 = vpack.c.b16 %v2937, %v2933
        %v3138 = vpack.c.b16 %v2938, %v2934
        %v3139 = vpack.c.b16 %v2939, %v2935
        %v3140 = vpack.c.b16 %v2940, %v2936
        %v3141 = vpack.c.b16 %v2945, %v2941
        %v3142 = vpack.c.b16 %v2946, %v2942
        %v3143 = vpack.c.b16 %v2947, %v2943
        %v3144 = vpack.c.b16 %v2948, %v2944
        %v3145 = vpack.c.b16 %v2953, %v2949
        %v3146 = vpack.c.b16 %v2954, %v2950
        %v3147 = vpack.c.b16 %v2955, %v2951
        %v3148 = vpack.c.b16 %v2956, %v2952
        %v3149 = vpack.c.b16 %v2961, %v2957
        %v3150 = vpack.c.b16 %v2962, %v2958
        %v3151 = vpack.c.b16 %v2963, %v2959
        %v3152 = vpack.c.b16 %v2964, %v2960
        %v3153 = vpack.c.b16 %v2969, %v2965
        %v3154 = vpack.c.b16 %v2970, %v2966
        %v3155 = vpack.c.b16 %v2971, %v2967
        %v3156 = vpack.c.b16 %v2972, %v2968
        %v3157 = vpack.c.b16 %v2977, %v2973
        %v3158 = vpack.c.b16 %v2978, %v2974
        %v3159 = vpack.c.b16 %v2979, %v2975
        %v3160 = vpack.c.b16 %v2980, %v2976
        %v3161 = vpack.c.b16 %v2985, %v2981
        %v3162 = vpack.c.b16 %v2986, %v2982
        %v3163 = vpack.c.b16 %v2987, %v2983
        %v3164 = vpack.c.b16 %v2988, %v2984
        %v3165 = vpack.c.b16 %v2993, %v2989
        %v3166 = vpack.c.b16 %v2994, %v2990
        %v3167 = vpack.c.b16 %v2995, %v2991
        %v3168 = vpack.c.b16 %v2996, %v2992
        %v3169 = vpack.c.b16 %v3001, %v2997
        %v3170 = vpack.c.b16 %v3002, %v2998
        %v3171 = vpack.c.b16 %v3003, %v2999
        %v3172 = vpack.c.b16 %v3004, %v3000
        %v3173 = vpack.c.b16 %v3009, %v3005
        %v3174 = vpack.c.b16 %v3010, %v3006
        %v3175 = vpack.c.b16 %v3011, %v3007
        %v3176 = vpack.c.b16 %v3012, %v3008
        %v3177 = vpack.c.b16 %v3017, %v3013
        %v3178 = vpack.c.b16 %v3018, %v3014
        %v3179 = vpack.c.b16 %v3019, %v3015
        %v3180 = vpack.c.b16 %v3020, %v3016
        %v3181 = vpack.c.b16 %v3025, %v3021
        %v3182 = vpack.c.b16 %v3026, %v3022
        %v3183 = vpack.c.b16 %v3027, %v3023
        %v3184 = vpack.c.b16 %v3028, %v3024
        %v3185 = vpack.c.b16 %v3033, %v3029
        %v3186 = vpack.c.b16 %v3034, %v3030
        %v3187 = vpack.c.b16 %v3035, %v3031
        %v3188 = vpack.c.b16 %v3036, %v3032
        %v3189 = vpack.c.b16 %v3041, %v3037
        %v3190 = vpack.c.b16 %v3042, %v3038
        %v3191 = vpack.c.b16 %v3043, %v3039
        %v3192 = vpack.c.b16 %v3044, %v3040
        %v3193 = vpack.c.b16 %v3049, %v3045
        %v3194 = vpack.c.b16 %v3050, %v3046
        %v3195 = vpack.c.b16 %v3051, %v3047
        %v3196 = vpack.c.b16 %v3052, %v3048
        %v3197 = vpack.c.b16 %v3057, %v3053
        %v3198 = vpack.c.b16 %v3058, %v3054
        %v3199 = vpack.c.b16 %v3059, %v3055
        %v3200 = vpack.c.b16 %v3060, %v3056
        %v3201 = vpack.c.b16 %v3065, %v3061
        %v3202 = vpack.c.b16 %v3066, %v3062
        %v3203 = vpack.c.b16 %v3067, %v3063
        %v3204 = vpack.c.b16 %v3068, %v3064
        %v3205 = vpack.c.b16 %v3073, %v3069
        %v3206 = vpack.c.b16 %v3074, %v3070
        %v3207 = vpack.c.b16 %v3075, %v3071
        %v3208 = vpack.c.b16 %v3076, %v3072
        %v3209 = vpack.c.b16 %v3081, %v3077
        %v3210 = vpack.c.b16 %v3082, %v3078
        %v3211 = vpack.c.b16 %v3083, %v3079
        %v3212 = vpack.c.b16 %v3084, %v3080
        %3341 = vmatprep.subr.bf16.mxu0 %v3086
        %3342 = vmatpush1.bf16.msra.mxu0 %v3085
        %3343 = vmatprep.subr.bf16.mxu0 %v3090
        %3344 = vmatpush1.bf16.msra.mxu0 %v3089
        %3345 = vmatprep.subr.bf16.mxu0 %v3094
        %3346 = vmatpush1.bf16.msra.mxu0 %v3093
        %3347 = vmatprep.subr.bf16.mxu0 %v3098
        %3348 = vmatpush1.bf16.msra.mxu0 %v3097
        %3349 = vmatprep.subr.bf16.mxu0 %v3102
        %3350 = vmatpush1.bf16.msra.mxu0 %v3101
        %3351 = vmatprep.subr.bf16.mxu0 %v3106
        %3352 = vmatpush1.bf16.msra.mxu0 %v3105
        %3353 = vmatprep.subr.bf16.mxu0 %v3110
        %3354 = vmatpush1.bf16.msra.mxu0 %v3109
        %3355 = vmatprep.subr.bf16.mxu0 %v3114
        %3356 = vmatpush1.bf16.msra.mxu0 %v3113
        %3357 = vmatprep.subr.bf16.mxu0 %v3118
        %3358 = vmatpush1.bf16.msra.mxu0 %v3117
        %3359 = vmatprep.subr.bf16.mxu0 %v3122
        %3360 = vmatpush1.bf16.msra.mxu0 %v3121
        %3361 = vmatprep.subr.bf16.mxu0 %v3126
        %3362 = vmatpush1.bf16.msra.mxu0 %v3125
        %3363 = vmatprep.subr.bf16.mxu0 %v3130
        %3364 = vmatpush1.bf16.msra.mxu0 %v3129
        %3365 = vmatprep.subr.bf16.mxu0 %v3134
        %3366 = vmatpush1.bf16.msra.mxu0 %v3133
        %3367 = vmatprep.subr.bf16.mxu0 %v3138
        %3368 = vmatpush1.bf16.msra.mxu0 %v3137
        %3369 = vmatprep.subr.bf16.mxu0 %v3142
        %3370 = vmatpush1.bf16.msra.mxu0 %v3141
        %3371 = vmatprep.subr.bf16.mxu0 %v3146
        %3372 = vmatpush1.bf16.msra.mxu0 %v3145
        %3373 = vmatprep.mubr.bf16.mxu0 %v2569
        %3374 = vmatmul.mubr.bf16.gmra.mrb[0].mxu0 %v2568
        %v3375 = vpop.f32.mrb[0].mxu0
        %v3376 = vadd.f32 0.0, %v3375
        %v3377 = vpop.f32.mrb[0].mxu0
        %v3378 = vadd.f32 0.0, %v3377
        %v3379 = vpop.f32.mrb[0].mxu0
        %v3380 = vadd.f32 0.0, %v3379
        %v3381 = vpop.f32.mrb[0].mxu0
        %v3382 = vadd.f32 0.0, %v3381
        %3383 = vdwg.mxu0
        %3384 = vmatprep.subr.bf16.mxu0 %v3150
        %3385 = vmatpush1.bf16.msra.mxu0 %v3149
        %3386 = vmatprep.subr.bf16.mxu0 %v3154
        %3387 = vmatpush1.bf16.msra.mxu0 %v3153
        %3388 = vmatprep.subr.bf16.mxu0 %v3158
        %3389 = vmatpush1.bf16.msra.mxu0 %v3157
        %3390 = vmatprep.subr.bf16.mxu0 %v3162
        %3391 = vmatpush1.bf16.msra.mxu0 %v3161
        %3392 = vmatprep.subr.bf16.mxu0 %v3166
        %3393 = vmatpush1.bf16.msra.mxu0 %v3165
        %3394 = vmatprep.subr.bf16.mxu0 %v3170
        %3395 = vmatpush1.bf16.msra.mxu0 %v3169
        %3396 = vmatprep.subr.bf16.mxu0 %v3174
        %3397 = vmatpush1.bf16.msra.mxu0 %v3173
        %3398 = vmatprep.subr.bf16.mxu0 %v3178
        %3399 = vmatpush1.bf16.msra.mxu0 %v3177
        %3400 = vmatprep.subr.bf16.mxu0 %v3182
        %3401 = vmatpush1.bf16.msra.mxu0 %v3181
        %3402 = vmatprep.subr.bf16.mxu0 %v3186
        %3403 = vmatpush1.bf16.msra.mxu0 %v3185
        %3404 = vmatprep.subr.bf16.mxu0 %v3190
        %3405 = vmatpush1.bf16.msra.mxu0 %v3189
        %3406 = vmatprep.subr.bf16.mxu0 %v3194
        %3407 = vmatpush1.bf16.msra.mxu0 %v3193
        %3408 = vmatprep.subr.bf16.mxu0 %v3198
        %3409 = vmatpush1.bf16.msra.mxu0 %v3197
        %3410 = vmatprep.subr.bf16.mxu0 %v3202
        %3411 = vmatpush1.bf16.msra.mxu0 %v3201
        %3412 = vmatprep.subr.bf16.mxu0 %v3206
        %3413 = vmatpush1.bf16.msra.mxu0 %v3205
        %3414 = vmatprep.subr.bf16.mxu0 %v3210
        %3415 = vmatpush1.bf16.msra.mxu0 %v3209
        %3416 = vmatprep.mubr.bf16.mxu0 %v2571
        %3417 = vmatmul.mubr.bf16.gmra.mrb[0].mxu0 %v2570
        %v3418 = vpop.f32.mrb[0].mxu0
        %v3419 = vadd.f32 %v3376, %v3418
        %v3420 = vpop.f32.mrb[0].mxu0
        %v3421 = vadd.f32 %v3378, %v3420
        %v3422 = vpop.f32.mrb[0].mxu0
        %v3423 = vadd.f32 %v3380, %v3422
        %v3424 = vpop.f32.mrb[0].mxu0
        %v3425 = vadd.f32 %v3382, %v3424
        %3426 = vdwg.mxu0
        %3427 = vmatprep.subr.bf16.mxu0 %v3088
        %3428 = vmatpush1.bf16.msra.mxu0 %v3087
        %3429 = vmatprep.subr.bf16.mxu0 %v3092
        %3430 = vmatpush1.bf16.msra.mxu0 %v3091
        %3431 = vmatprep.subr.bf16.mxu0 %v3096
        %3432 = vmatpush1.bf16.msra.mxu0 %v3095
        %3433 = vmatprep.subr.bf16.mxu0 %v3100
        %3434 = vmatpush1.bf16.msra.mxu0 %v3099
        %3435 = vmatprep.subr.bf16.mxu0 %v3104
        %3436 = vmatpush1.bf16.msra.mxu0 %v3103
        %3437 = vmatprep.subr.bf16.mxu0 %v3108
        %3438 = vmatpush1.bf16.msra.mxu0 %v3107
        %3439 = vmatprep.subr.bf16.mxu0 %v3112
        %3440 = vmatpush1.bf16.msra.mxu0 %v3111
        %3441 = vmatprep.subr.bf16.mxu0 %v3116
        %3442 = vmatpush1.bf16.msra.mxu0 %v3115
        %3443 = vmatprep.subr.bf16.mxu0 %v3120
        %3444 = vmatpush1.bf16.msra.mxu0 %v3119
        %3445 = vmatprep.subr.bf16.mxu0 %v3124
        %3446 = vmatpush1.bf16.msra.mxu0 %v3123
        %3447 = vmatprep.subr.bf16.mxu0 %v3128
        %3448 = vmatpush1.bf16.msra.mxu0 %v3127
        %3449 = vmatprep.subr.bf16.mxu0 %v3132
        %3450 = vmatpush1.bf16.msra.mxu0 %v3131
        %3451 = vmatprep.subr.bf16.mxu0 %v3136
        %3452 = vmatpush1.bf16.msra.mxu0 %v3135
        %3453 = vmatprep.subr.bf16.mxu0 %v3140
        %3454 = vmatpush1.bf16.msra.mxu0 %v3139
        %3455 = vmatprep.subr.bf16.mxu0 %v3144
        %3456 = vmatpush1.bf16.msra.mxu0 %v3143
        %3457 = vmatprep.subr.bf16.mxu0 %v3148
        %3458 = vmatpush1.bf16.msra.mxu0 %v3147
        %3459 = vmatprep.mubr.bf16.mxu0 %v2569
        %3460 = vmatmul.mubr.bf16.gmra.mrb[0].mxu0 %v2568
        %v3461 = vpop.f32.mrb[0].mxu0
        %v3462 = vadd.f32 0.0, %v3461
        %v3463 = vpop.f32.mrb[0].mxu0
        %v3464 = vadd.f32 0.0, %v3463
        %v3465 = vpop.f32.mrb[0].mxu0
        %v3466 = vadd.f32 0.0, %v3465
        %v3467 = vpop.f32.mrb[0].mxu0
        %v3468 = vadd.f32 0.0, %v3467
        %3469 = vdwg.mxu0
        %3470 = vmatprep.subr.bf16.mxu0 %v3152
        %3471 = vmatpush1.bf16.msra.mxu0 %v3151
        %3472 = vmatprep.subr.bf16.mxu0 %v3156
        %3473 = vmatpush1.bf16.msra.mxu0 %v3155
        %3474 = vmatprep.subr.bf16.mxu0 %v3160
        %3475 = vmatpush1.bf16.msra.mxu0 %v3159
        %3476 = vmatprep.subr.bf16.mxu0 %v3164
        %3477 = vmatpush1.bf16.msra.mxu0 %v3163
        %3478 = vmatprep.subr.bf16.mxu0 %v3168
        %3479 = vmatpush1.bf16.msra.mxu0 %v3167
        %3480 = vmatprep.subr.bf16.mxu0 %v3172
        %3481 = vmatpush1.bf16.msra.mxu0 %v3171
        %3482 = vmatprep.subr.bf16.mxu0 %v3176
        %3483 = vmatpush1.bf16.msra.mxu0 %v3175
        %3484 = vmatprep.subr.bf16.mxu0 %v3180
        %3485 = vmatpush1.bf16.msra.mxu0 %v3179
        %3486 = vmatprep.subr.bf16.mxu0 %v3184
        %3487 = vmatpush1.bf16.msra.mxu0 %v3183
        %3488 = vmatprep.subr.bf16.mxu0 %v3188
        %3489 = vmatpush1.bf16.msra.mxu0 %v3187
        %3490 = vmatprep.subr.bf16.mxu0 %v3192
        %3491 = vmatpush1.bf16.msra.mxu0 %v3191
        %3492 = vmatprep.subr.bf16.mxu0 %v3196
        %3493 = vmatpush1.bf16.msra.mxu0 %v3195
        %3494 = vmatprep.subr.bf16.mxu0 %v3200
        %3495 = vmatpush1.bf16.msra.mxu0 %v3199
        %3496 = vmatprep.subr.bf16.mxu0 %v3204
        %3497 = vmatpush1.bf16.msra.mxu0 %v3203
        %3498 = vmatprep.subr.bf16.mxu0 %v3208
        %3499 = vmatpush1.bf16.msra.mxu0 %v3207
        %3500 = vmatprep.subr.bf16.mxu0 %v3212
        %3501 = vmatpush1.bf16.msra.mxu0 %v3211
        %3502 = vmatprep.mubr.bf16.mxu0 %v2571
        %3503 = vmatmul.mubr.bf16.gmra.mrb[0].mxu0 %v2570
        %v3504 = vpop.f32.mrb[0].mxu0
        %v3505 = vadd.f32 %v3462, %v3504
        %v3506 = vpop.f32.mrb[0].mxu0
        %v3507 = vadd.f32 %v3464, %v3506
        %v3508 = vpop.f32.mrb[0].mxu0
        %v3509 = vadd.f32 %v3466, %v3508
        %v3510 = vpop.f32.mrb[0].mxu0
        %v3511 = vadd.f32 %v3468, %v3510
        %3512 = vdwg.mxu0
        %v3513 = vpack.c.bf16 %v3423, %v3419
        %v3514 = vpack.c.bf16 %v3425, %v3421
        %v3515 = vpack.c.bf16 %v3509, %v3505
        %v3516 = vpack.c.bf16 %v3511, %v3507
        %s3517 = scalar_lea.vmem %s4, 8
        %v3518 = vld [vmem:[%s3517] sm:$0xf]
        %v3521 = vunpack.c.l.s4 1966171168
        %v3522 = vunpack.c.0.s8 %v3521
        %v3523 = vlaneseq
        %v3524 = vshrl.u32 %v3523, 7
        %v3525 = vsub.s32 %v3522, %v3524
        %v3526 = vrot.slane %v3518, %v3525
        %v3527 = vcombine.high %v3526, %v3526
        %v3529 = vunpack.c.l.s4 1966171168
        %v3530 = vunpack.c.0.s8 %v3529
        %v3531 = vlaneseq
        %v3532 = vshrl.u32 %v3531, 7
        %v3533 = vsub.s32 %v3530, %v3532
        %v3534 = vrot.slane %v3526, %v3533
        %v3536 = vunpack.c.l.s4 1966171168
        %v3537 = vunpack.c.0.s8 %v3536
        %v3538 = vlaneseq
        %v3539 = vshrl.u32 %v3538, 7
        %v3540 = vsub.s32 %v3537, %v3539
        %v3541 = vrot.slane %v3527, %v3540
        %v3542 = vcombine.high %v3534, %v3534
        %v3543 = vcombine.high %v3541, %v3541
        %v3545 = vpack.i.b16 %v3534, %v3534
        %v3547 = vlaneseq
        %v3548 = vshrl.u32 %v3547, 7
        %v3549 = vsub.s32 0, %v3548
        %v3550 = vrot.slane %v3545, %v3549
        %v3552 = vpack.i.b16 %v3541, %v3541
        %v3554 = vlaneseq
        %v3555 = vshrl.u32 %v3554, 7
        %v3556 = vsub.s32 0, %v3555
        %v3557 = vrot.slane %v3552, %v3556
        %v3559 = vpack.i.b16 %v3542, %v3542
        %v3561 = vlaneseq
        %v3562 = vshrl.u32 %v3561, 7
        %v3563 = vsub.s32 0, %v3562
        %v3564 = vrot.slane %v3559, %v3563
        %v3566 = vpack.i.b16 %v3543, %v3543
        %v3568 = vlaneseq
        %v3569 = vshrl.u32 %v3568, 7
        %v3570 = vsub.s32 0, %v3569
        %v3571 = vrot.slane %v3566, %v3570
        %v3572 = vadd.bf16 %v3513, %v3550
        %v3573 = vadd.bf16 %v3514, %v3557
        %v3574 = vadd.bf16 %v3515, %v3564
        %v3575 = vadd.bf16 %v3516, %v3571
        %v3576 = vmax.bf16 %v3572, 0
        %v3577 = vmax.bf16 %v3573, 0
        %v3578 = vmax.bf16 %v3574, 0
        %v3579 = vmax.bf16 %v3575, 0
        %s3580 = scalar_lea.vmem [#allocation7], 3072
        %v3581 = vld [vmem:[%s3580] sm:$0xff]
        %v3582 = vld [vmem:[%s3580 + $0x8] sm:$0xff]
        %v3583 = vld [vmem:[%s3580 + $0x10] sm:$0xff]
        %v3584 = vld [vmem:[%s3580 + $0x18] sm:$0xff]
        %v3585 = vld [vmem:[%s3580 + $0x20] sm:$0xff]
        %v3586 = vld [vmem:[%s3580 + $0x28] sm:$0xff]
        %v3587 = vld [vmem:[%s3580 + $0x30] sm:$0xff]
        %v3588 = vld [vmem:[%s3580 + $0x38] sm:$0xff]
        %v3589 = vld [vmem:[%s3580 + $0x40] sm:$0xff]
        %v3590 = vld [vmem:[%s3580 + $0x48] sm:$0xff]
        %v3591 = vld [vmem:[%s3580 + $0x50] sm:$0xff]
        %v3592 = vld [vmem:[%s3580 + $0x58] sm:$0xff]
        %v3593 = vld [vmem:[%s3580 + $0x60] sm:$0xff]
        %v3594 = vld [vmem:[%s3580 + $0x68] sm:$0xff]
        %v3595 = vld [vmem:[%s3580 + $0x70] sm:$0xff]
        %v3596 = vld [vmem:[%s3580 + $0x78] sm:$0xff]
        %v3597 = vld [vmem:[%s3580 + $0x80] sm:$0xff]
        %v3598 = vld [vmem:[%s3580 + $0x88] sm:$0xff]
        %v3599 = vld [vmem:[%s3580 + $0x90] sm:$0xff]
        %v3600 = vld [vmem:[%s3580 + $0x98] sm:$0xff]
        %v3601 = vld [vmem:[%s3580 + $0xa0] sm:$0xff]
        %v3602 = vld [vmem:[%s3580 + $0xa8] sm:$0xff]
        %v3603 = vld [vmem:[%s3580 + $0xb0] sm:$0xff]
        %v3604 = vld [vmem:[%s3580 + $0xb8] sm:$0xff]
        %v3605 = vld [vmem:[%s3580 + $0xc0] sm:$0xff]
        %v3606 = vld [vmem:[%s3580 + $0xc8] sm:$0xff]
        %v3607 = vld [vmem:[%s3580 + $0xd0] sm:$0xff]
        %v3608 = vld [vmem:[%s3580 + $0xd8] sm:$0xff]
        %v3609 = vld [vmem:[%s3580 + $0xe0] sm:$0xff]
        %v3610 = vld [vmem:[%s3580 + $0xe8] sm:$0xff]
        %v3611 = vld [vmem:[%s3580 + $0xf0] sm:$0xff]
        %v3612 = vld [vmem:[%s3580 + $0xf8] sm:$0xff]
        %v3613 = vld [vmem:[%s3580 + $0x100] sm:$0xff]
        %v3614 = vld [vmem:[%s3580 + $0x108] sm:$0xff]
        %v3615 = vld [vmem:[%s3580 + $0x110] sm:$0xff]
        %v3616 = vld [vmem:[%s3580 + $0x118] sm:$0xff]
        %v3617 = vld [vmem:[%s3580 + $0x120] sm:$0xff]
        %v3618 = vld [vmem:[%s3580 + $0x128] sm:$0xff]
        %v3619 = vld [vmem:[%s3580 + $0x130] sm:$0xff]
        %v3620 = vld [vmem:[%s3580 + $0x138] sm:$0xff]
        %v3621 = vld [vmem:[%s3580 + $0x140] sm:$0xff]
        %v3622 = vld [vmem:[%s3580 + $0x148] sm:$0xff]
        %v3623 = vld [vmem:[%s3580 + $0x150] sm:$0xff]
        %v3624 = vld [vmem:[%s3580 + $0x158] sm:$0xff]
        %v3625 = vld [vmem:[%s3580 + $0x160] sm:$0xff]
        %v3626 = vld [vmem:[%s3580 + $0x168] sm:$0xff]
        %v3627 = vld [vmem:[%s3580 + $0x170] sm:$0xff]
        %v3628 = vld [vmem:[%s3580 + $0x178] sm:$0xff]
        %v3629 = vld [vmem:[%s3580 + $0x180] sm:$0xff]
        %v3630 = vld [vmem:[%s3580 + $0x188] sm:$0xff]
        %v3631 = vld [vmem:[%s3580 + $0x190] sm:$0xff]
        %v3632 = vld [vmem:[%s3580 + $0x198] sm:$0xff]
        %v3633 = vld [vmem:[%s3580 + $0x1a0] sm:$0xff]
        %v3634 = vld [vmem:[%s3580 + $0x1a8] sm:$0xff]
        %v3635 = vld [vmem:[%s3580 + $0x1b0] sm:$0xff]
        %v3636 = vld [vmem:[%s3580 + $0x1b8] sm:$0xff]
        %v3637 = vld [vmem:[%s3580 + $0x1c0] sm:$0xff]
        %v3638 = vld [vmem:[%s3580 + $0x1c8] sm:$0xff]
        %v3639 = vld [vmem:[%s3580 + $0x1d0] sm:$0xff]
        %v3640 = vld [vmem:[%s3580 + $0x1d8] sm:$0xff]
        %v3641 = vld [vmem:[%s3580 + $0x1e0] sm:$0xff]
        %v3642 = vld [vmem:[%s3580 + $0x1e8] sm:$0xff]
        %v3643 = vld [vmem:[%s3580 + $0x1f0] sm:$0xff]
        %v3644 = vld [vmem:[%s3580 + $0x1f8] sm:$0xff]
        %v3645 = vld [vmem:[%s3580 + $0x200] sm:$0xff]
        %v3646 = vld [vmem:[%s3580 + $0x208] sm:$0xff]
        %v3647 = vld [vmem:[%s3580 + $0x210] sm:$0xff]
        %v3648 = vld [vmem:[%s3580 + $0x218] sm:$0xff]
        %v3649 = vld [vmem:[%s3580 + $0x220] sm:$0xff]
        %v3650 = vld [vmem:[%s3580 + $0x228] sm:$0xff]
        %v3651 = vld [vmem:[%s3580 + $0x230] sm:$0xff]
        %v3652 = vld [vmem:[%s3580 + $0x238] sm:$0xff]
        %v3653 = vld [vmem:[%s3580 + $0x240] sm:$0xff]
        %v3654 = vld [vmem:[%s3580 + $0x248] sm:$0xff]
        %v3655 = vld [vmem:[%s3580 + $0x250] sm:$0xff]
        %v3656 = vld [vmem:[%s3580 + $0x258] sm:$0xff]
        %v3657 = vld [vmem:[%s3580 + $0x260] sm:$0xff]
        %v3658 = vld [vmem:[%s3580 + $0x268] sm:$0xff]
        %v3659 = vld [vmem:[%s3580 + $0x270] sm:$0xff]
        %v3660 = vld [vmem:[%s3580 + $0x278] sm:$0xff]
        %v3661 = vld [vmem:[%s3580 + $0x280] sm:$0xff]
        %v3662 = vld [vmem:[%s3580 + $0x288] sm:$0xff]
        %v3663 = vld [vmem:[%s3580 + $0x290] sm:$0xff]
        %v3664 = vld [vmem:[%s3580 + $0x298] sm:$0xff]
        %v3665 = vld [vmem:[%s3580 + $0x2a0] sm:$0xff]
        %v3666 = vld [vmem:[%s3580 + $0x2a8] sm:$0xff]
        %v3667 = vld [vmem:[%s3580 + $0x2b0] sm:$0xff]
        %v3668 = vld [vmem:[%s3580 + $0x2b8] sm:$0xff]
        %v3669 = vld [vmem:[%s3580 + $0x2c0] sm:$0xff]
        %v3670 = vld [vmem:[%s3580 + $0x2c8] sm:$0xff]
        %v3671 = vld [vmem:[%s3580 + $0x2d0] sm:$0xff]
        %v3672 = vld [vmem:[%s3580 + $0x2d8] sm:$0xff]
        %v3673 = vld [vmem:[%s3580 + $0x2e0] sm:$0xff]
        %v3674 = vld [vmem:[%s3580 + $0x2e8] sm:$0xff]
        %v3675 = vld [vmem:[%s3580 + $0x2f0] sm:$0xff]
        %v3676 = vld [vmem:[%s3580 + $0x2f8] sm:$0xff]
        %v3677 = vld [vmem:[%s3580 + $0x300] sm:$0xff]
        %v3678 = vld [vmem:[%s3580 + $0x308] sm:$0xff]
        %v3679 = vld [vmem:[%s3580 + $0x310] sm:$0xff]
        %v3680 = vld [vmem:[%s3580 + $0x318] sm:$0xff]
        %v3681 = vld [vmem:[%s3580 + $0x320] sm:$0xff]
        %v3682 = vld [vmem:[%s3580 + $0x328] sm:$0xff]
        %v3683 = vld [vmem:[%s3580 + $0x330] sm:$0xff]
        %v3684 = vld [vmem:[%s3580 + $0x338] sm:$0xff]
        %v3685 = vld [vmem:[%s3580 + $0x340] sm:$0xff]
        %v3686 = vld [vmem:[%s3580 + $0x348] sm:$0xff]
        %v3687 = vld [vmem:[%s3580 + $0x350] sm:$0xff]
        %v3688 = vld [vmem:[%s3580 + $0x358] sm:$0xff]
        %v3689 = vld [vmem:[%s3580 + $0x360] sm:$0xff]
        %v3690 = vld [vmem:[%s3580 + $0x368] sm:$0xff]
        %v3691 = vld [vmem:[%s3580 + $0x370] sm:$0xff]
        %v3692 = vld [vmem:[%s3580 + $0x378] sm:$0xff]
        %v3693 = vld [vmem:[%s3580 + $0x380] sm:$0xff]
        %v3694 = vld [vmem:[%s3580 + $0x388] sm:$0xff]
        %v3695 = vld [vmem:[%s3580 + $0x390] sm:$0xff]
        %v3696 = vld [vmem:[%s3580 + $0x398] sm:$0xff]
        %v3697 = vld [vmem:[%s3580 + $0x3a0] sm:$0xff]
        %v3698 = vld [vmem:[%s3580 + $0x3a8] sm:$0xff]
        %v3699 = vld [vmem:[%s3580 + $0x3b0] sm:$0xff]
        %v3700 = vld [vmem:[%s3580 + $0x3b8] sm:$0xff]
        %v3701 = vld [vmem:[%s3580 + $0x3c0] sm:$0xff]
        %v3702 = vld [vmem:[%s3580 + $0x3c8] sm:$0xff]
        %v3703 = vld [vmem:[%s3580 + $0x3d0] sm:$0xff]
        %v3704 = vld [vmem:[%s3580 + $0x3d8] sm:$0xff]
        %v3705 = vld [vmem:[%s3580 + $0x3e0] sm:$0xff]
        %v3706 = vld [vmem:[%s3580 + $0x3e8] sm:$0xff]
        %v3707 = vld [vmem:[%s3580 + $0x3f0] sm:$0xff]
        %v3708 = vld [vmem:[%s3580 + $0x3f8] sm:$0xff]
        %v3837 = vunpack.c.l.b16 %v3581
        %v3838 = vunpack.c.h.b16 %v3581
        %v3839 = vunpack.c.l.b16 %v3582
        %v3840 = vunpack.c.h.b16 %v3582
        %v3841 = vunpack.c.l.b16 %v3583
        %v3842 = vunpack.c.h.b16 %v3583
        %v3843 = vunpack.c.l.b16 %v3584
        %v3844 = vunpack.c.h.b16 %v3584
        %v3845 = vunpack.c.l.b16 %v3585
        %v3846 = vunpack.c.h.b16 %v3585
        %v3847 = vunpack.c.l.b16 %v3586
        %v3848 = vunpack.c.h.b16 %v3586
        %v3849 = vunpack.c.l.b16 %v3587
        %v3850 = vunpack.c.h.b16 %v3587
        %v3851 = vunpack.c.l.b16 %v3588
        %v3852 = vunpack.c.h.b16 %v3588
        %v3853 = vunpack.c.l.b16 %v3589
        %v3854 = vunpack.c.h.b16 %v3589
        %v3855 = vunpack.c.l.b16 %v3590
        %v3856 = vunpack.c.h.b16 %v3590
        %v3857 = vunpack.c.l.b16 %v3591
        %v3858 = vunpack.c.h.b16 %v3591
        %v3859 = vunpack.c.l.b16 %v3592
        %v3860 = vunpack.c.h.b16 %v3592
        %v3861 = vunpack.c.l.b16 %v3593
        %v3862 = vunpack.c.h.b16 %v3593
        %v3863 = vunpack.c.l.b16 %v3594
        %v3864 = vunpack.c.h.b16 %v3594
        %v3865 = vunpack.c.l.b16 %v3595
        %v3866 = vunpack.c.h.b16 %v3595
        %v3867 = vunpack.c.l.b16 %v3596
        %v3868 = vunpack.c.h.b16 %v3596
        %v3869 = vunpack.c.l.b16 %v3597
        %v3870 = vunpack.c.h.b16 %v3597
        %v3871 = vunpack.c.l.b16 %v3598
        %v3872 = vunpack.c.h.b16 %v3598
        %v3873 = vunpack.c.l.b16 %v3599
        %v3874 = vunpack.c.h.b16 %v3599
        %v3875 = vunpack.c.l.b16 %v3600
        %v3876 = vunpack.c.h.b16 %v3600
        %v3877 = vunpack.c.l.b16 %v3601
        %v3878 = vunpack.c.h.b16 %v3601
        %v3879 = vunpack.c.l.b16 %v3602
        %v3880 = vunpack.c.h.b16 %v3602
        %v3881 = vunpack.c.l.b16 %v3603
        %v3882 = vunpack.c.h.b16 %v3603
        %v3883 = vunpack.c.l.b16 %v3604
        %v3884 = vunpack.c.h.b16 %v3604
        %v3885 = vunpack.c.l.b16 %v3605
        %v3886 = vunpack.c.h.b16 %v3605
        %v3887 = vunpack.c.l.b16 %v3606
        %v3888 = vunpack.c.h.b16 %v3606
        %v3889 = vunpack.c.l.b16 %v3607
        %v3890 = vunpack.c.h.b16 %v3607
        %v3891 = vunpack.c.l.b16 %v3608
        %v3892 = vunpack.c.h.b16 %v3608
        %v3893 = vunpack.c.l.b16 %v3609
        %v3894 = vunpack.c.h.b16 %v3609
        %v3895 = vunpack.c.l.b16 %v3610
        %v3896 = vunpack.c.h.b16 %v3610
        %v3897 = vunpack.c.l.b16 %v3611
        %v3898 = vunpack.c.h.b16 %v3611
        %v3899 = vunpack.c.l.b16 %v3612
        %v3900 = vunpack.c.h.b16 %v3612
        %v3901 = vunpack.c.l.b16 %v3613
        %v3902 = vunpack.c.h.b16 %v3613
        %v3903 = vunpack.c.l.b16 %v3614
        %v3904 = vunpack.c.h.b16 %v3614
        %v3905 = vunpack.c.l.b16 %v3615
        %v3906 = vunpack.c.h.b16 %v3615
        %v3907 = vunpack.c.l.b16 %v3616
        %v3908 = vunpack.c.h.b16 %v3616
        %v3909 = vunpack.c.l.b16 %v3617
        %v3910 = vunpack.c.h.b16 %v3617
        %v3911 = vunpack.c.l.b16 %v3618
        %v3912 = vunpack.c.h.b16 %v3618
        %v3913 = vunpack.c.l.b16 %v3619
        %v3914 = vunpack.c.h.b16 %v3619
        %v3915 = vunpack.c.l.b16 %v3620
        %v3916 = vunpack.c.h.b16 %v3620
        %v3917 = vunpack.c.l.b16 %v3621
        %v3918 = vunpack.c.h.b16 %v3621
        %v3919 = vunpack.c.l.b16 %v3622
        %v3920 = vunpack.c.h.b16 %v3622
        %v3921 = vunpack.c.l.b16 %v3623
        %v3922 = vunpack.c.h.b16 %v3623
        %v3923 = vunpack.c.l.b16 %v3624
        %v3924 = vunpack.c.h.b16 %v3624
        %v3925 = vunpack.c.l.b16 %v3625
        %v3926 = vunpack.c.h.b16 %v3625
        %v3927 = vunpack.c.l.b16 %v3626
        %v3928 = vunpack.c.h.b16 %v3626
        %v3929 = vunpack.c.l.b16 %v3627
        %v3930 = vunpack.c.h.b16 %v3627
        %v3931 = vunpack.c.l.b16 %v3628
        %v3932 = vunpack.c.h.b16 %v3628
        %v3933 = vunpack.c.l.b16 %v3629
        %v3934 = vunpack.c.h.b16 %v3629
        %v3935 = vunpack.c.l.b16 %v3630
        %v3936 = vunpack.c.h.b16 %v3630
        %v3937 = vunpack.c.l.b16 %v3631
        %v3938 = vunpack.c.h.b16 %v3631
        %v3939 = vunpack.c.l.b16 %v3632
        %v3940 = vunpack.c.h.b16 %v3632
        %v3941 = vunpack.c.l.b16 %v3633
        %v3942 = vunpack.c.h.b16 %v3633
        %v3943 = vunpack.c.l.b16 %v3634
        %v3944 = vunpack.c.h.b16 %v3634
        %v3945 = vunpack.c.l.b16 %v3635
        %v3946 = vunpack.c.h.b16 %v3635
        %v3947 = vunpack.c.l.b16 %v3636
        %v3948 = vunpack.c.h.b16 %v3636
        %v3949 = vunpack.c.l.b16 %v3637
        %v3950 = vunpack.c.h.b16 %v3637
        %v3951 = vunpack.c.l.b16 %v3638
        %v3952 = vunpack.c.h.b16 %v3638
        %v3953 = vunpack.c.l.b16 %v3639
        %v3954 = vunpack.c.h.b16 %v3639
        %v3955 = vunpack.c.l.b16 %v3640
        %v3956 = vunpack.c.h.b16 %v3640
        %v3957 = vunpack.c.l.b16 %v3641
        %v3958 = vunpack.c.h.b16 %v3641
        %v3959 = vunpack.c.l.b16 %v3642
        %v3960 = vunpack.c.h.b16 %v3642
        %v3961 = vunpack.c.l.b16 %v3643
        %v3962 = vunpack.c.h.b16 %v3643
        %v3963 = vunpack.c.l.b16 %v3644
        %v3964 = vunpack.c.h.b16 %v3644
        %v3965 = vunpack.c.l.b16 %v3645
        %v3966 = vunpack.c.h.b16 %v3645
        %v3967 = vunpack.c.l.b16 %v3646
        %v3968 = vunpack.c.h.b16 %v3646
        %v3969 = vunpack.c.l.b16 %v3647
        %v3970 = vunpack.c.h.b16 %v3647
        %v3971 = vunpack.c.l.b16 %v3648
        %v3972 = vunpack.c.h.b16 %v3648
        %v3973 = vunpack.c.l.b16 %v3649
        %v3974 = vunpack.c.h.b16 %v3649
        %v3975 = vunpack.c.l.b16 %v3650
        %v3976 = vunpack.c.h.b16 %v3650
        %v3977 = vunpack.c.l.b16 %v3651
        %v3978 = vunpack.c.h.b16 %v3651
        %v3979 = vunpack.c.l.b16 %v3652
        %v3980 = vunpack.c.h.b16 %v3652
        %v3981 = vunpack.c.l.b16 %v3653
        %v3982 = vunpack.c.h.b16 %v3653
        %v3983 = vunpack.c.l.b16 %v3654
        %v3984 = vunpack.c.h.b16 %v3654
        %v3985 = vunpack.c.l.b16 %v3655
        %v3986 = vunpack.c.h.b16 %v3655
        %v3987 = vunpack.c.l.b16 %v3656
        %v3988 = vunpack.c.h.b16 %v3656
        %v3989 = vunpack.c.l.b16 %v3657
        %v3990 = vunpack.c.h.b16 %v3657
        %v3991 = vunpack.c.l.b16 %v3658
        %v3992 = vunpack.c.h.b16 %v3658
        %v3993 = vunpack.c.l.b16 %v3659
        %v3994 = vunpack.c.h.b16 %v3659
        %v3995 = vunpack.c.l.b16 %v3660
        %v3996 = vunpack.c.h.b16 %v3660
        %v3997 = vunpack.c.l.b16 %v3661
        %v3998 = vunpack.c.h.b16 %v3661
        %v3999 = vunpack.c.l.b16 %v3662
        %v4000 = vunpack.c.h.b16 %v3662
        %v4001 = vunpack.c.l.b16 %v3663
        %v4002 = vunpack.c.h.b16 %v3663
        %v4003 = vunpack.c.l.b16 %v3664
        %v4004 = vunpack.c.h.b16 %v3664
        %v4005 = vunpack.c.l.b16 %v3665
        %v4006 = vunpack.c.h.b16 %v3665
        %v4007 = vunpack.c.l.b16 %v3666
        %v4008 = vunpack.c.h.b16 %v3666
        %v4009 = vunpack.c.l.b16 %v3667
        %v4010 = vunpack.c.h.b16 %v3667
        %v4011 = vunpack.c.l.b16 %v3668
        %v4012 = vunpack.c.h.b16 %v3668
        %v4013 = vunpack.c.l.b16 %v3669
        %v4014 = vunpack.c.h.b16 %v3669
        %v4015 = vunpack.c.l.b16 %v3670
        %v4016 = vunpack.c.h.b16 %v3670
        %v4017 = vunpack.c.l.b16 %v3671
        %v4018 = vunpack.c.h.b16 %v3671
        %v4019 = vunpack.c.l.b16 %v3672
        %v4020 = vunpack.c.h.b16 %v3672
        %v4021 = vunpack.c.l.b16 %v3673
        %v4022 = vunpack.c.h.b16 %v3673
        %v4023 = vunpack.c.l.b16 %v3674
        %v4024 = vunpack.c.h.b16 %v3674
        %v4025 = vunpack.c.l.b16 %v3675
        %v4026 = vunpack.c.h.b16 %v3675
        %v4027 = vunpack.c.l.b16 %v3676
        %v4028 = vunpack.c.h.b16 %v3676
        %v4029 = vunpack.c.l.b16 %v3677
        %v4030 = vunpack.c.h.b16 %v3677
        %v4031 = vunpack.c.l.b16 %v3678
        %v4032 = vunpack.c.h.b16 %v3678
        %v4033 = vunpack.c.l.b16 %v3679
        %v4034 = vunpack.c.h.b16 %v3679
        %v4035 = vunpack.c.l.b16 %v3680
        %v4036 = vunpack.c.h.b16 %v3680
        %v4037 = vunpack.c.l.b16 %v3681
        %v4038 = vunpack.c.h.b16 %v3681
        %v4039 = vunpack.c.l.b16 %v3682
        %v4040 = vunpack.c.h.b16 %v3682
        %v4041 = vunpack.c.l.b16 %v3683
        %v4042 = vunpack.c.h.b16 %v3683
        %v4043 = vunpack.c.l.b16 %v3684
        %v4044 = vunpack.c.h.b16 %v3684
        %v4045 = vunpack.c.l.b16 %v3685
        %v4046 = vunpack.c.h.b16 %v3685
        %v4047 = vunpack.c.l.b16 %v3686
        %v4048 = vunpack.c.h.b16 %v3686
        %v4049 = vunpack.c.l.b16 %v3687
        %v4050 = vunpack.c.h.b16 %v3687
        %v4051 = vunpack.c.l.b16 %v3688
        %v4052 = vunpack.c.h.b16 %v3688
        %v4053 = vunpack.c.l.b16 %v3689
        %v4054 = vunpack.c.h.b16 %v3689
        %v4055 = vunpack.c.l.b16 %v3690
        %v4056 = vunpack.c.h.b16 %v3690
        %v4057 = vunpack.c.l.b16 %v3691
        %v4058 = vunpack.c.h.b16 %v3691
        %v4059 = vunpack.c.l.b16 %v3692
        %v4060 = vunpack.c.h.b16 %v3692
        %v4061 = vunpack.c.l.b16 %v3693
        %v4062 = vunpack.c.h.b16 %v3693
        %v4063 = vunpack.c.l.b16 %v3694
        %v4064 = vunpack.c.h.b16 %v3694
        %v4065 = vunpack.c.l.b16 %v3695
        %v4066 = vunpack.c.h.b16 %v3695
        %v4067 = vunpack.c.l.b16 %v3696
        %v4068 = vunpack.c.h.b16 %v3696
        %v4069 = vunpack.c.l.b16 %v3697
        %v4070 = vunpack.c.h.b16 %v3697
        %v4071 = vunpack.c.l.b16 %v3698
        %v4072 = vunpack.c.h.b16 %v3698
        %v4073 = vunpack.c.l.b16 %v3699
        %v4074 = vunpack.c.h.b16 %v3699
        %v4075 = vunpack.c.l.b16 %v3700
        %v4076 = vunpack.c.h.b16 %v3700
        %v4077 = vunpack.c.l.b16 %v3701
        %v4078 = vunpack.c.h.b16 %v3701
        %v4079 = vunpack.c.l.b16 %v3702
        %v4080 = vunpack.c.h.b16 %v3702
        %v4081 = vunpack.c.l.b16 %v3703
        %v4082 = vunpack.c.h.b16 %v3703
        %v4083 = vunpack.c.l.b16 %v3704
        %v4084 = vunpack.c.h.b16 %v3704
        %v4085 = vunpack.c.l.b16 %v3705
        %v4086 = vunpack.c.h.b16 %v3705
        %v4087 = vunpack.c.l.b16 %v3706
        %v4088 = vunpack.c.h.b16 %v3706
        %v4089 = vunpack.c.l.b16 %v3707
        %v4090 = vunpack.c.h.b16 %v3707
        %v4091 = vunpack.c.l.b16 %v3708
        %v4092 = vunpack.c.h.b16 %v3708
        %v4093 = vpack.c.b16 %v3841, %v3837
        %v4094 = vpack.c.b16 %v3842, %v3838
        %v4095 = vpack.c.b16 %v3843, %v3839
        %v4096 = vpack.c.b16 %v3844, %v3840
        %v4097 = vpack.c.b16 %v3849, %v3845
        %v4098 = vpack.c.b16 %v3850, %v3846
        %v4099 = vpack.c.b16 %v3851, %v3847
        %v4100 = vpack.c.b16 %v3852, %v3848
        %v4101 = vpack.c.b16 %v3857, %v3853
        %v4102 = vpack.c.b16 %v3858, %v3854
        %v4103 = vpack.c.b16 %v3859, %v3855
        %v4104 = vpack.c.b16 %v3860, %v3856
        %v4105 = vpack.c.b16 %v3865, %v3861
        %v4106 = vpack.c.b16 %v3866, %v3862
        %v4107 = vpack.c.b16 %v3867, %v3863
        %v4108 = vpack.c.b16 %v3868, %v3864
        %v4109 = vpack.c.b16 %v3873, %v3869
        %v4110 = vpack.c.b16 %v3874, %v3870
        %v4111 = vpack.c.b16 %v3875, %v3871
        %v4112 = vpack.c.b16 %v3876, %v3872
        %v4113 = vpack.c.b16 %v3881, %v3877
        %v4114 = vpack.c.b16 %v3882, %v3878
        %v4115 = vpack.c.b16 %v3883, %v3879
        %v4116 = vpack.c.b16 %v3884, %v3880
        %v4117 = vpack.c.b16 %v3889, %v3885
        %v4118 = vpack.c.b16 %v3890, %v3886
        %v4119 = vpack.c.b16 %v3891, %v3887
        %v4120 = vpack.c.b16 %v3892, %v3888
        %v4121 = vpack.c.b16 %v3897, %v3893
        %v4122 = vpack.c.b16 %v3898, %v3894
        %v4123 = vpack.c.b16 %v3899, %v3895
        %v4124 = vpack.c.b16 %v3900, %v3896
        %v4125 = vpack.c.b16 %v3905, %v3901
        %v4126 = vpack.c.b16 %v3906, %v3902
        %v4127 = vpack.c.b16 %v3907, %v3903
        %v4128 = vpack.c.b16 %v3908, %v3904
        %v4129 = vpack.c.b16 %v3913, %v3909
        %v4130 = vpack.c.b16 %v3914, %v3910
        %v4131 = vpack.c.b16 %v3915, %v3911
        %v4132 = vpack.c.b16 %v3916, %v3912
        %v4133 = vpack.c.b16 %v3921, %v3917
        %v4134 = vpack.c.b16 %v3922, %v3918
        %v4135 = vpack.c.b16 %v3923, %v3919
        %v4136 = vpack.c.b16 %v3924, %v3920
        %v4137 = vpack.c.b16 %v3929, %v3925
        %v4138 = vpack.c.b16 %v3930, %v3926
        %v4139 = vpack.c.b16 %v3931, %v3927
        %v4140 = vpack.c.b16 %v3932, %v3928
        %v4141 = vpack.c.b16 %v3937, %v3933
        %v4142 = vpack.c.b16 %v3938, %v3934
        %v4143 = vpack.c.b16 %v3939, %v3935
        %v4144 = vpack.c.b16 %v3940, %v3936
        %v4145 = vpack.c.b16 %v3945, %v3941
        %v4146 = vpack.c.b16 %v3946, %v3942
        %v4147 = vpack.c.b16 %v3947, %v3943
        %v4148 = vpack.c.b16 %v3948, %v3944
        %v4149 = vpack.c.b16 %v3953, %v3949
        %v4150 = vpack.c.b16 %v3954, %v3950
        %v4151 = vpack.c.b16 %v3955, %v3951
        %v4152 = vpack.c.b16 %v3956, %v3952
        %v4153 = vpack.c.b16 %v3961, %v3957
        %v4154 = vpack.c.b16 %v3962, %v3958
        %v4155 = vpack.c.b16 %v3963, %v3959
        %v4156 = vpack.c.b16 %v3964, %v3960
        %v4157 = vpack.c.b16 %v3969, %v3965
        %v4158 = vpack.c.b16 %v3970, %v3966
        %v4159 = vpack.c.b16 %v3971, %v3967
        %v4160 = vpack.c.b16 %v3972, %v3968
        %v4161 = vpack.c.b16 %v3977, %v3973
        %v4162 = vpack.c.b16 %v3978, %v3974
        %v4163 = vpack.c.b16 %v3979, %v3975
        %v4164 = vpack.c.b16 %v3980, %v3976
        %v4165 = vpack.c.b16 %v3985, %v3981
        %v4166 = vpack.c.b16 %v3986, %v3982
        %v4167 = vpack.c.b16 %v3987, %v3983
        %v4168 = vpack.c.b16 %v3988, %v3984
        %v4169 = vpack.c.b16 %v3993, %v3989
        %v4170 = vpack.c.b16 %v3994, %v3990
        %v4171 = vpack.c.b16 %v3995, %v3991
        %v4172 = vpack.c.b16 %v3996, %v3992
        %v4173 = vpack.c.b16 %v4001, %v3997
        %v4174 = vpack.c.b16 %v4002, %v3998
        %v4175 = vpack.c.b16 %v4003, %v3999
        %v4176 = vpack.c.b16 %v4004, %v4000
        %v4177 = vpack.c.b16 %v4009, %v4005
        %v4178 = vpack.c.b16 %v4010, %v4006
        %v4179 = vpack.c.b16 %v4011, %v4007
        %v4180 = vpack.c.b16 %v4012, %v4008
        %v4181 = vpack.c.b16 %v4017, %v4013
        %v4182 = vpack.c.b16 %v4018, %v4014
        %v4183 = vpack.c.b16 %v4019, %v4015
        %v4184 = vpack.c.b16 %v4020, %v4016
        %v4185 = vpack.c.b16 %v4025, %v4021
        %v4186 = vpack.c.b16 %v4026, %v4022
        %v4187 = vpack.c.b16 %v4027, %v4023
        %v4188 = vpack.c.b16 %v4028, %v4024
        %v4189 = vpack.c.b16 %v4033, %v4029
        %v4190 = vpack.c.b16 %v4034, %v4030
        %v4191 = vpack.c.b16 %v4035, %v4031
        %v4192 = vpack.c.b16 %v4036, %v4032
        %v4193 = vpack.c.b16 %v4041, %v4037
        %v4194 = vpack.c.b16 %v4042, %v4038
        %v4195 = vpack.c.b16 %v4043, %v4039
        %v4196 = vpack.c.b16 %v4044, %v4040
        %v4197 = vpack.c.b16 %v4049, %v4045
        %v4198 = vpack.c.b16 %v4050, %v4046
        %v4199 = vpack.c.b16 %v4051, %v4047
        %v4200 = vpack.c.b16 %v4052, %v4048
        %v4201 = vpack.c.b16 %v4057, %v4053
        %v4202 = vpack.c.b16 %v4058, %v4054
        %v4203 = vpack.c.b16 %v4059, %v4055
        %v4204 = vpack.c.b16 %v4060, %v4056
        %v4205 = vpack.c.b16 %v4065, %v4061
        %v4206 = vpack.c.b16 %v4066, %v4062
        %v4207 = vpack.c.b16 %v4067, %v4063
        %v4208 = vpack.c.b16 %v4068, %v4064
        %v4209 = vpack.c.b16 %v4073, %v4069
        %v4210 = vpack.c.b16 %v4074, %v4070
        %v4211 = vpack.c.b16 %v4075, %v4071
        %v4212 = vpack.c.b16 %v4076, %v4072
        %v4213 = vpack.c.b16 %v4081, %v4077
        %v4214 = vpack.c.b16 %v4082, %v4078
        %v4215 = vpack.c.b16 %v4083, %v4079
        %v4216 = vpack.c.b16 %v4084, %v4080
        %v4217 = vpack.c.b16 %v4089, %v4085
        %v4218 = vpack.c.b16 %v4090, %v4086
        %v4219 = vpack.c.b16 %v4091, %v4087
        %v4220 = vpack.c.b16 %v4092, %v4088
        %4349 = vmatprep.subr.bf16.mxu0 %v4094
        %4350 = vmatpush1.bf16.msra.mxu0 %v4093
        %4351 = vmatprep.subr.bf16.mxu0 %v4098
        %4352 = vmatpush1.bf16.msra.mxu0 %v4097
        %4353 = vmatprep.subr.bf16.mxu0 %v4102
        %4354 = vmatpush1.bf16.msra.mxu0 %v4101
        %4355 = vmatprep.subr.bf16.mxu0 %v4106
        %4356 = vmatpush1.bf16.msra.mxu0 %v4105
        %4357 = vmatprep.subr.bf16.mxu0 %v4110
        %4358 = vmatpush1.bf16.msra.mxu0 %v4109
        %4359 = vmatprep.subr.bf16.mxu0 %v4114
        %4360 = vmatpush1.bf16.msra.mxu0 %v4113
        %4361 = vmatprep.subr.bf16.mxu0 %v4118
        %4362 = vmatpush1.bf16.msra.mxu0 %v4117
        %4363 = vmatprep.subr.bf16.mxu0 %v4122
        %4364 = vmatpush1.bf16.msra.mxu0 %v4121
        %4365 = vmatprep.subr.bf16.mxu0 %v4126
        %4366 = vmatpush1.bf16.msra.mxu0 %v4125
        %4367 = vmatprep.subr.bf16.mxu0 %v4130
        %4368 = vmatpush1.bf16.msra.mxu0 %v4129
        %4369 = vmatprep.subr.bf16.mxu0 %v4134
        %4370 = vmatpush1.bf16.msra.mxu0 %v4133
        %4371 = vmatprep.subr.bf16.mxu0 %v4138
        %4372 = vmatpush1.bf16.msra.mxu0 %v4137
        %4373 = vmatprep.subr.bf16.mxu0 %v4142
        %4374 = vmatpush1.bf16.msra.mxu0 %v4141
        %4375 = vmatprep.subr.bf16.mxu0 %v4146
        %4376 = vmatpush1.bf16.msra.mxu0 %v4145
        %4377 = vmatprep.subr.bf16.mxu0 %v4150
        %4378 = vmatpush1.bf16.msra.mxu0 %v4149
        %4379 = vmatprep.subr.bf16.mxu0 %v4154
        %4380 = vmatpush1.bf16.msra.mxu0 %v4153
        %4381 = vmatprep.mubr.bf16.mxu0 %v3577
        %4382 = vmatmul.mubr.bf16.gmra.mrb[0].mxu0 %v3576
        %v4383 = vpop.f32.mrb[0].mxu0
        %v4384 = vadd.f32 0.0, %v4383
        %v4385 = vpop.f32.mrb[0].mxu0
        %v4386 = vadd.f32 0.0, %v4385
        %v4387 = vpop.f32.mrb[0].mxu0
        %v4388 = vadd.f32 0.0, %v4387
        %v4389 = vpop.f32.mrb[0].mxu0
        %v4390 = vadd.f32 0.0, %v4389
        %4391 = vdwg.mxu0
        %4392 = vmatprep.subr.bf16.mxu0 %v4158
        %4393 = vmatpush1.bf16.msra.mxu0 %v4157
        %4394 = vmatprep.subr.bf16.mxu0 %v4162
        %4395 = vmatpush1.bf16.msra.mxu0 %v4161
        %4396 = vmatprep.subr.bf16.mxu0 %v4166
        %4397 = vmatpush1.bf16.msra.mxu0 %v4165
        %4398 = vmatprep.subr.bf16.mxu0 %v4170
        %4399 = vmatpush1.bf16.msra.mxu0 %v4169
        %4400 = vmatprep.subr.bf16.mxu0 %v4174
        %4401 = vmatpush1.bf16.msra.mxu0 %v4173
        %4402 = vmatprep.subr.bf16.mxu0 %v4178
        %4403 = vmatpush1.bf16.msra.mxu0 %v4177
        %4404 = vmatprep.subr.bf16.mxu0 %v4182
        %4405 = vmatpush1.bf16.msra.mxu0 %v4181
        %4406 = vmatprep.subr.bf16.mxu0 %v4186
        %4407 = vmatpush1.bf16.msra.mxu0 %v4185
        %4408 = vmatprep.subr.bf16.mxu0 %v4190
        %4409 = vmatpush1.bf16.msra.mxu0 %v4189
        %4410 = vmatprep.subr.bf16.mxu0 %v4194
        %4411 = vmatpush1.bf16.msra.mxu0 %v4193
        %4412 = vmatprep.subr.bf16.mxu0 %v4198
        %4413 = vmatpush1.bf16.msra.mxu0 %v4197
        %4414 = vmatprep.subr.bf16.mxu0 %v4202
        %4415 = vmatpush1.bf16.msra.mxu0 %v4201
        %4416 = vmatprep.subr.bf16.mxu0 %v4206
        %4417 = vmatpush1.bf16.msra.mxu0 %v4205
        %4418 = vmatprep.subr.bf16.mxu0 %v4210
        %4419 = vmatpush1.bf16.msra.mxu0 %v4209
        %4420 = vmatprep.subr.bf16.mxu0 %v4214
        %4421 = vmatpush1.bf16.msra.mxu0 %v4213
        %4422 = vmatprep.subr.bf16.mxu0 %v4218
        %4423 = vmatpush1.bf16.msra.mxu0 %v4217
        %4424 = vmatprep.mubr.bf16.mxu0 %v3579
        %4425 = vmatmul.mubr.bf16.gmra.mrb[0].mxu0 %v3578
        %v4426 = vpop.f32.mrb[0].mxu0
        %v4427 = vadd.f32 %v4384, %v4426
        %v4428 = vpop.f32.mrb[0].mxu0
        %v4429 = vadd.f32 %v4386, %v4428
        %v4430 = vpop.f32.mrb[0].mxu0
        %v4431 = vadd.f32 %v4388, %v4430
        %v4432 = vpop.f32.mrb[0].mxu0
        %v4433 = vadd.f32 %v4390, %v4432
        %4434 = vdwg.mxu0
        %4435 = vmatprep.subr.bf16.mxu0 %v4096
        %4436 = vmatpush1.bf16.msra.mxu0 %v4095
        %4437 = vmatprep.subr.bf16.mxu0 %v4100
        %4438 = vmatpush1.bf16.msra.mxu0 %v4099
        %4439 = vmatprep.subr.bf16.mxu0 %v4104
        %4440 = vmatpush1.bf16.msra.mxu0 %v4103
        %4441 = vmatprep.subr.bf16.mxu0 %v4108
        %4442 = vmatpush1.bf16.msra.mxu0 %v4107
        %4443 = vmatprep.subr.bf16.mxu0 %v4112
        %4444 = vmatpush1.bf16.msra.mxu0 %v4111
        %4445 = vmatprep.subr.bf16.mxu0 %v4116
        %4446 = vmatpush1.bf16.msra.mxu0 %v4115
        %4447 = vmatprep.subr.bf16.mxu0 %v4120
        %4448 = vmatpush1.bf16.msra.mxu0 %v4119
        %4449 = vmatprep.subr.bf16.mxu0 %v4124
        %4450 = vmatpush1.bf16.msra.mxu0 %v4123
        %4451 = vmatprep.subr.bf16.mxu0 %v4128
        %4452 = vmatpush1.bf16.msra.mxu0 %v4127
        %4453 = vmatprep.subr.bf16.mxu0 %v4132
        %4454 = vmatpush1.bf16.msra.mxu0 %v4131
        %4455 = vmatprep.subr.bf16.mxu0 %v4136
        %4456 = vmatpush1.bf16.msra.mxu0 %v4135
        %4457 = vmatprep.subr.bf16.mxu0 %v4140
        %4458 = vmatpush1.bf16.msra.mxu0 %v4139
        %4459 = vmatprep.subr.bf16.mxu0 %v4144
        %4460 = vmatpush1.bf16.msra.mxu0 %v4143
        %4461 = vmatprep.subr.bf16.mxu0 %v4148
        %4462 = vmatpush1.bf16.msra.mxu0 %v4147
        %4463 = vmatprep.subr.bf16.mxu0 %v4152
        %4464 = vmatpush1.bf16.msra.mxu0 %v4151
        %4465 = vmatprep.subr.bf16.mxu0 %v4156
        %4466 = vmatpush1.bf16.msra.mxu0 %v4155
        %4467 = vmatprep.mubr.bf16.mxu0 %v3577
        %4468 = vmatmul.mubr.bf16.gmra.mrb[0].mxu0 %v3576
        %v4469 = vpop.f32.mrb[0].mxu0
        %v4470 = vadd.f32 0.0, %v4469
        %v4471 = vpop.f32.mrb[0].mxu0
        %v4472 = vadd.f32 0.0, %v4471
        %v4473 = vpop.f32.mrb[0].mxu0
        %v4474 = vadd.f32 0.0, %v4473
        %v4475 = vpop.f32.mrb[0].mxu0
        %v4476 = vadd.f32 0.0, %v4475
        %4477 = vdwg.mxu0
        %4478 = vmatprep.subr.bf16.mxu0 %v4160
        %4479 = vmatpush1.bf16.msra.mxu0 %v4159
        %4480 = vmatprep.subr.bf16.mxu0 %v4164
        %4481 = vmatpush1.bf16.msra.mxu0 %v4163
        %4482 = vmatprep.subr.bf16.mxu0 %v4168
        %4483 = vmatpush1.bf16.msra.mxu0 %v4167
        %4484 = vmatprep.subr.bf16.mxu0 %v4172
        %4485 = vmatpush1.bf16.msra.mxu0 %v4171
        %4486 = vmatprep.subr.bf16.mxu0 %v4176
        %4487 = vmatpush1.bf16.msra.mxu0 %v4175
        %4488 = vmatprep.subr.bf16.mxu0 %v4180
        %4489 = vmatpush1.bf16.msra.mxu0 %v4179
        %4490 = vmatprep.subr.bf16.mxu0 %v4184
        %4491 = vmatpush1.bf16.msra.mxu0 %v4183
        %4492 = vmatprep.subr.bf16.mxu0 %v4188
        %4493 = vmatpush1.bf16.msra.mxu0 %v4187
        %4494 = vmatprep.subr.bf16.mxu0 %v4192
        %4495 = vmatpush1.bf16.msra.mxu0 %v4191
        %4496 = vmatprep.subr.bf16.mxu0 %v4196
        %4497 = vmatpush1.bf16.msra.mxu0 %v4195
        %4498 = vmatprep.subr.bf16.mxu0 %v4200
        %4499 = vmatpush1.bf16.msra.mxu0 %v4199
        %4500 = vmatprep.subr.bf16.mxu0 %v4204
        %4501 = vmatpush1.bf16.msra.mxu0 %v4203
        %4502 = vmatprep.subr.bf16.mxu0 %v4208
        %4503 = vmatpush1.bf16.msra.mxu0 %v4207
        %4504 = vmatprep.subr.bf16.mxu0 %v4212
        %4505 = vmatpush1.bf16.msra.mxu0 %v4211
        %4506 = vmatprep.subr.bf16.mxu0 %v4216
        %4507 = vmatpush1.bf16.msra.mxu0 %v4215
        %4508 = vmatprep.subr.bf16.mxu0 %v4220
        %4509 = vmatpush1.bf16.msra.mxu0 %v4219
        %4510 = vmatprep.mubr.bf16.mxu0 %v3579
        %4511 = vmatmul.mubr.bf16.gmra.mrb[0].mxu0 %v3578
        %v4512 = vpop.f32.mrb[0].mxu0
        %v4513 = vadd.f32 %v4470, %v4512
        %v4514 = vpop.f32.mrb[0].mxu0
        %v4515 = vadd.f32 %v4472, %v4514
        %v4516 = vpop.f32.mrb[0].mxu0
        %v4517 = vadd.f32 %v4474, %v4516
        %v4518 = vpop.f32.mrb[0].mxu0
        %v4519 = vadd.f32 %v4476, %v4518
        %4520 = vdwg.mxu0
        %v4521 = vpack.c.bf16 %v4431, %v4427
        %v4522 = vpack.c.bf16 %v4433, %v4429
        %v4523 = vpack.c.bf16 %v4517, %v4513
        %v4524 = vpack.c.bf16 %v4519, %v4515
        %s4525 = scalar_lea.vmem %s4, 12
        %v4526 = vld [vmem:[%s4525] sm:$0xf]
        %v4529 = vunpack.c.l.s4 1966171168
        %v4530 = vunpack.c.0.s8 %v4529
        %v4531 = vlaneseq
        %v4532 = vshrl.u32 %v4531, 7
        %v4533 = vsub.s32 %v4530, %v4532
        %v4534 = vrot.slane %v4526, %v4533
        %v4535 = vcombine.high %v4534, %v4534
        %v4537 = vunpack.c.l.s4 1966171168
        %v4538 = vunpack.c.0.s8 %v4537
        %v4539 = vlaneseq
        %v4540 = vshrl.u32 %v4539, 7
        %v4541 = vsub.s32 %v4538, %v4540
        %v4542 = vrot.slane %v4534, %v4541
        %v4544 = vunpack.c.l.s4 1966171168
        %v4545 = vunpack.c.0.s8 %v4544
        %v4546 = vlaneseq
        %v4547 = vshrl.u32 %v4546, 7
        %v4548 = vsub.s32 %v4545, %v4547
        %v4549 = vrot.slane %v4535, %v4548
        %v4550 = vcombine.high %v4542, %v4542
        %v4551 = vcombine.high %v4549, %v4549
        %v4553 = vpack.i.b16 %v4542, %v4542
        %v4555 = vlaneseq
        %v4556 = vshrl.u32 %v4555, 7
        %v4557 = vsub.s32 0, %v4556
        %v4558 = vrot.slane %v4553, %v4557
        %v4560 = vpack.i.b16 %v4549, %v4549
        %v4562 = vlaneseq
        %v4563 = vshrl.u32 %v4562, 7
        %v4564 = vsub.s32 0, %v4563
        %v4565 = vrot.slane %v4560, %v4564
        %v4567 = vpack.i.b16 %v4550, %v4550
        %v4569 = vlaneseq
        %v4570 = vshrl.u32 %v4569, 7
        %v4571 = vsub.s32 0, %v4570
        %v4572 = vrot.slane %v4567, %v4571
        %v4574 = vpack.i.b16 %v4551, %v4551
        %v4576 = vlaneseq
        %v4577 = vshrl.u32 %v4576, 7
        %v4578 = vsub.s32 0, %v4577
        %v4579 = vrot.slane %v4574, %v4578
        %v4580 = vadd.bf16 %v4521, %v4558
        %v4581 = vadd.bf16 %v4522, %v4565
        %v4582 = vadd.bf16 %v4523, %v4572
        %v4583 = vadd.bf16 %v4524, %v4579
        %v4584 = vmax.bf16 %v4580, 0
        %v4585 = vmax.bf16 %v4581, 0
        %v4586 = vmax.bf16 %v4582, 0
        %v4587 = vmax.bf16 %v4583, 0
        %s4588 = scalar_lea.vmem [#allocation7], 4096
        %v4589 = vld [vmem:[%s4588] sm:$0xff]
        %v4590 = vld [vmem:[%s4588 + $0x8] sm:$0xff]
        %v4591 = vld [vmem:[%s4588 + $0x10] sm:$0xff]
        %v4592 = vld [vmem:[%s4588 + $0x18] sm:$0xff]
        %v4593 = vld [vmem:[%s4588 + $0x20] sm:$0xff]
        %v4594 = vld [vmem:[%s4588 + $0x28] sm:$0xff]
        %v4595 = vld [vmem:[%s4588 + $0x30] sm:$0xff]
        %v4596 = vld [vmem:[%s4588 + $0x38] sm:$0xff]
        %v4597 = vld [vmem:[%s4588 + $0x40] sm:$0xff]
        %v4598 = vld [vmem:[%s4588 + $0x48] sm:$0xff]
        %v4599 = vld [vmem:[%s4588 + $0x50] sm:$0xff]
        %v4600 = vld [vmem:[%s4588 + $0x58] sm:$0xff]
        %v4601 = vld [vmem:[%s4588 + $0x60] sm:$0xff]
        %v4602 = vld [vmem:[%s4588 + $0x68] sm:$0xff]
        %v4603 = vld [vmem:[%s4588 + $0x70] sm:$0xff]
        %v4604 = vld [vmem:[%s4588 + $0x78] sm:$0xff]
        %v4605 = vld [vmem:[%s4588 + $0x80] sm:$0xff]
        %v4606 = vld [vmem:[%s4588 + $0x88] sm:$0xff]
        %v4607 = vld [vmem:[%s4588 + $0x90] sm:$0xff]
        %v4608 = vld [vmem:[%s4588 + $0x98] sm:$0xff]
        %v4609 = vld [vmem:[%s4588 + $0xa0] sm:$0xff]
        %v4610 = vld [vmem:[%s4588 + $0xa8] sm:$0xff]
        %v4611 = vld [vmem:[%s4588 + $0xb0] sm:$0xff]
        %v4612 = vld [vmem:[%s4588 + $0xb8] sm:$0xff]
        %v4613 = vld [vmem:[%s4588 + $0xc0] sm:$0xff]
        %v4614 = vld [vmem:[%s4588 + $0xc8] sm:$0xff]
        %v4615 = vld [vmem:[%s4588 + $0xd0] sm:$0xff]
        %v4616 = vld [vmem:[%s4588 + $0xd8] sm:$0xff]
        %v4617 = vld [vmem:[%s4588 + $0xe0] sm:$0xff]
        %v4618 = vld [vmem:[%s4588 + $0xe8] sm:$0xff]
        %v4619 = vld [vmem:[%s4588 + $0xf0] sm:$0xff]
        %v4620 = vld [vmem:[%s4588 + $0xf8] sm:$0xff]
        %v4621 = vld [vmem:[%s4588 + $0x100] sm:$0xff]
        %v4622 = vld [vmem:[%s4588 + $0x108] sm:$0xff]
        %v4623 = vld [vmem:[%s4588 + $0x110] sm:$0xff]
        %v4624 = vld [vmem:[%s4588 + $0x118] sm:$0xff]
        %v4625 = vld [vmem:[%s4588 + $0x120] sm:$0xff]
        %v4626 = vld [vmem:[%s4588 + $0x128] sm:$0xff]
        %v4627 = vld [vmem:[%s4588 + $0x130] sm:$0xff]
        %v4628 = vld [vmem:[%s4588 + $0x138] sm:$0xff]
        %v4629 = vld [vmem:[%s4588 + $0x140] sm:$0xff]
        %v4630 = vld [vmem:[%s4588 + $0x148] sm:$0xff]
        %v4631 = vld [vmem:[%s4588 + $0x150] sm:$0xff]
        %v4632 = vld [vmem:[%s4588 + $0x158] sm:$0xff]
        %v4633 = vld [vmem:[%s4588 + $0x160] sm:$0xff]
        %v4634 = vld [vmem:[%s4588 + $0x168] sm:$0xff]
        %v4635 = vld [vmem:[%s4588 + $0x170] sm:$0xff]
        %v4636 = vld [vmem:[%s4588 + $0x178] sm:$0xff]
        %v4637 = vld [vmem:[%s4588 + $0x180] sm:$0xff]
        %v4638 = vld [vmem:[%s4588 + $0x188] sm:$0xff]
        %v4639 = vld [vmem:[%s4588 + $0x190] sm:$0xff]
        %v4640 = vld [vmem:[%s4588 + $0x198] sm:$0xff]
        %v4641 = vld [vmem:[%s4588 + $0x1a0] sm:$0xff]
        %v4642 = vld [vmem:[%s4588 + $0x1a8] sm:$0xff]
        %v4643 = vld [vmem:[%s4588 + $0x1b0] sm:$0xff]
        %v4644 = vld [vmem:[%s4588 + $0x1b8] sm:$0xff]
        %v4645 = vld [vmem:[%s4588 + $0x1c0] sm:$0xff]
        %v4646 = vld [vmem:[%s4588 + $0x1c8] sm:$0xff]
        %v4647 = vld [vmem:[%s4588 + $0x1d0] sm:$0xff]
        %v4648 = vld [vmem:[%s4588 + $0x1d8] sm:$0xff]
        %v4649 = vld [vmem:[%s4588 + $0x1e0] sm:$0xff]
        %v4650 = vld [vmem:[%s4588 + $0x1e8] sm:$0xff]
        %v4651 = vld [vmem:[%s4588 + $0x1f0] sm:$0xff]
        %v4652 = vld [vmem:[%s4588 + $0x1f8] sm:$0xff]
        %v4653 = vld [vmem:[%s4588 + $0x200] sm:$0xff]
        %v4654 = vld [vmem:[%s4588 + $0x208] sm:$0xff]
        %v4655 = vld [vmem:[%s4588 + $0x210] sm:$0xff]
        %v4656 = vld [vmem:[%s4588 + $0x218] sm:$0xff]
        %v4657 = vld [vmem:[%s4588 + $0x220] sm:$0xff]
        %v4658 = vld [vmem:[%s4588 + $0x228] sm:$0xff]
        %v4659 = vld [vmem:[%s4588 + $0x230] sm:$0xff]
        %v4660 = vld [vmem:[%s4588 + $0x238] sm:$0xff]
        %v4661 = vld [vmem:[%s4588 + $0x240] sm:$0xff]
        %v4662 = vld [vmem:[%s4588 + $0x248] sm:$0xff]
        %v4663 = vld [vmem:[%s4588 + $0x250] sm:$0xff]
        %v4664 = vld [vmem:[%s4588 + $0x258] sm:$0xff]
        %v4665 = vld [vmem:[%s4588 + $0x260] sm:$0xff]
        %v4666 = vld [vmem:[%s4588 + $0x268] sm:$0xff]
        %v4667 = vld [vmem:[%s4588 + $0x270] sm:$0xff]
        %v4668 = vld [vmem:[%s4588 + $0x278] sm:$0xff]
        %v4669 = vld [vmem:[%s4588 + $0x280] sm:$0xff]
        %v4670 = vld [vmem:[%s4588 + $0x288] sm:$0xff]
        %v4671 = vld [vmem:[%s4588 + $0x290] sm:$0xff]
        %v4672 = vld [vmem:[%s4588 + $0x298] sm:$0xff]
        %v4673 = vld [vmem:[%s4588 + $0x2a0] sm:$0xff]
        %v4674 = vld [vmem:[%s4588 + $0x2a8] sm:$0xff]
        %v4675 = vld [vmem:[%s4588 + $0x2b0] sm:$0xff]
        %v4676 = vld [vmem:[%s4588 + $0x2b8] sm:$0xff]
        %v4677 = vld [vmem:[%s4588 + $0x2c0] sm:$0xff]
        %v4678 = vld [vmem:[%s4588 + $0x2c8] sm:$0xff]
        %v4679 = vld [vmem:[%s4588 + $0x2d0] sm:$0xff]
        %v4680 = vld [vmem:[%s4588 + $0x2d8] sm:$0xff]
        %v4681 = vld [vmem:[%s4588 + $0x2e0] sm:$0xff]
        %v4682 = vld [vmem:[%s4588 + $0x2e8] sm:$0xff]
        %v4683 = vld [vmem:[%s4588 + $0x2f0] sm:$0xff]
        %v4684 = vld [vmem:[%s4588 + $0x2f8] sm:$0xff]
        %v4685 = vld [vmem:[%s4588 + $0x300] sm:$0xff]
        %v4686 = vld [vmem:[%s4588 + $0x308] sm:$0xff]
        %v4687 = vld [vmem:[%s4588 + $0x310] sm:$0xff]
        %v4688 = vld [vmem:[%s4588 + $0x318] sm:$0xff]
        %v4689 = vld [vmem:[%s4588 + $0x320] sm:$0xff]
        %v4690 = vld [vmem:[%s4588 + $0x328] sm:$0xff]
        %v4691 = vld [vmem:[%s4588 + $0x330] sm:$0xff]
        %v4692 = vld [vmem:[%s4588 + $0x338] sm:$0xff]
        %v4693 = vld [vmem:[%s4588 + $0x340] sm:$0xff]
        %v4694 = vld [vmem:[%s4588 + $0x348] sm:$0xff]
        %v4695 = vld [vmem:[%s4588 + $0x350] sm:$0xff]
        %v4696 = vld [vmem:[%s4588 + $0x358] sm:$0xff]
        %v4697 = vld [vmem:[%s4588 + $0x360] sm:$0xff]
        %v4698 = vld [vmem:[%s4588 + $0x368] sm:$0xff]
        %v4699 = vld [vmem:[%s4588 + $0x370] sm:$0xff]
        %v4700 = vld [vmem:[%s4588 + $0x378] sm:$0xff]
        %v4701 = vld [vmem:[%s4588 + $0x380] sm:$0xff]
        %v4702 = vld [vmem:[%s4588 + $0x388] sm:$0xff]
        %v4703 = vld [vmem:[%s4588 + $0x390] sm:$0xff]
        %v4704 = vld [vmem:[%s4588 + $0x398] sm:$0xff]
        %v4705 = vld [vmem:[%s4588 + $0x3a0] sm:$0xff]
        %v4706 = vld [vmem:[%s4588 + $0x3a8] sm:$0xff]
        %v4707 = vld [vmem:[%s4588 + $0x3b0] sm:$0xff]
        %v4708 = vld [vmem:[%s4588 + $0x3b8] sm:$0xff]
        %v4709 = vld [vmem:[%s4588 + $0x3c0] sm:$0xff]
        %v4710 = vld [vmem:[%s4588 + $0x3c8] sm:$0xff]
        %v4711 = vld [vmem:[%s4588 + $0x3d0] sm:$0xff]
        %v4712 = vld [vmem:[%s4588 + $0x3d8] sm:$0xff]
        %v4713 = vld [vmem:[%s4588 + $0x3e0] sm:$0xff]
        %v4714 = vld [vmem:[%s4588 + $0x3e8] sm:$0xff]
        %v4715 = vld [vmem:[%s4588 + $0x3f0] sm:$0xff]
        %v4716 = vld [vmem:[%s4588 + $0x3f8] sm:$0xff]
        %v4845 = vunpack.c.l.b16 %v4589
        %v4846 = vunpack.c.h.b16 %v4589
        %v4847 = vunpack.c.l.b16 %v4590
        %v4848 = vunpack.c.h.b16 %v4590
        %v4849 = vunpack.c.l.b16 %v4591
        %v4850 = vunpack.c.h.b16 %v4591
        %v4851 = vunpack.c.l.b16 %v4592
        %v4852 = vunpack.c.h.b16 %v4592
        %v4853 = vunpack.c.l.b16 %v4593
        %v4854 = vunpack.c.h.b16 %v4593
        %v4855 = vunpack.c.l.b16 %v4594
        %v4856 = vunpack.c.h.b16 %v4594
        %v4857 = vunpack.c.l.b16 %v4595
        %v4858 = vunpack.c.h.b16 %v4595
        %v4859 = vunpack.c.l.b16 %v4596
        %v4860 = vunpack.c.h.b16 %v4596
        %v4861 = vunpack.c.l.b16 %v4597
        %v4862 = vunpack.c.h.b16 %v4597
        %v4863 = vunpack.c.l.b16 %v4598
        %v4864 = vunpack.c.h.b16 %v4598
        %v4865 = vunpack.c.l.b16 %v4599
        %v4866 = vunpack.c.h.b16 %v4599
        %v4867 = vunpack.c.l.b16 %v4600
        %v4868 = vunpack.c.h.b16 %v4600
        %v4869 = vunpack.c.l.b16 %v4601
        %v4870 = vunpack.c.h.b16 %v4601
        %v4871 = vunpack.c.l.b16 %v4602
        %v4872 = vunpack.c.h.b16 %v4602
        %v4873 = vunpack.c.l.b16 %v4603
        %v4874 = vunpack.c.h.b16 %v4603
        %v4875 = vunpack.c.l.b16 %v4604
        %v4876 = vunpack.c.h.b16 %v4604
        %v4877 = vunpack.c.l.b16 %v4605
        %v4878 = vunpack.c.h.b16 %v4605
        %v4879 = vunpack.c.l.b16 %v4606
        %v4880 = vunpack.c.h.b16 %v4606
        %v4881 = vunpack.c.l.b16 %v4607
        %v4882 = vunpack.c.h.b16 %v4607
        %v4883 = vunpack.c.l.b16 %v4608
        %v4884 = vunpack.c.h.b16 %v4608
        %v4885 = vunpack.c.l.b16 %v4609
        %v4886 = vunpack.c.h.b16 %v4609
        %v4887 = vunpack.c.l.b16 %v4610
        %v4888 = vunpack.c.h.b16 %v4610
        %v4889 = vunpack.c.l.b16 %v4611
        %v4890 = vunpack.c.h.b16 %v4611
        %v4891 = vunpack.c.l.b16 %v4612
        %v4892 = vunpack.c.h.b16 %v4612
        %v4893 = vunpack.c.l.b16 %v4613
        %v4894 = vunpack.c.h.b16 %v4613
        %v4895 = vunpack.c.l.b16 %v4614
        %v4896 = vunpack.c.h.b16 %v4614
        %v4897 = vunpack.c.l.b16 %v4615
        %v4898 = vunpack.c.h.b16 %v4615
        %v4899 = vunpack.c.l.b16 %v4616
        %v4900 = vunpack.c.h.b16 %v4616
        %v4901 = vunpack.c.l.b16 %v4617
        %v4902 = vunpack.c.h.b16 %v4617
        %v4903 = vunpack.c.l.b16 %v4618
        %v4904 = vunpack.c.h.b16 %v4618
        %v4905 = vunpack.c.l.b16 %v4619
        %v4906 = vunpack.c.h.b16 %v4619
        %v4907 = vunpack.c.l.b16 %v4620
        %v4908 = vunpack.c.h.b16 %v4620
        %v4909 = vunpack.c.l.b16 %v4621
        %v4910 = vunpack.c.h.b16 %v4621
        %v4911 = vunpack.c.l.b16 %v4622
        %v4912 = vunpack.c.h.b16 %v4622
        %v4913 = vunpack.c.l.b16 %v4623
        %v4914 = vunpack.c.h.b16 %v4623
        %v4915 = vunpack.c.l.b16 %v4624
        %v4916 = vunpack.c.h.b16 %v4624
        %v4917 = vunpack.c.l.b16 %v4625
        %v4918 = vunpack.c.h.b16 %v4625
        %v4919 = vunpack.c.l.b16 %v4626
        %v4920 = vunpack.c.h.b16 %v4626
        %v4921 = vunpack.c.l.b16 %v4627
        %v4922 = vunpack.c.h.b16 %v4627
        %v4923 = vunpack.c.l.b16 %v4628
        %v4924 = vunpack.c.h.b16 %v4628
        %v4925 = vunpack.c.l.b16 %v4629
        %v4926 = vunpack.c.h.b16 %v4629
        %v4927 = vunpack.c.l.b16 %v4630
        %v4928 = vunpack.c.h.b16 %v4630
        %v4929 = vunpack.c.l.b16 %v4631
        %v4930 = vunpack.c.h.b16 %v4631
        %v4931 = vunpack.c.l.b16 %v4632
        %v4932 = vunpack.c.h.b16 %v4632
        %v4933 = vunpack.c.l.b16 %v4633
        %v4934 = vunpack.c.h.b16 %v4633
        %v4935 = vunpack.c.l.b16 %v4634
        %v4936 = vunpack.c.h.b16 %v4634
        %v4937 = vunpack.c.l.b16 %v4635
        %v4938 = vunpack.c.h.b16 %v4635
        %v4939 = vunpack.c.l.b16 %v4636
        %v4940 = vunpack.c.h.b16 %v4636
        %v4941 = vunpack.c.l.b16 %v4637
        %v4942 = vunpack.c.h.b16 %v4637
        %v4943 = vunpack.c.l.b16 %v4638
        %v4944 = vunpack.c.h.b16 %v4638
        %v4945 = vunpack.c.l.b16 %v4639
        %v4946 = vunpack.c.h.b16 %v4639
        %v4947 = vunpack.c.l.b16 %v4640
        %v4948 = vunpack.c.h.b16 %v4640
        %v4949 = vunpack.c.l.b16 %v4641
        %v4950 = vunpack.c.h.b16 %v4641
        %v4951 = vunpack.c.l.b16 %v4642
        %v4952 = vunpack.c.h.b16 %v4642
        %v4953 = vunpack.c.l.b16 %v4643
        %v4954 = vunpack.c.h.b16 %v4643
        %v4955 = vunpack.c.l.b16 %v4644
        %v4956 = vunpack.c.h.b16 %v4644
        %v4957 = vunpack.c.l.b16 %v4645
        %v4958 = vunpack.c.h.b16 %v4645
        %v4959 = vunpack.c.l.b16 %v4646
        %v4960 = vunpack.c.h.b16 %v4646
        %v4961 = vunpack.c.l.b16 %v4647
        %v4962 = vunpack.c.h.b16 %v4647
        %v4963 = vunpack.c.l.b16 %v4648
        %v4964 = vunpack.c.h.b16 %v4648
        %v4965 = vunpack.c.l.b16 %v4649
        %v4966 = vunpack.c.h.b16 %v4649
        %v4967 = vunpack.c.l.b16 %v4650
        %v4968 = vunpack.c.h.b16 %v4650
        %v4969 = vunpack.c.l.b16 %v4651
        %v4970 = vunpack.c.h.b16 %v4651
        %v4971 = vunpack.c.l.b16 %v4652
        %v4972 = vunpack.c.h.b16 %v4652
        %v4973 = vunpack.c.l.b16 %v4653
        %v4974 = vunpack.c.h.b16 %v4653
        %v4975 = vunpack.c.l.b16 %v4654
        %v4976 = vunpack.c.h.b16 %v4654
        %v4977 = vunpack.c.l.b16 %v4655
        %v4978 = vunpack.c.h.b16 %v4655
        %v4979 = vunpack.c.l.b16 %v4656
        %v4980 = vunpack.c.h.b16 %v4656
        %v4981 = vunpack.c.l.b16 %v4657
        %v4982 = vunpack.c.h.b16 %v4657
        %v4983 = vunpack.c.l.b16 %v4658
        %v4984 = vunpack.c.h.b16 %v4658
        %v4985 = vunpack.c.l.b16 %v4659
        %v4986 = vunpack.c.h.b16 %v4659
        %v4987 = vunpack.c.l.b16 %v4660
        %v4988 = vunpack.c.h.b16 %v4660
        %v4989 = vunpack.c.l.b16 %v4661
        %v4990 = vunpack.c.h.b16 %v4661
        %v4991 = vunpack.c.l.b16 %v4662
        %v4992 = vunpack.c.h.b16 %v4662
        %v4993 = vunpack.c.l.b16 %v4663
        %v4994 = vunpack.c.h.b16 %v4663
        %v4995 = vunpack.c.l.b16 %v4664
        %v4996 = vunpack.c.h.b16 %v4664
        %v4997 = vunpack.c.l.b16 %v4665
        %v4998 = vunpack.c.h.b16 %v4665
        %v4999 = vunpack.c.l.b16 %v4666
        %v5000 = vunpack.c.h.b16 %v4666
        %v5001 = vunpack.c.l.b16 %v4667
        %v5002 = vunpack.c.h.b16 %v4667
        %v5003 = vunpack.c.l.b16 %v4668
        %v5004 = vunpack.c.h.b16 %v4668
        %v5005 = vunpack.c.l.b16 %v4669
        %v5006 = vunpack.c.h.b16 %v4669
        %v5007 = vunpack.c.l.b16 %v4670
        %v5008 = vunpack.c.h.b16 %v4670
        %v5009 = vunpack.c.l.b16 %v4671
        %v5010 = vunpack.c.h.b16 %v4671
        %v5011 = vunpack.c.l.b16 %v4672
        %v5012 = vunpack.c.h.b16 %v4672
        %v5013 = vunpack.c.l.b16 %v4673
        %v5014 = vunpack.c.h.b16 %v4673
        %v5015 = vunpack.c.l.b16 %v4674
        %v5016 = vunpack.c.h.b16 %v4674
        %v5017 = vunpack.c.l.b16 %v4675
        %v5018 = vunpack.c.h.b16 %v4675
        %v5019 = vunpack.c.l.b16 %v4676
        %v5020 = vunpack.c.h.b16 %v4676
        %v5021 = vunpack.c.l.b16 %v4677
        %v5022 = vunpack.c.h.b16 %v4677
        %v5023 = vunpack.c.l.b16 %v4678
        %v5024 = vunpack.c.h.b16 %v4678
        %v5025 = vunpack.c.l.b16 %v4679
        %v5026 = vunpack.c.h.b16 %v4679
        %v5027 = vunpack.c.l.b16 %v4680
        %v5028 = vunpack.c.h.b16 %v4680
        %v5029 = vunpack.c.l.b16 %v4681
        %v5030 = vunpack.c.h.b16 %v4681
        %v5031 = vunpack.c.l.b16 %v4682
        %v5032 = vunpack.c.h.b16 %v4682
        %v5033 = vunpack.c.l.b16 %v4683
        %v5034 = vunpack.c.h.b16 %v4683
        %v5035 = vunpack.c.l.b16 %v4684
        %v5036 = vunpack.c.h.b16 %v4684
        %v5037 = vunpack.c.l.b16 %v4685
        %v5038 = vunpack.c.h.b16 %v4685
        %v5039 = vunpack.c.l.b16 %v4686
        %v5040 = vunpack.c.h.b16 %v4686
        %v5041 = vunpack.c.l.b16 %v4687
        %v5042 = vunpack.c.h.b16 %v4687
        %v5043 = vunpack.c.l.b16 %v4688
        %v5044 = vunpack.c.h.b16 %v4688
        %v5045 = vunpack.c.l.b16 %v4689
        %v5046 = vunpack.c.h.b16 %v4689
        %v5047 = vunpack.c.l.b16 %v4690
        %v5048 = vunpack.c.h.b16 %v4690
        %v5049 = vunpack.c.l.b16 %v4691
        %v5050 = vunpack.c.h.b16 %v4691
        %v5051 = vunpack.c.l.b16 %v4692
        %v5052 = vunpack.c.h.b16 %v4692
        %v5053 = vunpack.c.l.b16 %v4693
        %v5054 = vunpack.c.h.b16 %v4693
        %v5055 = vunpack.c.l.b16 %v4694
        %v5056 = vunpack.c.h.b16 %v4694
        %v5057 = vunpack.c.l.b16 %v4695
        %v5058 = vunpack.c.h.b16 %v4695
        %v5059 = vunpack.c.l.b16 %v4696
        %v5060 = vunpack.c.h.b16 %v4696
        %v5061 = vunpack.c.l.b16 %v4697
        %v5062 = vunpack.c.h.b16 %v4697
        %v5063 = vunpack.c.l.b16 %v4698
        %v5064 = vunpack.c.h.b16 %v4698
        %v5065 = vunpack.c.l.b16 %v4699
        %v5066 = vunpack.c.h.b16 %v4699
        %v5067 = vunpack.c.l.b16 %v4700
        %v5068 = vunpack.c.h.b16 %v4700
        %v5069 = vunpack.c.l.b16 %v4701
        %v5070 = vunpack.c.h.b16 %v4701
        %v5071 = vunpack.c.l.b16 %v4702
        %v5072 = vunpack.c.h.b16 %v4702
        %v5073 = vunpack.c.l.b16 %v4703
        %v5074 = vunpack.c.h.b16 %v4703
        %v5075 = vunpack.c.l.b16 %v4704
        %v5076 = vunpack.c.h.b16 %v4704
        %v5077 = vunpack.c.l.b16 %v4705
        %v5078 = vunpack.c.h.b16 %v4705
        %v5079 = vunpack.c.l.b16 %v4706
        %v5080 = vunpack.c.h.b16 %v4706
        %v5081 = vunpack.c.l.b16 %v4707
        %v5082 = vunpack.c.h.b16 %v4707
        %v5083 = vunpack.c.l.b16 %v4708
        %v5084 = vunpack.c.h.b16 %v4708
        %v5085 = vunpack.c.l.b16 %v4709
        %v5086 = vunpack.c.h.b16 %v4709
        %v5087 = vunpack.c.l.b16 %v4710
        %v5088 = vunpack.c.h.b16 %v4710
        %v5089 = vunpack.c.l.b16 %v4711
        %v5090 = vunpack.c.h.b16 %v4711
        %v5091 = vunpack.c.l.b16 %v4712
        %v5092 = vunpack.c.h.b16 %v4712
        %v5093 = vunpack.c.l.b16 %v4713
        %v5094 = vunpack.c.h.b16 %v4713
        %v5095 = vunpack.c.l.b16 %v4714
        %v5096 = vunpack.c.h.b16 %v4714
        %v5097 = vunpack.c.l.b16 %v4715
        %v5098 = vunpack.c.h.b16 %v4715
        %v5099 = vunpack.c.l.b16 %v4716
        %v5100 = vunpack.c.h.b16 %v4716
        %v5101 = vpack.c.b16 %v4849, %v4845
        %v5102 = vpack.c.b16 %v4850, %v4846
        %v5103 = vpack.c.b16 %v4851, %v4847
        %v5104 = vpack.c.b16 %v4852, %v4848
        %v5105 = vpack.c.b16 %v4857, %v4853
        %v5106 = vpack.c.b16 %v4858, %v4854
        %v5107 = vpack.c.b16 %v4859, %v4855
        %v5108 = vpack.c.b16 %v4860, %v4856
        %v5109 = vpack.c.b16 %v4865, %v4861
        %v5110 = vpack.c.b16 %v4866, %v4862
        %v5111 = vpack.c.b16 %v4867, %v4863
        %v5112 = vpack.c.b16 %v4868, %v4864
        %v5113 = vpack.c.b16 %v4873, %v4869
        %v5114 = vpack.c.b16 %v4874, %v4870
        %v5115 = vpack.c.b16 %v4875, %v4871
        %v5116 = vpack.c.b16 %v4876, %v4872
        %v5117 = vpack.c.b16 %v4881, %v4877
        %v5118 = vpack.c.b16 %v4882, %v4878
        %v5119 = vpack.c.b16 %v4883, %v4879
        %v5120 = vpack.c.b16 %v4884, %v4880
        %v5121 = vpack.c.b16 %v4889, %v4885
        %v5122 = vpack.c.b16 %v4890, %v4886
        %v5123 = vpack.c.b16 %v4891, %v4887
        %v5124 = vpack.c.b16 %v4892, %v4888
        %v5125 = vpack.c.b16 %v4897, %v4893
        %v5126 = vpack.c.b16 %v4898, %v4894
        %v5127 = vpack.c.b16 %v4899, %v4895
        %v5128 = vpack.c.b16 %v4900, %v4896
        %v5129 = vpack.c.b16 %v4905, %v4901
        %v5130 = vpack.c.b16 %v4906, %v4902
        %v5131 = vpack.c.b16 %v4907, %v4903
        %v5132 = vpack.c.b16 %v4908, %v4904
        %v5133 = vpack.c.b16 %v4913, %v4909
        %v5134 = vpack.c.b16 %v4914, %v4910
        %v5135 = vpack.c.b16 %v4915, %v4911
        %v5136 = vpack.c.b16 %v4916, %v4912
        %v5137 = vpack.c.b16 %v4921, %v4917
        %v5138 = vpack.c.b16 %v4922, %v4918
        %v5139 = vpack.c.b16 %v4923, %v4919
        %v5140 = vpack.c.b16 %v4924, %v4920
        %v5141 = vpack.c.b16 %v4929, %v4925
        %v5142 = vpack.c.b16 %v4930, %v4926
        %v5143 = vpack.c.b16 %v4931, %v4927
        %v5144 = vpack.c.b16 %v4932, %v4928
        %v5145 = vpack.c.b16 %v4937, %v4933
        %v5146 = vpack.c.b16 %v4938, %v4934
        %v5147 = vpack.c.b16 %v4939, %v4935
        %v5148 = vpack.c.b16 %v4940, %v4936
        %v5149 = vpack.c.b16 %v4945, %v4941
        %v5150 = vpack.c.b16 %v4946, %v4942
        %v5151 = vpack.c.b16 %v4947, %v4943
        %v5152 = vpack.c.b16 %v4948, %v4944
        %v5153 = vpack.c.b16 %v4953, %v4949
        %v5154 = vpack.c.b16 %v4954, %v4950
        %v5155 = vpack.c.b16 %v4955, %v4951
        %v5156 = vpack.c.b16 %v4956, %v4952
        %v5157 = vpack.c.b16 %v4961, %v4957
        %v5158 = vpack.c.b16 %v4962, %v4958
        %v5159 = vpack.c.b16 %v4963, %v4959
        %v5160 = vpack.c.b16 %v4964, %v4960
        %v5161 = vpack.c.b16 %v4969, %v4965
        %v5162 = vpack.c.b16 %v4970, %v4966
        %v5163 = vpack.c.b16 %v4971, %v4967
        %v5164 = vpack.c.b16 %v4972, %v4968
        %v5165 = vpack.c.b16 %v4977, %v4973
        %v5166 = vpack.c.b16 %v4978, %v4974
        %v5167 = vpack.c.b16 %v4979, %v4975
        %v5168 = vpack.c.b16 %v4980, %v4976
        %v5169 = vpack.c.b16 %v4985, %v4981
        %v5170 = vpack.c.b16 %v4986, %v4982
        %v5171 = vpack.c.b16 %v4987, %v4983
        %v5172 = vpack.c.b16 %v4988, %v4984
        %v5173 = vpack.c.b16 %v4993, %v4989
        %v5174 = vpack.c.b16 %v4994, %v4990
        %v5175 = vpack.c.b16 %v4995, %v4991
        %v5176 = vpack.c.b16 %v4996, %v4992
        %v5177 = vpack.c.b16 %v5001, %v4997
        %v5178 = vpack.c.b16 %v5002, %v4998
        %v5179 = vpack.c.b16 %v5003, %v4999
        %v5180 = vpack.c.b16 %v5004, %v5000
        %v5181 = vpack.c.b16 %v5009, %v5005
        %v5182 = vpack.c.b16 %v5010, %v5006
        %v5183 = vpack.c.b16 %v5011, %v5007
        %v5184 = vpack.c.b16 %v5012, %v5008
        %v5185 = vpack.c.b16 %v5017, %v5013
        %v5186 = vpack.c.b16 %v5018, %v5014
        %v5187 = vpack.c.b16 %v5019, %v5015
        %v5188 = vpack.c.b16 %v5020, %v5016
        %v5189 = vpack.c.b16 %v5025, %v5021
        %v5190 = vpack.c.b16 %v5026, %v5022
        %v5191 = vpack.c.b16 %v5027, %v5023
        %v5192 = vpack.c.b16 %v5028, %v5024
        %v5193 = vpack.c.b16 %v5033, %v5029
        %v5194 = vpack.c.b16 %v5034, %v5030
        %v5195 = vpack.c.b16 %v5035, %v5031
        %v5196 = vpack.c.b16 %v5036, %v5032
        %v5197 = vpack.c.b16 %v5041, %v5037
        %v5198 = vpack.c.b16 %v5042, %v5038
        %v5199 = vpack.c.b16 %v5043, %v5039
        %v5200 = vpack.c.b16 %v5044, %v5040
        %v5201 = vpack.c.b16 %v5049, %v5045
        %v5202 = vpack.c.b16 %v5050, %v5046
        %v5203 = vpack.c.b16 %v5051, %v5047
        %v5204 = vpack.c.b16 %v5052, %v5048
        %v5205 = vpack.c.b16 %v5057, %v5053
        %v5206 = vpack.c.b16 %v5058, %v5054
        %v5207 = vpack.c.b16 %v5059, %v5055
        %v5208 = vpack.c.b16 %v5060, %v5056
        %v5209 = vpack.c.b16 %v5065, %v5061
        %v5210 = vpack.c.b16 %v5066, %v5062
        %v5211 = vpack.c.b16 %v5067, %v5063
        %v5212 = vpack.c.b16 %v5068, %v5064
        %v5213 = vpack.c.b16 %v5073, %v5069
        %v5214 = vpack.c.b16 %v5074, %v5070
        %v5215 = vpack.c.b16 %v5075, %v5071
        %v5216 = vpack.c.b16 %v5076, %v5072
        %v5217 = vpack.c.b16 %v5081, %v5077
        %v5218 = vpack.c.b16 %v5082, %v5078
        %v5219 = vpack.c.b16 %v5083, %v5079
        %v5220 = vpack.c.b16 %v5084, %v5080
        %v5221 = vpack.c.b16 %v5089, %v5085
        %v5222 = vpack.c.b16 %v5090, %v5086
        %v5223 = vpack.c.b16 %v5091, %v5087
        %v5224 = vpack.c.b16 %v5092, %v5088
        %v5225 = vpack.c.b16 %v5097, %v5093
        %v5226 = vpack.c.b16 %v5098, %v5094
        %v5227 = vpack.c.b16 %v5099, %v5095
        %v5228 = vpack.c.b16 %v5100, %v5096
        %5357 = vmatprep.subr.bf16.mxu0 %v5102
        %5358 = vmatpush1.bf16.msra.mxu0 %v5101
        %5359 = vmatprep.subr.bf16.mxu0 %v5106
        %5360 = vmatpush1.bf16.msra.mxu0 %v5105
        %5361 = vmatprep.subr.bf16.mxu0 %v5110
        %5362 = vmatpush1.bf16.msra.mxu0 %v5109
        %5363 = vmatprep.subr.bf16.mxu0 %v5114
        %5364 = vmatpush1.bf16.msra.mxu0 %v5113
        %5365 = vmatprep.subr.bf16.mxu0 %v5118
        %5366 = vmatpush1.bf16.msra.mxu0 %v5117
        %5367 = vmatprep.subr.bf16.mxu0 %v5122
        %5368 = vmatpush1.bf16.msra.mxu0 %v5121
        %5369 = vmatprep.subr.bf16.mxu0 %v5126
        %5370 = vmatpush1.bf16.msra.mxu0 %v5125
        %5371 = vmatprep.subr.bf16.mxu0 %v5130
        %5372 = vmatpush1.bf16.msra.mxu0 %v5129
        %5373 = vmatprep.subr.bf16.mxu0 %v5134
        %5374 = vmatpush1.bf16.msra.mxu0 %v5133
        %5375 = vmatprep.subr.bf16.mxu0 %v5138
        %5376 = vmatpush1.bf16.msra.mxu0 %v5137
        %5377 = vmatprep.subr.bf16.mxu0 %v5142
        %5378 = vmatpush1.bf16.msra.mxu0 %v5141
        %5379 = vmatprep.subr.bf16.mxu0 %v5146
        %5380 = vmatpush1.bf16.msra.mxu0 %v5145
        %5381 = vmatprep.subr.bf16.mxu0 %v5150
        %5382 = vmatpush1.bf16.msra.mxu0 %v5149
        %5383 = vmatprep.subr.bf16.mxu0 %v5154
        %5384 = vmatpush1.bf16.msra.mxu0 %v5153
        %5385 = vmatprep.subr.bf16.mxu0 %v5158
        %5386 = vmatpush1.bf16.msra.mxu0 %v5157
        %5387 = vmatprep.subr.bf16.mxu0 %v5162
        %5388 = vmatpush1.bf16.msra.mxu0 %v5161
        %5389 = vmatprep.mubr.bf16.mxu0 %v4585
        %5390 = vmatmul.mubr.bf16.gmra.mrb[0].mxu0 %v4584
        %v5391 = vpop.f32.mrb[0].mxu0
        %v5392 = vadd.f32 0.0, %v5391
        %v5393 = vpop.f32.mrb[0].mxu0
        %v5394 = vadd.f32 0.0, %v5393
        %v5395 = vpop.f32.mrb[0].mxu0
        %v5396 = vadd.f32 0.0, %v5395
        %v5397 = vpop.f32.mrb[0].mxu0
        %v5398 = vadd.f32 0.0, %v5397
        %5399 = vdwg.mxu0
        %5400 = vmatprep.subr.bf16.mxu0 %v5166
        %5401 = vmatpush1.bf16.msra.mxu0 %v5165
        %5402 = vmatprep.subr.bf16.mxu0 %v5170
        %5403 = vmatpush1.bf16.msra.mxu0 %v5169
        %5404 = vmatprep.subr.bf16.mxu0 %v5174
        %5405 = vmatpush1.bf16.msra.mxu0 %v5173
        %5406 = vmatprep.subr.bf16.mxu0 %v5178
        %5407 = vmatpush1.bf16.msra.mxu0 %v5177
        %5408 = vmatprep.subr.bf16.mxu0 %v5182
        %5409 = vmatpush1.bf16.msra.mxu0 %v5181
        %5410 = vmatprep.subr.bf16.mxu0 %v5186
        %5411 = vmatpush1.bf16.msra.mxu0 %v5185
        %5412 = vmatprep.subr.bf16.mxu0 %v5190
        %5413 = vmatpush1.bf16.msra.mxu0 %v5189
        %5414 = vmatprep.subr.bf16.mxu0 %v5194
        %5415 = vmatpush1.bf16.msra.mxu0 %v5193
        %5416 = vmatprep.subr.bf16.mxu0 %v5198
        %5417 = vmatpush1.bf16.msra.mxu0 %v5197
        %5418 = vmatprep.subr.bf16.mxu0 %v5202
        %5419 = vmatpush1.bf16.msra.mxu0 %v5201
        %5420 = vmatprep.subr.bf16.mxu0 %v5206
        %5421 = vmatpush1.bf16.msra.mxu0 %v5205
        %5422 = vmatprep.subr.bf16.mxu0 %v5210
        %5423 = vmatpush1.bf16.msra.mxu0 %v5209
        %5424 = vmatprep.subr.bf16.mxu0 %v5214
        %5425 = vmatpush1.bf16.msra.mxu0 %v5213
        %5426 = vmatprep.subr.bf16.mxu0 %v5218
        %5427 = vmatpush1.bf16.msra.mxu0 %v5217
        %5428 = vmatprep.subr.bf16.mxu0 %v5222
        %5429 = vmatpush1.bf16.msra.mxu0 %v5221
        %5430 = vmatprep.subr.bf16.mxu0 %v5226
        %5431 = vmatpush1.bf16.msra.mxu0 %v5225
        %5432 = vmatprep.mubr.bf16.mxu0 %v4587
        %5433 = vmatmul.mubr.bf16.gmra.mrb[0].mxu0 %v4586
        %v5434 = vpop.f32.mrb[0].mxu0
        %v5435 = vadd.f32 %v5392, %v5434
        %v5436 = vpop.f32.mrb[0].mxu0
        %v5437 = vadd.f32 %v5394, %v5436
        %v5438 = vpop.f32.mrb[0].mxu0
        %v5439 = vadd.f32 %v5396, %v5438
        %v5440 = vpop.f32.mrb[0].mxu0
        %v5441 = vadd.f32 %v5398, %v5440
        %5442 = vdwg.mxu0
        %5443 = vmatprep.subr.bf16.mxu0 %v5104
        %5444 = vmatpush1.bf16.msra.mxu0 %v5103
        %5445 = vmatprep.subr.bf16.mxu0 %v5108
        %5446 = vmatpush1.bf16.msra.mxu0 %v5107
        %5447 = vmatprep.subr.bf16.mxu0 %v5112
        %5448 = vmatpush1.bf16.msra.mxu0 %v5111
        %5449 = vmatprep.subr.bf16.mxu0 %v5116
        %5450 = vmatpush1.bf16.msra.mxu0 %v5115
        %5451 = vmatprep.subr.bf16.mxu0 %v5120
        %5452 = vmatpush1.bf16.msra.mxu0 %v5119
        %5453 = vmatprep.subr.bf16.mxu0 %v5124
        %5454 = vmatpush1.bf16.msra.mxu0 %v5123
        %5455 = vmatprep.subr.bf16.mxu0 %v5128
        %5456 = vmatpush1.bf16.msra.mxu0 %v5127
        %5457 = vmatprep.subr.bf16.mxu0 %v5132
        %5458 = vmatpush1.bf16.msra.mxu0 %v5131
        %5459 = vmatprep.subr.bf16.mxu0 %v5136
        %5460 = vmatpush1.bf16.msra.mxu0 %v5135
        %5461 = vmatprep.subr.bf16.mxu0 %v5140
        %5462 = vmatpush1.bf16.msra.mxu0 %v5139
        %5463 = vmatprep.subr.bf16.mxu0 %v5144
        %5464 = vmatpush1.bf16.msra.mxu0 %v5143
        %5465 = vmatprep.subr.bf16.mxu0 %v5148
        %5466 = vmatpush1.bf16.msra.mxu0 %v5147
        %5467 = vmatprep.subr.bf16.mxu0 %v5152
        %5468 = vmatpush1.bf16.msra.mxu0 %v5151
        %5469 = vmatprep.subr.bf16.mxu0 %v5156
        %5470 = vmatpush1.bf16.msra.mxu0 %v5155
        %5471 = vmatprep.subr.bf16.mxu0 %v5160
        %5472 = vmatpush1.bf16.msra.mxu0 %v5159
        %5473 = vmatprep.subr.bf16.mxu0 %v5164
        %5474 = vmatpush1.bf16.msra.mxu0 %v5163
        %5475 = vmatprep.mubr.bf16.mxu0 %v4585
        %5476 = vmatmul.mubr.bf16.gmra.mrb[0].mxu0 %v4584
        %v5477 = vpop.f32.mrb[0].mxu0
        %v5478 = vadd.f32 0.0, %v5477
        %v5479 = vpop.f32.mrb[0].mxu0
        %v5480 = vadd.f32 0.0, %v5479
        %v5481 = vpop.f32.mrb[0].mxu0
        %v5482 = vadd.f32 0.0, %v5481
        %v5483 = vpop.f32.mrb[0].mxu0
        %v5484 = vadd.f32 0.0, %v5483
        %5485 = vdwg.mxu0
        %5486 = vmatprep.subr.bf16.mxu0 %v5168
        %5487 = vmatpush1.bf16.msra.mxu0 %v5167
        %5488 = vmatprep.subr.bf16.mxu0 %v5172
        %5489 = vmatpush1.bf16.msra.mxu0 %v5171
        %5490 = vmatprep.subr.bf16.mxu0 %v5176
        %5491 = vmatpush1.bf16.msra.mxu0 %v5175
        %5492 = vmatprep.subr.bf16.mxu0 %v5180
        %5493 = vmatpush1.bf16.msra.mxu0 %v5179
        %5494 = vmatprep.subr.bf16.mxu0 %v5184
        %5495 = vmatpush1.bf16.msra.mxu0 %v5183
        %5496 = vmatprep.subr.bf16.mxu0 %v5188
        %5497 = vmatpush1.bf16.msra.mxu0 %v5187
        %5498 = vmatprep.subr.bf16.mxu0 %v5192
        %5499 = vmatpush1.bf16.msra.mxu0 %v5191
        %5500 = vmatprep.subr.bf16.mxu0 %v5196
        %5501 = vmatpush1.bf16.msra.mxu0 %v5195
        %5502 = vmatprep.subr.bf16.mxu0 %v5200
        %5503 = vmatpush1.bf16.msra.mxu0 %v5199
        %5504 = vmatprep.subr.bf16.mxu0 %v5204
        %5505 = vmatpush1.bf16.msra.mxu0 %v5203
        %5506 = vmatprep.subr.bf16.mxu0 %v5208
        %5507 = vmatpush1.bf16.msra.mxu0 %v5207
        %5508 = vmatprep.subr.bf16.mxu0 %v5212
        %5509 = vmatpush1.bf16.msra.mxu0 %v5211
        %5510 = vmatprep.subr.bf16.mxu0 %v5216
        %5511 = vmatpush1.bf16.msra.mxu0 %v5215
        %5512 = vmatprep.subr.bf16.mxu0 %v5220
        %5513 = vmatpush1.bf16.msra.mxu0 %v5219
        %5514 = vmatprep.subr.bf16.mxu0 %v5224
        %5515 = vmatpush1.bf16.msra.mxu0 %v5223
        %5516 = vmatprep.subr.bf16.mxu0 %v5228
        %5517 = vmatpush1.bf16.msra.mxu0 %v5227
        %5518 = vmatprep.mubr.bf16.mxu0 %v4587
        %5519 = vmatmul.mubr.bf16.gmra.mrb[0].mxu0 %v4586
        %v5520 = vpop.f32.mrb[0].mxu0
        %v5521 = vadd.f32 %v5478, %v5520
        %v5522 = vpop.f32.mrb[0].mxu0
        %v5523 = vadd.f32 %v5480, %v5522
        %v5524 = vpop.f32.mrb[0].mxu0
        %v5525 = vadd.f32 %v5482, %v5524
        %v5526 = vpop.f32.mrb[0].mxu0
        %v5527 = vadd.f32 %v5484, %v5526
        %5528 = vdwg.mxu0
        %v5529 = vpack.c.bf16 %v5439, %v5435
        %v5530 = vpack.c.bf16 %v5441, %v5437
        %v5531 = vpack.c.bf16 %v5525, %v5521
        %v5532 = vpack.c.bf16 %v5527, %v5523
        %s5533 = scalar_lea.vmem %s4, 16
        %v5534 = vld [vmem:[%s5533] sm:$0xf]
        %v5537 = vunpack.c.l.s4 1966171168
        %v5538 = vunpack.c.0.s8 %v5537
        %v5539 = vlaneseq
        %v5540 = vshrl.u32 %v5539, 7
        %v5541 = vsub.s32 %v5538, %v5540
        %v5542 = vrot.slane %v5534, %v5541
        %v5543 = vcombine.high %v5542, %v5542
        %v5545 = vunpack.c.l.s4 1966171168
        %v5546 = vunpack.c.0.s8 %v5545
        %v5547 = vlaneseq
        %v5548 = vshrl.u32 %v5547, 7
        %v5549 = vsub.s32 %v5546, %v5548
        %v5550 = vrot.slane %v5542, %v5549
        %v5552 = vunpack.c.l.s4 1966171168
        %v5553 = vunpack.c.0.s8 %v5552
        %v5554 = vlaneseq
        %v5555 = vshrl.u32 %v5554, 7
        %v5556 = vsub.s32 %v5553, %v5555
        %v5557 = vrot.slane %v5543, %v5556
        %v5558 = vcombine.high %v5550, %v5550
        %v5559 = vcombine.high %v5557, %v5557
        %v5561 = vpack.i.b16 %v5550, %v5550
        %v5563 = vlaneseq
        %v5564 = vshrl.u32 %v5563, 7
        %v5565 = vsub.s32 0, %v5564
        %v5566 = vrot.slane %v5561, %v5565
        %v5568 = vpack.i.b16 %v5557, %v5557
        %v5570 = vlaneseq
        %v5571 = vshrl.u32 %v5570, 7
        %v5572 = vsub.s32 0, %v5571
        %v5573 = vrot.slane %v5568, %v5572
        %v5575 = vpack.i.b16 %v5558, %v5558
        %v5577 = vlaneseq
        %v5578 = vshrl.u32 %v5577, 7
        %v5579 = vsub.s32 0, %v5578
        %v5580 = vrot.slane %v5575, %v5579
        %v5582 = vpack.i.b16 %v5559, %v5559
        %v5584 = vlaneseq
        %v5585 = vshrl.u32 %v5584, 7
        %v5586 = vsub.s32 0, %v5585
        %v5587 = vrot.slane %v5582, %v5586
        %v5588 = vadd.bf16 %v5529, %v5566
        %v5589 = vadd.bf16 %v5530, %v5573
        %v5590 = vadd.bf16 %v5531, %v5580
        %v5591 = vadd.bf16 %v5532, %v5587
        %v5592 = vmax.bf16 %v5588, 0
        %v5593 = vmax.bf16 %v5589, 0
        %v5594 = vmax.bf16 %v5590, 0
        %v5595 = vmax.bf16 %v5591, 0
        %v5596 = vld [vmem:[#allocation8] sm:$0xf]
        %v5597 = vld [vmem:[#allocation8 + $0x4] sm:$0xf]
        %v5598 = vld [vmem:[#allocation8 + $0x8] sm:$0xf]
        %v5599 = vld [vmem:[#allocation8 + $0xc] sm:$0xf]
        %v5600 = vld [vmem:[#allocation8 + $0x10] sm:$0xf]
        %v5601 = vld [vmem:[#allocation8 + $0x14] sm:$0xf]
        %v5602 = vld [vmem:[#allocation8 + $0x18] sm:$0xf]
        %v5603 = vld [vmem:[#allocation8 + $0x1c] sm:$0xf]
        %v5604 = vld [vmem:[#allocation8 + $0x20] sm:$0xf]
        %v5605 = vld [vmem:[#allocation8 + $0x24] sm:$0xf]
        %v5606 = vld [vmem:[#allocation8 + $0x28] sm:$0xf]
        %v5607 = vld [vmem:[#allocation8 + $0x2c] sm:$0xf]
        %v5608 = vld [vmem:[#allocation8 + $0x30] sm:$0xf]
        %v5609 = vld [vmem:[#allocation8 + $0x34] sm:$0xf]
        %v5610 = vld [vmem:[#allocation8 + $0x38] sm:$0xf]
        %v5611 = vld [vmem:[#allocation8 + $0x3c] sm:$0xf]
        %v5612 = vld [vmem:[#allocation8 + $0x40] sm:$0xf]
        %v5613 = vld [vmem:[#allocation8 + $0x44] sm:$0xf]
        %v5614 = vld [vmem:[#allocation8 + $0x48] sm:$0xf]
        %v5615 = vld [vmem:[#allocation8 + $0x4c] sm:$0xf]
        %v5616 = vld [vmem:[#allocation8 + $0x50] sm:$0xf]
        %v5617 = vld [vmem:[#allocation8 + $0x54] sm:$0xf]
        %v5618 = vld [vmem:[#allocation8 + $0x58] sm:$0xf]
        %v5619 = vld [vmem:[#allocation8 + $0x5c] sm:$0xf]
        %v5620 = vld [vmem:[#allocation8 + $0x60] sm:$0xf]
        %v5621 = vld [vmem:[#allocation8 + $0x64] sm:$0xf]
        %v5622 = vld [vmem:[#allocation8 + $0x68] sm:$0xf]
        %v5623 = vld [vmem:[#allocation8 + $0x6c] sm:$0xf]
        %v5624 = vld [vmem:[#allocation8 + $0x70] sm:$0xf]
        %v5625 = vld [vmem:[#allocation8 + $0x74] sm:$0xf]
        %v5626 = vld [vmem:[#allocation8 + $0x78] sm:$0xf]
        %v5627 = vld [vmem:[#allocation8 + $0x7c] sm:$0xf]
        %v5628 = vld [vmem:[#allocation8 + $0x80] sm:$0xf]
        %v5629 = vld [vmem:[#allocation8 + $0x84] sm:$0xf]
        %v5630 = vld [vmem:[#allocation8 + $0x88] sm:$0xf]
        %v5631 = vld [vmem:[#allocation8 + $0x8c] sm:$0xf]
        %v5632 = vld [vmem:[#allocation8 + $0x90] sm:$0xf]
        %v5633 = vld [vmem:[#allocation8 + $0x94] sm:$0xf]
        %v5634 = vld [vmem:[#allocation8 + $0x98] sm:$0xf]
        %v5635 = vld [vmem:[#allocation8 + $0x9c] sm:$0xf]
        %v5636 = vld [vmem:[#allocation8 + $0xa0] sm:$0xf]
        %v5637 = vld [vmem:[#allocation8 + $0xa4] sm:$0xf]
        %v5638 = vld [vmem:[#allocation8 + $0xa8] sm:$0xf]
        %v5639 = vld [vmem:[#allocation8 + $0xac] sm:$0xf]
        %v5640 = vld [vmem:[#allocation8 + $0xb0] sm:$0xf]
        %v5641 = vld [vmem:[#allocation8 + $0xb4] sm:$0xf]
        %v5642 = vld [vmem:[#allocation8 + $0xb8] sm:$0xf]
        %v5643 = vld [vmem:[#allocation8 + $0xbc] sm:$0xf]
        %v5644 = vld [vmem:[#allocation8 + $0xc0] sm:$0xf]
        %v5645 = vld [vmem:[#allocation8 + $0xc4] sm:$0xf]
        %v5646 = vld [vmem:[#allocation8 + $0xc8] sm:$0xf]
        %v5647 = vld [vmem:[#allocation8 + $0xcc] sm:$0xf]
        %v5648 = vld [vmem:[#allocation8 + $0xd0] sm:$0xf]
        %v5649 = vld [vmem:[#allocation8 + $0xd4] sm:$0xf]
        %v5650 = vld [vmem:[#allocation8 + $0xd8] sm:$0xf]
        %v5651 = vld [vmem:[#allocation8 + $0xdc] sm:$0xf]
        %v5652 = vld [vmem:[#allocation8 + $0xe0] sm:$0xf]
        %v5653 = vld [vmem:[#allocation8 + $0xe4] sm:$0xf]
        %v5654 = vld [vmem:[#allocation8 + $0xe8] sm:$0xf]
        %v5655 = vld [vmem:[#allocation8 + $0xec] sm:$0xf]
        %v5656 = vld [vmem:[#allocation8 + $0xf0] sm:$0xf]
        %v5657 = vld [vmem:[#allocation8 + $0xf4] sm:$0xf]
        %v5658 = vld [vmem:[#allocation8 + $0xf8] sm:$0xf]
        %v5659 = vld [vmem:[#allocation8 + $0xfc] sm:$0xf]
        %v5660 = vld [vmem:[#allocation10] sm:$0x1]
        %v5662 = vlaneseq
        %v5663 = vshrl.u32 %v5662, 7
        %v5664 = vsub.s32 0, %v5663
        %v5665 = vrot.slane %v5660, %v5664
        %v5731 = vunpack.c.l.b16 %v5596
        %v5732 = vunpack.c.l.b16 %v5597
        %v5733 = vunpack.c.l.b16 %v5598
        %v5734 = vunpack.c.l.b16 %v5599
        %v5735 = vunpack.c.l.b16 %v5600
        %v5736 = vunpack.c.l.b16 %v5601
        %v5737 = vunpack.c.l.b16 %v5602
        %v5738 = vunpack.c.l.b16 %v5603
        %v5739 = vunpack.c.l.b16 %v5604
        %v5740 = vunpack.c.l.b16 %v5605
        %v5741 = vunpack.c.l.b16 %v5606
        %v5742 = vunpack.c.l.b16 %v5607
        %v5743 = vunpack.c.l.b16 %v5608
        %v5744 = vunpack.c.l.b16 %v5609
        %v5745 = vunpack.c.l.b16 %v5610
        %v5746 = vunpack.c.l.b16 %v5611
        %v5747 = vunpack.c.l.b16 %v5612
        %v5748 = vunpack.c.l.b16 %v5613
        %v5749 = vunpack.c.l.b16 %v5614
        %v5750 = vunpack.c.l.b16 %v5615
        %v5751 = vunpack.c.l.b16 %v5616
        %v5752 = vunpack.c.l.b16 %v5617
        %v5753 = vunpack.c.l.b16 %v5618
        %v5754 = vunpack.c.l.b16 %v5619
        %v5755 = vunpack.c.l.b16 %v5620
        %v5756 = vunpack.c.l.b16 %v5621
        %v5757 = vunpack.c.l.b16 %v5622
        %v5758 = vunpack.c.l.b16 %v5623
        %v5759 = vunpack.c.l.b16 %v5624
        %v5760 = vunpack.c.l.b16 %v5625
        %v5761 = vunpack.c.l.b16 %v5626
        %v5762 = vunpack.c.l.b16 %v5627
        %v5763 = vunpack.c.l.b16 %v5628
        %v5764 = vunpack.c.l.b16 %v5629
        %v5765 = vunpack.c.l.b16 %v5630
        %v5766 = vunpack.c.l.b16 %v5631
        %v5767 = vunpack.c.l.b16 %v5632
        %v5768 = vunpack.c.l.b16 %v5633
        %v5769 = vunpack.c.l.b16 %v5634
        %v5770 = vunpack.c.l.b16 %v5635
        %v5771 = vunpack.c.l.b16 %v5636
        %v5772 = vunpack.c.l.b16 %v5637
        %v5773 = vunpack.c.l.b16 %v5638
        %v5774 = vunpack.c.l.b16 %v5639
        %v5775 = vunpack.c.l.b16 %v5640
        %v5776 = vunpack.c.l.b16 %v5641
        %v5777 = vunpack.c.l.b16 %v5642
        %v5778 = vunpack.c.l.b16 %v5643
        %v5779 = vunpack.c.l.b16 %v5644
        %v5780 = vunpack.c.l.b16 %v5645
        %v5781 = vunpack.c.l.b16 %v5646
        %v5782 = vunpack.c.l.b16 %v5647
        %v5783 = vunpack.c.l.b16 %v5648
        %v5784 = vunpack.c.l.b16 %v5649
        %v5785 = vunpack.c.l.b16 %v5650
        %v5786 = vunpack.c.l.b16 %v5651
        %v5787 = vunpack.c.l.b16 %v5652
        %v5788 = vunpack.c.l.b16 %v5653
        %v5789 = vunpack.c.l.b16 %v5654
        %v5790 = vunpack.c.l.b16 %v5655
        %v5791 = vunpack.c.l.b16 %v5656
        %v5792 = vunpack.c.l.b16 %v5657
        %v5793 = vunpack.c.l.b16 %v5658
        %v5794 = vunpack.c.l.b16 %v5659
        %v5795 = vpack.c.b16 %v5732, %v5731
        %v5796 = vpack.c.b16 %v5734, %v5733
        %v5797 = vpack.c.b16 %v5736, %v5735
        %v5798 = vpack.c.b16 %v5738, %v5737
        %v5799 = vpack.c.b16 %v5740, %v5739
        %v5800 = vpack.c.b16 %v5742, %v5741
        %v5801 = vpack.c.b16 %v5744, %v5743
        %v5802 = vpack.c.b16 %v5746, %v5745
        %v5803 = vpack.c.b16 %v5748, %v5747
        %v5804 = vpack.c.b16 %v5750, %v5749
        %v5805 = vpack.c.b16 %v5752, %v5751
        %v5806 = vpack.c.b16 %v5754, %v5753
        %v5807 = vpack.c.b16 %v5756, %v5755
        %v5808 = vpack.c.b16 %v5758, %v5757
        %v5809 = vpack.c.b16 %v5760, %v5759
        %v5810 = vpack.c.b16 %v5762, %v5761
        %v5811 = vpack.c.b16 %v5764, %v5763
        %v5812 = vpack.c.b16 %v5766, %v5765
        %v5813 = vpack.c.b16 %v5768, %v5767
        %v5814 = vpack.c.b16 %v5770, %v5769
        %v5815 = vpack.c.b16 %v5772, %v5771
        %v5816 = vpack.c.b16 %v5774, %v5773
        %v5817 = vpack.c.b16 %v5776, %v5775
        %v5818 = vpack.c.b16 %v5778, %v5777
        %v5819 = vpack.c.b16 %v5780, %v5779
        %v5820 = vpack.c.b16 %v5782, %v5781
        %v5821 = vpack.c.b16 %v5784, %v5783
        %v5822 = vpack.c.b16 %v5786, %v5785
        %v5823 = vpack.c.b16 %v5788, %v5787
        %v5824 = vpack.c.b16 %v5790, %v5789
        %v5825 = vpack.c.b16 %v5792, %v5791
        %v5826 = vpack.c.b16 %v5794, %v5793
        %5859 = vmatprep.subr.bf16.mxu0 0
        %5860 = vmatpush1.bf16.msra.mxu0 %v5795
        %5861 = vmatprep.subr.bf16.mxu0 0
        %5862 = vmatpush1.bf16.msra.mxu0 %v5796
        %5863 = vmatprep.subr.bf16.mxu0 0
        %5864 = vmatpush1.bf16.msra.mxu0 %v5797
        %5865 = vmatprep.subr.bf16.mxu0 0
        %5866 = vmatpush1.bf16.msra.mxu0 %v5798
        %5867 = vmatprep.subr.bf16.mxu0 0
        %5868 = vmatpush1.bf16.msra.mxu0 %v5799
        %5869 = vmatprep.subr.bf16.mxu0 0
        %5870 = vmatpush1.bf16.msra.mxu0 %v5800
        %5871 = vmatprep.subr.bf16.mxu0 0
        %5872 = vmatpush1.bf16.msra.mxu0 %v5801
        %5873 = vmatprep.subr.bf16.mxu0 0
        %5874 = vmatpush1.bf16.msra.mxu0 %v5802
        %5875 = vmatprep.subr.bf16.mxu0 0
        %5876 = vmatpush1.bf16.msra.mxu0 %v5803
        %5877 = vmatprep.subr.bf16.mxu0 0
        %5878 = vmatpush1.bf16.msra.mxu0 %v5804
        %5879 = vmatprep.subr.bf16.mxu0 0
        %5880 = vmatpush1.bf16.msra.mxu0 %v5805
        %5881 = vmatprep.subr.bf16.mxu0 0
        %5882 = vmatpush1.bf16.msra.mxu0 %v5806
        %5883 = vmatprep.subr.bf16.mxu0 0
        %5884 = vmatpush1.bf16.msra.mxu0 %v5807
        %5885 = vmatprep.subr.bf16.mxu0 0
        %5886 = vmatpush1.bf16.msra.mxu0 %v5808
        %5887 = vmatprep.subr.bf16.mxu0 0
        %5888 = vmatpush1.bf16.msra.mxu0 %v5809
        %5889 = vmatprep.subr.bf16.mxu0 0
        %5890 = vmatpush1.bf16.msra.mxu0 %v5810
        %5891 = vmatprep.mubr.bf16.mxu0 %v5593
        %5892 = vmatmul.mubr.bf16.gmra.mrb[0].mxu0 %v5592
        %v5893 = vpop.f32.mrb[0].mxu0
        %v5894 = vadd.f32 %v5665, %v5893
        %v5895 = vpop.f32.mrb[0].mxu0
        %v5896 = vpop.f32.mrb[0].mxu0
        %v5897 = vadd.f32 %v5665, %v5896
        %v5898 = vpop.f32.mrb[0].mxu0
        %5899 = vdwg.mxu0
        %5900 = vmatprep.subr.bf16.mxu0 0
        %5901 = vmatpush1.bf16.msra.mxu0 %v5811
        %5902 = vmatprep.subr.bf16.mxu0 0
        %5903 = vmatpush1.bf16.msra.mxu0 %v5812
        %5904 = vmatprep.subr.bf16.mxu0 0
        %5905 = vmatpush1.bf16.msra.mxu0 %v5813
        %5906 = vmatprep.subr.bf16.mxu0 0
        %5907 = vmatpush1.bf16.msra.mxu0 %v5814
        %5908 = vmatprep.subr.bf16.mxu0 0
        %5909 = vmatpush1.bf16.msra.mxu0 %v5815
        %5910 = vmatprep.subr.bf16.mxu0 0
        %5911 = vmatpush1.bf16.msra.mxu0 %v5816
        %5912 = vmatprep.subr.bf16.mxu0 0
        %5913 = vmatpush1.bf16.msra.mxu0 %v5817
        %5914 = vmatprep.subr.bf16.mxu0 0
        %5915 = vmatpush1.bf16.msra.mxu0 %v5818
        %5916 = vmatprep.subr.bf16.mxu0 0
        %5917 = vmatpush1.bf16.msra.mxu0 %v5819
        %5918 = vmatprep.subr.bf16.mxu0 0
        %5919 = vmatpush1.bf16.msra.mxu0 %v5820
        %5920 = vmatprep.subr.bf16.mxu0 0
        %5921 = vmatpush1.bf16.msra.mxu0 %v5821
        %5922 = vmatprep.subr.bf16.mxu0 0
        %5923 = vmatpush1.bf16.msra.mxu0 %v5822
        %5924 = vmatprep.subr.bf16.mxu0 0
        %5925 = vmatpush1.bf16.msra.mxu0 %v5823
        %5926 = vmatprep.subr.bf16.mxu0 0
        %5927 = vmatpush1.bf16.msra.mxu0 %v5824
        %5928 = vmatprep.subr.bf16.mxu0 0
        %5929 = vmatpush1.bf16.msra.mxu0 %v5825
        %5930 = vmatprep.subr.bf16.mxu0 0
        %5931 = vmatpush1.bf16.msra.mxu0 %v5826
        %5932 = vmatprep.mubr.bf16.mxu0 %v5595
        %5933 = vmatmul.mubr.bf16.gmra.mrb[0].mxu0 %v5594
        %v5934 = vpop.f32.mrb[0].mxu0
        %v5935 = vadd.f32 %v5894, %v5934
        %v5936 = vpop.f32.mrb[0].mxu0
        %v5937 = vpop.f32.mrb[0].mxu0
        %v5938 = vadd.f32 %v5897, %v5937
        %v5939 = vpop.f32.mrb[0].mxu0
        %5940 = vdwg.mxu0
        %v5941 = vxor.u32 %v5935, 2147483648
        %v5942 = vxor.u32 %v5938, 2147483648
        %v5943 = vmul.f32 %v5941, 1.442695
        %v5944 = vpow.pop %v5943
        %v5945 = vmul.f32 %v5942, 1.442695
        %v5946 = vpow.pop %v5945
        %v5947 = vadd.f32 %v5944, 1.0
        %v5948 = vadd.f32 %v5946, 1.0
        %v5949 = vrcp.pop %v5947
        %v5950 = vmul.f32 1.0, %v5949
        %v5951 = vrcp.pop %v5948
        %v5952 = vmul.f32 1.0, %v5951
        %5953 = vst [vmem:[%s341] sm:$0xff] %v5950
        %5954 = vst [vmem:[%s341 + $0x8] sm:$0xff] %v5952
        %s5955 = sand.u32 %s184, 1
        %s5956 = scalar_lea.sflag [#allocation4], %s5955
        %s5957 = sand.u32 %s184, 1
        %s5958 = smul.addr %s5957, 16
        %s5959 = scalar_lea.vmem [#allocation11], %s5958
        // Predicated region
        $region69: #{tpu_custom_call.1} parent=47 // pred_check
          %p5960 = pneg %p194
        $region70: #{tpu_custom_call.1} parent=47 // pred_check_branch
          %5962 = sbr.rel (%p5960) target = $region72
        $region71: #{tpu_custom_call.1} parent=47 // pred_region
          %s5963 = smul.u32 2, %s24
          %s5965 = ssub.s32 256, 256
          %5966 = vsyncadd %s5956, %s5965
          %s5967 = smul.addr %s5963, 128
          %s5968 = scalar_lea.hbm %s7, %s5967
          %s5969 = sshll.u32 %s5959, 4
          %s5970 = int_to_ptr.vmem [resolvable:$true] %s5969
          %5975 = dma.vmem_to_hbm [thread:$0]  %s5970, 256, %s5968, %s5956, 128, 128, 8
        $region72: #{tpu_custom_call.1} parent=47 // pred_fallthru
          _
      $region48: #{tpu_custom_call.1} parent=5 // pred_fallthru
        _
      %p5976 = scmp.le.s32.totalorder 2, %s19
      // Predicated region
      $region73: #{tpu_custom_call.1} parent=5 // pred_check
        %p5977 = pneg %p5976
      $region74: #{tpu_custom_call.1} parent=5 // pred_check_branch
        %5979 = sbr.rel (%p5977) target = $region76
      $region75: #{tpu_custom_call.1} parent=5 // pred_region
        %s5980 = ssub.s32 %s19, 2
        // Predicated region
        $region77: #{tpu_custom_call.1} parent=75 // pred_check
          %p5981 = pneg %p200
        $region78: #{tpu_custom_call.1} parent=75 // pred_check_branch
          %5983 = sbr.rel (%p5981) target = $region80
        $region79: #{tpu_custom_call.1} parent=75 // pred_region
          %s5984 = sand.u32 %s185, 1
          %s5985 = scalar_lea.sflag [#allocation4], %s5984
          %s5986 = sand.u32 %s185, 1
          %s5987 = smul.addr %s5986, 16
          %s5988 = scalar_lea.vmem [#allocation11], %s5987
          %5989 = dma.done %s5985, 256
        $region80: #{tpu_custom_call.1} parent=75 // pred_fallthru
          _
      $region76: #{tpu_custom_call.1} parent=5 // pred_fallthru
        _
    $region6: #{tpu_custom_call.1} parent=1 // loop_footer
      %s23 = sadd.s32 1, %s19
    $region7: #{tpu_custom_call.1} parent=1 // loop_footer_branch
      %18 = sbr.rel target = $region3
    $region8: #{tpu_custom_call.1} parent=1 // loop_exit
      _
    %5990 = vsyncpa [#allocation3], 1
    %s5991 = scalar_lea.sflag [#allocation3], 1
    %5992 = vsyncpa %s5991, 1
    %5993 = vsyncpa [#allocation6], 1
    %5994 = vsyncpa [#allocation9], 1
    %5995 = vsyncpa [#allocation4], 1
    %s5996 = scalar_lea.sflag [#allocation4], 1
    %5997 = vsyncpa %s5996, 1

// kernel: tpu_custom_call.1
$region0: #{tpu_custom_call.1}
  #allocation0 [shape = 'u32[]', space=smem, size = 0x4, offset = 0x4, fixed_abs, tag = 'smem constant byte address 0x4 - core index']
  #allocation1 [shape = 'u32[144,128]{1,0:T(1,128)}', space=vmem, size = 0x12000, scoped, tag = 'internal scratch']
  %s0 = inlined_call_operand.vmem [shape: f32[32,24], index: 0, kind: input, shape index: {}]
  %s1 = inlined_call_operand.hbm [shape: bf16[24,512], index: 1, kind: input, shape index: {}]
  %s2 = inlined_call_operand.hbm [shape: bf16[1,512], index: 2, kind: input, shape index: {}]
  %s3 = inlined_call_operand.hbm [shape: bf16[5,512,512], index: 3, kind: input, shape index: {}]
  %s4 = inlined_call_operand.vmem [shape: bf16[5,1,512], index: 4, kind: input, shape index: {}]
  %s5 = inlined_call_operand.hbm [shape: bf16[512,128], index: 5, kind: input, shape index: {}]
  %s6 = inlined_call_operand.hbm [shape: f32[1,128], index: 6, kind: input, shape index: {}]
  %s7 = inlined_call_operand.hbm [shape: f32[32,128], index: 7, kind: output, shape index: {}]
  %s8 = sld [smem:[#allocation0]]
  $region81: #{tpu_custom_call.1} parent=0
    _
  %s10 = ssub.s32 1, %s8
  %s11 = scalar_select 0, %s10, %s8
  $region1: #{tpu_custom_call.1} parent=0
    #allocation2 [shape = 'u8[24576]{0}', space=vmem, size = 0x6000, scoped, tag = 'input window, operand 1, single buffered']
    #allocation3 [shape = 's32[2]{0}', space=sflag, size = 0x8, scoped, tag = 'scoped memory for tpu_custom_call.1']
    #allocation4 [shape = 's32[2]{0}', space=sflag, size = 0x8, scoped, tag = 'scoped memory for tpu_custom_call.1']
    #allocation5 [shape = 'u8[2048]{0}', space=vmem, size = 0x800, scoped, tag = 'input window, operand 2, single buffered']
    #allocation6 [shape = 's32[1]{0}', space=sflag, size = 0x4, scoped, tag = 'scoped memory for tpu_custom_call.1']
    #allocation7 [shape = 'u8[2621440]{0}', space=vmem, size = 0x280000, scoped, tag = 'input window, operand 3, single buffered']
    #allocation8 [shape = 'u8[131072]{0}', space=vmem, size = 0x20000, scoped, tag = 'input window, operand 5, single buffered']
    #allocation9 [shape = 's32[1]{0}', space=sflag, size = 0x4, scoped, tag = 'scoped memory for tpu_custom_call.1']
    #allocation10 [shape = 'u8[512]{0}', space=vmem, size = 0x400, scoped, tag = 'input window, operand 6, single buffered']
    #allocation11 [shape = 'u8[16384]{0}', space=vmem, size = 0x4000, scoped, tag = 'output window, operand 0']
    %12 = vsyncpa [#allocation3], 0
    %13 = vsyncpa [#allocation6], 0
    %14 = vsyncpa [#allocation9], 0
    %15 = vsyncpa [#allocation4], 0
    %s16 = scalar_lea.sflag [#allocation4], 1
    %17 = vsyncpa %s16, 0
    loop: start=0, step=1, limit=4
    $region2: #{tpu_custom_call.1} parent=1 // loop_pre_header
      _
    $region3: #{tpu_custom_call.1} parent=1 // loop_header
      %s19 = sphi 0, %s23
      %p20 = scmp.ge.s32.totalorder %s19, 4
      %s29 = sphi 0, %s31
      %s32 = sphi 0, %s29
      %s33 = sphi 0, %s32
      %s49 = sphi 0, %s33
      %s53 = sphi 0, %s53
      %s55 = sphi 0, %s53
      %s56 = sphi 0, %s55
      %s70 = sphi 0, %s56
      %s74 = sphi 0, %s74
      %s76 = sphi 0, %s74
      %s77 = sphi 0, %s76
      %s91 = sphi 0, %s77
      %s95 = sphi 0, %s95
      %s97 = sphi 0, %s95
      %s98 = sphi 0, %s97
      %s112 = sphi 0, %s98
      %s116 = sphi 0, %s116
      %s118 = sphi 0, %s116
      %s119 = sphi 0, %s118
      %s133 = sphi 0, %s119
      %s137 = sphi 0, %s137
      %s139 = sphi 0, %s137
      %s140 = sphi 0, %s139
      %s154 = sphi 0, %s140
      %s158 = sphi 0, %s158
      %s160 = sphi 0, %s158
      %s161 = sphi 0, %s160
      %s175 = sphi 0, %s161
      %s181 = sphi 0, %s183
      %s184 = sphi 0, %s181
      %s185 = sphi 0, %s184
      %s201 = sphi 0, %s185
    $region4: #{tpu_custom_call.1} parent=1 // loop_header_branch
      %22 = sbr.rel (%p20) target = $region8
    $region5: #{tpu_custom_call.1} parent=1 // loop_body
      %s24 = ssub.s32 %s19, 1
      %s25 = ssub.s32 %s19, 2
      %s26 = sadd.s32 %s19, 1
      %s27 = ssub.s32 %s19, %s26
      %p28 = scmp.eq.s32.totalorder %s27, 0
      %s30 = sadd.s32 %s29, 1
      %s31 = scalar_select %p28, %s29, %s30
      %p34 = pneg %p28
      %p35 = scmp.eq.s32.totalorder %s19, 1
      %p36 = por %p34, %p35
      %p37 = scmp.ne.s32.totalorder %s29, %s32
      %p38 = scmp.eq.s32.totalorder %s19, 0
      %p39 = por %p37, %p38
      %p40 = scmp.ne.s32.totalorder %s29, %s32
      %p41 = scmp.eq.s32.totalorder %s24, 1
      %p42 = por %p40, %p41
      %p43 = scmp.ne.s32.totalorder %s32, %s33
      %p44 = scmp.eq.s32.totalorder %s24, 0
      %p45 = por %p43, %p44
      %p46 = scmp.ne.s32.totalorder %s32, %s33
      %p47 = scmp.eq.s32.totalorder %s25, 1
      %p48 = por %p46, %p47
      %p50 = scmp.ne.s32.totalorder %s33, %s49
      %p51 = scmp.eq.s32.totalorder %s25, 0
      %p52 = por %p50, %p51
      %s54 = sadd.s32 %s53, 1
      %p57 = scmp.eq.s32.totalorder %s19, 1
      %p58 = scmp.ne.s32.totalorder %s53, %s55
      %p59 = scmp.eq.s32.totalorder %s19, 0
      %p60 = por %p58, %p59
      %p61 = scmp.ne.s32.totalorder %s53, %s55
      %p62 = scmp.eq.s32.totalorder %s24, 1
      %p63 = por %p61, %p62
      %p64 = scmp.ne.s32.totalorder %s55, %s56
      %p65 = scmp.eq.s32.totalorder %s24, 0
      %p66 = por %p64, %p65
      %p67 = scmp.ne.s32.totalorder %s55, %s56
      %p68 = scmp.eq.s32.totalorder %s25, 1
      %p69 = por %p67, %p68
      %p71 = scmp.ne.s32.totalorder %s56, %s70
      %p72 = scmp.eq.s32.totalorder %s25, 0
      %p73 = por %p71, %p72
      %s75 = sadd.s32 %s74, 1
      %p78 = scmp.eq.s32.totalorder %s19, 1
      %p79 = scmp.ne.s32.totalorder %s74, %s76
      %p80 = scmp.eq.s32.totalorder %s19, 0
      %p81 = por %p79, %p80
      %p82 = scmp.ne.s32.totalorder %s74, %s76
      %p83 = scmp.eq.s32.totalorder %s24, 1
      %p84 = por %p82, %p83
      %p85 = scmp.ne.s32.totalorder %s76, %s77
      %p86 = scmp.eq.s32.totalorder %s24, 0
      %p87 = por %p85, %p86
      %p88 = scmp.ne.s32.totalorder %s76, %s77
      %p89 = scmp.eq.s32.totalorder %s25, 1
      %p90 = por %p88, %p89
      %p92 = scmp.ne.s32.totalorder %s77, %s91
      %p93 = scmp.eq.s32.totalorder %s25, 0
      %p94 = por %p92, %p93
      %s96 = sadd.s32 %s95, 1
      %p99 = scmp.eq.s32.totalorder %s19, 1
      %p100 = scmp.ne.s32.totalorder %s95, %s97
      %p101 = scmp.eq.s32.totalorder %s19, 0
      %p102 = por %p100, %p101
      %p103 = scmp.ne.s32.totalorder %s95, %s97
      %p104 = scmp.eq.s32.totalorder %s24, 1
      %p105 = por %p103, %p104
      %p106 = scmp.ne.s32.totalorder %s97, %s98
      %p107 = scmp.eq.s32.totalorder %s24, 0
      %p108 = por %p106, %p107
      %p109 = scmp.ne.s32.totalorder %s97, %s98
      %p110 = scmp.eq.s32.totalorder %s25, 1
      %p111 = por %p109, %p110
      %p113 = scmp.ne.s32.totalorder %s98, %s112
      %p114 = scmp.eq.s32.totalorder %s25, 0
      %p115 = por %p113, %p114
      %s117 = sadd.s32 %s116, 1
      %p120 = scmp.eq.s32.totalorder %s19, 1
      %p121 = scmp.ne.s32.totalorder %s116, %s118
      %p122 = scmp.eq.s32.totalorder %s19, 0
      %p123 = por %p121, %p122
      %p124 = scmp.ne.s32.totalorder %s116, %s118
      %p125 = scmp.eq.s32.totalorder %s24, 1
      %p126 = por %p124, %p125
      %p127 = scmp.ne.s32.totalorder %s118, %s119
      %p128 = scmp.eq.s32.totalorder %s24, 0
      %p129 = por %p127, %p128
      %p130 = scmp.ne.s32.totalorder %s118, %s119
      %p131 = scmp.eq.s32.totalorder %s25, 1
      %p132 = por %p130, %p131
      %p134 = scmp.ne.s32.totalorder %s119, %s133
      %p135 = scmp.eq.s32.totalorder %s25, 0
      %p136 = por %p134, %p135
      %s138 = sadd.s32 %s137, 1
      %p141 = scmp.eq.s32.totalorder %s19, 1
      %p142 = scmp.ne.s32.totalorder %s137, %s139
      %p143 = scmp.eq.s32.totalorder %s19, 0
      %p144 = por %p142, %p143
      %p145 = scmp.ne.s32.totalorder %s137, %s139
      %p146 = scmp.eq.s32.totalorder %s24, 1
      %p147 = por %p145, %p146
      %p148 = scmp.ne.s32.totalorder %s139, %s140
      %p149 = scmp.eq.s32.totalorder %s24, 0
      %p150 = por %p148, %p149
      %p151 = scmp.ne.s32.totalorder %s139, %s140
      %p152 = scmp.eq.s32.totalorder %s25, 1
      %p153 = por %p151, %p152
      %p155 = scmp.ne.s32.totalorder %s140, %s154
      %p156 = scmp.eq.s32.totalorder %s25, 0
      %p157 = por %p155, %p156
      %s159 = sadd.s32 %s158, 1
      %p162 = scmp.eq.s32.totalorder %s19, 1
      %p163 = scmp.ne.s32.totalorder %s158, %s160
      %p164 = scmp.eq.s32.totalorder %s19, 0
      %p165 = por %p163, %p164
      %p166 = scmp.ne.s32.totalorder %s158, %s160
      %p167 = scmp.eq.s32.totalorder %s24, 1
      %p168 = por %p166, %p167
      %p169 = scmp.ne.s32.totalorder %s160, %s161
      %p170 = scmp.eq.s32.totalorder %s24, 0
      %p171 = por %p169, %p170
      %p172 = scmp.ne.s32.totalorder %s160, %s161
      %p173 = scmp.eq.s32.totalorder %s25, 1
      %p174 = por %p172, %p173
      %p176 = scmp.ne.s32.totalorder %s161, %s175
      %p177 = scmp.eq.s32.totalorder %s25, 0
      %p178 = por %p176, %p177
      %s179 = ssub.s32 %s19, %s26
      %p180 = scmp.eq.s32.totalorder %s179, 0
      %s182 = sadd.s32 %s181, 1
      %s183 = scalar_select %p180, %s181, %s182
      %p186 = pneg %p180
      %p187 = scmp.eq.s32.totalorder %s19, 1
      %p188 = por %p186, %p187
      %p189 = scmp.ne.s32.totalorder %s181, %s184
      %p190 = scmp.eq.s32.totalorder %s19, 0
      %p191 = por %p189, %p190
      %p192 = scmp.ne.s32.totalorder %s181, %s184
      %p193 = scmp.eq.s32.totalorder %s24, 1
      %p194 = por %p192, %p193
      %p195 = scmp.ne.s32.totalorder %s184, %s185
      %p196 = scmp.eq.s32.totalorder %s24, 0
      %p197 = por %p195, %p196
      %p198 = scmp.ne.s32.totalorder %s184, %s185
      %p199 = scmp.eq.s32.totalorder %s25, 1
      %p200 = por %p198, %p199
      %p202 = scmp.ne.s32.totalorder %s185, %s201
      %p203 = scmp.eq.s32.totalorder %s25, 0
      %p204 = por %p202, %p203
      %p205 = scmp.le.s32.totalorder 1, %s19
      %p206 = scmp.lt.s32.totalorder %s19, 3
      %p207 = pnand %p205, %p206
      %p208 = pneg %p207
      // Predicated region
      $region9: #{tpu_custom_call.1} parent=5 // pred_check
        _
      $region10: #{tpu_custom_call.1} parent=5 // pred_check_branch
        %210 = sbr.rel (%p207) target = $region12
      $region11: #{tpu_custom_call.1} parent=5 // pred_region
        %s211 = ssub.s32 %s19, 1
        // Predicated region
        $region13: #{tpu_custom_call.1} parent=11 // pred_check
          %p212 = pneg %p66
        $region14: #{tpu_custom_call.1} parent=11 // pred_check_branch
          %214 = sbr.rel (%p212) target = $region16
        $region15: #{tpu_custom_call.1} parent=11 // pred_region
          %s216 = ssub.s32 768, 768
          %217 = vsyncadd [#allocation3], %s216
          %s218 = sshll.u32 [#allocation2], 4
          %s219 = int_to_ptr.vmem [resolvable:$true] %s218
          %224 = dma.hbm_to_vmem [thread:$0]  %s1, 768, %s219, [#allocation3], 256, 256, 16
        $region16: #{tpu_custom_call.1} parent=11 // pred_fallthru
          _
        // Predicated region
        $region17: #{tpu_custom_call.1} parent=11 // pred_check
          %p225 = pneg %p87
        $region18: #{tpu_custom_call.1} parent=11 // pred_check_branch
          %227 = sbr.rel (%p225) target = $region20
        $region19: #{tpu_custom_call.1} parent=11 // pred_region
          %s229 = ssub.s32 64, 64
          %230 = vsyncadd [#allocation6], %s229
          %s232 = sshll.u32 [#allocation5], 4
          %s233 = int_to_ptr.vmem [resolvable:$true] %s232
          %235 = dma.hbm_to_vmem [thread:$0]  %s2, 64, %s233, [#allocation6]
        $region20: #{tpu_custom_call.1} parent=11 // pred_fallthru
          _
        // Predicated region
        $region21: #{tpu_custom_call.1} parent=11 // pred_check
          %p236 = pneg %p108
        $region22: #{tpu_custom_call.1} parent=11 // pred_check_branch
          %238 = sbr.rel (%p236) target = $region24
        $region23: #{tpu_custom_call.1} parent=11 // pred_region
          %s240 = ssub.s32 81920, 81920
          %241 = vsyncadd [#allocation6], %s240
          %s242 = sshll.u32 [#allocation7], 4
          %s243 = int_to_ptr.vmem [resolvable:$true] %s242
          %248 = dma.hbm_to_vmem [thread:$0]  %s3, 81920, %s243, [#allocation6], 256, 256, 16
        $region24: #{tpu_custom_call.1} parent=11 // pred_fallthru
          _
        // Predicated region
        $region25: #{tpu_custom_call.1} parent=11 // pred_check
          %p249 = pneg %p129
        $region26: #{tpu_custom_call.1} parent=11 // pred_check_branch
          %251 = sbr.rel (%p249) target = $region28
        $region27: #{tpu_custom_call.1} parent=11 // pred_region
          _
        $region28: #{tpu_custom_call.1} parent=11 // pred_fallthru
          _
        // Predicated region
        $region29: #{tpu_custom_call.1} parent=11 // pred_check
          %p252 = pneg %p150
        $region30: #{tpu_custom_call.1} parent=11 // pred_check_branch
          %254 = sbr.rel (%p252) target = $region32
        $region31: #{tpu_custom_call.1} parent=11 // pred_region
          %s256 = ssub.s32 4096, 4096
          %257 = vsyncadd [#allocation9], %s256
          %s258 = sshll.u32 [#allocation8], 4
          %s259 = int_to_ptr.vmem [resolvable:$true] %s258
          %264 = dma.hbm_to_vmem [thread:$0]  %s5, 4096, %s259, [#allocation9], 64, 64, 4
        $region32: #{tpu_custom_call.1} parent=11 // pred_fallthru
          _
        // Predicated region
        $region33: #{tpu_custom_call.1} parent=11 // pred_check
          %p265 = pneg %p171
        $region34: #{tpu_custom_call.1} parent=11 // pred_check_branch
          %267 = sbr.rel (%p265) target = $region36
        $region35: #{tpu_custom_call.1} parent=11 // pred_region
          %s269 = ssub.s32 16, 16
          %270 = vsyncadd [#allocation9], %s269
          %s272 = sshll.u32 [#allocation10], 4
          %s273 = int_to_ptr.vmem [resolvable:$true] %s272
          %275 = dma.hbm_to_vmem [thread:$0]  %s6, 16, %s273, [#allocation9]
        $region36: #{tpu_custom_call.1} parent=11 // pred_fallthru
          _
      $region12: #{tpu_custom_call.1} parent=5 // pred_fallthru
        _
      %p276 = scmp.lt.s32.totalorder %s19, 2
      // Predicated region
      $region37: #{tpu_custom_call.1} parent=5 // pred_check
        %p277 = pneg %p276
      $region38: #{tpu_custom_call.1} parent=5 // pred_check_branch
        %279 = sbr.rel (%p277) target = $region40
      $region39: #{tpu_custom_call.1} parent=5 // pred_region
        // Predicated region
        $region41: #{tpu_custom_call.1} parent=39 // pred_check
          %p280 = pneg %p39
        $region42: #{tpu_custom_call.1} parent=39 // pred_check_branch
          %282 = sbr.rel (%p280) target = $region44
        $region43: #{tpu_custom_call.1} parent=39 // pred_region
          %s283 = smul.u32 2, %s19
          %p284 = scmp.lt.s32.totalorder %s283, 3
          %s285 = scalar_select %p284, %s283, 3
          %s286 = smul.addr %s285, 8
          %s287 = scalar_lea.vmem %s0, %s286
          %s288 = smul.u32 2, %s19
        $region44: #{tpu_custom_call.1} parent=39 // pred_fallthru
          _
      $region40: #{tpu_custom_call.1} parent=5 // pred_fallthru
        _
      %p289 = scmp.le.s32.totalorder 1, %s19
      %p290 = scmp.lt.s32.totalorder %s19, 3
      %p291 = pnand %p289, %p290
      %p292 = pneg %p291
      // Predicated region
      $region45: #{tpu_custom_call.1} parent=5 // pred_check
        _
      $region46: #{tpu_custom_call.1} parent=5 // pred_check_branch
        %294 = sbr.rel (%p291) target = $region48
      $region47: #{tpu_custom_call.1} parent=5 // pred_region
        %s295 = ssub.s32 %s19, 1
        // Predicated region
        $region49: #{tpu_custom_call.1} parent=47 // pred_check
          %p296 = pneg %p66
        $region50: #{tpu_custom_call.1} parent=47 // pred_check_branch
          %298 = sbr.rel (%p296) target = $region52
        $region51: #{tpu_custom_call.1} parent=47 // pred_region
          %299 = dma.done [#allocation3], 768
        $region52: #{tpu_custom_call.1} parent=47 // pred_fallthru
          _
        // Predicated region
        $region53: #{tpu_custom_call.1} parent=47 // pred_check
          %p300 = pneg %p87
        $region54: #{tpu_custom_call.1} parent=47 // pred_check_branch
          %302 = sbr.rel (%p300) target = $region56
        $region55: #{tpu_custom_call.1} parent=47 // pred_region
          %303 = dma.done [#allocation6], 64
        $region56: #{tpu_custom_call.1} parent=47 // pred_fallthru
          _
        // Predicated region
        $region57: #{tpu_custom_call.1} parent=47 // pred_check
          %p304 = pneg %p108
        $region58: #{tpu_custom_call.1} parent=47 // pred_check_branch
          %306 = sbr.rel (%p304) target = $region60
        $region59: #{tpu_custom_call.1} parent=47 // pred_region
          %307 = dma.done [#allocation6], 81920
        $region60: #{tpu_custom_call.1} parent=47 // pred_fallthru
          _
        // Predicated region
        $region61: #{tpu_custom_call.1} parent=47 // pred_check
          %p308 = pneg %p150
        $region62: #{tpu_custom_call.1} parent=47 // pred_check_branch
          %310 = sbr.rel (%p308) target = $region64
        $region63: #{tpu_custom_call.1} parent=47 // pred_region
          %311 = dma.done [#allocation9], 4096
        $region64: #{tpu_custom_call.1} parent=47 // pred_fallthru
          _
        // Predicated region
        $region65: #{tpu_custom_call.1} parent=47 // pred_check
          %p312 = pneg %p171
        $region66: #{tpu_custom_call.1} parent=47 // pred_check_branch
          %314 = sbr.rel (%p312) target = $region68
        $region67: #{tpu_custom_call.1} parent=47 // pred_region
          %315 = dma.done [#allocation9], 16
        $region68: #{tpu_custom_call.1} parent=47 // pred_fallthru
          _
        %s316 = smul.u32 2, %s24
        %p317 = scmp.lt.s32.totalorder %s316, 3
        %s318 = scalar_select %p317, %s316, 3
        %s319 = smul.addr %s318, 8
        %s320 = scalar_lea.vmem %s0, %s319
        %p321 = pneg %p45
        %p322 = pneg %p42
        %p323 = pneg %p66
        %p324 = pneg %p63
        %p325 = pneg %p87
        %p326 = pneg %p84
        %p327 = pneg %p108
        %p328 = pneg %p105
        %p329 = pneg %p129
        %p330 = pneg %p126
        %p331 = pneg %p150
        %p332 = pneg %p147
        %p333 = pneg %p171
        %p334 = pneg %p168
        %p335 = pneg %p197
        %p336 = pneg %p194
        %s337 = sand.u32 %s184, 1
        %s338 = scalar_lea.sflag [#allocation4], %s337
        %s339 = sand.u32 %s184, 1
        %s340 = smul.addr %s339, 16
        %s341 = scalar_lea.vmem [#allocation11], %s340
        %s342 = smul.u32 2, %s24
        %p343 = scmp.lt.s32.totalorder %s342, 3
        %s344 = scalar_select %p343, %s342, 3
        %s345 = smul.addr %s344, 8
        %s346 = scalar_lea.vmem %s0, %s345
        %s347 = smul.u32 2, %s24
        %s348 = smul.u32 2, %s24
        %v350 = vld [vmem:[%s346] sm:$0xff]
        %v351 = vld [vmem:[%s346 + $0x8] sm:$0xff]
        %v352 = vpack.c.bf16 %v351, %v350
        %v353 = vld [vmem:[#allocation2] sm:$0xff]
        %v354 = vld [vmem:[#allocation2 + $0x8] sm:$0xff]
        %v355 = vld [vmem:[#allocation2 + $0x10] sm:$0xff]
        %v356 = vld [vmem:[#allocation2 + $0x18] sm:$0xff]
        %v357 = vld [vmem:[#allocation2 + $0x20] sm:$0xff]
        %v358 = vld [vmem:[#allocation2 + $0x28] sm:$0xff]
        %v365 = vunpack.c.l.b16 %v353
        %v366 = vunpack.c.h.b16 %v353
        %v367 = vunpack.c.l.b16 %v354
        %v368 = vunpack.c.h.b16 %v354
        %v369 = vunpack.c.l.b16 %v355
        %v370 = vunpack.c.h.b16 %v355
        %v371 = vunpack.c.l.b16 %v356
        %v372 = vunpack.c.h.b16 %v356
        %v373 = vunpack.c.l.b16 %v357
        %v374 = vunpack.c.h.b16 %v357
        %v375 = vunpack.c.l.b16 %v358
        %v376 = vunpack.c.h.b16 %v358
        %v377 = vpack.c.b16 %v369, %v365
        %v378 = vpack.c.b16 %v370, %v366
        %v379 = vpack.c.b16 %v371, %v367
        %v380 = vpack.c.b16 %v372, %v368
        %v381 = vpack.c.b16 %v373, %v373
        %v382 = vpack.c.b16 %v374, %v374
        %v383 = vpack.c.b16 %v375, %v375
        %v384 = vpack.c.b16 %v376, %v376
        %vm389 = vcmask 195584
        %v391 = vsel %vm389, %v352, 0
        %vm393 = vcmask 1043456
        %v395 = vsel %vm393, %v381, 0
        %v398 = vsel %vm393, %v382, 0
        %v401 = vsel %vm393, %v383, 0
        %v404 = vsel %vm393, %v384, 0
        %406 = vmatprep.subr.bf16.mxu0 %v378
        %407 = vmatpush1.bf16.msra.mxu0 %v377
        %408 = vmatprep.subr.bf16.mxu0 %v398
        %409 = vmatpush1.bf16.msra.mxu0 %v395
        %410 = vmatprep.subr.bf16.mxu0 0
        %411 = vmatpush1.bf16.msra.mxu0 0
        %412 = vmatprep.subr.bf16.mxu0 0
        %413 = vmatpush1.bf16.msra.mxu0 0
        %414 = vmatprep.subr.bf16.mxu0 0
        %415 = vmatpush1.bf16.msra.mxu0 0
        %416 = vmatprep.subr.bf16.mxu0 0
        %417 = vmatpush1.bf16.msra.mxu0 0
        %418 = vmatprep.subr.bf16.mxu0 0
        %419 = vmatpush1.bf16.msra.mxu0 0
        %420 = vmatprep.subr.bf16.mxu0 0
        %421 = vmatpush1.bf16.msra.mxu0 0
        %422 = vmatprep.subr.bf16.mxu0 0
        %423 = vmatpush1.bf16.msra.mxu0 0
        %424 = vmatprep.subr.bf16.mxu0 0
        %425 = vmatpush1.bf16.msra.mxu0 0
        %426 = vmatprep.subr.bf16.mxu0 0
        %427 = vmatpush1.bf16.msra.mxu0 0
        %428 = vmatprep.subr.bf16.mxu0 0
        %429 = vmatpush1.bf16.msra.mxu0 0
        %430 = vmatprep.subr.bf16.mxu0 0
        %431 = vmatpush1.bf16.msra.mxu0 0
        %432 = vmatprep.subr.bf16.mxu0 0
        %433 = vmatpush1.bf16.msra.mxu0 0
        %434 = vmatprep.subr.bf16.mxu0 0
        %435 = vmatpush1.bf16.msra.mxu0 0
        %436 = vmatprep.subr.bf16.mxu0 0
        %437 = vmatpush1.bf16.msra.mxu0 0
        %438 = vmatprep.mubr.bf16.mxu0 0
        %439 = vmatmul.mubr.bf16.gmra.mrb[0].mxu0 %v391
        %v440 = vpop.f32.mrb[0].mxu0
        %v441 = vadd.f32 0.0, %v440
        %v442 = vpop.f32.mrb[0].mxu0
        %v443 = vadd.f32 0.0, %v442
        %v444 = vpop.f32.mrb[0].mxu0
        %v445 = vadd.f32 0.0, %v444
        %v446 = vpop.f32.mrb[0].mxu0
        %v447 = vadd.f32 0.0, %v446
        %448 = vdwg.mxu0
        %449 = vmatprep.subr.bf16.mxu0 %v380
        %450 = vmatpush1.bf16.msra.mxu0 %v379
        %451 = vmatprep.subr.bf16.mxu0 %v404
        %452 = vmatpush1.bf16.msra.mxu0 %v401
        %453 = vmatprep.subr.bf16.mxu0 0
        %454 = vmatpush1.bf16.msra.mxu0 0
        %455 = vmatprep.subr.bf16.mxu0 0
        %456 = vmatpush1.bf16.msra.mxu0 0
        %457 = vmatprep.subr.bf16.mxu0 0
        %458 = vmatpush1.bf16.msra.mxu0 0
        %459 = vmatprep.subr.bf16.mxu0 0
        %460 = vmatpush1.bf16.msra.mxu0 0
        %461 = vmatprep.subr.bf16.mxu0 0
        %462 = vmatpush1.bf16.msra.mxu0 0
        %463 = vmatprep.subr.bf16.mxu0 0
        %464 = vmatpush1.bf16.msra.mxu0 0
        %465 = vmatprep.subr.bf16.mxu0 0
        %466 = vmatpush1.bf16.msra.mxu0 0
        %467 = vmatprep.subr.bf16.mxu0 0
        %468 = vmatpush1.bf16.msra.mxu0 0
        %469 = vmatprep.subr.bf16.mxu0 0
        %470 = vmatpush1.bf16.msra.mxu0 0
        %471 = vmatprep.subr.bf16.mxu0 0
        %472 = vmatpush1.bf16.msra.mxu0 0
        %473 = vmatprep.subr.bf16.mxu0 0
        %474 = vmatpush1.bf16.msra.mxu0 0
        %475 = vmatprep.subr.bf16.mxu0 0
        %476 = vmatpush1.bf16.msra.mxu0 0
        %477 = vmatprep.subr.bf16.mxu0 0
        %478 = vmatpush1.bf16.msra.mxu0 0
        %479 = vmatprep.subr.bf16.mxu0 0
        %480 = vmatpush1.bf16.msra.mxu0 0
        %481 = vmatprep.mubr.bf16.mxu0 0
        %482 = vmatmul.mubr.bf16.gmra.mrb[0].mxu0 %v391
        %v483 = vpop.f32.mrb[0].mxu0
        %v484 = vadd.f32 0.0, %v483
        %v485 = vpop.f32.mrb[0].mxu0
        %v486 = vadd.f32 0.0, %v485
        %v487 = vpop.f32.mrb[0].mxu0
        %v488 = vadd.f32 0.0, %v487
        %v489 = vpop.f32.mrb[0].mxu0
        %v490 = vadd.f32 0.0, %v489
        %491 = vdwg.mxu0
        %v492 = vpack.c.bf16 %v445, %v441
        %v493 = vpack.c.bf16 %v447, %v443
        %v494 = vpack.c.bf16 %v488, %v484
        %v495 = vpack.c.bf16 %v490, %v486
        %v496 = vld [vmem:[#allocation5] sm:$0xf]
        %v499 = vunpack.c.l.s4 1966171168
        %v500 = vunpack.c.0.s8 %v499
        %v501 = vlaneseq
        %v502 = vshrl.u32 %v501, 7
        %v503 = vsub.s32 %v500, %v502
        %v504 = vrot.slane %v496, %v503
        %v505 = vcombine.high %v504, %v504
        %v507 = vunpack.c.l.s4 1966171168
        %v508 = vunpack.c.0.s8 %v507
        %v509 = vlaneseq
        %v510 = vshrl.u32 %v509, 7
        %v511 = vsub.s32 %v508, %v510
        %v512 = vrot.slane %v504, %v511
        %v514 = vunpack.c.l.s4 1966171168
        %v515 = vunpack.c.0.s8 %v514
        %v516 = vlaneseq
        %v517 = vshrl.u32 %v516, 7
        %v518 = vsub.s32 %v515, %v517
        %v519 = vrot.slane %v505, %v518
        %v520 = vcombine.high %v512, %v512
        %v521 = vcombine.high %v519, %v519
        %v523 = vpack.i.b16 %v512, %v512
        %v525 = vlaneseq
        %v526 = vshrl.u32 %v525, 7
        %v527 = vsub.s32 0, %v526
        %v528 = vrot.slane %v523, %v527
        %v530 = vpack.i.b16 %v519, %v519
        %v532 = vlaneseq
        %v533 = vshrl.u32 %v532, 7
        %v534 = vsub.s32 0, %v533
        %v535 = vrot.slane %v530, %v534
        %v537 = vpack.i.b16 %v520, %v520
        %v539 = vlaneseq
        %v540 = vshrl.u32 %v539, 7
        %v541 = vsub.s32 0, %v540
        %v542 = vrot.slane %v537, %v541
        %v544 = vpack.i.b16 %v521, %v521
        %v546 = vlaneseq
        %v547 = vshrl.u32 %v546, 7
        %v548 = vsub.s32 0, %v547
        %v549 = vrot.slane %v544, %v548
        %v550 = vadd.bf16 %v492, %v528
        %v551 = vadd.bf16 %v493, %v535
        %v552 = vadd.bf16 %v494, %v542
        %v553 = vadd.bf16 %v495, %v549
        %v554 = vmax.bf16 %v550, 0
        %v555 = vmax.bf16 %v551, 0
        %v556 = vmax.bf16 %v552, 0
        %v557 = vmax.bf16 %v553, 0
        %v558 = vld [vmem:[#allocation7] sm:$0xff]
        %v559 = vld [vmem:[#allocation7 + $0x8] sm:$0xff]
        %v560 = vld [vmem:[#allocation7 + $0x10] sm:$0xff]
        %v561 = vld [vmem:[#allocation7 + $0x18] sm:$0xff]
        %v562 = vld [vmem:[#allocation7 + $0x20] sm:$0xff]
        %v563 = vld [vmem:[#allocation7 + $0x28] sm:$0xff]
        %v564 = vld [vmem:[#allocation7 + $0x30] sm:$0xff]
        %v565 = vld [vmem:[#allocation7 + $0x38] sm:$0xff]
        %v566 = vld [vmem:[#allocation7 + $0x40] sm:$0xff]
        %v567 = vld [vmem:[#allocation7 + $0x48] sm:$0xff]
        %v568 = vld [vmem:[#allocation7 + $0x50] sm:$0xff]
        %v569 = vld [vmem:[#allocation7 + $0x58] sm:$0xff]
        %v570 = vld [vmem:[#allocation7 + $0x60] sm:$0xff]
        %v571 = vld [vmem:[#allocation7 + $0x68] sm:$0xff]
        %v572 = vld [vmem:[#allocation7 + $0x70] sm:$0xff]
        %v573 = vld [vmem:[#allocation7 + $0x78] sm:$0xff]
        %v574 = vld [vmem:[#allocation7 + $0x80] sm:$0xff]
        %v575 = vld [vmem:[#allocation7 + $0x88] sm:$0xff]
        %v576 = vld [vmem:[#allocation7 + $0x90] sm:$0xff]
        %v577 = vld [vmem:[#allocation7 + $0x98] sm:$0xff]
        %v578 = vld [vmem:[#allocation7 + $0xa0] sm:$0xff]
        %v579 = vld [vmem:[#allocation7 + $0xa8] sm:$0xff]
        %v580 = vld [vmem:[#allocation7 + $0xb0] sm:$0xff]
        %v581 = vld [vmem:[#allocation7 + $0xb8] sm:$0xff]
        %v582 = vld [vmem:[#allocation7 + $0xc0] sm:$0xff]
        %v583 = vld [vmem:[#allocation7 + $0xc8] sm:$0xff]
        %v584 = vld [vmem:[#allocation7 + $0xd0] sm:$0xff]
        %v585 = vld [vmem:[#allocation7 + $0xd8] sm:$0xff]
        %v586 = vld [vmem:[#allocation7 + $0xe0] sm:$0xff]
        %v587 = vld [vmem:[#allocation7 + $0xe8] sm:$0xff]
        %v588 = vld [vmem:[#allocation7 + $0xf0] sm:$0xff]
        %v589 = vld [vmem:[#allocation7 + $0xf8] sm:$0xff]
        %v590 = vld [vmem:[#allocation7 + $0x100] sm:$0xff]
        %v591 = vld [vmem:[#allocation7 + $0x108] sm:$0xff]
        %v592 = vld [vmem:[#allocation7 + $0x110] sm:$0xff]
        %v593 = vld [vmem:[#allocation7 + $0x118] sm:$0xff]
        %v594 = vld [vmem:[#allocation7 + $0x120] sm:$0xff]
        %v595 = vld [vmem:[#allocation7 + $0x128] sm:$0xff]
        %v596 = vld [vmem:[#allocation7 + $0x130] sm:$0xff]
        %v597 = vld [vmem:[#allocation7 + $0x138] sm:$0xff]
        %v598 = vld [vmem:[#allocation7 + $0x140] sm:$0xff]
        %v599 = vld [vmem:[#allocation7 + $0x148] sm:$0xff]
        %v600 = vld [vmem:[#allocation7 + $0x150] sm:$0xff]
        %v601 = vld [vmem:[#allocation7 + $0x158] sm:$0xff]
        %v602 = vld [vmem:[#allocation7 + $0x160] sm:$0xff]
        %v603 = vld [vmem:[#allocation7 + $0x168] sm:$0xff]
        %v604 = vld [vmem:[#allocation7 + $0x170] sm:$0xff]
        %v605 = vld [vmem:[#allocation7 + $0x178] sm:$0xff]
        %v606 = vld [vmem:[#allocation7 + $0x180] sm:$0xff]
        %v607 = vld [vmem:[#allocation7 + $0x188] sm:$0xff]
        %v608 = vld [vmem:[#allocation7 + $0x190] sm:$0xff]
        %v609 = vld [vmem:[#allocation7 + $0x198] sm:$0xff]
        %v610 = vld [vmem:[#allocation7 + $0x1a0] sm:$0xff]
        %v611 = vld [vmem:[#allocation7 + $0x1a8] sm:$0xff]
        %v612 = vld [vmem:[#allocation7 + $0x1b0] sm:$0xff]
        %v613 = vld [vmem:[#allocation7 + $0x1b8] sm:$0xff]
        %v614 = vld [vmem:[#allocation7 + $0x1c0] sm:$0xff]
        %v615 = vld [vmem:[#allocation7 + $0x1c8] sm:$0xff]
        %v616 = vld [vmem:[#allocation7 + $0x1d0] sm:$0xff]
        %v617 = vld [vmem:[#allocation7 + $0x1d8] sm:$0xff]
        %v618 = vld [vmem:[#allocation7 + $0x1e0] sm:$0xff]
        %v619 = vld [vmem:[#allocation7 + $0x1e8] sm:$0xff]
        %v620 = vld [vmem:[#allocation7 + $0x1f0] sm:$0xff]
        %v621 = vld [vmem:[#allocation7 + $0x1f8] sm:$0xff]
        %v622 = vld [vmem:[#allocation7 + $0x200] sm:$0xff]
        %v623 = vld [vmem:[#allocation7 + $0x208] sm:$0xff]
        %v624 = vld [vmem:[#allocation7 + $0x210] sm:$0xff]
        %v625 = vld [vmem:[#allocation7 + $0x218] sm:$0xff]
        %v626 = vld [vmem:[#allocation7 + $0x220] sm:$0xff]
        %v627 = vld [vmem:[#allocation7 + $0x228] sm:$0xff]
        %v628 = vld [vmem:[#allocation7 + $0x230] sm:$0xff]
        %v629 = vld [vmem:[#allocation7 + $0x238] sm:$0xff]
        %v630 = vld [vmem:[#allocation7 + $0x240] sm:$0xff]
        %v631 = vld [vmem:[#allocation7 + $0x248] sm:$0xff]
        %v632 = vld [vmem:[#allocation7 + $0x250] sm:$0xff]
        %v633 = vld [vmem:[#allocation7 + $0x258] sm:$0xff]
        %v634 = vld [vmem:[#allocation7 + $0x260] sm:$0xff]
        %v635 = vld [vmem:[#allocation7 + $0x268] sm:$0xff]
        %v636 = vld [vmem:[#allocation7 + $0x270] sm:$0xff]
        %v637 = vld [vmem:[#allocation7 + $0x278] sm:$0xff]
        %v638 = vld [vmem:[#allocation7 + $0x280] sm:$0xff]
        %v639 = vld [vmem:[#allocation7 + $0x288] sm:$0xff]
        %v640 = vld [vmem:[#allocation7 + $0x290] sm:$0xff]
        %v641 = vld [vmem:[#allocation7 + $0x298] sm:$0xff]
        %v642 = vld [vmem:[#allocation7 + $0x2a0] sm:$0xff]
        %v643 = vld [vmem:[#allocation7 + $0x2a8] sm:$0xff]
        %v644 = vld [vmem:[#allocation7 + $0x2b0] sm:$0xff]
        %v645 = vld [vmem:[#allocation7 + $0x2b8] sm:$0xff]
        %v646 = vld [vmem:[#allocation7 + $0x2c0] sm:$0xff]
        %v647 = vld [vmem:[#allocation7 + $0x2c8] sm:$0xff]
        %v648 = vld [vmem:[#allocation7 + $0x2d0] sm:$0xff]
        %v649 = vld [vmem:[#allocation7 + $0x2d8] sm:$0xff]
        %v650 = vld [vmem:[#allocation7 + $0x2e0] sm:$0xff]
        %v651 = vld [vmem:[#allocation7 + $0x2e8] sm:$0xff]
        %v652 = vld [vmem:[#allocation7 + $0x2f0] sm:$0xff]
        %v653 = vld [vmem:[#allocation7 + $0x2f8] sm:$0xff]
        %v654 = vld [vmem:[#allocation7 + $0x300] sm:$0xff]
        %v655 = vld [vmem:[#allocation7 + $0x308] sm:$0xff]
        %v656 = vld [vmem:[#allocation7 + $0x310] sm:$0xff]
        %v657 = vld [vmem:[#allocation7 + $0x318] sm:$0xff]
        %v658 = vld [vmem:[#allocation7 + $0x320] sm:$0xff]
        %v659 = vld [vmem:[#allocation7 + $0x328] sm:$0xff]
        %v660 = vld [vmem:[#allocation7 + $0x330] sm:$0xff]
        %v661 = vld [vmem:[#allocation7 + $0x338] sm:$0xff]
        %v662 = vld [vmem:[#allocation7 + $0x340] sm:$0xff]
        %v663 = vld [vmem:[#allocation7 + $0x348] sm:$0xff]
        %v664 = vld [vmem:[#allocation7 + $0x350] sm:$0xff]
        %v665 = vld [vmem:[#allocation7 + $0x358] sm:$0xff]
        %v666 = vld [vmem:[#allocation7 + $0x360] sm:$0xff]
        %v667 = vld [vmem:[#allocation7 + $0x368] sm:$0xff]
        %v668 = vld [vmem:[#allocation7 + $0x370] sm:$0xff]
        %v669 = vld [vmem:[#allocation7 + $0x378] sm:$0xff]
        %v670 = vld [vmem:[#allocation7 + $0x380] sm:$0xff]
        %v671 = vld [vmem:[#allocation7 + $0x388] sm:$0xff]
        %v672 = vld [vmem:[#allocation7 + $0x390] sm:$0xff]
        %v673 = vld [vmem:[#allocation7 + $0x398] sm:$0xff]
        %v674 = vld [vmem:[#allocation7 + $0x3a0] sm:$0xff]
        %v675 = vld [vmem:[#allocation7 + $0x3a8] sm:$0xff]
        %v676 = vld [vmem:[#allocation7 + $0x3b0] sm:$0xff]
        %v677 = vld [vmem:[#allocation7 + $0x3b8] sm:$0xff]
        %v678 = vld [vmem:[#allocation7 + $0x3c0] sm:$0xff]
        %v679 = vld [vmem:[#allocation7 + $0x3c8] sm:$0xff]
        %v680 = vld [vmem:[#allocation7 + $0x3d0] sm:$0xff]
        %v681 = vld [vmem:[#allocation7 + $0x3d8] sm:$0xff]
        %v682 = vld [vmem:[#allocation7 + $0x3e0] sm:$0xff]
        %v683 = vld [vmem:[#allocation7 + $0x3e8] sm:$0xff]
        %v684 = vld [vmem:[#allocation7 + $0x3f0] sm:$0xff]
        %v685 = vld [vmem:[#allocation7 + $0x3f8] sm:$0xff]
        %v814 = vunpack.c.l.b16 %v558
        %v815 = vunpack.c.h.b16 %v558
        %v816 = vunpack.c.l.b16 %v559
        %v817 = vunpack.c.h.b16 %v559
        %v818 = vunpack.c.l.b16 %v560
        %v819 = vunpack.c.h.b16 %v560
        %v820 = vunpack.c.l.b16 %v561
        %v821 = vunpack.c.h.b16 %v561
        %v822 = vunpack.c.l.b16 %v562
        %v823 = vunpack.c.h.b16 %v562
        %v824 = vunpack.c.l.b16 %v563
        %v825 = vunpack.c.h.b16 %v563
        %v826 = vunpack.c.l.b16 %v564
        %v827 = vunpack.c.h.b16 %v564
        %v828 = vunpack.c.l.b16 %v565
        %v829 = vunpack.c.h.b16 %v565
        %v830 = vunpack.c.l.b16 %v566
        %v831 = vunpack.c.h.b16 %v566
        %v832 = vunpack.c.l.b16 %v567
        %v833 = vunpack.c.h.b16 %v567
        %v834 = vunpack.c.l.b16 %v568
        %v835 = vunpack.c.h.b16 %v568
        %v836 = vunpack.c.l.b16 %v569
        %v837 = vunpack.c.h.b16 %v569
        %v838 = vunpack.c.l.b16 %v570
        %v839 = vunpack.c.h.b16 %v570
        %v840 = vunpack.c.l.b16 %v571
        %v841 = vunpack.c.h.b16 %v571
        %v842 = vunpack.c.l.b16 %v572
        %v843 = vunpack.c.h.b16 %v572
        %v844 = vunpack.c.l.b16 %v573
        %v845 = vunpack.c.h.b16 %v573
        %v846 = vunpack.c.l.b16 %v574
        %v847 = vunpack.c.h.b16 %v574
        %v848 = vunpack.c.l.b16 %v575
        %v849 = vunpack.c.h.b16 %v575
        %v850 = vunpack.c.l.b16 %v576
        %v851 = vunpack.c.h.b16 %v576
        %v852 = vunpack.c.l.b16 %v577
        %v853 = vunpack.c.h.b16 %v577
        %v854 = vunpack.c.l.b16 %v578
        %v855 = vunpack.c.h.b16 %v578
        %v856 = vunpack.c.l.b16 %v579
        %v857 = vunpack.c.h.b16 %v579
        %v858 = vunpack.c.l.b16 %v580
        %v859 = vunpack.c.h.b16 %v580
        %v860 = vunpack.c.l.b16 %v581
        %v861 = vunpack.c.h.b16 %v581
        %v862 = vunpack.c.l.b16 %v582
        %v863 = vunpack.c.h.b16 %v582
        %v864 = vunpack.c.l.b16 %v583
        %v865 = vunpack.c.h.b16 %v583
        %v866 = vunpack.c.l.b16 %v584
        %v867 = vunpack.c.h.b16 %v584
        %v868 = vunpack.c.l.b16 %v585
        %v869 = vunpack.c.h.b16 %v585
        %v870 = vunpack.c.l.b16 %v586
        %v871 = vunpack.c.h.b16 %v586
        %v872 = vunpack.c.l.b16 %v587
        %v873 = vunpack.c.h.b16 %v587
        %v874 = vunpack.c.l.b16 %v588
        %v875 = vunpack.c.h.b16 %v588
        %v876 = vunpack.c.l.b16 %v589
        %v877 = vunpack.c.h.b16 %v589
        %v878 = vunpack.c.l.b16 %v590
        %v879 = vunpack.c.h.b16 %v590
        %v880 = vunpack.c.l.b16 %v591
        %v881 = vunpack.c.h.b16 %v591
        %v882 = vunpack.c.l.b16 %v592
        %v883 = vunpack.c.h.b16 %v592
        %v884 = vunpack.c.l.b16 %v593
        %v885 = vunpack.c.h.b16 %v593
        %v886 = vunpack.c.l.b16 %v594
        %v887 = vunpack.c.h.b16 %v594
        %v888 = vunpack.c.l.b16 %v595
        %v889 = vunpack.c.h.b16 %v595
        %v890 = vunpack.c.l.b16 %v596
        %v891 = vunpack.c.h.b16 %v596
        %v892 = vunpack.c.l.b16 %v597
        %v893 = vunpack.c.h.b16 %v597
        %v894 = vunpack.c.l.b16 %v598
        %v895 = vunpack.c.h.b16 %v598
        %v896 = vunpack.c.l.b16 %v599
        %v897 = vunpack.c.h.b16 %v599
        %v898 = vunpack.c.l.b16 %v600
        %v899 = vunpack.c.h.b16 %v600
        %v900 = vunpack.c.l.b16 %v601
        %v901 = vunpack.c.h.b16 %v601
        %v902 = vunpack.c.l.b16 %v602
        %v903 = vunpack.c.h.b16 %v602
        %v904 = vunpack.c.l.b16 %v603
        %v905 = vunpack.c.h.b16 %v603
        %v906 = vunpack.c.l.b16 %v604
        %v907 = vunpack.c.h.b16 %v604
        %v908 = vunpack.c.l.b16 %v605
        %v909 = vunpack.c.h.b16 %v605
        %v910 = vunpack.c.l.b16 %v606
        %v911 = vunpack.c.h.b16 %v606
        %v912 = vunpack.c.l.b16 %v607
        %v913 = vunpack.c.h.b16 %v607
        %v914 = vunpack.c.l.b16 %v608
        %v915 = vunpack.c.h.b16 %v608
        %v916 = vunpack.c.l.b16 %v609
        %v917 = vunpack.c.h.b16 %v609
        %v918 = vunpack.c.l.b16 %v610
        %v919 = vunpack.c.h.b16 %v610
        %v920 = vunpack.c.l.b16 %v611
        %v921 = vunpack.c.h.b16 %v611
        %v922 = vunpack.c.l.b16 %v612
        %v923 = vunpack.c.h.b16 %v612
        %v924 = vunpack.c.l.b16 %v613
        %v925 = vunpack.c.h.b16 %v613
        %v926 = vunpack.c.l.b16 %v614
        %v927 = vunpack.c.h.b16 %v614
        %v928 = vunpack.c.l.b16 %v615
        %v929 = vunpack.c.h.b16 %v615
        %v930 = vunpack.c.l.b16 %v616
        %v931 = vunpack.c.h.b16 %v616
        %v932 = vunpack.c.l.b16 %v617
        %v933 = vunpack.c.h.b16 %v617
        %v934 = vunpack.c.l.b16 %v618
        %v935 = vunpack.c.h.b16 %v618
        %v936 = vunpack.c.l.b16 %v619
        %v937 = vunpack.c.h.b16 %v619
        %v938 = vunpack.c.l.b16 %v620
        %v939 = vunpack.c.h.b16 %v620
        %v940 = vunpack.c.l.b16 %v621
        %v941 = vunpack.c.h.b16 %v621
        %v942 = vunpack.c.l.b16 %v622
        %v943 = vunpack.c.h.b16 %v622
        %v944 = vunpack.c.l.b16 %v623
        %v945 = vunpack.c.h.b16 %v623
        %v946 = vunpack.c.l.b16 %v624
        %v947 = vunpack.c.h.b16 %v624
        %v948 = vunpack.c.l.b16 %v625
        %v949 = vunpack.c.h.b16 %v625
        %v950 = vunpack.c.l.b16 %v626
        %v951 = vunpack.c.h.b16 %v626
        %v952 = vunpack.c.l.b16 %v627
        %v953 = vunpack.c.h.b16 %v627
        %v954 = vunpack.c.l.b16 %v628
        %v955 = vunpack.c.h.b16 %v628
        %v956 = vunpack.c.l.b16 %v629
        %v957 = vunpack.c.h.b16 %v629
        %v958 = vunpack.c.l.b16 %v630
        %v959 = vunpack.c.h.b16 %v630
        %v960 = vunpack.c.l.b16 %v631
        %v961 = vunpack.c.h.b16 %v631
        %v962 = vunpack.c.l.b16 %v632
        %v963 = vunpack.c.h.b16 %v632
        %v964 = vunpack.c.l.b16 %v633
        %v965 = vunpack.c.h.b16 %v633
        %v966 = vunpack.c.l.b16 %v634
        %v967 = vunpack.c.h.b16 %v634
        %v968 = vunpack.c.l.b16 %v635
        %v969 = vunpack.c.h.b16 %v635
        %v970 = vunpack.c.l.b16 %v636
        %v971 = vunpack.c.h.b16 %v636
        %v972 = vunpack.c.l.b16 %v637
        %v973 = vunpack.c.h.b16 %v637
        %v974 = vunpack.c.l.b16 %v638
        %v975 = vunpack.c.h.b16 %v638
        %v976 = vunpack.c.l.b16 %v639
        %v977 = vunpack.c.h.b16 %v639
        %v978 = vunpack.c.l.b16 %v640
        %v979 = vunpack.c.h.b16 %v640
        %v980 = vunpack.c.l.b16 %v641
        %v981 = vunpack.c.h.b16 %v641
        %v982 = vunpack.c.l.b16 %v642
        %v983 = vunpack.c.h.b16 %v642
        %v984 = vunpack.c.l.b16 %v643
        %v985 = vunpack.c.h.b16 %v643
        %v986 = vunpack.c.l.b16 %v644
        %v987 = vunpack.c.h.b16 %v644
        %v988 = vunpack.c.l.b16 %v645
        %v989 = vunpack.c.h.b16 %v645
        %v990 = vunpack.c.l.b16 %v646
        %v991 = vunpack.c.h.b16 %v646
        %v992 = vunpack.c.l.b16 %v647
        %v993 = vunpack.c.h.b16 %v647
        %v994 = vunpack.c.l.b16 %v648
        %v995 = vunpack.c.h.b16 %v648
        %v996 = vunpack.c.l.b16 %v649
        %v997 = vunpack.c.h.b16 %v649
        %v998 = vunpack.c.l.b16 %v650
        %v999 = vunpack.c.h.b16 %v650
        %v1000 = vunpack.c.l.b16 %v651
        %v1001 = vunpack.c.h.b16 %v651
        %v1002 = vunpack.c.l.b16 %v652
        %v1003 = vunpack.c.h.b16 %v652
        %v1004 = vunpack.c.l.b16 %v653
        %v1005 = vunpack.c.h.b16 %v653
        %v1006 = vunpack.c.l.b16 %v654
        %v1007 = vunpack.c.h.b16 %v654
        %v1008 = vunpack.c.l.b16 %v655
        %v1009 = vunpack.c.h.b16 %v655
        %v1010 = vunpack.c.l.b16 %v656
        %v1011 = vunpack.c.h.b16 %v656
        %v1012 = vunpack.c.l.b16 %v657
        %v1013 = vunpack.c.h.b16 %v657
        %v1014 = vunpack.c.l.b16 %v658
        %v1015 = vunpack.c.h.b16 %v658
        %v1016 = vunpack.c.l.b16 %v659
        %v1017 = vunpack.c.h.b16 %v659
        %v1018 = vunpack.c.l.b16 %v660
        %v1019 = vunpack.c.h.b16 %v660
        %v1020 = vunpack.c.l.b16 %v661
        %v1021 = vunpack.c.h.b16 %v661
        %v1022 = vunpack.c.l.b16 %v662
        %v1023 = vunpack.c.h.b16 %v662
        %v1024 = vunpack.c.l.b16 %v663
        %v1025 = vunpack.c.h.b16 %v663
        %v1026 = vunpack.c.l.b16 %v664
        %v1027 = vunpack.c.h.b16 %v664
        %v1028 = vunpack.c.l.b16 %v665
        %v1029 = vunpack.c.h.b16 %v665
        %v1030 = vunpack.c.l.b16 %v666
        %v1031 = vunpack.c.h.b16 %v666
        %v1032 = vunpack.c.l.b16 %v667
        %v1033 = vunpack.c.h.b16 %v667
        %v1034 = vunpack.c.l.b16 %v668
        %v1035 = vunpack.c.h.b16 %v668
        %v1036 = vunpack.c.l.b16 %v669
        %v1037 = vunpack.c.h.b16 %v669
        %v1038 = vunpack.c.l.b16 %v670
        %v1039 = vunpack.c.h.b16 %v670
        %v1040 = vunpack.c.l.b16 %v671
        %v1041 = vunpack.c.h.b16 %v671
        %v1042 = vunpack.c.l.b16 %v672
        %v1043 = vunpack.c.h.b16 %v672
        %v1044 = vunpack.c.l.b16 %v673
        %v1045 = vunpack.c.h.b16 %v673
        %v1046 = vunpack.c.l.b16 %v674
        %v1047 = vunpack.c.h.b16 %v674
        %v1048 = vunpack.c.l.b16 %v675
        %v1049 = vunpack.c.h.b16 %v675
        %v1050 = vunpack.c.l.b16 %v676
        %v1051 = vunpack.c.h.b16 %v676
        %v1052 = vunpack.c.l.b16 %v677
        %v1053 = vunpack.c.h.b16 %v677
        %v1054 = vunpack.c.l.b16 %v678
        %v1055 = vunpack.c.h.b16 %v678
        %v1056 = vunpack.c.l.b16 %v679
        %v1057 = vunpack.c.h.b16 %v679
        %v1058 = vunpack.c.l.b16 %v680
        %v1059 = vunpack.c.h.b16 %v680
        %v1060 = vunpack.c.l.b16 %v681
        %v1061 = vunpack.c.h.b16 %v681
        %v1062 = vunpack.c.l.b16 %v682
        %v1063 = vunpack.c.h.b16 %v682
        %v1064 = vunpack.c.l.b16 %v683
        %v1065 = vunpack.c.h.b16 %v683
        %v1066 = vunpack.c.l.b16 %v684
        %v1067 = vunpack.c.h.b16 %v684
        %v1068 = vunpack.c.l.b16 %v685
        %v1069 = vunpack.c.h.b16 %v685
        %v1070 = vpack.c.b16 %v818, %v814
        %v1071 = vpack.c.b16 %v819, %v815
        %v1072 = vpack.c.b16 %v820, %v816
        %v1073 = vpack.c.b16 %v821, %v817
        %v1074 = vpack.c.b16 %v826, %v822
        %v1075 = vpack.c.b16 %v827, %v823
        %v1076 = vpack.c.b16 %v828, %v824
        %v1077 = vpack.c.b16 %v829, %v825
        %v1078 = vpack.c.b16 %v834, %v830
        %v1079 = vpack.c.b16 %v835, %v831
        %v1080 = vpack.c.b16 %v836, %v832
        %v1081 = vpack.c.b16 %v837, %v833
        %v1082 = vpack.c.b16 %v842, %v838
        %v1083 = vpack.c.b16 %v843, %v839
        %v1084 = vpack.c.b16 %v844, %v840
        %v1085 = vpack.c.b16 %v845, %v841
        %v1086 = vpack.c.b16 %v850, %v846
        %v1087 = vpack.c.b16 %v851, %v847
        %v1088 = vpack.c.b16 %v852, %v848
        %v1089 = vpack.c.b16 %v853, %v849
        %v1090 = vpack.c.b16 %v858, %v854
        %v1091 = vpack.c.b16 %v859, %v855
        %v1092 = vpack.c.b16 %v860, %v856
        %v1093 = vpack.c.b16 %v861, %v857
        %v1094 = vpack.c.b16 %v866, %v862
        %v1095 = vpack.c.b16 %v867, %v863
        %v1096 = vpack.c.b16 %v868, %v864
        %v1097 = vpack.c.b16 %v869, %v865
        %v1098 = vpack.c.b16 %v874, %v870
        %v1099 = vpack.c.b16 %v875, %v871
        %v1100 = vpack.c.b16 %v876, %v872
        %v1101 = vpack.c.b16 %v877, %v873
        %v1102 = vpack.c.b16 %v882, %v878
        %v1103 = vpack.c.b16 %v883, %v879
        %v1104 = vpack.c.b16 %v884, %v880
        %v1105 = vpack.c.b16 %v885, %v881
        %v1106 = vpack.c.b16 %v890, %v886
        %v1107 = vpack.c.b16 %v891, %v887
        %v1108 = vpack.c.b16 %v892, %v888
        %v1109 = vpack.c.b16 %v893, %v889
        %v1110 = vpack.c.b16 %v898, %v894
        %v1111 = vpack.c.b16 %v899, %v895
        %v1112 = vpack.c.b16 %v900, %v896
        %v1113 = vpack.c.b16 %v901, %v897
        %v1114 = vpack.c.b16 %v906, %v902
        %v1115 = vpack.c.b16 %v907, %v903
        %v1116 = vpack.c.b16 %v908, %v904
        %v1117 = vpack.c.b16 %v909, %v905
        %v1118 = vpack.c.b16 %v914, %v910
        %v1119 = vpack.c.b16 %v915, %v911
        %v1120 = vpack.c.b16 %v916, %v912
        %v1121 = vpack.c.b16 %v917, %v913
        %v1122 = vpack.c.b16 %v922, %v918
        %v1123 = vpack.c.b16 %v923, %v919
        %v1124 = vpack.c.b16 %v924, %v920
        %v1125 = vpack.c.b16 %v925, %v921
        %v1126 = vpack.c.b16 %v930, %v926
        %v1127 = vpack.c.b16 %v931, %v927
        %v1128 = vpack.c.b16 %v932, %v928
        %v1129 = vpack.c.b16 %v933, %v929
        %v1130 = vpack.c.b16 %v938, %v934
        %v1131 = vpack.c.b16 %v939, %v935
        %v1132 = vpack.c.b16 %v940, %v936
        %v1133 = vpack.c.b16 %v941, %v937
        %v1134 = vpack.c.b16 %v946, %v942
        %v1135 = vpack.c.b16 %v947, %v943
        %v1136 = vpack.c.b16 %v948, %v944
        %v1137 = vpack.c.b16 %v949, %v945
        %v1138 = vpack.c.b16 %v954, %v950
        %v1139 = vpack.c.b16 %v955, %v951
        %v1140 = vpack.c.b16 %v956, %v952
        %v1141 = vpack.c.b16 %v957, %v953
        %v1142 = vpack.c.b16 %v962, %v958
        %v1143 = vpack.c.b16 %v963, %v959
        %v1144 = vpack.c.b16 %v964, %v960
        %v1145 = vpack.c.b16 %v965, %v961
        %v1146 = vpack.c.b16 %v970, %v966
        %v1147 = vpack.c.b16 %v971, %v967
        %v1148 = vpack.c.b16 %v972, %v968
        %v1149 = vpack.c.b16 %v973, %v969
        %v1150 = vpack.c.b16 %v978, %v974
        %v1151 = vpack.c.b16 %v979, %v975
        %v1152 = vpack.c.b16 %v980, %v976
        %v1153 = vpack.c.b16 %v981, %v977
        %v1154 = vpack.c.b16 %v986, %v982
        %v1155 = vpack.c.b16 %v987, %v983
        %v1156 = vpack.c.b16 %v988, %v984
        %v1157 = vpack.c.b16 %v989, %v985
        %v1158 = vpack.c.b16 %v994, %v990
        %v1159 = vpack.c.b16 %v995, %v991
        %v1160 = vpack.c.b16 %v996, %v992
        %v1161 = vpack.c.b16 %v997, %v993
        %v1162 = vpack.c.b16 %v1002, %v998
        %v1163 = vpack.c.b16 %v1003, %v999
        %v1164 = vpack.c.b16 %v1004, %v1000
        %v1165 = vpack.c.b16 %v1005, %v1001
        %v1166 = vpack.c.b16 %v1010, %v1006
        %v1167 = vpack.c.b16 %v1011, %v1007
        %v1168 = vpack.c.b16 %v1012, %v1008
        %v1169 = vpack.c.b16 %v1013, %v1009
        %v1170 = vpack.c.b16 %v1018, %v1014
        %v1171 = vpack.c.b16 %v1019, %v1015
        %v1172 = vpack.c.b16 %v1020, %v1016
        %v1173 = vpack.c.b16 %v1021, %v1017
        %v1174 = vpack.c.b16 %v1026, %v1022
        %v1175 = vpack.c.b16 %v1027, %v1023
        %v1176 = vpack.c.b16 %v1028, %v1024
        %v1177 = vpack.c.b16 %v1029, %v1025
        %v1178 = vpack.c.b16 %v1034, %v1030
        %v1179 = vpack.c.b16 %v1035, %v1031
        %v1180 = vpack.c.b16 %v1036, %v1032
        %v1181 = vpack.c.b16 %v1037, %v1033
        %v1182 = vpack.c.b16 %v1042, %v1038
        %v1183 = vpack.c.b16 %v1043, %v1039
        %v1184 = vpack.c.b16 %v1044, %v1040
        %v1185 = vpack.c.b16 %v1045, %v1041
        %v1186 = vpack.c.b16 %v1050, %v1046
        %v1187 = vpack.c.b16 %v1051, %v1047
        %v1188 = vpack.c.b16 %v1052, %v1048
        %v1189 = vpack.c.b16 %v1053, %v1049
        %v1190 = vpack.c.b16 %v1058, %v1054
        %v1191 = vpack.c.b16 %v1059, %v1055
        %v1192 = vpack.c.b16 %v1060, %v1056
        %v1193 = vpack.c.b16 %v1061, %v1057
        %v1194 = vpack.c.b16 %v1066, %v1062
        %v1195 = vpack.c.b16 %v1067, %v1063
        %v1196 = vpack.c.b16 %v1068, %v1064
        %v1197 = vpack.c.b16 %v1069, %v1065
        %1326 = vmatprep.subr.bf16.mxu0 %v1071
        %1327 = vmatpush1.bf16.msra.mxu0 %v1070
        %1328 = vmatprep.subr.bf16.mxu0 %v1075
        %1329 = vmatpush1.bf16.msra.mxu0 %v1074
        %1330 = vmatprep.subr.bf16.mxu0 %v1079
        %1331 = vmatpush1.bf16.msra.mxu0 %v1078
        %1332 = vmatprep.subr.bf16.mxu0 %v1083
        %1333 = vmatpush1.bf16.msra.mxu0 %v1082
        %1334 = vmatprep.subr.bf16.mxu0 %v1087
        %1335 = vmatpush1.bf16.msra.mxu0 %v1086
        %1336 = vmatprep.subr.bf16.mxu0 %v1091
        %1337 = vmatpush1.bf16.msra.mxu0 %v1090
        %1338 = vmatprep.subr.bf16.mxu0 %v1095
        %1339 = vmatpush1.bf16.msra.mxu0 %v1094
        %1340 = vmatprep.subr.bf16.mxu0 %v1099
        %1341 = vmatpush1.bf16.msra.mxu0 %v1098
        %1342 = vmatprep.subr.bf16.mxu0 %v1103
        %1343 = vmatpush1.bf16.msra.mxu0 %v1102
        %1344 = vmatprep.subr.bf16.mxu0 %v1107
        %1345 = vmatpush1.bf16.msra.mxu0 %v1106
        %1346 = vmatprep.subr.bf16.mxu0 %v1111
        %1347 = vmatpush1.bf16.msra.mxu0 %v1110
        %1348 = vmatprep.subr.bf16.mxu0 %v1115
        %1349 = vmatpush1.bf16.msra.mxu0 %v1114
        %1350 = vmatprep.subr.bf16.mxu0 %v1119
        %1351 = vmatpush1.bf16.msra.mxu0 %v1118
        %1352 = vmatprep.subr.bf16.mxu0 %v1123
        %1353 = vmatpush1.bf16.msra.mxu0 %v1122
        %1354 = vmatprep.subr.bf16.mxu0 %v1127
        %1355 = vmatpush1.bf16.msra.mxu0 %v1126
        %1356 = vmatprep.subr.bf16.mxu0 %v1131
        %1357 = vmatpush1.bf16.msra.mxu0 %v1130
        %1358 = vmatprep.mubr.bf16.mxu0 %v555
        %1359 = vmatmul.mubr.bf16.gmra.mrb[0].mxu0 %v554
        %v1360 = vpop.f32.mrb[0].mxu0
        %v1361 = vadd.f32 0.0, %v1360
        %v1362 = vpop.f32.mrb[0].mxu0
        %v1363 = vadd.f32 0.0, %v1362
        %v1364 = vpop.f32.mrb[0].mxu0
        %v1365 = vadd.f32 0.0, %v1364
        %v1366 = vpop.f32.mrb[0].mxu0
        %v1367 = vadd.f32 0.0, %v1366
        %1368 = vdwg.mxu0
        %1369 = vmatprep.subr.bf16.mxu0 %v1135
        %1370 = vmatpush1.bf16.msra.mxu0 %v1134
        %1371 = vmatprep.subr.bf16.mxu0 %v1139
        %1372 = vmatpush1.bf16.msra.mxu0 %v1138
        %1373 = vmatprep.subr.bf16.mxu0 %v1143
        %1374 = vmatpush1.bf16.msra.mxu0 %v1142
        %1375 = vmatprep.subr.bf16.mxu0 %v1147
        %1376 = vmatpush1.bf16.msra.mxu0 %v1146
        %1377 = vmatprep.subr.bf16.mxu0 %v1151
        %1378 = vmatpush1.bf16.msra.mxu0 %v1150
        %1379 = vmatprep.subr.bf16.mxu0 %v1155
        %1380 = vmatpush1.bf16.msra.mxu0 %v1154
        %1381 = vmatprep.subr.bf16.mxu0 %v1159
        %1382 = vmatpush1.bf16.msra.mxu0 %v1158
        %1383 = vmatprep.subr.bf16.mxu0 %v1163
        %1384 = vmatpush1.bf16.msra.mxu0 %v1162
        %1385 = vmatprep.subr.bf16.mxu0 %v1167
        %1386 = vmatpush1.bf16.msra.mxu0 %v1166
        %1387 = vmatprep.subr.bf16.mxu0 %v1171
        %1388 = vmatpush1.bf16.msra.mxu0 %v1170
        %1389 = vmatprep.subr.bf16.mxu0 %v1175
        %1390 = vmatpush1.bf16.msra.mxu0 %v1174
        %1391 = vmatprep.subr.bf16.mxu0 %v1179
        %1392 = vmatpush1.bf16.msra.mxu0 %v1178
        %1393 = vmatprep.subr.bf16.mxu0 %v1183
        %1394 = vmatpush1.bf16.msra.mxu0 %v1182
        %1395 = vmatprep.subr.bf16.mxu0 %v1187
        %1396 = vmatpush1.bf16.msra.mxu0 %v1186
        %1397 = vmatprep.subr.bf16.mxu0 %v1191
        %1398 = vmatpush1.bf16.msra.mxu0 %v1190
        %1399 = vmatprep.subr.bf16.mxu0 %v1195
        %1400 = vmatpush1.bf16.msra.mxu0 %v1194
        %1401 = vmatprep.mubr.bf16.mxu0 %v557
        %1402 = vmatmul.mubr.bf16.gmra.mrb[0].mxu0 %v556
        %v1403 = vpop.f32.mrb[0].mxu0
        %v1404 = vadd.f32 %v1361, %v1403
        %v1405 = vpop.f32.mrb[0].mxu0
        %v1406 = vadd.f32 %v1363, %v1405
        %v1407 = vpop.f32.mrb[0].mxu0
        %v1408 = vadd.f32 %v1365, %v1407
        %v1409 = vpop.f32.mrb[0].mxu0
        %v1410 = vadd.f32 %v1367, %v1409
        %1411 = vdwg.mxu0
        %1412 = vmatprep.subr.bf16.mxu0 %v1073
        %1413 = vmatpush1.bf16.msra.mxu0 %v1072
        %1414 = vmatprep.subr.bf16.mxu0 %v1077
        %1415 = vmatpush1.bf16.msra.mxu0 %v1076
        %1416 = vmatprep.subr.bf16.mxu0 %v1081
        %1417 = vmatpush1.bf16.msra.mxu0 %v1080
        %1418 = vmatprep.subr.bf16.mxu0 %v1085
        %1419 = vmatpush1.bf16.msra.mxu0 %v1084
        %1420 = vmatprep.subr.bf16.mxu0 %v1089
        %1421 = vmatpush1.bf16.msra.mxu0 %v1088
        %1422 = vmatprep.subr.bf16.mxu0 %v1093
        %1423 = vmatpush1.bf16.msra.mxu0 %v1092
        %1424 = vmatprep.subr.bf16.mxu0 %v1097
        %1425 = vmatpush1.bf16.msra.mxu0 %v1096
        %1426 = vmatprep.subr.bf16.mxu0 %v1101
        %1427 = vmatpush1.bf16.msra.mxu0 %v1100
        %1428 = vmatprep.subr.bf16.mxu0 %v1105
        %1429 = vmatpush1.bf16.msra.mxu0 %v1104
        %1430 = vmatprep.subr.bf16.mxu0 %v1109
        %1431 = vmatpush1.bf16.msra.mxu0 %v1108
        %1432 = vmatprep.subr.bf16.mxu0 %v1113
        %1433 = vmatpush1.bf16.msra.mxu0 %v1112
        %1434 = vmatprep.subr.bf16.mxu0 %v1117
        %1435 = vmatpush1.bf16.msra.mxu0 %v1116
        %1436 = vmatprep.subr.bf16.mxu0 %v1121
        %1437 = vmatpush1.bf16.msra.mxu0 %v1120
        %1438 = vmatprep.subr.bf16.mxu0 %v1125
        %1439 = vmatpush1.bf16.msra.mxu0 %v1124
        %1440 = vmatprep.subr.bf16.mxu0 %v1129
        %1441 = vmatpush1.bf16.msra.mxu0 %v1128
        %1442 = vmatprep.subr.bf16.mxu0 %v1133
        %1443 = vmatpush1.bf16.msra.mxu0 %v1132
        %1444 = vmatprep.mubr.bf16.mxu0 %v555
        %1445 = vmatmul.mubr.bf16.gmra.mrb[0].mxu0 %v554
        %v1446 = vpop.f32.mrb[0].mxu0
        %v1447 = vadd.f32 0.0, %v1446
        %v1448 = vpop.f32.mrb[0].mxu0
        %v1449 = vadd.f32 0.0, %v1448
        %v1450 = vpop.f32.mrb[0].mxu0
        %v1451 = vadd.f32 0.0, %v1450
        %v1452 = vpop.f32.mrb[0].mxu0
        %v1453 = vadd.f32 0.0, %v1452
        %1454 = vdwg.mxu0
        %1455 = vmatprep.subr.bf16.mxu0 %v1137
        %1456 = vmatpush1.bf16.msra.mxu0 %v1136
        %1457 = vmatprep.subr.bf16.mxu0 %v1141
        %1458 = vmatpush1.bf16.msra.mxu0 %v1140
        %1459 = vmatprep.subr.bf16.mxu0 %v1145
        %1460 = vmatpush1.bf16.msra.mxu0 %v1144
        %1461 = vmatprep.subr.bf16.mxu0 %v1149
        %1462 = vmatpush1.bf16.msra.mxu0 %v1148
        %1463 = vmatprep.subr.bf16.mxu0 %v1153
        %1464 = vmatpush1.bf16.msra.mxu0 %v1152
        %1465 = vmatprep.subr.bf16.mxu0 %v1157
        %1466 = vmatpush1.bf16.msra.mxu0 %v1156
        %1467 = vmatprep.subr.bf16.mxu0 %v1161
        %1468 = vmatpush1.bf16.msra.mxu0 %v1160
        %1469 = vmatprep.subr.bf16.mxu0 %v1165
        %1470 = vmatpush1.bf16.msra.mxu0 %v1164
        %1471 = vmatprep.subr.bf16.mxu0 %v1169
        %1472 = vmatpush1.bf16.msra.mxu0 %v1168
        %1473 = vmatprep.subr.bf16.mxu0 %v1173
        %1474 = vmatpush1.bf16.msra.mxu0 %v1172
        %1475 = vmatprep.subr.bf16.mxu0 %v1177
        %1476 = vmatpush1.bf16.msra.mxu0 %v1176
        %1477 = vmatprep.subr.bf16.mxu0 %v1181
        %1478 = vmatpush1.bf16.msra.mxu0 %v1180
        %1479 = vmatprep.subr.bf16.mxu0 %v1185
        %1480 = vmatpush1.bf16.msra.mxu0 %v1184
        %1481 = vmatprep.subr.bf16.mxu0 %v1189
        %1482 = vmatpush1.bf16.msra.mxu0 %v1188
        %1483 = vmatprep.subr.bf16.mxu0 %v1193
        %1484 = vmatpush1.bf16.msra.mxu0 %v1192
        %1485 = vmatprep.subr.bf16.mxu0 %v1197
        %1486 = vmatpush1.bf16.msra.mxu0 %v1196
        %1487 = vmatprep.mubr.bf16.mxu0 %v557
        %1488 = vmatmul.mubr.bf16.gmra.mrb[0].mxu0 %v556
        %v1489 = vpop.f32.mrb[0].mxu0
        %v1490 = vadd.f32 %v1447, %v1489
        %v1491 = vpop.f32.mrb[0].mxu0
        %v1492 = vadd.f32 %v1449, %v1491
        %v1493 = vpop.f32.mrb[0].mxu0
        %v1494 = vadd.f32 %v1451, %v1493
        %v1495 = vpop.f32.mrb[0].mxu0
        %v1496 = vadd.f32 %v1453, %v1495
        %1497 = vdwg.mxu0
        %v1498 = vpack.c.bf16 %v1408, %v1404
        %v1499 = vpack.c.bf16 %v1410, %v1406
        %v1500 = vpack.c.bf16 %v1494, %v1490
        %v1501 = vpack.c.bf16 %v1496, %v1492
        %v1502 = vld [vmem:[%s4] sm:$0xf]
        %v1505 = vunpack.c.l.s4 1966171168
        %v1506 = vunpack.c.0.s8 %v1505
        %v1507 = vlaneseq
        %v1508 = vshrl.u32 %v1507, 7
        %v1509 = vsub.s32 %v1506, %v1508
        %v1510 = vrot.slane %v1502, %v1509
        %v1511 = vcombine.high %v1510, %v1510
        %v1513 = vunpack.c.l.s4 1966171168
        %v1514 = vunpack.c.0.s8 %v1513
        %v1515 = vlaneseq
        %v1516 = vshrl.u32 %v1515, 7
        %v1517 = vsub.s32 %v1514, %v1516
        %v1518 = vrot.slane %v1510, %v1517
        %v1520 = vunpack.c.l.s4 1966171168
        %v1521 = vunpack.c.0.s8 %v1520
        %v1522 = vlaneseq
        %v1523 = vshrl.u32 %v1522, 7
        %v1524 = vsub.s32 %v1521, %v1523
        %v1525 = vrot.slane %v1511, %v1524
        %v1526 = vcombine.high %v1518, %v1518
        %v1527 = vcombine.high %v1525, %v1525
        %v1529 = vpack.i.b16 %v1518, %v1518
        %v1531 = vlaneseq
        %v1532 = vshrl.u32 %v1531, 7
        %v1533 = vsub.s32 0, %v1532
        %v1534 = vrot.slane %v1529, %v1533
        %v1536 = vpack.i.b16 %v1525, %v1525
        %v1538 = vlaneseq
        %v1539 = vshrl.u32 %v1538, 7
        %v1540 = vsub.s32 0, %v1539
        %v1541 = vrot.slane %v1536, %v1540
        %v1543 = vpack.i.b16 %v1526, %v1526
        %v1545 = vlaneseq
        %v1546 = vshrl.u32 %v1545, 7
        %v1547 = vsub.s32 0, %v1546
        %v1548 = vrot.slane %v1543, %v1547
        %v1550 = vpack.i.b16 %v1527, %v1527
        %v1552 = vlaneseq
        %v1553 = vshrl.u32 %v1552, 7
        %v1554 = vsub.s32 0, %v1553
        %v1555 = vrot.slane %v1550, %v1554
        %v1556 = vadd.bf16 %v1498, %v1534
        %v1557 = vadd.bf16 %v1499, %v1541
        %v1558 = vadd.bf16 %v1500, %v1548
        %v1559 = vadd.bf16 %v1501, %v1555
        %v1560 = vmax.bf16 %v1556, 0
        %v1561 = vmax.bf16 %v1557, 0
        %v1562 = vmax.bf16 %v1558, 0
        %v1563 = vmax.bf16 %v1559, 0
        %s1564 = scalar_lea.vmem [#allocation7], 1024
        %v1565 = vld [vmem:[%s1564] sm:$0xff]
        %v1566 = vld [vmem:[%s1564 + $0x8] sm:$0xff]
        %v1567 = vld [vmem:[%s1564 + $0x10] sm:$0xff]
        %v1568 = vld [vmem:[%s1564 + $0x18] sm:$0xff]
        %v1569 = vld [vmem:[%s1564 + $0x20] sm:$0xff]
        %v1570 = vld [vmem:[%s1564 + $0x28] sm:$0xff]
        %v1571 = vld [vmem:[%s1564 + $0x30] sm:$0xff]
        %v1572 = vld [vmem:[%s1564 + $0x38] sm:$0xff]
        %v1573 = vld [vmem:[%s1564 + $0x40] sm:$0xff]
        %v1574 = vld [vmem:[%s1564 + $0x48] sm:$0xff]
        %v1575 = vld [vmem:[%s1564 + $0x50] sm:$0xff]
        %v1576 = vld [vmem:[%s1564 + $0x58] sm:$0xff]
        %v1577 = vld [vmem:[%s1564 + $0x60] sm:$0xff]
        %v1578 = vld [vmem:[%s1564 + $0x68] sm:$0xff]
        %v1579 = vld [vmem:[%s1564 + $0x70] sm:$0xff]
        %v1580 = vld [vmem:[%s1564 + $0x78] sm:$0xff]
        %v1581 = vld [vmem:[%s1564 + $0x80] sm:$0xff]
        %v1582 = vld [vmem:[%s1564 + $0x88] sm:$0xff]
        %v1583 = vld [vmem:[%s1564 + $0x90] sm:$0xff]
        %v1584 = vld [vmem:[%s1564 + $0x98] sm:$0xff]
        %v1585 = vld [vmem:[%s1564 + $0xa0] sm:$0xff]
        %v1586 = vld [vmem:[%s1564 + $0xa8] sm:$0xff]
        %v1587 = vld [vmem:[%s1564 + $0xb0] sm:$0xff]
        %v1588 = vld [vmem:[%s1564 + $0xb8] sm:$0xff]
        %v1589 = vld [vmem:[%s1564 + $0xc0] sm:$0xff]
        %v1590 = vld [vmem:[%s1564 + $0xc8] sm:$0xff]
        %v1591 = vld [vmem:[%s1564 + $0xd0] sm:$0xff]
        %v1592 = vld [vmem:[%s1564 + $0xd8] sm:$0xff]
        %v1593 = vld [vmem:[%s1564 + $0xe0] sm:$0xff]
        %v1594 = vld [vmem:[%s1564 + $0xe8] sm:$0xff]
        %v1595 = vld [vmem:[%s1564 + $0xf0] sm:$0xff]
        %v1596 = vld [vmem:[%s1564 + $0xf8] sm:$0xff]
        %v1597 = vld [vmem:[%s1564 + $0x100] sm:$0xff]
        %v1598 = vld [vmem:[%s1564 + $0x108] sm:$0xff]
        %v1599 = vld [vmem:[%s1564 + $0x110] sm:$0xff]
        %v1600 = vld [vmem:[%s1564 + $0x118] sm:$0xff]
        %v1601 = vld [vmem:[%s1564 + $0x120] sm:$0xff]
        %v1602 = vld [vmem:[%s1564 + $0x128] sm:$0xff]
        %v1603 = vld [vmem:[%s1564 + $0x130] sm:$0xff]
        %v1604 = vld [vmem:[%s1564 + $0x138] sm:$0xff]
        %v1605 = vld [vmem:[%s1564 + $0x140] sm:$0xff]
        %v1606 = vld [vmem:[%s1564 + $0x148] sm:$0xff]
        %v1607 = vld [vmem:[%s1564 + $0x150] sm:$0xff]
        %v1608 = vld [vmem:[%s1564 + $0x158] sm:$0xff]
        %v1609 = vld [vmem:[%s1564 + $0x160] sm:$0xff]
        %v1610 = vld [vmem:[%s1564 + $0x168] sm:$0xff]
        %v1611 = vld [vmem:[%s1564 + $0x170] sm:$0xff]
        %v1612 = vld [vmem:[%s1564 + $0x178] sm:$0xff]
        %v1613 = vld [vmem:[%s1564 + $0x180] sm:$0xff]
        %v1614 = vld [vmem:[%s1564 + $0x188] sm:$0xff]
        %v1615 = vld [vmem:[%s1564 + $0x190] sm:$0xff]
        %v1616 = vld [vmem:[%s1564 + $0x198] sm:$0xff]
        %v1617 = vld [vmem:[%s1564 + $0x1a0] sm:$0xff]
        %v1618 = vld [vmem:[%s1564 + $0x1a8] sm:$0xff]
        %v1619 = vld [vmem:[%s1564 + $0x1b0] sm:$0xff]
        %v1620 = vld [vmem:[%s1564 + $0x1b8] sm:$0xff]
        %v1621 = vld [vmem:[%s1564 + $0x1c0] sm:$0xff]
        %v1622 = vld [vmem:[%s1564 + $0x1c8] sm:$0xff]
        %v1623 = vld [vmem:[%s1564 + $0x1d0] sm:$0xff]
        %v1624 = vld [vmem:[%s1564 + $0x1d8] sm:$0xff]
        %v1625 = vld [vmem:[%s1564 + $0x1e0] sm:$0xff]
        %v1626 = vld [vmem:[%s1564 + $0x1e8] sm:$0xff]
        %v1627 = vld [vmem:[%s1564 + $0x1f0] sm:$0xff]
        %v1628 = vld [vmem:[%s1564 + $0x1f8] sm:$0xff]
        %v1629 = vld [vmem:[%s1564 + $0x200] sm:$0xff]
        %v1630 = vld [vmem:[%s1564 + $0x208] sm:$0xff]
        %v1631 = vld [vmem:[%s1564 + $0x210] sm:$0xff]
        %v1632 = vld [vmem:[%s1564 + $0x218] sm:$0xff]
        %v1633 = vld [vmem:[%s1564 + $0x220] sm:$0xff]
        %v1634 = vld [vmem:[%s1564 + $0x228] sm:$0xff]
        %v1635 = vld [vmem:[%s1564 + $0x230] sm:$0xff]
        %v1636 = vld [vmem:[%s1564 + $0x238] sm:$0xff]
        %v1637 = vld [vmem:[%s1564 + $0x240] sm:$0xff]
        %v1638 = vld [vmem:[%s1564 + $0x248] sm:$0xff]
        %v1639 = vld [vmem:[%s1564 + $0x250] sm:$0xff]
        %v1640 = vld [vmem:[%s1564 + $0x258] sm:$0xff]
        %v1641 = vld [vmem:[%s1564 + $0x260] sm:$0xff]
        %v1642 = vld [vmem:[%s1564 + $0x268] sm:$0xff]
        %v1643 = vld [vmem:[%s1564 + $0x270] sm:$0xff]
        %v1644 = vld [vmem:[%s1564 + $0x278] sm:$0xff]
        %v1645 = vld [vmem:[%s1564 + $0x280] sm:$0xff]
        %v1646 = vld [vmem:[%s1564 + $0x288] sm:$0xff]
        %v1647 = vld [vmem:[%s1564 + $0x290] sm:$0xff]
        %v1648 = vld [vmem:[%s1564 + $0x298] sm:$0xff]
        %v1649 = vld [vmem:[%s1564 + $0x2a0] sm:$0xff]
        %v1650 = vld [vmem:[%s1564 + $0x2a8] sm:$0xff]
        %v1651 = vld [vmem:[%s1564 + $0x2b0] sm:$0xff]
        %v1652 = vld [vmem:[%s1564 + $0x2b8] sm:$0xff]
        %v1653 = vld [vmem:[%s1564 + $0x2c0] sm:$0xff]
        %v1654 = vld [vmem:[%s1564 + $0x2c8] sm:$0xff]
        %v1655 = vld [vmem:[%s1564 + $0x2d0] sm:$0xff]
        %v1656 = vld [vmem:[%s1564 + $0x2d8] sm:$0xff]
        %v1657 = vld [vmem:[%s1564 + $0x2e0] sm:$0xff]
        %v1658 = vld [vmem:[%s1564 + $0x2e8] sm:$0xff]
        %v1659 = vld [vmem:[%s1564 + $0x2f0] sm:$0xff]
        %v1660 = vld [vmem:[%s1564 + $0x2f8] sm:$0xff]
        %v1661 = vld [vmem:[%s1564 + $0x300] sm:$0xff]
        %v1662 = vld [vmem:[%s1564 + $0x308] sm:$0xff]
        %v1663 = vld [vmem:[%s1564 + $0x310] sm:$0xff]
        %v1664 = vld [vmem:[%s1564 + $0x318] sm:$0xff]
        %v1665 = vld [vmem:[%s1564 + $0x320] sm:$0xff]
        %v1666 = vld [vmem:[%s1564 + $0x328] sm:$0xff]
        %v1667 = vld [vmem:[%s1564 + $0x330] sm:$0xff]
        %v1668 = vld [vmem:[%s1564 + $0x338] sm:$0xff]
        %v1669 = vld [vmem:[%s1564 + $0x340] sm:$0xff]
        %v1670 = vld [vmem:[%s1564 + $0x348] sm:$0xff]
        %v1671 = vld [vmem:[%s1564 + $0x350] sm:$0xff]
        %v1672 = vld [vmem:[%s1564 + $0x358] sm:$0xff]
        %v1673 = vld [vmem:[%s1564 + $0x360] sm:$0xff]
        %v1674 = vld [vmem:[%s1564 + $0x368] sm:$0xff]
        %v1675 = vld [vmem:[%s1564 + $0x370] sm:$0xff]
        %v1676 = vld [vmem:[%s1564 + $0x378] sm:$0xff]
        %v1677 = vld [vmem:[%s1564 + $0x380] sm:$0xff]
        %v1678 = vld [vmem:[%s1564 + $0x388] sm:$0xff]
        %v1679 = vld [vmem:[%s1564 + $0x390] sm:$0xff]
        %v1680 = vld [vmem:[%s1564 + $0x398] sm:$0xff]
        %v1681 = vld [vmem:[%s1564 + $0x3a0] sm:$0xff]
        %v1682 = vld [vmem:[%s1564 + $0x3a8] sm:$0xff]
        %v1683 = vld [vmem:[%s1564 + $0x3b0] sm:$0xff]
        %v1684 = vld [vmem:[%s1564 + $0x3b8] sm:$0xff]
        %v1685 = vld [vmem:[%s1564 + $0x3c0] sm:$0xff]
        %v1686 = vld [vmem:[%s1564 + $0x3c8] sm:$0xff]
        %v1687 = vld [vmem:[%s1564 + $0x3d0] sm:$0xff]
        %v1688 = vld [vmem:[%s1564 + $0x3d8] sm:$0xff]
        %v1689 = vld [vmem:[%s1564 + $0x3e0] sm:$0xff]
        %v1690 = vld [vmem:[%s1564 + $0x3e8] sm:$0xff]
        %v1691 = vld [vmem:[%s1564 + $0x3f0] sm:$0xff]
        %v1692 = vld [vmem:[%s1564 + $0x3f8] sm:$0xff]
        %v1821 = vunpack.c.l.b16 %v1565
        %v1822 = vunpack.c.h.b16 %v1565
        %v1823 = vunpack.c.l.b16 %v1566
        %v1824 = vunpack.c.h.b16 %v1566
        %v1825 = vunpack.c.l.b16 %v1567
        %v1826 = vunpack.c.h.b16 %v1567
        %v1827 = vunpack.c.l.b16 %v1568
        %v1828 = vunpack.c.h.b16 %v1568
        %v1829 = vunpack.c.l.b16 %v1569
        %v1830 = vunpack.c.h.b16 %v1569
        %v1831 = vunpack.c.l.b16 %v1570
        %v1832 = vunpack.c.h.b16 %v1570
        %v1833 = vunpack.c.l.b16 %v1571
        %v1834 = vunpack.c.h.b16 %v1571
        %v1835 = vunpack.c.l.b16 %v1572
        %v1836 = vunpack.c.h.b16 %v1572
        %v1837 = vunpack.c.l.b16 %v1573
        %v1838 = vunpack.c.h.b16 %v1573
        %v1839 = vunpack.c.l.b16 %v1574
        %v1840 = vunpack.c.h.b16 %v1574
        %v1841 = vunpack.c.l.b16 %v1575
        %v1842 = vunpack.c.h.b16 %v1575
        %v1843 = vunpack.c.l.b16 %v1576
        %v1844 = vunpack.c.h.b16 %v1576
        %v1845 = vunpack.c.l.b16 %v1577
        %v1846 = vunpack.c.h.b16 %v1577
        %v1847 = vunpack.c.l.b16 %v1578
        %v1848 = vunpack.c.h.b16 %v1578
        %v1849 = vunpack.c.l.b16 %v1579
        %v1850 = vunpack.c.h.b16 %v1579
        %v1851 = vunpack.c.l.b16 %v1580
        %v1852 = vunpack.c.h.b16 %v1580
        %v1853 = vunpack.c.l.b16 %v1581
        %v1854 = vunpack.c.h.b16 %v1581
        %v1855 = vunpack.c.l.b16 %v1582
        %v1856 = vunpack.c.h.b16 %v1582
        %v1857 = vunpack.c.l.b16 %v1583
        %v1858 = vunpack.c.h.b16 %v1583
        %v1859 = vunpack.c.l.b16 %v1584
        %v1860 = vunpack.c.h.b16 %v1584
        %v1861 = vunpack.c.l.b16 %v1585
        %v1862 = vunpack.c.h.b16 %v1585
        %v1863 = vunpack.c.l.b16 %v1586
        %v1864 = vunpack.c.h.b16 %v1586
        %v1865 = vunpack.c.l.b16 %v1587
        %v1866 = vunpack.c.h.b16 %v1587
        %v1867 = vunpack.c.l.b16 %v1588
        %v1868 = vunpack.c.h.b16 %v1588
        %v1869 = vunpack.c.l.b16 %v1589
        %v1870 = vunpack.c.h.b16 %v1589
        %v1871 = vunpack.c.l.b16 %v1590
        %v1872 = vunpack.c.h.b16 %v1590
        %v1873 = vunpack.c.l.b16 %v1591
        %v1874 = vunpack.c.h.b16 %v1591
        %v1875 = vunpack.c.l.b16 %v1592
        %v1876 = vunpack.c.h.b16 %v1592
        %v1877 = vunpack.c.l.b16 %v1593
        %v1878 = vunpack.c.h.b16 %v1593
        %v1879 = vunpack.c.l.b16 %v1594
        %v1880 = vunpack.c.h.b16 %v1594
        %v1881 = vunpack.c.l.b16 %v1595
        %v1882 = vunpack.c.h.b16 %v1595
        %v1883 = vunpack.c.l.b16 %v1596
        %v1884 = vunpack.c.h.b16 %v1596
        %v1885 = vunpack.c.l.b16 %v1597
        %v1886 = vunpack.c.h.b16 %v1597
        %v1887 = vunpack.c.l.b16 %v1598
        %v1888 = vunpack.c.h.b16 %v1598
        %v1889 = vunpack.c.l.b16 %v1599
        %v1890 = vunpack.c.h.b16 %v1599
        %v1891 = vunpack.c.l.b16 %v1600
        %v1892 = vunpack.c.h.b16 %v1600
        %v1893 = vunpack.c.l.b16 %v1601
        %v1894 = vunpack.c.h.b16 %v1601
        %v1895 = vunpack.c.l.b16 %v1602
        %v1896 = vunpack.c.h.b16 %v1602
        %v1897 = vunpack.c.l.b16 %v1603
        %v1898 = vunpack.c.h.b16 %v1603
        %v1899 = vunpack.c.l.b16 %v1604
        %v1900 = vunpack.c.h.b16 %v1604
        %v1901 = vunpack.c.l.b16 %v1605
        %v1902 = vunpack.c.h.b16 %v1605
        %v1903 = vunpack.c.l.b16 %v1606
        %v1904 = vunpack.c.h.b16 %v1606
        %v1905 = vunpack.c.l.b16 %v1607
        %v1906 = vunpack.c.h.b16 %v1607
        %v1907 = vunpack.c.l.b16 %v1608
        %v1908 = vunpack.c.h.b16 %v1608
        %v1909 = vunpack.c.l.b16 %v1609
        %v1910 = vunpack.c.h.b16 %v1609
        %v1911 = vunpack.c.l.b16 %v1610
        %v1912 = vunpack.c.h.b16 %v1610
        %v1913 = vunpack.c.l.b16 %v1611
        %v1914 = vunpack.c.h.b16 %v1611
        %v1915 = vunpack.c.l.b16 %v1612
        %v1916 = vunpack.c.h.b16 %v1612
        %v1917 = vunpack.c.l.b16 %v1613
        %v1918 = vunpack.c.h.b16 %v1613
        %v1919 = vunpack.c.l.b16 %v1614
        %v1920 = vunpack.c.h.b16 %v1614
        %v1921 = vunpack.c.l.b16 %v1615
        %v1922 = vunpack.c.h.b16 %v1615
        %v1923 = vunpack.c.l.b16 %v1616
        %v1924 = vunpack.c.h.b16 %v1616
        %v1925 = vunpack.c.l.b16 %v1617
        %v1926 = vunpack.c.h.b16 %v1617
        %v1927 = vunpack.c.l.b16 %v1618
        %v1928 = vunpack.c.h.b16 %v1618
        %v1929 = vunpack.c.l.b16 %v1619
        %v1930 = vunpack.c.h.b16 %v1619
        %v1931 = vunpack.c.l.b16 %v1620
        %v1932 = vunpack.c.h.b16 %v1620
        %v1933 = vunpack.c.l.b16 %v1621
        %v1934 = vunpack.c.h.b16 %v1621
        %v1935 = vunpack.c.l.b16 %v1622
        %v1936 = vunpack.c.h.b16 %v1622
        %v1937 = vunpack.c.l.b16 %v1623
        %v1938 = vunpack.c.h.b16 %v1623
        %v1939 = vunpack.c.l.b16 %v1624
        %v1940 = vunpack.c.h.b16 %v1624
        %v1941 = vunpack.c.l.b16 %v1625
        %v1942 = vunpack.c.h.b16 %v1625
        %v1943 = vunpack.c.l.b16 %v1626
        %v1944 = vunpack.c.h.b16 %v1626
        %v1945 = vunpack.c.l.b16 %v1627
        %v1946 = vunpack.c.h.b16 %v1627
        %v1947 = vunpack.c.l.b16 %v1628
        %v1948 = vunpack.c.h.b16 %v1628
        %v1949 = vunpack.c.l.b16 %v1629
        %v1950 = vunpack.c.h.b16 %v1629
        %v1951 = vunpack.c.l.b16 %v1630
        %v1952 = vunpack.c.h.b16 %v1630
        %v1953 = vunpack.c.l.b16 %v1631
        %v1954 = vunpack.c.h.b16 %v1631
        %v1955 = vunpack.c.l.b16 %v1632
        %v1956 = vunpack.c.h.b16 %v1632
        %v1957 = vunpack.c.l.b16 %v1633
        %v1958 = vunpack.c.h.b16 %v1633
        %v1959 = vunpack.c.l.b16 %v1634
        %v1960 = vunpack.c.h.b16 %v1634
        %v1961 = vunpack.c.l.b16 %v1635
        %v1962 = vunpack.c.h.b16 %v1635
        %v1963 = vunpack.c.l.b16 %v1636
        %v1964 = vunpack.c.h.b16 %v1636
        %v1965 = vunpack.c.l.b16 %v1637
        %v1966 = vunpack.c.h.b16 %v1637
        %v1967 = vunpack.c.l.b16 %v1638
        %v1968 = vunpack.c.h.b16 %v1638
        %v1969 = vunpack.c.l.b16 %v1639
        %v1970 = vunpack.c.h.b16 %v1639
        %v1971 = vunpack.c.l.b16 %v1640
        %v1972 = vunpack.c.h.b16 %v1640
        %v1973 = vunpack.c.l.b16 %v1641
        %v1974 = vunpack.c.h.b16 %v1641
        %v1975 = vunpack.c.l.b16 %v1642
        %v1976 = vunpack.c.h.b16 %v1642
        %v1977 = vunpack.c.l.b16 %v1643
        %v1978 = vunpack.c.h.b16 %v1643
        %v1979 = vunpack.c.l.b16 %v1644
        %v1980 = vunpack.c.h.b16 %v1644
        %v1981 = vunpack.c.l.b16 %v1645
        %v1982 = vunpack.c.h.b16 %v1645
        %v1983 = vunpack.c.l.b16 %v1646
        %v1984 = vunpack.c.h.b16 %v1646
        %v1985 = vunpack.c.l.b16 %v1647
        %v1986 = vunpack.c.h.b16 %v1647
        %v1987 = vunpack.c.l.b16 %v1648
        %v1988 = vunpack.c.h.b16 %v1648
        %v1989 = vunpack.c.l.b16 %v1649
        %v1990 = vunpack.c.h.b16 %v1649
        %v1991 = vunpack.c.l.b16 %v1650
        %v1992 = vunpack.c.h.b16 %v1650
        %v1993 = vunpack.c.l.b16 %v1651
        %v1994 = vunpack.c.h.b16 %v1651
        %v1995 = vunpack.c.l.b16 %v1652
        %v1996 = vunpack.c.h.b16 %v1652
        %v1997 = vunpack.c.l.b16 %v1653
        %v1998 = vunpack.c.h.b16 %v1653
        %v1999 = vunpack.c.l.b16 %v1654
        %v2000 = vunpack.c.h.b16 %v1654
        %v2001 = vunpack.c.l.b16 %v1655
        %v2002 = vunpack.c.h.b16 %v1655
        %v2003 = vunpack.c.l.b16 %v1656
        %v2004 = vunpack.c.h.b16 %v1656
        %v2005 = vunpack.c.l.b16 %v1657
        %v2006 = vunpack.c.h.b16 %v1657
        %v2007 = vunpack.c.l.b16 %v1658
        %v2008 = vunpack.c.h.b16 %v1658
        %v2009 = vunpack.c.l.b16 %v1659
        %v2010 = vunpack.c.h.b16 %v1659
        %v2011 = vunpack.c.l.b16 %v1660
        %v2012 = vunpack.c.h.b16 %v1660
        %v2013 = vunpack.c.l.b16 %v1661
        %v2014 = vunpack.c.h.b16 %v1661
        %v2015 = vunpack.c.l.b16 %v1662
        %v2016 = vunpack.c.h.b16 %v1662
        %v2017 = vunpack.c.l.b16 %v1663
        %v2018 = vunpack.c.h.b16 %v1663
        %v2019 = vunpack.c.l.b16 %v1664
        %v2020 = vunpack.c.h.b16 %v1664
        %v2021 = vunpack.c.l.b16 %v1665
        %v2022 = vunpack.c.h.b16 %v1665
        %v2023 = vunpack.c.l.b16 %v1666
        %v2024 = vunpack.c.h.b16 %v1666
        %v2025 = vunpack.c.l.b16 %v1667
        %v2026 = vunpack.c.h.b16 %v1667
        %v2027 = vunpack.c.l.b16 %v1668
        %v2028 = vunpack.c.h.b16 %v1668
        %v2029 = vunpack.c.l.b16 %v1669
        %v2030 = vunpack.c.h.b16 %v1669
        %v2031 = vunpack.c.l.b16 %v1670
        %v2032 = vunpack.c.h.b16 %v1670
        %v2033 = vunpack.c.l.b16 %v1671
        %v2034 = vunpack.c.h.b16 %v1671
        %v2035 = vunpack.c.l.b16 %v1672
        %v2036 = vunpack.c.h.b16 %v1672
        %v2037 = vunpack.c.l.b16 %v1673
        %v2038 = vunpack.c.h.b16 %v1673
        %v2039 = vunpack.c.l.b16 %v1674
        %v2040 = vunpack.c.h.b16 %v1674
        %v2041 = vunpack.c.l.b16 %v1675
        %v2042 = vunpack.c.h.b16 %v1675
        %v2043 = vunpack.c.l.b16 %v1676
        %v2044 = vunpack.c.h.b16 %v1676
        %v2045 = vunpack.c.l.b16 %v1677
        %v2046 = vunpack.c.h.b16 %v1677
        %v2047 = vunpack.c.l.b16 %v1678
        %v2048 = vunpack.c.h.b16 %v1678
        %v2049 = vunpack.c.l.b16 %v1679
        %v2050 = vunpack.c.h.b16 %v1679
        %v2051 = vunpack.c.l.b16 %v1680
        %v2052 = vunpack.c.h.b16 %v1680
        %v2053 = vunpack.c.l.b16 %v1681
        %v2054 = vunpack.c.h.b16 %v1681
        %v2055 = vunpack.c.l.b16 %v1682
        %v2056 = vunpack.c.h.b16 %v1682
        %v2057 = vunpack.c.l.b16 %v1683
        %v2058 = vunpack.c.h.b16 %v1683
        %v2059 = vunpack.c.l.b16 %v1684
        %v2060 = vunpack.c.h.b16 %v1684
        %v2061 = vunpack.c.l.b16 %v1685
        %v2062 = vunpack.c.h.b16 %v1685
        %v2063 = vunpack.c.l.b16 %v1686
        %v2064 = vunpack.c.h.b16 %v1686
        %v2065 = vunpack.c.l.b16 %v1687
        %v2066 = vunpack.c.h.b16 %v1687
        %v2067 = vunpack.c.l.b16 %v1688
        %v2068 = vunpack.c.h.b16 %v1688
        %v2069 = vunpack.c.l.b16 %v1689
        %v2070 = vunpack.c.h.b16 %v1689
        %v2071 = vunpack.c.l.b16 %v1690
        %v2072 = vunpack.c.h.b16 %v1690
        %v2073 = vunpack.c.l.b16 %v1691
        %v2074 = vunpack.c.h.b16 %v1691
        %v2075 = vunpack.c.l.b16 %v1692
        %v2076 = vunpack.c.h.b16 %v1692
        %v2077 = vpack.c.b16 %v1825, %v1821
        %v2078 = vpack.c.b16 %v1826, %v1822
        %v2079 = vpack.c.b16 %v1827, %v1823
        %v2080 = vpack.c.b16 %v1828, %v1824
        %v2081 = vpack.c.b16 %v1833, %v1829
        %v2082 = vpack.c.b16 %v1834, %v1830
        %v2083 = vpack.c.b16 %v1835, %v1831
        %v2084 = vpack.c.b16 %v1836, %v1832
        %v2085 = vpack.c.b16 %v1841, %v1837
        %v2086 = vpack.c.b16 %v1842, %v1838
        %v2087 = vpack.c.b16 %v1843, %v1839
        %v2088 = vpack.c.b16 %v1844, %v1840
        %v2089 = vpack.c.b16 %v1849, %v1845
        %v2090 = vpack.c.b16 %v1850, %v1846
        %v2091 = vpack.c.b16 %v1851, %v1847
        %v2092 = vpack.c.b16 %v1852, %v1848
        %v2093 = vpack.c.b16 %v1857, %v1853
        %v2094 = vpack.c.b16 %v1858, %v1854
        %v2095 = vpack.c.b16 %v1859, %v1855
        %v2096 = vpack.c.b16 %v1860, %v1856
        %v2097 = vpack.c.b16 %v1865, %v1861
        %v2098 = vpack.c.b16 %v1866, %v1862
        %v2099 = vpack.c.b16 %v1867, %v1863
        %v2100 = vpack.c.b16 %v1868, %v1864
        %v2101 = vpack.c.b16 %v1873, %v1869
        %v2102 = vpack.c.b16 %v1874, %v1870
        %v2103 = vpack.c.b16 %v1875, %v1871
        %v2104 = vpack.c.b16 %v1876, %v1872
        %v2105 = vpack.c.b16 %v1881, %v1877
        %v2106 = vpack.c.b16 %v1882, %v1878
        %v2107 = vpack.c.b16 %v1883, %v1879
        %v2108 = vpack.c.b16 %v1884, %v1880
        %v2109 = vpack.c.b16 %v1889, %v1885
        %v2110 = vpack.c.b16 %v1890, %v1886
        %v2111 = vpack.c.b16 %v1891, %v1887
        %v2112 = vpack.c.b16 %v1892, %v1888
        %v2113 = vpack.c.b16 %v1897, %v1893
        %v2114 = vpack.c.b16 %v1898, %v1894
        %v2115 = vpack.c.b16 %v1899, %v1895
        %v2116 = vpack.c.b16 %v1900, %v1896
        %v2117 = vpack.c.b16 %v1905, %v1901
        %v2118 = vpack.c.b16 %v1906, %v1902
        %v2119 = vpack.c.b16 %v1907, %v1903
        %v2120 = vpack.c.b16 %v1908, %v1904
        %v2121 = vpack.c.b16 %v1913, %v1909
        %v2122 = vpack.c.b16 %v1914, %v1910
        %v2123 = vpack.c.b16 %v1915, %v1911
        %v2124 = vpack.c.b16 %v1916, %v1912
        %v2125 = vpack.c.b16 %v1921, %v1917
        %v2126 = vpack.c.b16 %v1922, %v1918
        %v2127 = vpack.c.b16 %v1923, %v1919
        %v2128 = vpack.c.b16 %v1924, %v1920
        %v2129 = vpack.c.b16 %v1929, %v1925
        %v2130 = vpack.c.b16 %v1930, %v1926
        %v2131 = vpack.c.b16 %v1931, %v1927
        %v2132 = vpack.c.b16 %v1932, %v1928
        %v2133 = vpack.c.b16 %v1937, %v1933
        %v2134 = vpack.c.b16 %v1938, %v1934
        %v2135 = vpack.c.b16 %v1939, %v1935
        %v2136 = vpack.c.b16 %v1940, %v1936
        %v2137 = vpack.c.b16 %v1945, %v1941
        %v2138 = vpack.c.b16 %v1946, %v1942
        %v2139 = vpack.c.b16 %v1947, %v1943
        %v2140 = vpack.c.b16 %v1948, %v1944
        %v2141 = vpack.c.b16 %v1953, %v1949
        %v2142 = vpack.c.b16 %v1954, %v1950
        %v2143 = vpack.c.b16 %v1955, %v1951
        %v2144 = vpack.c.b16 %v1956, %v1952
        %v2145 = vpack.c.b16 %v1961, %v1957
        %v2146 = vpack.c.b16 %v1962, %v1958
        %v2147 = vpack.c.b16 %v1963, %v1959
        %v2148 = vpack.c.b16 %v1964, %v1960
        %v2149 = vpack.c.b16 %v1969, %v1965
        %v2150 = vpack.c.b16 %v1970, %v1966
        %v2151 = vpack.c.b16 %v1971, %v1967
        %v2152 = vpack.c.b16 %v1972, %v1968
        %v2153 = vpack.c.b16 %v1977, %v1973
        %v2154 = vpack.c.b16 %v1978, %v1974
        %v2155 = vpack.c.b16 %v1979, %v1975
        %v2156 = vpack.c.b16 %v1980, %v1976
        %v2157 = vpack.c.b16 %v1985, %v1981
        %v2158 = vpack.c.b16 %v1986, %v1982
        %v2159 = vpack.c.b16 %v1987, %v1983
        %v2160 = vpack.c.b16 %v1988, %v1984
        %v2161 = vpack.c.b16 %v1993, %v1989
        %v2162 = vpack.c.b16 %v1994, %v1990
        %v2163 = vpack.c.b16 %v1995, %v1991
        %v2164 = vpack.c.b16 %v1996, %v1992
        %v2165 = vpack.c.b16 %v2001, %v1997
        %v2166 = vpack.c.b16 %v2002, %v1998
        %v2167 = vpack.c.b16 %v2003, %v1999
        %v2168 = vpack.c.b16 %v2004, %v2000
        %v2169 = vpack.c.b16 %v2009, %v2005
        %v2170 = vpack.c.b16 %v2010, %v2006
        %v2171 = vpack.c.b16 %v2011, %v2007
        %v2172 = vpack.c.b16 %v2012, %v2008
        %v2173 = vpack.c.b16 %v2017, %v2013
        %v2174 = vpack.c.b16 %v2018, %v2014
        %v2175 = vpack.c.b16 %v2019, %v2015
        %v2176 = vpack.c.b16 %v2020, %v2016
        %v2177 = vpack.c.b16 %v2025, %v2021
        %v2178 = vpack.c.b16 %v2026, %v2022
        %v2179 = vpack.c.b16 %v2027, %v2023
        %v2180 = vpack.c.b16 %v2028, %v2024
        %v2181 = vpack.c.b16 %v2033, %v2029
        %v2182 = vpack.c.b16 %v2034, %v2030
        %v2183 = vpack.c.b16 %v2035, %v2031
        %v2184 = vpack.c.b16 %v2036, %v2032
        %v2185 = vpack.c.b16 %v2041, %v2037
        %v2186 = vpack.c.b16 %v2042, %v2038
        %v2187 = vpack.c.b16 %v2043, %v2039
        %v2188 = vpack.c.b16 %v2044, %v2040
        %v2189 = vpack.c.b16 %v2049, %v2045
        %v2190 = vpack.c.b16 %v2050, %v2046
        %v2191 = vpack.c.b16 %v2051, %v2047
        %v2192 = vpack.c.b16 %v2052, %v2048
        %v2193 = vpack.c.b16 %v2057, %v2053
        %v2194 = vpack.c.b16 %v2058, %v2054
        %v2195 = vpack.c.b16 %v2059, %v2055
        %v2196 = vpack.c.b16 %v2060, %v2056
        %v2197 = vpack.c.b16 %v2065, %v2061
        %v2198 = vpack.c.b16 %v2066, %v2062
        %v2199 = vpack.c.b16 %v2067, %v2063
        %v2200 = vpack.c.b16 %v2068, %v2064
        %v2201 = vpack.c.b16 %v2073, %v2069
        %v2202 = vpack.c.b16 %v2074, %v2070
        %v2203 = vpack.c.b16 %v2075, %v2071
        %v2204 = vpack.c.b16 %v2076, %v2072
        %2333 = vmatprep.subr.bf16.mxu0 %v2078
        %2334 = vmatpush1.bf16.msra.mxu0 %v2077
        %2335 = vmatprep.subr.bf16.mxu0 %v2082
        %2336 = vmatpush1.bf16.msra.mxu0 %v2081
        %2337 = vmatprep.subr.bf16.mxu0 %v2086
        %2338 = vmatpush1.bf16.msra.mxu0 %v2085
        %2339 = vmatprep.subr.bf16.mxu0 %v2090
        %2340 = vmatpush1.bf16.msra.mxu0 %v2089
        %2341 = vmatprep.subr.bf16.mxu0 %v2094
        %2342 = vmatpush1.bf16.msra.mxu0 %v2093
        %2343 = vmatprep.subr.bf16.mxu0 %v2098
        %2344 = vmatpush1.bf16.msra.mxu0 %v2097
        %2345 = vmatprep.subr.bf16.mxu0 %v2102
        %2346 = vmatpush1.bf16.msra.mxu0 %v2101
        %2347 = vmatprep.subr.bf16.mxu0 %v2106
        %2348 = vmatpush1.bf16.msra.mxu0 %v2105
        %2349 = vmatprep.subr.bf16.mxu0 %v2110
        %2350 = vmatpush1.bf16.msra.mxu0 %v2109
        %2351 = vmatprep.subr.bf16.mxu0 %v2114
        %2352 = vmatpush1.bf16.msra.mxu0 %v2113
        %2353 = vmatprep.subr.bf16.mxu0 %v2118
        %2354 = vmatpush1.bf16.msra.mxu0 %v2117
        %2355 = vmatprep.subr.bf16.mxu0 %v2122
        %2356 = vmatpush1.bf16.msra.mxu0 %v2121
        %2357 = vmatprep.subr.bf16.mxu0 %v2126
        %2358 = vmatpush1.bf16.msra.mxu0 %v2125
        %2359 = vmatprep.subr.bf16.mxu0 %v2130
        %2360 = vmatpush1.bf16.msra.mxu0 %v2129
        %2361 = vmatprep.subr.bf16.mxu0 %v2134
        %2362 = vmatpush1.bf16.msra.mxu0 %v2133
        %2363 = vmatprep.subr.bf16.mxu0 %v2138
        %2364 = vmatpush1.bf16.msra.mxu0 %v2137
        %2365 = vmatprep.mubr.bf16.mxu0 %v1561
        %2366 = vmatmul.mubr.bf16.gmra.mrb[0].mxu0 %v1560
        %v2367 = vpop.f32.mrb[0].mxu0
        %v2368 = vadd.f32 0.0, %v2367
        %v2369 = vpop.f32.mrb[0].mxu0
        %v2370 = vadd.f32 0.0, %v2369
        %v2371 = vpop.f32.mrb[0].mxu0
        %v2372 = vadd.f32 0.0, %v2371
        %v2373 = vpop.f32.mrb[0].mxu0
        %v2374 = vadd.f32 0.0, %v2373
        %2375 = vdwg.mxu0
        %2376 = vmatprep.subr.bf16.mxu0 %v2142
        %2377 = vmatpush1.bf16.msra.mxu0 %v2141
        %2378 = vmatprep.subr.bf16.mxu0 %v2146
        %2379 = vmatpush1.bf16.msra.mxu0 %v2145
        %2380 = vmatprep.subr.bf16.mxu0 %v2150
        %2381 = vmatpush1.bf16.msra.mxu0 %v2149
        %2382 = vmatprep.subr.bf16.mxu0 %v2154
        %2383 = vmatpush1.bf16.msra.mxu0 %v2153
        %2384 = vmatprep.subr.bf16.mxu0 %v2158
        %2385 = vmatpush1.bf16.msra.mxu0 %v2157
        %2386 = vmatprep.subr.bf16.mxu0 %v2162
        %2387 = vmatpush1.bf16.msra.mxu0 %v2161
        %2388 = vmatprep.subr.bf16.mxu0 %v2166
        %2389 = vmatpush1.bf16.msra.mxu0 %v2165
        %2390 = vmatprep.subr.bf16.mxu0 %v2170
        %2391 = vmatpush1.bf16.msra.mxu0 %v2169
        %2392 = vmatprep.subr.bf16.mxu0 %v2174
        %2393 = vmatpush1.bf16.msra.mxu0 %v2173
        %2394 = vmatprep.subr.bf16.mxu0 %v2178
        %2395 = vmatpush1.bf16.msra.mxu0 %v2177
        %2396 = vmatprep.subr.bf16.mxu0 %v2182
        %2397 = vmatpush1.bf16.msra.mxu0 %v2181
        %2398 = vmatprep.subr.bf16.mxu0 %v2186
        %2399 = vmatpush1.bf16.msra.mxu0 %v2185
        %2400 = vmatprep.subr.bf16.mxu0 %v2190
        %2401 = vmatpush1.bf16.msra.mxu0 %v2189
        %2402 = vmatprep.subr.bf16.mxu0 %v2194
        %2403 = vmatpush1.bf16.msra.mxu0 %v2193
        %2404 = vmatprep.subr.bf16.mxu0 %v2198
        %2405 = vmatpush1.bf16.msra.mxu0 %v2197
        %2406 = vmatprep.subr.bf16.mxu0 %v2202
        %2407 = vmatpush1.bf16.msra.mxu0 %v2201
        %2408 = vmatprep.mubr.bf16.mxu0 %v1563
        %2409 = vmatmul.mubr.bf16.gmra.mrb[0].mxu0 %v1562
        %v2410 = vpop.f32.mrb[0].mxu0
        %v2411 = vadd.f32 %v2368, %v2410
        %v2412 = vpop.f32.mrb[0].mxu0
        %v2413 = vadd.f32 %v2370, %v2412
        %v2414 = vpop.f32.mrb[0].mxu0
        %v2415 = vadd.f32 %v2372, %v2414
        %v2416 = vpop.f32.mrb[0].mxu0
        %v2417 = vadd.f32 %v2374, %v2416
        %2418 = vdwg.mxu0
        %2419 = vmatprep.subr.bf16.mxu0 %v2080
        %2420 = vmatpush1.bf16.msra.mxu0 %v2079
        %2421 = vmatprep.subr.bf16.mxu0 %v2084
        %2422 = vmatpush1.bf16.msra.mxu0 %v2083
        %2423 = vmatprep.subr.bf16.mxu0 %v2088
        %2424 = vmatpush1.bf16.msra.mxu0 %v2087
        %2425 = vmatprep.subr.bf16.mxu0 %v2092
        %2426 = vmatpush1.bf16.msra.mxu0 %v2091
        %2427 = vmatprep.subr.bf16.mxu0 %v2096
        %2428 = vmatpush1.bf16.msra.mxu0 %v2095
        %2429 = vmatprep.subr.bf16.mxu0 %v2100
        %2430 = vmatpush1.bf16.msra.mxu0 %v2099
        %2431 = vmatprep.subr.bf16.mxu0 %v2104
        %2432 = vmatpush1.bf16.msra.mxu0 %v2103
        %2433 = vmatprep.subr.bf16.mxu0 %v2108
        %2434 = vmatpush1.bf16.msra.mxu0 %v2107
        %2435 = vmatprep.subr.bf16.mxu0 %v2112
        %2436 = vmatpush1.bf16.msra.mxu0 %v2111
        %2437 = vmatprep.subr.bf16.mxu0 %v2116
        %2438 = vmatpush1.bf16.msra.mxu0 %v2115
        %2439 = vmatprep.subr.bf16.mxu0 %v2120
        %2440 = vmatpush1.bf16.msra.mxu0 %v2119
        %2441 = vmatprep.subr.bf16.mxu0 %v2124
        %2442 = vmatpush1.bf16.msra.mxu0 %v2123
        %2443 = vmatprep.subr.bf16.mxu0 %v2128
        %2444 = vmatpush1.bf16.msra.mxu0 %v2127
        %2445 = vmatprep.subr.bf16.mxu0 %v2132
        %2446 = vmatpush1.bf16.msra.mxu0 %v2131
        %2447 = vmatprep.subr.bf16.mxu0 %v2136
        %2448 = vmatpush1.bf16.msra.mxu0 %v2135
        %2449 = vmatprep.subr.bf16.mxu0 %v2140
        %2450 = vmatpush1.bf16.msra.mxu0 %v2139
        %2451 = vmatprep.mubr.bf16.mxu0 %v1561
        %2452 = vmatmul.mubr.bf16.gmra.mrb[0].mxu0 %v1560
        %v2453 = vpop.f32.mrb[0].mxu0
        %v2454 = vadd.f32 0.0, %v2453
        %v2455 = vpop.f32.mrb[0].mxu0
        %v2456 = vadd.f32 0.0, %v2455
        %v2457 = vpop.f32.mrb[0].mxu0
        %v2458 = vadd.f32 0.0, %v2457
        %v2459 = vpop.f32.mrb[0].mxu0
        %v2460 = vadd.f32 0.0, %v2459
        %2461 = vdwg.mxu0
        %2462 = vmatprep.subr.bf16.mxu0 %v2144
        %2463 = vmatpush1.bf16.msra.mxu0 %v2143
        %2464 = vmatprep.subr.bf16.mxu0 %v2148
        %2465 = vmatpush1.bf16.msra.mxu0 %v2147
        %2466 = vmatprep.subr.bf16.mxu0 %v2152
        %2467 = vmatpush1.bf16.msra.mxu0 %v2151
        %2468 = vmatprep.subr.bf16.mxu0 %v2156
        %2469 = vmatpush1.bf16.msra.mxu0 %v2155
        %2470 = vmatprep.subr.bf16.mxu0 %v2160
        %2471 = vmatpush1.bf16.msra.mxu0 %v2159
        %2472 = vmatprep.subr.bf16.mxu0 %v2164
        %2473 = vmatpush1.bf16.msra.mxu0 %v2163
        %2474 = vmatprep.subr.bf16.mxu0 %v2168
        %2475 = vmatpush1.bf16.msra.mxu0 %v2167
        %2476 = vmatprep.subr.bf16.mxu0 %v2172
        %2477 = vmatpush1.bf16.msra.mxu0 %v2171
        %2478 = vmatprep.subr.bf16.mxu0 %v2176
        %2479 = vmatpush1.bf16.msra.mxu0 %v2175
        %2480 = vmatprep.subr.bf16.mxu0 %v2180
        %2481 = vmatpush1.bf16.msra.mxu0 %v2179
        %2482 = vmatprep.subr.bf16.mxu0 %v2184
        %2483 = vmatpush1.bf16.msra.mxu0 %v2183
        %2484 = vmatprep.subr.bf16.mxu0 %v2188
        %2485 = vmatpush1.bf16.msra.mxu0 %v2187
        %2486 = vmatprep.subr.bf16.mxu0 %v2192
        %2487 = vmatpush1.bf16.msra.mxu0 %v2191
        %2488 = vmatprep.subr.bf16.mxu0 %v2196
        %2489 = vmatpush1.bf16.msra.mxu0 %v2195
        %2490 = vmatprep.subr.bf16.mxu0 %v2200
        %2491 = vmatpush1.bf16.msra.mxu0 %v2199
        %2492 = vmatprep.subr.bf16.mxu0 %v2204
        %2493 = vmatpush1.bf16.msra.mxu0 %v2203
        %2494 = vmatprep.mubr.bf16.mxu0 %v1563
        %2495 = vmatmul.mubr.bf16.gmra.mrb[0].mxu0 %v1562
        %v2496 = vpop.f32.mrb[0].mxu0
        %v2497 = vadd.f32 %v2454, %v2496
        %v2498 = vpop.f32.mrb[0].mxu0
        %v2499 = vadd.f32 %v2456, %v2498
        %v2500 = vpop.f32.mrb[0].mxu0
        %v2501 = vadd.f32 %v2458, %v2500
        %v2502 = vpop.f32.mrb[0].mxu0
        %v2503 = vadd.f32 %v2460, %v2502
        %2504 = vdwg.mxu0
        %v2505 = vpack.c.bf16 %v2415, %v2411
        %v2506 = vpack.c.bf16 %v2417, %v2413
        %v2507 = vpack.c.bf16 %v2501, %v2497
        %v2508 = vpack.c.bf16 %v2503, %v2499
        %s2509 = scalar_lea.vmem %s4, 4
        %v2510 = vld [vmem:[%s2509] sm:$0xf]
        %v2513 = vunpack.c.l.s4 1966171168
        %v2514 = vunpack.c.0.s8 %v2513
        %v2515 = vlaneseq
        %v2516 = vshrl.u32 %v2515, 7
        %v2517 = vsub.s32 %v2514, %v2516
        %v2518 = vrot.slane %v2510, %v2517
        %v2519 = vcombine.high %v2518, %v2518
        %v2521 = vunpack.c.l.s4 1966171168
        %v2522 = vunpack.c.0.s8 %v2521
        %v2523 = vlaneseq
        %v2524 = vshrl.u32 %v2523, 7
        %v2525 = vsub.s32 %v2522, %v2524
        %v2526 = vrot.slane %v2518, %v2525
        %v2528 = vunpack.c.l.s4 1966171168
        %v2529 = vunpack.c.0.s8 %v2528
        %v2530 = vlaneseq
        %v2531 = vshrl.u32 %v2530, 7
        %v2532 = vsub.s32 %v2529, %v2531
        %v2533 = vrot.slane %v2519, %v2532
        %v2534 = vcombine.high %v2526, %v2526
        %v2535 = vcombine.high %v2533, %v2533
        %v2537 = vpack.i.b16 %v2526, %v2526
        %v2539 = vlaneseq
        %v2540 = vshrl.u32 %v2539, 7
        %v2541 = vsub.s32 0, %v2540
        %v2542 = vrot.slane %v2537, %v2541
        %v2544 = vpack.i.b16 %v2533, %v2533
        %v2546 = vlaneseq
        %v2547 = vshrl.u32 %v2546, 7
        %v2548 = vsub.s32 0, %v2547
        %v2549 = vrot.slane %v2544, %v2548
        %v2551 = vpack.i.b16 %v2534, %v2534
        %v2553 = vlaneseq
        %v2554 = vshrl.u32 %v2553, 7
        %v2555 = vsub.s32 0, %v2554
        %v2556 = vrot.slane %v2551, %v2555
        %v2558 = vpack.i.b16 %v2535, %v2535
        %v2560 = vlaneseq
        %v2561 = vshrl.u32 %v2560, 7
        %v2562 = vsub.s32 0, %v2561
        %v2563 = vrot.slane %v2558, %v2562
        %v2564 = vadd.bf16 %v2505, %v2542
        %v2565 = vadd.bf16 %v2506, %v2549
        %v2566 = vadd.bf16 %v2507, %v2556
        %v2567 = vadd.bf16 %v2508, %v2563
        %v2568 = vmax.bf16 %v2564, 0
        %v2569 = vmax.bf16 %v2565, 0
        %v2570 = vmax.bf16 %v2566, 0
        %v2571 = vmax.bf16 %v2567, 0
        %s2572 = scalar_lea.vmem [#allocation7], 2048
        %v2573 = vld [vmem:[%s2572] sm:$0xff]
        %v2574 = vld [vmem:[%s2572 + $0x8] sm:$0xff]
        %v2575 = vld [vmem:[%s2572 + $0x10] sm:$0xff]
        %v2576 = vld [vmem:[%s2572 + $0x18] sm:$0xff]
        %v2577 = vld [vmem:[%s2572 + $0x20] sm:$0xff]
        %v2578 = vld [vmem:[%s2572 + $0x28] sm:$0xff]
        %v2579 = vld [vmem:[%s2572 + $0x30] sm:$0xff]
        %v2580 = vld [vmem:[%s2572 + $0x38] sm:$0xff]
        %v2581 = vld [vmem:[%s2572 + $0x40] sm:$0xff]
        %v2582 = vld [vmem:[%s2572 + $0x48] sm:$0xff]
        %v2583 = vld [vmem:[%s2572 + $0x50] sm:$0xff]
        %v2584 = vld [vmem:[%s2572 + $0x58] sm:$0xff]
        %v2585 = vld [vmem:[%s2572 + $0x60] sm:$0xff]
        %v2586 = vld [vmem:[%s2572 + $0x68] sm:$0xff]
        %v2587 = vld [vmem:[%s2572 + $0x70] sm:$0xff]
        %v2588 = vld [vmem:[%s2572 + $0x78] sm:$0xff]
        %v2589 = vld [vmem:[%s2572 + $0x80] sm:$0xff]
        %v2590 = vld [vmem:[%s2572 + $0x88] sm:$0xff]
        %v2591 = vld [vmem:[%s2572 + $0x90] sm:$0xff]
        %v2592 = vld [vmem:[%s2572 + $0x98] sm:$0xff]
        %v2593 = vld [vmem:[%s2572 + $0xa0] sm:$0xff]
        %v2594 = vld [vmem:[%s2572 + $0xa8] sm:$0xff]
        %v2595 = vld [vmem:[%s2572 + $0xb0] sm:$0xff]
        %v2596 = vld [vmem:[%s2572 + $0xb8] sm:$0xff]
        %v2597 = vld [vmem:[%s2572 + $0xc0] sm:$0xff]
        %v2598 = vld [vmem:[%s2572 + $0xc8] sm:$0xff]
        %v2599 = vld [vmem:[%s2572 + $0xd0] sm:$0xff]
        %v2600 = vld [vmem:[%s2572 + $0xd8] sm:$0xff]
        %v2601 = vld [vmem:[%s2572 + $0xe0] sm:$0xff]
        %v2602 = vld [vmem:[%s2572 + $0xe8] sm:$0xff]
        %v2603 = vld [vmem:[%s2572 + $0xf0] sm:$0xff]
        %v2604 = vld [vmem:[%s2572 + $0xf8] sm:$0xff]
        %v2605 = vld [vmem:[%s2572 + $0x100] sm:$0xff]
        %v2606 = vld [vmem:[%s2572 + $0x108] sm:$0xff]
        %v2607 = vld [vmem:[%s2572 + $0x110] sm:$0xff]
        %v2608 = vld [vmem:[%s2572 + $0x118] sm:$0xff]
        %v2609 = vld [vmem:[%s2572 + $0x120] sm:$0xff]
        %v2610 = vld [vmem:[%s2572 + $0x128] sm:$0xff]
        %v2611 = vld [vmem:[%s2572 + $0x130] sm:$0xff]
        %v2612 = vld [vmem:[%s2572 + $0x138] sm:$0xff]
        %v2613 = vld [vmem:[%s2572 + $0x140] sm:$0xff]
        %v2614 = vld [vmem:[%s2572 + $0x148] sm:$0xff]
        %v2615 = vld [vmem:[%s2572 + $0x150] sm:$0xff]
        %v2616 = vld [vmem:[%s2572 + $0x158] sm:$0xff]
        %v2617 = vld [vmem:[%s2572 + $0x160] sm:$0xff]
        %v2618 = vld [vmem:[%s2572 + $0x168] sm:$0xff]
        %v2619 = vld [vmem:[%s2572 + $0x170] sm:$0xff]
        %v2620 = vld [vmem:[%s2572 + $0x178] sm:$0xff]
        %v2621 = vld [vmem:[%s2572 + $0x180] sm:$0xff]
        %v2622 = vld [vmem:[%s2572 + $0x188] sm:$0xff]
        %v2623 = vld [vmem:[%s2572 + $0x190] sm:$0xff]
        %v2624 = vld [vmem:[%s2572 + $0x198] sm:$0xff]
        %v2625 = vld [vmem:[%s2572 + $0x1a0] sm:$0xff]
        %v2626 = vld [vmem:[%s2572 + $0x1a8] sm:$0xff]
        %v2627 = vld [vmem:[%s2572 + $0x1b0] sm:$0xff]
        %v2628 = vld [vmem:[%s2572 + $0x1b8] sm:$0xff]
        %v2629 = vld [vmem:[%s2572 + $0x1c0] sm:$0xff]
        %v2630 = vld [vmem:[%s2572 + $0x1c8] sm:$0xff]
        %v2631 = vld [vmem:[%s2572 + $0x1d0] sm:$0xff]
        %v2632 = vld [vmem:[%s2572 + $0x1d8] sm:$0xff]
        %v2633 = vld [vmem:[%s2572 + $0x1e0] sm:$0xff]
        %v2634 = vld [vmem:[%s2572 + $0x1e8] sm:$0xff]
        %v2635 = vld [vmem:[%s2572 + $0x1f0] sm:$0xff]
        %v2636 = vld [vmem:[%s2572 + $0x1f8] sm:$0xff]
        %v2637 = vld [vmem:[%s2572 + $0x200] sm:$0xff]
        %v2638 = vld [vmem:[%s2572 + $0x208] sm:$0xff]
        %v2639 = vld [vmem:[%s2572 + $0x210] sm:$0xff]
        %v2640 = vld [vmem:[%s2572 + $0x218] sm:$0xff]
        %v2641 = vld [vmem:[%s2572 + $0x220] sm:$0xff]
        %v2642 = vld [vmem:[%s2572 + $0x228] sm:$0xff]
        %v2643 = vld [vmem:[%s2572 + $0x230] sm:$0xff]
        %v2644 = vld [vmem:[%s2572 + $0x238] sm:$0xff]
        %v2645 = vld [vmem:[%s2572 + $0x240] sm:$0xff]
        %v2646 = vld [vmem:[%s2572 + $0x248] sm:$0xff]
        %v2647 = vld [vmem:[%s2572 + $0x250] sm:$0xff]
        %v2648 = vld [vmem:[%s2572 + $0x258] sm:$0xff]
        %v2649 = vld [vmem:[%s2572 + $0x260] sm:$0xff]
        %v2650 = vld [vmem:[%s2572 + $0x268] sm:$0xff]
        %v2651 = vld [vmem:[%s2572 + $0x270] sm:$0xff]
        %v2652 = vld [vmem:[%s2572 + $0x278] sm:$0xff]
        %v2653 = vld [vmem:[%s2572 + $0x280] sm:$0xff]
        %v2654 = vld [vmem:[%s2572 + $0x288] sm:$0xff]
        %v2655 = vld [vmem:[%s2572 + $0x290] sm:$0xff]
        %v2656 = vld [vmem:[%s2572 + $0x298] sm:$0xff]
        %v2657 = vld [vmem:[%s2572 + $0x2a0] sm:$0xff]
        %v2658 = vld [vmem:[%s2572 + $0x2a8] sm:$0xff]
        %v2659 = vld [vmem:[%s2572 + $0x2b0] sm:$0xff]
        %v2660 = vld [vmem:[%s2572 + $0x2b8] sm:$0xff]
        %v2661 = vld [vmem:[%s2572 + $0x2c0] sm:$0xff]
        %v2662 = vld [vmem:[%s2572 + $0x2c8] sm:$0xff]
        %v2663 = vld [vmem:[%s2572 + $0x2d0] sm:$0xff]
        %v2664 = vld [vmem:[%s2572 + $0x2d8] sm:$0xff]
        %v2665 = vld [vmem:[%s2572 + $0x2e0] sm:$0xff]
        %v2666 = vld [vmem:[%s2572 + $0x2e8] sm:$0xff]
        %v2667 = vld [vmem:[%s2572 + $0x2f0] sm:$0xff]
        %v2668 = vld [vmem:[%s2572 + $0x2f8] sm:$0xff]
        %v2669 = vld [vmem:[%s2572 + $0x300] sm:$0xff]
        %v2670 = vld [vmem:[%s2572 + $0x308] sm:$0xff]
        %v2671 = vld [vmem:[%s2572 + $0x310] sm:$0xff]
        %v2672 = vld [vmem:[%s2572 + $0x318] sm:$0xff]
        %v2673 = vld [vmem:[%s2572 + $0x320] sm:$0xff]
        %v2674 = vld [vmem:[%s2572 + $0x328] sm:$0xff]
        %v2675 = vld [vmem:[%s2572 + $0x330] sm:$0xff]
        %v2676 = vld [vmem:[%s2572 + $0x338] sm:$0xff]
        %v2677 = vld [vmem:[%s2572 + $0x340] sm:$0xff]
        %v2678 = vld [vmem:[%s2572 + $0x348] sm:$0xff]
        %v2679 = vld [vmem:[%s2572 + $0x350] sm:$0xff]
        %v2680 = vld [vmem:[%s2572 + $0x358] sm:$0xff]
        %v2681 = vld [vmem:[%s2572 + $0x360] sm:$0xff]
        %v2682 = vld [vmem:[%s2572 + $0x368] sm:$0xff]
        %v2683 = vld [vmem:[%s2572 + $0x370] sm:$0xff]
        %v2684 = vld [vmem:[%s2572 + $0x378] sm:$0xff]
        %v2685 = vld [vmem:[%s2572 + $0x380] sm:$0xff]
        %v2686 = vld [vmem:[%s2572 + $0x388] sm:$0xff]
        %v2687 = vld [vmem:[%s2572 + $0x390] sm:$0xff]
        %v2688 = vld [vmem:[%s2572 + $0x398] sm:$0xff]
        %v2689 = vld [vmem:[%s2572 + $0x3a0] sm:$0xff]
        %v2690 = vld [vmem:[%s2572 + $0x3a8] sm:$0xff]
        %v2691 = vld [vmem:[%s2572 + $0x3b0] sm:$0xff]
        %v2692 = vld [vmem:[%s2572 + $0x3b8] sm:$0xff]
        %v2693 = vld [vmem:[%s2572 + $0x3c0] sm:$0xff]
        %v2694 = vld [vmem:[%s2572 + $0x3c8] sm:$0xff]
        %v2695 = vld [vmem:[%s2572 + $0x3d0] sm:$0xff]
        %v2696 = vld [vmem:[%s2572 + $0x3d8] sm:$0xff]
        %v2697 = vld [vmem:[%s2572 + $0x3e0] sm:$0xff]
        %v2698 = vld [vmem:[%s2572 + $0x3e8] sm:$0xff]
        %v2699 = vld [vmem:[%s2572 + $0x3f0] sm:$0xff]
        %v2700 = vld [vmem:[%s2572 + $0x3f8] sm:$0xff]
        %v2829 = vunpack.c.l.b16 %v2573
        %v2830 = vunpack.c.h.b16 %v2573
        %v2831 = vunpack.c.l.b16 %v2574
        %v2832 = vunpack.c.h.b16 %v2574
        %v2833 = vunpack.c.l.b16 %v2575
        %v2834 = vunpack.c.h.b16 %v2575
        %v2835 = vunpack.c.l.b16 %v2576
        %v2836 = vunpack.c.h.b16 %v2576
        %v2837 = vunpack.c.l.b16 %v2577
        %v2838 = vunpack.c.h.b16 %v2577
        %v2839 = vunpack.c.l.b16 %v2578
        %v2840 = vunpack.c.h.b16 %v2578
        %v2841 = vunpack.c.l.b16 %v2579
        %v2842 = vunpack.c.h.b16 %v2579
        %v2843 = vunpack.c.l.b16 %v2580
        %v2844 = vunpack.c.h.b16 %v2580
        %v2845 = vunpack.c.l.b16 %v2581
        %v2846 = vunpack.c.h.b16 %v2581
        %v2847 = vunpack.c.l.b16 %v2582
        %v2848 = vunpack.c.h.b16 %v2582
        %v2849 = vunpack.c.l.b16 %v2583
        %v2850 = vunpack.c.h.b16 %v2583
        %v2851 = vunpack.c.l.b16 %v2584
        %v2852 = vunpack.c.h.b16 %v2584
        %v2853 = vunpack.c.l.b16 %v2585
        %v2854 = vunpack.c.h.b16 %v2585
        %v2855 = vunpack.c.l.b16 %v2586
        %v2856 = vunpack.c.h.b16 %v2586
        %v2857 = vunpack.c.l.b16 %v2587
        %v2858 = vunpack.c.h.b16 %v2587
        %v2859 = vunpack.c.l.b16 %v2588
        %v2860 = vunpack.c.h.b16 %v2588
        %v2861 = vunpack.c.l.b16 %v2589
        %v2862 = vunpack.c.h.b16 %v2589
        %v2863 = vunpack.c.l.b16 %v2590
        %v2864 = vunpack.c.h.b16 %v2590
        %v2865 = vunpack.c.l.b16 %v2591
        %v2866 = vunpack.c.h.b16 %v2591
        %v2867 = vunpack.c.l.b16 %v2592
        %v2868 = vunpack.c.h.b16 %v2592
        %v2869 = vunpack.c.l.b16 %v2593
        %v2870 = vunpack.c.h.b16 %v2593
        %v2871 = vunpack.c.l.b16 %v2594
        %v2872 = vunpack.c.h.b16 %v2594
        %v2873 = vunpack.c.l.b16 %v2595
        %v2874 = vunpack.c.h.b16 %v2595
        %v2875 = vunpack.c.l.b16 %v2596
        %v2876 = vunpack.c.h.b16 %v2596
        %v2877 = vunpack.c.l.b16 %v2597
        %v2878 = vunpack.c.h.b16 %v2597
        %v2879 = vunpack.c.l.b16 %v2598
        %v2880 = vunpack.c.h.b16 %v2598
        %v2881 = vunpack.c.l.b16 %v2599
        %v2882 = vunpack.c.h.b16 %v2599
        %v2883 = vunpack.c.l.b16 %v2600
        %v2884 = vunpack.c.h.b16 %v2600
        %v2885 = vunpack.c.l.b16 %v2601
        %v2886 = vunpack.c.h.b16 %v2601
        %v2887 = vunpack.c.l.b16 %v2602
        %v2888 = vunpack.c.h.b16 %v2602
        %v2889 = vunpack.c.l.b16 %v2603
        %v2890 = vunpack.c.h.b16 %v2603
        %v2891 = vunpack.c.l.b16 %v2604
        %v2892 = vunpack.c.h.b16 %v2604
        %v2893 = vunpack.c.l.b16 %v2605
        %v2894 = vunpack.c.h.b16 %v2605
        %v2895 = vunpack.c.l.b16 %v2606
        %v2896 = vunpack.c.h.b16 %v2606
        %v2897 = vunpack.c.l.b16 %v2607
        %v2898 = vunpack.c.h.b16 %v2607
        %v2899 = vunpack.c.l.b16 %v2608
        %v2900 = vunpack.c.h.b16 %v2608
        %v2901 = vunpack.c.l.b16 %v2609
        %v2902 = vunpack.c.h.b16 %v2609
        %v2903 = vunpack.c.l.b16 %v2610
        %v2904 = vunpack.c.h.b16 %v2610
        %v2905 = vunpack.c.l.b16 %v2611
        %v2906 = vunpack.c.h.b16 %v2611
        %v2907 = vunpack.c.l.b16 %v2612
        %v2908 = vunpack.c.h.b16 %v2612
        %v2909 = vunpack.c.l.b16 %v2613
        %v2910 = vunpack.c.h.b16 %v2613
        %v2911 = vunpack.c.l.b16 %v2614
        %v2912 = vunpack.c.h.b16 %v2614
        %v2913 = vunpack.c.l.b16 %v2615
        %v2914 = vunpack.c.h.b16 %v2615
        %v2915 = vunpack.c.l.b16 %v2616
        %v2916 = vunpack.c.h.b16 %v2616
        %v2917 = vunpack.c.l.b16 %v2617
        %v2918 = vunpack.c.h.b16 %v2617
        %v2919 = vunpack.c.l.b16 %v2618
        %v2920 = vunpack.c.h.b16 %v2618
        %v2921 = vunpack.c.l.b16 %v2619
        %v2922 = vunpack.c.h.b16 %v2619
        %v2923 = vunpack.c.l.b16 %v2620
        %v2924 = vunpack.c.h.b16 %v2620
        %v2925 = vunpack.c.l.b16 %v2621
        %v2926 = vunpack.c.h.b16 %v2621
        %v2927 = vunpack.c.l.b16 %v2622
        %v2928 = vunpack.c.h.b16 %v2622
        %v2929 = vunpack.c.l.b16 %v2623
        %v2930 = vunpack.c.h.b16 %v2623
        %v2931 = vunpack.c.l.b16 %v2624
        %v2932 = vunpack.c.h.b16 %v2624
        %v2933 = vunpack.c.l.b16 %v2625
        %v2934 = vunpack.c.h.b16 %v2625
        %v2935 = vunpack.c.l.b16 %v2626
        %v2936 = vunpack.c.h.b16 %v2626
        %v2937 = vunpack.c.l.b16 %v2627
        %v2938 = vunpack.c.h.b16 %v2627
        %v2939 = vunpack.c.l.b16 %v2628
        %v2940 = vunpack.c.h.b16 %v2628
        %v2941 = vunpack.c.l.b16 %v2629
        %v2942 = vunpack.c.h.b16 %v2629
        %v2943 = vunpack.c.l.b16 %v2630
        %v2944 = vunpack.c.h.b16 %v2630
        %v2945 = vunpack.c.l.b16 %v2631
        %v2946 = vunpack.c.h.b16 %v2631
        %v2947 = vunpack.c.l.b16 %v2632
        %v2948 = vunpack.c.h.b16 %v2632
        %v2949 = vunpack.c.l.b16 %v2633
        %v2950 = vunpack.c.h.b16 %v2633
        %v2951 = vunpack.c.l.b16 %v2634
        %v2952 = vunpack.c.h.b16 %v2634
        %v2953 = vunpack.c.l.b16 %v2635
        %v2954 = vunpack.c.h.b16 %v2635
        %v2955 = vunpack.c.l.b16 %v2636
        %v2956 = vunpack.c.h.b16 %v2636
        %v2957 = vunpack.c.l.b16 %v2637
        %v2958 = vunpack.c.h.b16 %v2637
        %v2959 = vunpack.c.l.b16 %v2638
        %v2960 = vunpack.c.h.b16 %v2638
        %v2961 = vunpack.c.l.b16 %v2639
        %v2962 = vunpack.c.h.b16 %v2639
        %v2963 = vunpack.c.l.b16 %v2640
        %v2964 = vunpack.c.h.b16 %v2640
        %v2965 = vunpack.c.l.b16 %v2641
        %v2966 = vunpack.c.h.b16 %v2641
        %v2967 = vunpack.c.l.b16 %v2642
        %v2968 = vunpack.c.h.b16 %v2642
        %v2969 = vunpack.c.l.b16 %v2643
        %v2970 = vunpack.c.h.b16 %v2643
        %v2971 = vunpack.c.l.b16 %v2644
        %v2972 = vunpack.c.h.b16 %v2644
        %v2973 = vunpack.c.l.b16 %v2645
        %v2974 = vunpack.c.h.b16 %v2645
        %v2975 = vunpack.c.l.b16 %v2646
        %v2976 = vunpack.c.h.b16 %v2646
        %v2977 = vunpack.c.l.b16 %v2647
        %v2978 = vunpack.c.h.b16 %v2647
        %v2979 = vunpack.c.l.b16 %v2648
        %v2980 = vunpack.c.h.b16 %v2648
        %v2981 = vunpack.c.l.b16 %v2649
        %v2982 = vunpack.c.h.b16 %v2649
        %v2983 = vunpack.c.l.b16 %v2650
        %v2984 = vunpack.c.h.b16 %v2650
        %v2985 = vunpack.c.l.b16 %v2651
        %v2986 = vunpack.c.h.b16 %v2651
        %v2987 = vunpack.c.l.b16 %v2652
        %v2988 = vunpack.c.h.b16 %v2652
        %v2989 = vunpack.c.l.b16 %v2653
        %v2990 = vunpack.c.h.b16 %v2653
        %v2991 = vunpack.c.l.b16 %v2654
        %v2992 = vunpack.c.h.b16 %v2654
        %v2993 = vunpack.c.l.b16 %v2655
        %v2994 = vunpack.c.h.b16 %v2655
        %v2995 = vunpack.c.l.b16 %v2656
        %v2996 = vunpack.c.h.b16 %v2656
        %v2997 = vunpack.c.l.b16 %v2657
        %v2998 = vunpack.c.h.b16 %v2657
        %v2999 = vunpack.c.l.b16 %v2658
        %v3000 = vunpack.c.h.b16 %v2658
        %v3001 = vunpack.c.l.b16 %v2659
        %v3002 = vunpack.c.h.b16 %v2659
        %v3003 = vunpack.c.l.b16 %v2660
        %v3004 = vunpack.c.h.b16 %v2660
        %v3005 = vunpack.c.l.b16 %v2661
        %v3006 = vunpack.c.h.b16 %v2661
        %v3007 = vunpack.c.l.b16 %v2662
        %v3008 = vunpack.c.h.b16 %v2662
        %v3009 = vunpack.c.l.b16 %v2663
        %v3010 = vunpack.c.h.b16 %v2663
        %v3011 = vunpack.c.l.b16 %v2664
        %v3012 = vunpack.c.h.b16 %v2664
        %v3013 = vunpack.c.l.b16 %v2665
        %v3014 = vunpack.c.h.b16 %v2665
        %v3015 = vunpack.c.l.b16 %v2666
        %v3016 = vunpack.c.h.b16 %v2666
        %v3017 = vunpack.c.l.b16 %v2667
        %v3018 = vunpack.c.h.b16 %v2667
        %v3019 = vunpack.c.l.b16 %v2668
        %v3020 = vunpack.c.h.b16 %v2668
        %v3021 = vunpack.c.l.b16 %v2669
        %v3022 = vunpack.c.h.b16 %v2669
        %v3023 = vunpack.c.l.b16 %v2670
        %v3024 = vunpack.c.h.b16 %v2670
        %v3025 = vunpack.c.l.b16 %v2671
        %v3026 = vunpack.c.h.b16 %v2671
        %v3027 = vunpack.c.l.b16 %v2672
        %v3028 = vunpack.c.h.b16 %v2672
        %v3029 = vunpack.c.l.b16 %v2673
        %v3030 = vunpack.c.h.b16 %v2673
        %v3031 = vunpack.c.l.b16 %v2674
        %v3032 = vunpack.c.h.b16 %v2674
        %v3033 = vunpack.c.l.b16 %v2675
        %v3034 = vunpack.c.h.b16 %v2675
        %v3035 = vunpack.c.l.b16 %v2676
        %v3036 = vunpack.c.h.b16 %v2676
        %v3037 = vunpack.c.l.b16 %v2677
        %v3038 = vunpack.c.h.b16 %v2677
        %v3039 = vunpack.c.l.b16 %v2678
        %v3040 = vunpack.c.h.b16 %v2678
        %v3041 = vunpack.c.l.b16 %v2679
        %v3042 = vunpack.c.h.b16 %v2679
        %v3043 = vunpack.c.l.b16 %v2680
        %v3044 = vunpack.c.h.b16 %v2680
        %v3045 = vunpack.c.l.b16 %v2681
        %v3046 = vunpack.c.h.b16 %v2681
        %v3047 = vunpack.c.l.b16 %v2682
        %v3048 = vunpack.c.h.b16 %v2682
        %v3049 = vunpack.c.l.b16 %v2683
        %v3050 = vunpack.c.h.b16 %v2683
        %v3051 = vunpack.c.l.b16 %v2684
        %v3052 = vunpack.c.h.b16 %v2684
        %v3053 = vunpack.c.l.b16 %v2685
        %v3054 = vunpack.c.h.b16 %v2685
        %v3055 = vunpack.c.l.b16 %v2686
        %v3056 = vunpack.c.h.b16 %v2686
        %v3057 = vunpack.c.l.b16 %v2687
        %v3058 = vunpack.c.h.b16 %v2687
        %v3059 = vunpack.c.l.b16 %v2688
        %v3060 = vunpack.c.h.b16 %v2688
        %v3061 = vunpack.c.l.b16 %v2689
        %v3062 = vunpack.c.h.b16 %v2689
        %v3063 = vunpack.c.l.b16 %v2690
        %v3064 = vunpack.c.h.b16 %v2690
        %v3065 = vunpack.c.l.b16 %v2691
        %v3066 = vunpack.c.h.b16 %v2691
        %v3067 = vunpack.c.l.b16 %v2692
        %v3068 = vunpack.c.h.b16 %v2692
        %v3069 = vunpack.c.l.b16 %v2693
        %v3070 = vunpack.c.h.b16 %v2693
        %v3071 = vunpack.c.l.b16 %v2694
        %v3072 = vunpack.c.h.b16 %v2694
        %v3073 = vunpack.c.l.b16 %v2695
        %v3074 = vunpack.c.h.b16 %v2695
        %v3075 = vunpack.c.l.b16 %v2696
        %v3076 = vunpack.c.h.b16 %v2696
        %v3077 = vunpack.c.l.b16 %v2697
        %v3078 = vunpack.c.h.b16 %v2697
        %v3079 = vunpack.c.l.b16 %v2698
        %v3080 = vunpack.c.h.b16 %v2698
        %v3081 = vunpack.c.l.b16 %v2699
        %v3082 = vunpack.c.h.b16 %v2699
        %v3083 = vunpack.c.l.b16 %v2700
        %v3084 = vunpack.c.h.b16 %v2700
        %v3085 = vpack.c.b16 %v2833, %v2829
        %v3086 = vpack.c.b16 %v2834, %v2830
        %v3087 = vpack.c.b16 %v2835, %v2831
        %v3088 = vpack.c.b16 %v2836, %v2832
        %v3089 = vpack.c.b16 %v2841, %v2837
        %v3090 = vpack.c.b16 %v2842, %v2838
        %v3091 = vpack.c.b16 %v2843, %v2839
        %v3092 = vpack.c.b16 %v2844, %v2840
        %v3093 = vpack.c.b16 %v2849, %v2845
        %v3094 = vpack.c.b16 %v2850, %v2846
        %v3095 = vpack.c.b16 %v2851, %v2847
        %v3096 = vpack.c.b16 %v2852, %v2848
        %v3097 = vpack.c.b16 %v2857, %v2853
        %v3098 = vpack.c.b16 %v2858, %v2854
        %v3099 = vpack.c.b16 %v2859, %v2855
        %v3100 = vpack.c.b16 %v2860, %v2856
        %v3101 = vpack.c.b16 %v2865, %v2861
        %v3102 = vpack.c.b16 %v2866, %v2862
        %v3103 = vpack.c.b16 %v2867, %v2863
        %v3104 = vpack.c.b16 %v2868, %v2864
        %v3105 = vpack.c.b16 %v2873, %v2869
        %v3106 = vpack.c.b16 %v2874, %v2870
        %v3107 = vpack.c.b16 %v2875, %v2871
        %v3108 = vpack.c.b16 %v2876, %v2872
        %v3109 = vpack.c.b16 %v2881, %v2877
        %v3110 = vpack.c.b16 %v2882, %v2878
        %v3111 = vpack.c.b16 %v2883, %v2879
        %v3112 = vpack.c.b16 %v2884, %v2880
        %v3113 = vpack.c.b16 %v2889, %v2885
        %v3114 = vpack.c.b16 %v2890, %v2886
        %v3115 = vpack.c.b16 %v2891, %v2887
        %v3116 = vpack.c.b16 %v2892, %v2888
        %v3117 = vpack.c.b16 %v2897, %v2893
        %v3118 = vpack.c.b16 %v2898, %v2894
        %v3119 = vpack.c.b16 %v2899, %v2895
        %v3120 = vpack.c.b16 %v2900, %v2896
        %v3121 = vpack.c.b16 %v2905, %v2901
        %v3122 = vpack.c.b16 %v2906, %v2902
        %v3123 = vpack.c.b16 %v2907, %v2903
        %v3124 = vpack.c.b16 %v2908, %v2904
        %v3125 = vpack.c.b16 %v2913, %v2909
        %v3126 = vpack.c.b16 %v2914, %v2910
        %v3127 = vpack.c.b16 %v2915, %v2911
        %v3128 = vpack.c.b16 %v2916, %v2912
        %v3129 = vpack.c.b16 %v2921, %v2917
        %v3130 = vpack.c.b16 %v2922, %v2918
        %v3131 = vpack.c.b16 %v2923, %v2919
        %v3132 = vpack.c.b16 %v2924, %v2920
        %v3133 = vpack.c.b16 %v2929, %v2925
        %v3134 = vpack.c.b16 %v2930, %v2926
        %v3135 = vpack.c.b16 %v2931, %v2927
        %v3136 = vpack.c.b16 %v2932, %v2928
        %v3137 = vpack.c.b16 %v2937, %v2933
        %v3138 = vpack.c.b16 %v2938, %v2934
        %v3139 = vpack.c.b16 %v2939, %v2935
        %v3140 = vpack.c.b16 %v2940, %v2936
        %v3141 = vpack.c.b16 %v2945, %v2941
        %v3142 = vpack.c.b16 %v2946, %v2942
        %v3143 = vpack.c.b16 %v2947, %v2943
        %v3144 = vpack.c.b16 %v2948, %v2944
        %v3145 = vpack.c.b16 %v2953, %v2949
        %v3146 = vpack.c.b16 %v2954, %v2950
        %v3147 = vpack.c.b16 %v2955, %v2951
        %v3148 = vpack.c.b16 %v2956, %v2952
        %v3149 = vpack.c.b16 %v2961, %v2957
        %v3150 = vpack.c.b16 %v2962, %v2958
        %v3151 = vpack.c.b16 %v2963, %v2959
        %v3152 = vpack.c.b16 %v2964, %v2960
        %v3153 = vpack.c.b16 %v2969, %v2965
        %v3154 = vpack.c.b16 %v2970, %v2966
        %v3155 = vpack.c.b16 %v2971, %v2967
        %v3156 = vpack.c.b16 %v2972, %v2968
        %v3157 = vpack.c.b16 %v2977, %v2973
        %v3158 = vpack.c.b16 %v2978, %v2974
        %v3159 = vpack.c.b16 %v2979, %v2975
        %v3160 = vpack.c.b16 %v2980, %v2976
        %v3161 = vpack.c.b16 %v2985, %v2981
        %v3162 = vpack.c.b16 %v2986, %v2982
        %v3163 = vpack.c.b16 %v2987, %v2983
        %v3164 = vpack.c.b16 %v2988, %v2984
        %v3165 = vpack.c.b16 %v2993, %v2989
        %v3166 = vpack.c.b16 %v2994, %v2990
        %v3167 = vpack.c.b16 %v2995, %v2991
        %v3168 = vpack.c.b16 %v2996, %v2992
        %v3169 = vpack.c.b16 %v3001, %v2997
        %v3170 = vpack.c.b16 %v3002, %v2998
        %v3171 = vpack.c.b16 %v3003, %v2999
        %v3172 = vpack.c.b16 %v3004, %v3000
        %v3173 = vpack.c.b16 %v3009, %v3005
        %v3174 = vpack.c.b16 %v3010, %v3006
        %v3175 = vpack.c.b16 %v3011, %v3007
        %v3176 = vpack.c.b16 %v3012, %v3008
        %v3177 = vpack.c.b16 %v3017, %v3013
        %v3178 = vpack.c.b16 %v3018, %v3014
        %v3179 = vpack.c.b16 %v3019, %v3015
        %v3180 = vpack.c.b16 %v3020, %v3016
        %v3181 = vpack.c.b16 %v3025, %v3021
        %v3182 = vpack.c.b16 %v3026, %v3022
        %v3183 = vpack.c.b16 %v3027, %v3023
        %v3184 = vpack.c.b16 %v3028, %v3024
        %v3185 = vpack.c.b16 %v3033, %v3029
        %v3186 = vpack.c.b16 %v3034, %v3030
        %v3187 = vpack.c.b16 %v3035, %v3031
        %v3188 = vpack.c.b16 %v3036, %v3032
        %v3189 = vpack.c.b16 %v3041, %v3037
        %v3190 = vpack.c.b16 %v3042, %v3038
        %v3191 = vpack.c.b16 %v3043, %v3039
        %v3192 = vpack.c.b16 %v3044, %v3040
        %v3193 = vpack.c.b16 %v3049, %v3045
        %v3194 = vpack.c.b16 %v3050, %v3046
        %v3195 = vpack.c.b16 %v3051, %v3047
        %v3196 = vpack.c.b16 %v3052, %v3048
        %v3197 = vpack.c.b16 %v3057, %v3053
        %v3198 = vpack.c.b16 %v3058, %v3054
        %v3199 = vpack.c.b16 %v3059, %v3055
        %v3200 = vpack.c.b16 %v3060, %v3056
        %v3201 = vpack.c.b16 %v3065, %v3061
        %v3202 = vpack.c.b16 %v3066, %v3062
        %v3203 = vpack.c.b16 %v3067, %v3063
        %v3204 = vpack.c.b16 %v3068, %v3064
        %v3205 = vpack.c.b16 %v3073, %v3069
        %v3206 = vpack.c.b16 %v3074, %v3070
        %v3207 = vpack.c.b16 %v3075, %v3071
        %v3208 = vpack.c.b16 %v3076, %v3072
        %v3209 = vpack.c.b16 %v3081, %v3077
        %v3210 = vpack.c.b16 %v3082, %v3078
        %v3211 = vpack.c.b16 %v3083, %v3079
        %v3212 = vpack.c.b16 %v3084, %v3080
        %3341 = vmatprep.subr.bf16.mxu0 %v3086
        %3342 = vmatpush1.bf16.msra.mxu0 %v3085
        %3343 = vmatprep.subr.bf16.mxu0 %v3090
        %3344 = vmatpush1.bf16.msra.mxu0 %v3089
        %3345 = vmatprep.subr.bf16.mxu0 %v3094
        %3346 = vmatpush1.bf16.msra.mxu0 %v3093
        %3347 = vmatprep.subr.bf16.mxu0 %v3098
        %3348 = vmatpush1.bf16.msra.mxu0 %v3097
        %3349 = vmatprep.subr.bf16.mxu0 %v3102
        %3350 = vmatpush1.bf16.msra.mxu0 %v3101
        %3351 = vmatprep.subr.bf16.mxu0 %v3106
        %3352 = vmatpush1.bf16.msra.mxu0 %v3105
        %3353 = vmatprep.subr.bf16.mxu0 %v3110
        %3354 = vmatpush1.bf16.msra.mxu0 %v3109
        %3355 = vmatprep.subr.bf16.mxu0 %v3114
        %3356 = vmatpush1.bf16.msra.mxu0 %v3113
        %3357 = vmatprep.subr.bf16.mxu0 %v3118
        %3358 = vmatpush1.bf16.msra.mxu0 %v3117
        %3359 = vmatprep.subr.bf16.mxu0 %v3122
        %3360 = vmatpush1.bf16.msra.mxu0 %v3121
        %3361 = vmatprep.subr.bf16.mxu0 %v3126
        %3362 = vmatpush1.bf16.msra.mxu0 %v3125
        %3363 = vmatprep.subr.bf16.mxu0 %v3130
        %3364 = vmatpush1.bf16.msra.mxu0 %v3129
        %3365 = vmatprep.subr.bf16.mxu0 %v3134
        %3366 = vmatpush1.bf16.msra.mxu0 %v3133
        %3367 = vmatprep.subr.bf16.mxu0 %v3138
        %3368 = vmatpush1.bf16.msra.mxu0 %v3137
        %3369 = vmatprep.subr.bf16.mxu0 %v3142
        %3370 = vmatpush1.bf16.msra.mxu0 %v3141
        %3371 = vmatprep.subr.bf16.mxu0 %v3146
        %3372 = vmatpush1.bf16.msra.mxu0 %v3145
        %3373 = vmatprep.mubr.bf16.mxu0 %v2569
        %3374 = vmatmul.mubr.bf16.gmra.mrb[0].mxu0 %v2568
        %v3375 = vpop.f32.mrb[0].mxu0
        %v3376 = vadd.f32 0.0, %v3375
        %v3377 = vpop.f32.mrb[0].mxu0
        %v3378 = vadd.f32 0.0, %v3377
        %v3379 = vpop.f32.mrb[0].mxu0
        %v3380 = vadd.f32 0.0, %v3379
        %v3381 = vpop.f32.mrb[0].mxu0
        %v3382 = vadd.f32 0.0, %v3381
        %3383 = vdwg.mxu0
        %3384 = vmatprep.subr.bf16.mxu0 %v3150
        %3385 = vmatpush1.bf16.msra.mxu0 %v3149
        %3386 = vmatprep.subr.bf16.mxu0 %v3154
        %3387 = vmatpush1.bf16.msra.mxu0 %v3153
        %3388 = vmatprep.subr.bf16.mxu0 %v3158
        %3389 = vmatpush1.bf16.msra.mxu0 %v3157
        %3390 = vmatprep.subr.bf16.mxu0 %v3162
        %3391 = vmatpush1.bf16.msra.mxu0 %v3161
        %3392 = vmatprep.subr.bf16.mxu0 %v3166
        %3393 = vmatpush1.bf16.msra.mxu0 %v3165
        %3394 = vmatprep.subr.bf16.mxu0 %v3170
        %3395 = vmatpush1.bf16.msra.mxu0 %v3169
        %3396 = vmatprep.subr.bf16.mxu0 %v3174
        %3397 = vmatpush1.bf16.msra.mxu0 %v3173
        %3398 = vmatprep.subr.bf16.mxu0 %v3178
        %3399 = vmatpush1.bf16.msra.mxu0 %v3177
        %3400 = vmatprep.subr.bf16.mxu0 %v3182
        %3401 = vmatpush1.bf16.msra.mxu0 %v3181
        %3402 = vmatprep.subr.bf16.mxu0 %v3186
        %3403 = vmatpush1.bf16.msra.mxu0 %v3185
        %3404 = vmatprep.subr.bf16.mxu0 %v3190
        %3405 = vmatpush1.bf16.msra.mxu0 %v3189
        %3406 = vmatprep.subr.bf16.mxu0 %v3194
        %3407 = vmatpush1.bf16.msra.mxu0 %v3193
        %3408 = vmatprep.subr.bf16.mxu0 %v3198
        %3409 = vmatpush1.bf16.msra.mxu0 %v3197
        %3410 = vmatprep.subr.bf16.mxu0 %v3202
        %3411 = vmatpush1.bf16.msra.mxu0 %v3201
        %3412 = vmatprep.subr.bf16.mxu0 %v3206
        %3413 = vmatpush1.bf16.msra.mxu0 %v3205
        %3414 = vmatprep.subr.bf16.mxu0 %v3210
        %3415 = vmatpush1.bf16.msra.mxu0 %v3209
        %3416 = vmatprep.mubr.bf16.mxu0 %v2571
        %3417 = vmatmul.mubr.bf16.gmra.mrb[0].mxu0 %v2570
        %v3418 = vpop.f32.mrb[0].mxu0
        %v3419 = vadd.f32 %v3376, %v3418
        %v3420 = vpop.f32.mrb[0].mxu0
        %v3421 = vadd.f32 %v3378, %v3420
        %v3422 = vpop.f32.mrb[0].mxu0
        %v3423 = vadd.f32 %v3380, %v3422
        %v3424 = vpop.f32.mrb[0].mxu0
        %v3425 = vadd.f32 %v3382, %v3424
        %3426 = vdwg.mxu0
        %3427 = vmatprep.subr.bf16.mxu0 %v3088
        %3428 = vmatpush1.bf16.msra.mxu0 %v3087
        %3429 = vmatprep.subr.bf16.mxu0 %v3092
        %3430 = vmatpush1.bf16.msra.mxu0 %v3091
        %3431 = vmatprep.subr.bf16.mxu0 %v3096
        %3432 = vmatpush1.bf16.msra.mxu0 %v3095
        %3433 = vmatprep.subr.bf16.mxu0 %v3100
        %3434 = vmatpush1.bf16.msra.mxu0 %v3099
        %3435 = vmatprep.subr.bf16.mxu0 %v3104
        %3436 = vmatpush1.bf16.msra.mxu0 %v3103
        %3437 = vmatprep.subr.bf16.mxu0 %v3108
        %3438 = vmatpush1.bf16.msra.mxu0 %v3107
        %3439 = vmatprep.subr.bf16.mxu0 %v3112
        %3440 = vmatpush1.bf16.msra.mxu0 %v3111
        %3441 = vmatprep.subr.bf16.mxu0 %v3116
        %3442 = vmatpush1.bf16.msra.mxu0 %v3115
        %3443 = vmatprep.subr.bf16.mxu0 %v3120
        %3444 = vmatpush1.bf16.msra.mxu0 %v3119
        %3445 = vmatprep.subr.bf16.mxu0 %v3124
        %3446 = vmatpush1.bf16.msra.mxu0 %v3123
        %3447 = vmatprep.subr.bf16.mxu0 %v3128
        %3448 = vmatpush1.bf16.msra.mxu0 %v3127
        %3449 = vmatprep.subr.bf16.mxu0 %v3132
        %3450 = vmatpush1.bf16.msra.mxu0 %v3131
        %3451 = vmatprep.subr.bf16.mxu0 %v3136
        %3452 = vmatpush1.bf16.msra.mxu0 %v3135
        %3453 = vmatprep.subr.bf16.mxu0 %v3140
        %3454 = vmatpush1.bf16.msra.mxu0 %v3139
        %3455 = vmatprep.subr.bf16.mxu0 %v3144
        %3456 = vmatpush1.bf16.msra.mxu0 %v3143
        %3457 = vmatprep.subr.bf16.mxu0 %v3148
        %3458 = vmatpush1.bf16.msra.mxu0 %v3147
        %3459 = vmatprep.mubr.bf16.mxu0 %v2569
        %3460 = vmatmul.mubr.bf16.gmra.mrb[0].mxu0 %v2568
        %v3461 = vpop.f32.mrb[0].mxu0
        %v3462 = vadd.f32 0.0, %v3461
        %v3463 = vpop.f32.mrb[0].mxu0
        %v3464 = vadd.f32 0.0, %v3463
        %v3465 = vpop.f32.mrb[0].mxu0
        %v3466 = vadd.f32 0.0, %v3465
        %v3467 = vpop.f32.mrb[0].mxu0
        %v3468 = vadd.f32 0.0, %v3467
        %3469 = vdwg.mxu0
        %3470 = vmatprep.subr.bf16.mxu0 %v3152
        %3471 = vmatpush1.bf16.msra.mxu0 %v3151
        %3472 = vmatprep.subr.bf16.mxu0 %v3156
        %3473 = vmatpush1.bf16.msra.mxu0 %v3155
        %3474 = vmatprep.subr.bf16.mxu0 %v3160
        %3475 = vmatpush1.bf16.msra.mxu0 %v3159
        %3476 = vmatprep.subr.bf16.mxu0 %v3164
        %3477 = vmatpush1.bf16.msra.mxu0 %v3163
        %3478 = vmatprep.subr.bf16.mxu0 %v3168
        %3479 = vmatpush1.bf16.msra.mxu0 %v3167
        %3480 = vmatprep.subr.bf16.mxu0 %v3172
        %3481 = vmatpush1.bf16.msra.mxu0 %v3171
        %3482 = vmatprep.subr.bf16.mxu0 %v3176
        %3483 = vmatpush1.bf16.msra.mxu0 %v3175
        %3484 = vmatprep.subr.bf16.mxu0 %v3180
        %3485 = vmatpush1.bf16.msra.mxu0 %v3179
        %3486 = vmatprep.subr.bf16.mxu0 %v3184
        %3487 = vmatpush1.bf16.msra.mxu0 %v3183
        %3488 = vmatprep.subr.bf16.mxu0 %v3188
        %3489 = vmatpush1.bf16.msra.mxu0 %v3187
        %3490 = vmatprep.subr.bf16.mxu0 %v3192
        %3491 = vmatpush1.bf16.msra.mxu0 %v3191
        %3492 = vmatprep.subr.bf16.mxu0 %v3196
        %3493 = vmatpush1.bf16.msra.mxu0 %v3195
        %3494 = vmatprep.subr.bf16.mxu0 %v3200
        %3495 = vmatpush1.bf16.msra.mxu0 %v3199
        %3496 = vmatprep.subr.bf16.mxu0 %v3204
        %3497 = vmatpush1.bf16.msra.mxu0 %v3203
        %3498 = vmatprep.subr.bf16.mxu0 %v3208
        %3499 = vmatpush1.bf16.msra.mxu0 %v3207
        %3500 = vmatprep.subr.bf16.mxu0 %v3212
        %3501 = vmatpush1.bf16.msra.mxu0 %v3211
        %3502 = vmatprep.mubr.bf16.mxu0 %v2571
        %3503 = vmatmul.mubr.bf16.gmra.mrb[0].mxu0 %v2570
        %v3504 = vpop.f32.mrb[0].mxu0
        %v3505 = vadd.f32 %v3462, %v3504
        %v3506 = vpop.f32.mrb[0].mxu0
        %v3507 = vadd.f32 %v3464, %v3506
        %v3508 = vpop.f32.mrb[0].mxu0
        %v3509 = vadd.f32 %v3466, %v3508
        %v3510 = vpop.f32.mrb[0].mxu0
        %v3511 = vadd.f32 %v3468, %v3510
        %3512 = vdwg.mxu0
        %v3513 = vpack.c.bf16 %v3423, %v3419
        %v3514 = vpack.c.bf16 %v3425, %v3421
        %v3515 = vpack.c.bf16 %v3509, %v3505
        %v3516 = vpack.c.bf16 %v3511, %v3507
        %s3517 = scalar_lea.vmem %s4, 8
        %v3518 = vld [vmem:[%s3517] sm:$0xf]
        %v3521 = vunpack.c.l.s4 1966171168
        %v3522 = vunpack.c.0.s8 %v3521
        %v3523 = vlaneseq
        %v3524 = vshrl.u32 %v3523, 7
        %v3525 = vsub.s32 %v3522, %v3524
        %v3526 = vrot.slane %v3518, %v3525
        %v3527 = vcombine.high %v3526, %v3526
        %v3529 = vunpack.c.l.s4 1966171168
        %v3530 = vunpack.c.0.s8 %v3529
        %v3531 = vlaneseq
        %v3532 = vshrl.u32 %v3531, 7
        %v3533 = vsub.s32 %v3530, %v3532
        %v3534 = vrot.slane %v3526, %v3533
        %v3536 = vunpack.c.l.s4 1966171168
        %v3537 = vunpack.c.0.s8 %v3536
        %v3538 = vlaneseq
        %v3539 = vshrl.u32 %v3538, 7
        %v3540 = vsub.s32 %v3537, %v3539
        %v3541 = vrot.slane %v3527, %v3540
        %v3542 = vcombine.high %v3534, %v3534
        %v3543 = vcombine.high %v3541, %v3541
        %v3545 = vpack.i.b16 %v3534, %v3534
        %v3547 = vlaneseq
        %v3548 = vshrl.u32 %v3547, 7
        %v3549 = vsub.s32 0, %v3548
        %v3550 = vrot.slane %v3545, %v3549
        %v3552 = vpack.i.b16 %v3541, %v3541
        %v3554 = vlaneseq
        %v3555 = vshrl.u32 %v3554, 7
        %v3556 = vsub.s32 0, %v3555
        %v3557 = vrot.slane %v3552, %v3556
        %v3559 = vpack.i.b16 %v3542, %v3542
        %v3561 = vlaneseq
        %v3562 = vshrl.u32 %v3561, 7
        %v3563 = vsub.s32 0, %v3562
        %v3564 = vrot.slane %v3559, %v3563
        %v3566 = vpack.i.b16 %v3543, %v3543
        %v3568 = vlaneseq
        %v3569 = vshrl.u32 %v3568, 7
        %v3570 = vsub.s32 0, %v3569
        %v3571 = vrot.slane %v3566, %v3570
        %v3572 = vadd.bf16 %v3513, %v3550
        %v3573 = vadd.bf16 %v3514, %v3557
        %v3574 = vadd.bf16 %v3515, %v3564
        %v3575 = vadd.bf16 %v3516, %v3571
        %v3576 = vmax.bf16 %v3572, 0
        %v3577 = vmax.bf16 %v3573, 0
        %v3578 = vmax.bf16 %v3574, 0
        %v3579 = vmax.bf16 %v3575, 0
        %s3580 = scalar_lea.vmem [#allocation7], 3072
        %v3581 = vld [vmem:[%s3580] sm:$0xff]
        %v3582 = vld [vmem:[%s3580 + $0x8] sm:$0xff]
        %v3583 = vld [vmem:[%s3580 + $0x10] sm:$0xff]
        %v3584 = vld [vmem:[%s3580 + $0x18] sm:$0xff]
        %v3585 = vld [vmem:[%s3580 + $0x20] sm:$0xff]
        %v3586 = vld [vmem:[%s3580 + $0x28] sm:$0xff]
        %v3587 = vld [vmem:[%s3580 + $0x30] sm:$0xff]
        %v3588 = vld [vmem:[%s3580 + $0x38] sm:$0xff]
        %v3589 = vld [vmem:[%s3580 + $0x40] sm:$0xff]
        %v3590 = vld [vmem:[%s3580 + $0x48] sm:$0xff]
        %v3591 = vld [vmem:[%s3580 + $0x50] sm:$0xff]
        %v3592 = vld [vmem:[%s3580 + $0x58] sm:$0xff]
        %v3593 = vld [vmem:[%s3580 + $0x60] sm:$0xff]
        %v3594 = vld [vmem:[%s3580 + $0x68] sm:$0xff]
        %v3595 = vld [vmem:[%s3580 + $0x70] sm:$0xff]
        %v3596 = vld [vmem:[%s3580 + $0x78] sm:$0xff]
        %v3597 = vld [vmem:[%s3580 + $0x80] sm:$0xff]
        %v3598 = vld [vmem:[%s3580 + $0x88] sm:$0xff]
        %v3599 = vld [vmem:[%s3580 + $0x90] sm:$0xff]
        %v3600 = vld [vmem:[%s3580 + $0x98] sm:$0xff]
        %v3601 = vld [vmem:[%s3580 + $0xa0] sm:$0xff]
        %v3602 = vld [vmem:[%s3580 + $0xa8] sm:$0xff]
        %v3603 = vld [vmem:[%s3580 + $0xb0] sm:$0xff]
        %v3604 = vld [vmem:[%s3580 + $0xb8] sm:$0xff]
        %v3605 = vld [vmem:[%s3580 + $0xc0] sm:$0xff]
        %v3606 = vld [vmem:[%s3580 + $0xc8] sm:$0xff]
        %v3607 = vld [vmem:[%s3580 + $0xd0] sm:$0xff]
        %v3608 = vld [vmem:[%s3580 + $0xd8] sm:$0xff]
        %v3609 = vld [vmem:[%s3580 + $0xe0] sm:$0xff]
        %v3610 = vld [vmem:[%s3580 + $0xe8] sm:$0xff]
        %v3611 = vld [vmem:[%s3580 + $0xf0] sm:$0xff]
        %v3612 = vld [vmem:[%s3580 + $0xf8] sm:$0xff]
        %v3613 = vld [vmem:[%s3580 + $0x100] sm:$0xff]
        %v3614 = vld [vmem:[%s3580 + $0x108] sm:$0xff]
        %v3615 = vld [vmem:[%s3580 + $0x110] sm:$0xff]
        %v3616 = vld [vmem:[%s3580 + $0x118] sm:$0xff]
        %v3617 = vld [vmem:[%s3580 + $0x120] sm:$0xff]
        %v3618 = vld [vmem:[%s3580 + $0x128] sm:$0xff]
        %v3619 = vld [vmem:[%s3580 + $0x130] sm:$0xff]
        %v3620 = vld [vmem:[%s3580 + $0x138] sm:$0xff]
        %v3621 = vld [vmem:[%s3580 + $0x140] sm:$0xff]
        %v3622 = vld [vmem:[%s3580 + $0x148] sm:$0xff]
        %v3623 = vld [vmem:[%s3580 + $0x150] sm:$0xff]
        %v3624 = vld [vmem:[%s3580 + $0x158] sm:$0xff]
        %v3625 = vld [vmem:[%s3580 + $0x160] sm:$0xff]
        %v3626 = vld [vmem:[%s3580 + $0x168] sm:$0xff]
        %v3627 = vld [vmem:[%s3580 + $0x170] sm:$0xff]
        %v3628 = vld [vmem:[%s3580 + $0x178] sm:$0xff]
        %v3629 = vld [vmem:[%s3580 + $0x180] sm:$0xff]
        %v3630 = vld [vmem:[%s3580 + $0x188] sm:$0xff]
        %v3631 = vld [vmem:[%s3580 + $0x190] sm:$0xff]
        %v3632 = vld [vmem:[%s3580 + $0x198] sm:$0xff]
        %v3633 = vld [vmem:[%s3580 + $0x1a0] sm:$0xff]
        %v3634 = vld [vmem:[%s3580 + $0x1a8] sm:$0xff]
        %v3635 = vld [vmem:[%s3580 + $0x1b0] sm:$0xff]
        %v3636 = vld [vmem:[%s3580 + $0x1b8] sm:$0xff]
        %v3637 = vld [vmem:[%s3580 + $0x1c0] sm:$0xff]
        %v3638 = vld [vmem:[%s3580 + $0x1c8] sm:$0xff]
        %v3639 = vld [vmem:[%s3580 + $0x1d0] sm:$0xff]
        %v3640 = vld [vmem:[%s3580 + $0x1d8] sm:$0xff]
        %v3641 = vld [vmem:[%s3580 + $0x1e0] sm:$0xff]
        %v3642 = vld [vmem:[%s3580 + $0x1e8] sm:$0xff]
        %v3643 = vld [vmem:[%s3580 + $0x1f0] sm:$0xff]
        %v3644 = vld [vmem:[%s3580 + $0x1f8] sm:$0xff]
        %v3645 = vld [vmem:[%s3580 + $0x200] sm:$0xff]
        %v3646 = vld [vmem:[%s3580 + $0x208] sm:$0xff]
        %v3647 = vld [vmem:[%s3580 + $0x210] sm:$0xff]
        %v3648 = vld [vmem:[%s3580 + $0x218] sm:$0xff]
        %v3649 = vld [vmem:[%s3580 + $0x220] sm:$0xff]
        %v3650 = vld [vmem:[%s3580 + $0x228] sm:$0xff]
        %v3651 = vld [vmem:[%s3580 + $0x230] sm:$0xff]
        %v3652 = vld [vmem:[%s3580 + $0x238] sm:$0xff]
        %v3653 = vld [vmem:[%s3580 + $0x240] sm:$0xff]
        %v3654 = vld [vmem:[%s3580 + $0x248] sm:$0xff]
        %v3655 = vld [vmem:[%s3580 + $0x250] sm:$0xff]
        %v3656 = vld [vmem:[%s3580 + $0x258] sm:$0xff]
        %v3657 = vld [vmem:[%s3580 + $0x260] sm:$0xff]
        %v3658 = vld [vmem:[%s3580 + $0x268] sm:$0xff]
        %v3659 = vld [vmem:[%s3580 + $0x270] sm:$0xff]
        %v3660 = vld [vmem:[%s3580 + $0x278] sm:$0xff]
        %v3661 = vld [vmem:[%s3580 + $0x280] sm:$0xff]
        %v3662 = vld [vmem:[%s3580 + $0x288] sm:$0xff]
        %v3663 = vld [vmem:[%s3580 + $0x290] sm:$0xff]
        %v3664 = vld [vmem:[%s3580 + $0x298] sm:$0xff]
        %v3665 = vld [vmem:[%s3580 + $0x2a0] sm:$0xff]
        %v3666 = vld [vmem:[%s3580 + $0x2a8] sm:$0xff]
        %v3667 = vld [vmem:[%s3580 + $0x2b0] sm:$0xff]
        %v3668 = vld [vmem:[%s3580 + $0x2b8] sm:$0xff]
        %v3669 = vld [vmem:[%s3580 + $0x2c0] sm:$0xff]
        %v3670 = vld [vmem:[%s3580 + $0x2c8] sm:$0xff]
        %v3671 = vld [vmem:[%s3580 + $0x2d0] sm:$0xff]
        %v3672 = vld [vmem:[%s3580 + $0x2d8] sm:$0xff]
        %v3673 = vld [vmem:[%s3580 + $0x2e0] sm:$0xff]
        %v3674 = vld [vmem:[%s3580 + $0x2e8] sm:$0xff]
        %v3675 = vld [vmem:[%s3580 + $0x2f0] sm:$0xff]
        %v3676 = vld [vmem:[%s3580 + $0x2f8] sm:$0xff]
        %v3677 = vld [vmem:[%s3580 + $0x300] sm:$0xff]
        %v3678 = vld [vmem:[%s3580 + $0x308] sm:$0xff]
        %v3679 = vld [vmem:[%s3580 + $0x310] sm:$0xff]
        %v3680 = vld [vmem:[%s3580 + $0x318] sm:$0xff]
        %v3681 = vld [vmem:[%s3580 + $0x320] sm:$0xff]
        %v3682 = vld [vmem:[%s3580 + $0x328] sm:$0xff]
        %v3683 = vld [vmem:[%s3580 + $0x330] sm:$0xff]
        %v3684 = vld [vmem:[%s3580 + $0x338] sm:$0xff]
        %v3685 = vld [vmem:[%s3580 + $0x340] sm:$0xff]
        %v3686 = vld [vmem:[%s3580 + $0x348] sm:$0xff]
        %v3687 = vld [vmem:[%s3580 + $0x350] sm:$0xff]
        %v3688 = vld [vmem:[%s3580 + $0x358] sm:$0xff]
        %v3689 = vld [vmem:[%s3580 + $0x360] sm:$0xff]
        %v3690 = vld [vmem:[%s3580 + $0x368] sm:$0xff]
        %v3691 = vld [vmem:[%s3580 + $0x370] sm:$0xff]
        %v3692 = vld [vmem:[%s3580 + $0x378] sm:$0xff]
        %v3693 = vld [vmem:[%s3580 + $0x380] sm:$0xff]
        %v3694 = vld [vmem:[%s3580 + $0x388] sm:$0xff]
        %v3695 = vld [vmem:[%s3580 + $0x390] sm:$0xff]
        %v3696 = vld [vmem:[%s3580 + $0x398] sm:$0xff]
        %v3697 = vld [vmem:[%s3580 + $0x3a0] sm:$0xff]
        %v3698 = vld [vmem:[%s3580 + $0x3a8] sm:$0xff]
        %v3699 = vld [vmem:[%s3580 + $0x3b0] sm:$0xff]
        %v3700 = vld [vmem:[%s3580 + $0x3b8] sm:$0xff]
        %v3701 = vld [vmem:[%s3580 + $0x3c0] sm:$0xff]
        %v3702 = vld [vmem:[%s3580 + $0x3c8] sm:$0xff]
        %v3703 = vld [vmem:[%s3580 + $0x3d0] sm:$0xff]
        %v3704 = vld [vmem:[%s3580 + $0x3d8] sm:$0xff]
        %v3705 = vld [vmem:[%s3580 + $0x3e0] sm:$0xff]
        %v3706 = vld [vmem:[%s3580 + $0x3e8] sm:$0xff]
        %v3707 = vld [vmem:[%s3580 + $0x3f0] sm:$0xff]
        %v3708 = vld [vmem:[%s3580 + $0x3f8] sm:$0xff]
        %v3837 = vunpack.c.l.b16 %v3581
        %v3838 = vunpack.c.h.b16 %v3581
        %v3839 = vunpack.c.l.b16 %v3582
        %v3840 = vunpack.c.h.b16 %v3582
        %v3841 = vunpack.c.l.b16 %v3583
        %v3842 = vunpack.c.h.b16 %v3583
        %v3843 = vunpack.c.l.b16 %v3584
        %v3844 = vunpack.c.h.b16 %v3584
        %v3845 = vunpack.c.l.b16 %v3585
        %v3846 = vunpack.c.h.b16 %v3585
        %v3847 = vunpack.c.l.b16 %v3586
        %v3848 = vunpack.c.h.b16 %v3586
        %v3849 = vunpack.c.l.b16 %v3587
        %v3850 = vunpack.c.h.b16 %v3587
        %v3851 = vunpack.c.l.b16 %v3588
        %v3852 = vunpack.c.h.b16 %v3588
        %v3853 = vunpack.c.l.b16 %v3589
        %v3854 = vunpack.c.h.b16 %v3589
        %v3855 = vunpack.c.l.b16 %v3590
        %v3856 = vunpack.c.h.b16 %v3590
        %v3857 = vunpack.c.l.b16 %v3591
        %v3858 = vunpack.c.h.b16 %v3591
        %v3859 = vunpack.c.l.b16 %v3592
        %v3860 = vunpack.c.h.b16 %v3592
        %v3861 = vunpack.c.l.b16 %v3593
        %v3862 = vunpack.c.h.b16 %v3593
        %v3863 = vunpack.c.l.b16 %v3594
        %v3864 = vunpack.c.h.b16 %v3594
        %v3865 = vunpack.c.l.b16 %v3595
        %v3866 = vunpack.c.h.b16 %v3595
        %v3867 = vunpack.c.l.b16 %v3596
        %v3868 = vunpack.c.h.b16 %v3596
        %v3869 = vunpack.c.l.b16 %v3597
        %v3870 = vunpack.c.h.b16 %v3597
        %v3871 = vunpack.c.l.b16 %v3598
        %v3872 = vunpack.c.h.b16 %v3598
        %v3873 = vunpack.c.l.b16 %v3599
        %v3874 = vunpack.c.h.b16 %v3599
        %v3875 = vunpack.c.l.b16 %v3600
        %v3876 = vunpack.c.h.b16 %v3600
        %v3877 = vunpack.c.l.b16 %v3601
        %v3878 = vunpack.c.h.b16 %v3601
        %v3879 = vunpack.c.l.b16 %v3602
        %v3880 = vunpack.c.h.b16 %v3602
        %v3881 = vunpack.c.l.b16 %v3603
        %v3882 = vunpack.c.h.b16 %v3603
        %v3883 = vunpack.c.l.b16 %v3604
        %v3884 = vunpack.c.h.b16 %v3604
        %v3885 = vunpack.c.l.b16 %v3605
        %v3886 = vunpack.c.h.b16 %v3605
        %v3887 = vunpack.c.l.b16 %v3606
        %v3888 = vunpack.c.h.b16 %v3606
        %v3889 = vunpack.c.l.b16 %v3607
        %v3890 = vunpack.c.h.b16 %v3607
        %v3891 = vunpack.c.l.b16 %v3608
        %v3892 = vunpack.c.h.b16 %v3608
        %v3893 = vunpack.c.l.b16 %v3609
        %v3894 = vunpack.c.h.b16 %v3609
        %v3895 = vunpack.c.l.b16 %v3610
        %v3896 = vunpack.c.h.b16 %v3610
        %v3897 = vunpack.c.l.b16 %v3611
        %v3898 = vunpack.c.h.b16 %v3611
        %v3899 = vunpack.c.l.b16 %v3612
        %v3900 = vunpack.c.h.b16 %v3612
        %v3901 = vunpack.c.l.b16 %v3613
        %v3902 = vunpack.c.h.b16 %v3613
        %v3903 = vunpack.c.l.b16 %v3614
        %v3904 = vunpack.c.h.b16 %v3614
        %v3905 = vunpack.c.l.b16 %v3615
        %v3906 = vunpack.c.h.b16 %v3615
        %v3907 = vunpack.c.l.b16 %v3616
        %v3908 = vunpack.c.h.b16 %v3616
        %v3909 = vunpack.c.l.b16 %v3617
        %v3910 = vunpack.c.h.b16 %v3617
        %v3911 = vunpack.c.l.b16 %v3618
        %v3912 = vunpack.c.h.b16 %v3618
        %v3913 = vunpack.c.l.b16 %v3619
        %v3914 = vunpack.c.h.b16 %v3619
        %v3915 = vunpack.c.l.b16 %v3620
        %v3916 = vunpack.c.h.b16 %v3620
        %v3917 = vunpack.c.l.b16 %v3621
        %v3918 = vunpack.c.h.b16 %v3621
        %v3919 = vunpack.c.l.b16 %v3622
        %v3920 = vunpack.c.h.b16 %v3622
        %v3921 = vunpack.c.l.b16 %v3623
        %v3922 = vunpack.c.h.b16 %v3623
        %v3923 = vunpack.c.l.b16 %v3624
        %v3924 = vunpack.c.h.b16 %v3624
        %v3925 = vunpack.c.l.b16 %v3625
        %v3926 = vunpack.c.h.b16 %v3625
        %v3927 = vunpack.c.l.b16 %v3626
        %v3928 = vunpack.c.h.b16 %v3626
        %v3929 = vunpack.c.l.b16 %v3627
        %v3930 = vunpack.c.h.b16 %v3627
        %v3931 = vunpack.c.l.b16 %v3628
        %v3932 = vunpack.c.h.b16 %v3628
        %v3933 = vunpack.c.l.b16 %v3629
        %v3934 = vunpack.c.h.b16 %v3629
        %v3935 = vunpack.c.l.b16 %v3630
        %v3936 = vunpack.c.h.b16 %v3630
        %v3937 = vunpack.c.l.b16 %v3631
        %v3938 = vunpack.c.h.b16 %v3631
        %v3939 = vunpack.c.l.b16 %v3632
        %v3940 = vunpack.c.h.b16 %v3632
        %v3941 = vunpack.c.l.b16 %v3633
        %v3942 = vunpack.c.h.b16 %v3633
        %v3943 = vunpack.c.l.b16 %v3634
        %v3944 = vunpack.c.h.b16 %v3634
        %v3945 = vunpack.c.l.b16 %v3635
        %v3946 = vunpack.c.h.b16 %v3635
        %v3947 = vunpack.c.l.b16 %v3636
        %v3948 = vunpack.c.h.b16 %v3636
        %v3949 = vunpack.c.l.b16 %v3637
        %v3950 = vunpack.c.h.b16 %v3637
        %v3951 = vunpack.c.l.b16 %v3638
        %v3952 = vunpack.c.h.b16 %v3638
        %v3953 = vunpack.c.l.b16 %v3639
        %v3954 = vunpack.c.h.b16 %v3639
        %v3955 = vunpack.c.l.b16 %v3640
        %v3956 = vunpack.c.h.b16 %v3640
        %v3957 = vunpack.c.l.b16 %v3641
        %v3958 = vunpack.c.h.b16 %v3641
        %v3959 = vunpack.c.l.b16 %v3642
        %v3960 = vunpack.c.h.b16 %v3642
        %v3961 = vunpack.c.l.b16 %v3643
        %v3962 = vunpack.c.h.b16 %v3643
        %v3963 = vunpack.c.l.b16 %v3644
        %v3964 = vunpack.c.h.b16 %v3644
        %v3965 = vunpack.c.l.b16 %v3645
        %v3966 = vunpack.c.h.b16 %v3645
        %v3967 = vunpack.c.l.b16 %v3646
        %v3968 = vunpack.c.h.b16 %v3646
        %v3969 = vunpack.c.l.b16 %v3647
        %v3970 = vunpack.c.h.b16 %v3647
        %v3971 = vunpack.c.l.b16 %v3648
        %v3972 = vunpack.c.h.b16 %v3648
        %v3973 = vunpack.c.l.b16 %v3649
        %v3974 = vunpack.c.h.b16 %v3649
        %v3975 = vunpack.c.l.b16 %v3650
        %v3976 = vunpack.c.h.b16 %v3650
        %v3977 = vunpack.c.l.b16 %v3651
        %v3978 = vunpack.c.h.b16 %v3651
        %v3979 = vunpack.c.l.b16 %v3652
        %v3980 = vunpack.c.h.b16 %v3652
        %v3981 = vunpack.c.l.b16 %v3653
        %v3982 = vunpack.c.h.b16 %v3653
        %v3983 = vunpack.c.l.b16 %v3654
        %v3984 = vunpack.c.h.b16 %v3654
        %v3985 = vunpack.c.l.b16 %v3655
        %v3986 = vunpack.c.h.b16 %v3655
        %v3987 = vunpack.c.l.b16 %v3656
        %v3988 = vunpack.c.h.b16 %v3656
        %v3989 = vunpack.c.l.b16 %v3657
        %v3990 = vunpack.c.h.b16 %v3657
        %v3991 = vunpack.c.l.b16 %v3658
        %v3992 = vunpack.c.h.b16 %v3658
        %v3993 = vunpack.c.l.b16 %v3659
        %v3994 = vunpack.c.h.b16 %v3659
        %v3995 = vunpack.c.l.b16 %v3660
        %v3996 = vunpack.c.h.b16 %v3660
        %v3997 = vunpack.c.l.b16 %v3661
        %v3998 = vunpack.c.h.b16 %v3661
        %v3999 = vunpack.c.l.b16 %v3662
        %v4000 = vunpack.c.h.b16 %v3662
        %v4001 = vunpack.c.l.b16 %v3663
        %v4002 = vunpack.c.h.b16 %v3663
        %v4003 = vunpack.c.l.b16 %v3664
        %v4004 = vunpack.c.h.b16 %v3664
        %v4005 = vunpack.c.l.b16 %v3665
        %v4006 = vunpack.c.h.b16 %v3665
        %v4007 = vunpack.c.l.b16 %v3666
        %v4008 = vunpack.c.h.b16 %v3666
        %v4009 = vunpack.c.l.b16 %v3667
        %v4010 = vunpack.c.h.b16 %v3667
        %v4011 = vunpack.c.l.b16 %v3668
        %v4012 = vunpack.c.h.b16 %v3668
        %v4013 = vunpack.c.l.b16 %v3669
        %v4014 = vunpack.c.h.b16 %v3669
        %v4015 = vunpack.c.l.b16 %v3670
        %v4016 = vunpack.c.h.b16 %v3670
        %v4017 = vunpack.c.l.b16 %v3671
        %v4018 = vunpack.c.h.b16 %v3671
        %v4019 = vunpack.c.l.b16 %v3672
        %v4020 = vunpack.c.h.b16 %v3672
        %v4021 = vunpack.c.l.b16 %v3673
        %v4022 = vunpack.c.h.b16 %v3673
        %v4023 = vunpack.c.l.b16 %v3674
        %v4024 = vunpack.c.h.b16 %v3674
        %v4025 = vunpack.c.l.b16 %v3675
        %v4026 = vunpack.c.h.b16 %v3675
        %v4027 = vunpack.c.l.b16 %v3676
        %v4028 = vunpack.c.h.b16 %v3676
        %v4029 = vunpack.c.l.b16 %v3677
        %v4030 = vunpack.c.h.b16 %v3677
        %v4031 = vunpack.c.l.b16 %v3678
        %v4032 = vunpack.c.h.b16 %v3678
        %v4033 = vunpack.c.l.b16 %v3679
        %v4034 = vunpack.c.h.b16 %v3679
        %v4035 = vunpack.c.l.b16 %v3680
        %v4036 = vunpack.c.h.b16 %v3680
        %v4037 = vunpack.c.l.b16 %v3681
        %v4038 = vunpack.c.h.b16 %v3681
        %v4039 = vunpack.c.l.b16 %v3682
        %v4040 = vunpack.c.h.b16 %v3682
        %v4041 = vunpack.c.l.b16 %v3683
        %v4042 = vunpack.c.h.b16 %v3683
        %v4043 = vunpack.c.l.b16 %v3684
        %v4044 = vunpack.c.h.b16 %v3684
        %v4045 = vunpack.c.l.b16 %v3685
        %v4046 = vunpack.c.h.b16 %v3685
        %v4047 = vunpack.c.l.b16 %v3686
        %v4048 = vunpack.c.h.b16 %v3686
        %v4049 = vunpack.c.l.b16 %v3687
        %v4050 = vunpack.c.h.b16 %v3687
        %v4051 = vunpack.c.l.b16 %v3688
        %v4052 = vunpack.c.h.b16 %v3688
        %v4053 = vunpack.c.l.b16 %v3689
        %v4054 = vunpack.c.h.b16 %v3689
        %v4055 = vunpack.c.l.b16 %v3690
        %v4056 = vunpack.c.h.b16 %v3690
        %v4057 = vunpack.c.l.b16 %v3691
        %v4058 = vunpack.c.h.b16 %v3691
        %v4059 = vunpack.c.l.b16 %v3692
        %v4060 = vunpack.c.h.b16 %v3692
        %v4061 = vunpack.c.l.b16 %v3693
        %v4062 = vunpack.c.h.b16 %v3693
        %v4063 = vunpack.c.l.b16 %v3694
        %v4064 = vunpack.c.h.b16 %v3694
        %v4065 = vunpack.c.l.b16 %v3695
        %v4066 = vunpack.c.h.b16 %v3695
        %v4067 = vunpack.c.l.b16 %v3696
        %v4068 = vunpack.c.h.b16 %v3696
        %v4069 = vunpack.c.l.b16 %v3697
        %v4070 = vunpack.c.h.b16 %v3697
        %v4071 = vunpack.c.l.b16 %v3698
        %v4072 = vunpack.c.h.b16 %v3698
        %v4073 = vunpack.c.l.b16 %v3699
        %v4074 = vunpack.c.h.b16 %v3699
        %v4075 = vunpack.c.l.b16 %v3700
        %v4076 = vunpack.c.h.b16 %v3700
        %v4077 = vunpack.c.l.b16 %v3701
        %v4078 = vunpack.c.h.b16 %v3701
        %v4079 = vunpack.c.l.b16 %v3702
        %v4080 = vunpack.c.h.b16 %v3702
        %v4081 = vunpack.c.l.b16 %v3703
        %v4082 = vunpack.c.h.b16 %v3703
        %v4083 = vunpack.c.l.b16 %v3704
        %v4084 = vunpack.c.h.b16 %v3704
        %v4085 = vunpack.c.l.b16 %v3705
        %v4086 = vunpack.c.h.b16 %v3705
        %v4087 = vunpack.c.l.b16 %v3706
        %v4088 = vunpack.c.h.b16 %v3706
        %v4089 = vunpack.c.l.b16 %v3707
        %v4090 = vunpack.c.h.b16 %v3707
        %v4091 = vunpack.c.l.b16 %v3708
        %v4092 = vunpack.c.h.b16 %v3708
        %v4093 = vpack.c.b16 %v3841, %v3837
        %v4094 = vpack.c.b16 %v3842, %v3838
        %v4095 = vpack.c.b16 %v3843, %v3839
        %v4096 = vpack.c.b16 %v3844, %v3840
        %v4097 = vpack.c.b16 %v3849, %v3845
        %v4098 = vpack.c.b16 %v3850, %v3846
        %v4099 = vpack.c.b16 %v3851, %v3847
        %v4100 = vpack.c.b16 %v3852, %v3848
        %v4101 = vpack.c.b16 %v3857, %v3853
        %v4102 = vpack.c.b16 %v3858, %v3854
        %v4103 = vpack.c.b16 %v3859, %v3855
        %v4104 = vpack.c.b16 %v3860, %v3856
        %v4105 = vpack.c.b16 %v3865, %v3861
        %v4106 = vpack.c.b16 %v3866, %v3862
        %v4107 = vpack.c.b16 %v3867, %v3863
        %v4108 = vpack.c.b16 %v3868, %v3864
        %v4109 = vpack.c.b16 %v3873, %v3869
        %v4110 = vpack.c.b16 %v3874, %v3870
        %v4111 = vpack.c.b16 %v3875, %v3871
        %v4112 = vpack.c.b16 %v3876, %v3872
        %v4113 = vpack.c.b16 %v3881, %v3877
        %v4114 = vpack.c.b16 %v3882, %v3878
        %v4115 = vpack.c.b16 %v3883, %v3879
        %v4116 = vpack.c.b16 %v3884, %v3880
        %v4117 = vpack.c.b16 %v3889, %v3885
        %v4118 = vpack.c.b16 %v3890, %v3886
        %v4119 = vpack.c.b16 %v3891, %v3887
        %v4120 = vpack.c.b16 %v3892, %v3888
        %v4121 = vpack.c.b16 %v3897, %v3893
        %v4122 = vpack.c.b16 %v3898, %v3894
        %v4123 = vpack.c.b16 %v3899, %v3895
        %v4124 = vpack.c.b16 %v3900, %v3896
        %v4125 = vpack.c.b16 %v3905, %v3901
        %v4126 = vpack.c.b16 %v3906, %v3902
        %v4127 = vpack.c.b16 %v3907, %v3903
        %v4128 = vpack.c.b16 %v3908, %v3904
        %v4129 = vpack.c.b16 %v3913, %v3909
        %v4130 = vpack.c.b16 %v3914, %v3910
        %v4131 = vpack.c.b16 %v3915, %v3911
        %v4132 = vpack.c.b16 %v3916, %v3912
        %v4133 = vpack.c.b16 %v3921, %v3917
        %v4134 = vpack.c.b16 %v3922, %v3918
        %v4135 = vpack.c.b16 %v3923, %v3919
        %v4136 = vpack.c.b16 %v3924, %v3920
        %v4137 = vpack.c.b16 %v3929, %v3925
        %v4138 = vpack.c.b16 %v3930, %v3926
        %v4139 = vpack.c.b16 %v3931, %v3927
        %v4140 = vpack.c.b16 %v3932, %v3928
        %v4141 = vpack.c.b16 %v3937, %v3933
        %v4142 = vpack.c.b16 %v3938, %v3934
        %v4143 = vpack.c.b16 %v3939, %v3935
        %v4144 = vpack.c.b16 %v3940, %v3936
        %v4145 = vpack.c.b16 %v3945, %v3941
        %v4146 = vpack.c.b16 %v3946, %v3942
        %v4147 = vpack.c.b16 %v3947, %v3943
        %v4148 = vpack.c.b16 %v3948, %v3944
        %v4149 = vpack.c.b16 %v3953, %v3949
        %v4150 = vpack.c.b16 %v3954, %v3950
        %v4151 = vpack.c.b16 %v3955, %v3951
        %v4152 = vpack.c.b16 %v3956, %v3952
        %v4153 = vpack.c.b16 %v3961, %v3957
        %v4154 = vpack.c.b16 %v3962, %v3958
        %v4155 = vpack.c.b16 %v3963, %v3959
        %v4156 = vpack.c.b16 %v3964, %v3960
        %v4157 = vpack.c.b16 %v3969, %v3965
        %v4158 = vpack.c.b16 %v3970, %v3966
        %v4159 = vpack.c.b16 %v3971, %v3967
        %v4160 = vpack.c.b16 %v3972, %v3968
        %v4161 = vpack.c.b16 %v3977, %v3973
        %v4162 = vpack.c.b16 %v3978, %v3974
        %v4163 = vpack.c.b16 %v3979, %v3975
        %v4164 = vpack.c.b16 %v3980, %v3976
        %v4165 = vpack.c.b16 %v3985, %v3981
        %v4166 = vpack.c.b16 %v3986, %v3982
        %v4167 = vpack.c.b16 %v3987, %v3983
        %v4168 = vpack.c.b16 %v3988, %v3984
        %v4169 = vpack.c.b16 %v3993, %v3989
        %v4170 = vpack.c.b16 %v3994, %v3990
        %v4171 = vpack.c.b16 %v3995, %v3991
        %v4172 = vpack.c.b16 %v3996, %v3992
        %v4173 = vpack.c.b16 %v4001, %v3997
        %v4174 = vpack.c.b16 %v4002, %v3998
        %v4175 = vpack.c.b16 %v4003, %v3999
        %v4176 = vpack.c.b16 %v4004, %v4000
        %v4177 = vpack.c.b16 %v4009, %v4005
        %v4178 = vpack.c.b16 %v4010, %v4006
        %v4179 = vpack.c.b16 %v4011, %v4007
        %v4180 = vpack.c.b16 %v4012, %v4008
        %v4181 = vpack.c.b16 %v4017, %v4013
        %v4182 = vpack.c.b16 %v4018, %v4014
        %v4183 = vpack.c.b16 %v4019, %v4015
        %v4184 = vpack.c.b16 %v4020, %v4016
        %v4185 = vpack.c.b16 %v4025, %v4021
        %v4186 = vpack.c.b16 %v4026, %v4022
        %v4187 = vpack.c.b16 %v4027, %v4023
        %v4188 = vpack.c.b16 %v4028, %v4024
        %v4189 = vpack.c.b16 %v4033, %v4029
        %v4190 = vpack.c.b16 %v4034, %v4030
        %v4191 = vpack.c.b16 %v4035, %v4031
        %v4192 = vpack.c.b16 %v4036, %v4032
        %v4193 = vpack.c.b16 %v4041, %v4037
        %v4194 = vpack.c.b16 %v4042, %v4038
        %v4195 = vpack.c.b16 %v4043, %v4039
        %v4196 = vpack.c.b16 %v4044, %v4040
        %v4197 = vpack.c.b16 %v4049, %v4045
        %v4198 = vpack.c.b16 %v4050, %v4046
        %v4199 = vpack.c.b16 %v4051, %v4047
        %v4200 = vpack.c.b16 %v4052, %v4048
        %v4201 = vpack.c.b16 %v4057, %v4053
        %v4202 = vpack.c.b16 %v4058, %v4054
        %v4203 = vpack.c.b16 %v4059, %v4055
        %v4204 = vpack.c.b16 %v4060, %v4056
        %v4205 = vpack.c.b16 %v4065, %v4061
        %v4206 = vpack.c.b16 %v4066, %v4062
        %v4207 = vpack.c.b16 %v4067, %v4063
        %v4208 = vpack.c.b16 %v4068, %v4064
        %v4209 = vpack.c.b16 %v4073, %v4069
        %v4210 = vpack.c.b16 %v4074, %v4070
        %v4211 = vpack.c.b16 %v4075, %v4071
        %v4212 = vpack.c.b16 %v4076, %v4072
        %v4213 = vpack.c.b16 %v4081, %v4077
        %v4214 = vpack.c.b16 %v4082, %v4078
        %v4215 = vpack.c.b16 %v4083, %v4079
        %v4216 = vpack.c.b16 %v4084, %v4080
        %v4217 = vpack.c.b16 %v4089, %v4085
        %v4218 = vpack.c.b16 %v4090, %v4086
        %v4219 = vpack.c.b16 %v4091, %v4087
        %v4220 = vpack.c.b16 %v4092, %v4088
        %4349 = vmatprep.subr.bf16.mxu0 %v4094
        %4350 = vmatpush1.bf16.msra.mxu0 %v4093
        %4351 = vmatprep.subr.bf16.mxu0 %v4098
        %4352 = vmatpush1.bf16.msra.mxu0 %v4097
        %4353 = vmatprep.subr.bf16.mxu0 %v4102
        %4354 = vmatpush1.bf16.msra.mxu0 %v4101
        %4355 = vmatprep.subr.bf16.mxu0 %v4106
        %4356 = vmatpush1.bf16.msra.mxu0 %v4105
        %4357 = vmatprep.subr.bf16.mxu0 %v4110
        %4358 = vmatpush1.bf16.msra.mxu0 %v4109
        %4359 = vmatprep.subr.bf16.mxu0 %v4114
        %4360 = vmatpush1.bf16.msra.mxu0 %v4113
        %4361 = vmatprep.subr.bf16.mxu0 %v4118
        %4362 = vmatpush1.bf16.msra.mxu0 %v4117
        %4363 = vmatprep.subr.bf16.mxu0 %v4122
        %4364 = vmatpush1.bf16.msra.mxu0 %v4121
        %4365 = vmatprep.subr.bf16.mxu0 %v4126
        %4366 = vmatpush1.bf16.msra.mxu0 %v4125
        %4367 = vmatprep.subr.bf16.mxu0 %v4130
        %4368 = vmatpush1.bf16.msra.mxu0 %v4129
        %4369 = vmatprep.subr.bf16.mxu0 %v4134
        %4370 = vmatpush1.bf16.msra.mxu0 %v4133
        %4371 = vmatprep.subr.bf16.mxu0 %v4138
        %4372 = vmatpush1.bf16.msra.mxu0 %v4137
        %4373 = vmatprep.subr.bf16.mxu0 %v4142
        %4374 = vmatpush1.bf16.msra.mxu0 %v4141
        %4375 = vmatprep.subr.bf16.mxu0 %v4146
        %4376 = vmatpush1.bf16.msra.mxu0 %v4145
        %4377 = vmatprep.subr.bf16.mxu0 %v4150
        %4378 = vmatpush1.bf16.msra.mxu0 %v4149
        %4379 = vmatprep.subr.bf16.mxu0 %v4154
        %4380 = vmatpush1.bf16.msra.mxu0 %v4153
        %4381 = vmatprep.mubr.bf16.mxu0 %v3577
        %4382 = vmatmul.mubr.bf16.gmra.mrb[0].mxu0 %v3576
        %v4383 = vpop.f32.mrb[0].mxu0
        %v4384 = vadd.f32 0.0, %v4383
        %v4385 = vpop.f32.mrb[0].mxu0
        %v4386 = vadd.f32 0.0, %v4385
        %v4387 = vpop.f32.mrb[0].mxu0
        %v4388 = vadd.f32 0.0, %v4387
        %v4389 = vpop.f32.mrb[0].mxu0
        %v4390 = vadd.f32 0.0, %v4389
        %4391 = vdwg.mxu0
        %4392 = vmatprep.subr.bf16.mxu0 %v4158
        %4393 = vmatpush1.bf16.msra.mxu0 %v4157
        %4394 = vmatprep.subr.bf16.mxu0 %v4162
        %4395 = vmatpush1.bf16.msra.mxu0 %v4161
        %4396 = vmatprep.subr.bf16.mxu0 %v4166
        %4397 = vmatpush1.bf16.msra.mxu0 %v4165
        %4398 = vmatprep.subr.bf16.mxu0 %v4170
        %4399 = vmatpush1.bf16.msra.mxu0 %v4169
        %4400 = vmatprep.subr.bf16.mxu0 %v4174
        %4401 = vmatpush1.bf16.msra.mxu0 %v4173
        %4402 = vmatprep.subr.bf16.mxu0 %v4178
        %4403 = vmatpush1.bf16.msra.mxu0 %v4177
        %4404 = vmatprep.subr.bf16.mxu0 %v4182
        %4405 = vmatpush1.bf16.msra.mxu0 %v4181
        %4406 = vmatprep.subr.bf16.mxu0 %v4186
        %4407 = vmatpush1.bf16.msra.mxu0 %v4185
        %4408 = vmatprep.subr.bf16.mxu0 %v4190
        %4409 = vmatpush1.bf16.msra.mxu0 %v4189
        %4410 = vmatprep.subr.bf16.mxu0 %v4194
        %4411 = vmatpush1.bf16.msra.mxu0 %v4193
        %4412 = vmatprep.subr.bf16.mxu0 %v4198
        %4413 = vmatpush1.bf16.msra.mxu0 %v4197
        %4414 = vmatprep.subr.bf16.mxu0 %v4202
        %4415 = vmatpush1.bf16.msra.mxu0 %v4201
        %4416 = vmatprep.subr.bf16.mxu0 %v4206
        %4417 = vmatpush1.bf16.msra.mxu0 %v4205
        %4418 = vmatprep.subr.bf16.mxu0 %v4210
        %4419 = vmatpush1.bf16.msra.mxu0 %v4209
        %4420 = vmatprep.subr.bf16.mxu0 %v4214
        %4421 = vmatpush1.bf16.msra.mxu0 %v4213
        %4422 = vmatprep.subr.bf16.mxu0 %v4218
        %4423 = vmatpush1.bf16.msra.mxu0 %v4217
        %4424 = vmatprep.mubr.bf16.mxu0 %v3579
        %4425 = vmatmul.mubr.bf16.gmra.mrb[0].mxu0 %v3578
        %v4426 = vpop.f32.mrb[0].mxu0
        %v4427 = vadd.f32 %v4384, %v4426
        %v4428 = vpop.f32.mrb[0].mxu0
        %v4429 = vadd.f32 %v4386, %v4428
        %v4430 = vpop.f32.mrb[0].mxu0
        %v4431 = vadd.f32 %v4388, %v4430
        %v4432 = vpop.f32.mrb[0].mxu0
        %v4433 = vadd.f32 %v4390, %v4432
        %4434 = vdwg.mxu0
        %4435 = vmatprep.subr.bf16.mxu0 %v4096
        %4436 = vmatpush1.bf16.msra.mxu0 %v4095
        %4437 = vmatprep.subr.bf16.mxu0 %v4100
        %4438 = vmatpush1.bf16.msra.mxu0 %v4099
        %4439 = vmatprep.subr.bf16.mxu0 %v4104
        %4440 = vmatpush1.bf16.msra.mxu0 %v4103
        %4441 = vmatprep.subr.bf16.mxu0 %v4108
        %4442 = vmatpush1.bf16.msra.mxu0 %v4107
        %4443 = vmatprep.subr.bf16.mxu0 %v4112
        %4444 = vmatpush1.bf16.msra.mxu0 %v4111
        %4445 = vmatprep.subr.bf16.mxu0 %v4116
        %4446 = vmatpush1.bf16.msra.mxu0 %v4115
        %4447 = vmatprep.subr.bf16.mxu0 %v4120
        %4448 = vmatpush1.bf16.msra.mxu0 %v4119
        %4449 = vmatprep.subr.bf16.mxu0 %v4124
        %4450 = vmatpush1.bf16.msra.mxu0 %v4123
        %4451 = vmatprep.subr.bf16.mxu0 %v4128
        %4452 = vmatpush1.bf16.msra.mxu0 %v4127
        %4453 = vmatprep.subr.bf16.mxu0 %v4132
        %4454 = vmatpush1.bf16.msra.mxu0 %v4131
        %4455 = vmatprep.subr.bf16.mxu0 %v4136
        %4456 = vmatpush1.bf16.msra.mxu0 %v4135
        %4457 = vmatprep.subr.bf16.mxu0 %v4140
        %4458 = vmatpush1.bf16.msra.mxu0 %v4139
        %4459 = vmatprep.subr.bf16.mxu0 %v4144
        %4460 = vmatpush1.bf16.msra.mxu0 %v4143
        %4461 = vmatprep.subr.bf16.mxu0 %v4148
        %4462 = vmatpush1.bf16.msra.mxu0 %v4147
        %4463 = vmatprep.subr.bf16.mxu0 %v4152
        %4464 = vmatpush1.bf16.msra.mxu0 %v4151
        %4465 = vmatprep.subr.bf16.mxu0 %v4156
        %4466 = vmatpush1.bf16.msra.mxu0 %v4155
        %4467 = vmatprep.mubr.bf16.mxu0 %v3577
        %4468 = vmatmul.mubr.bf16.gmra.mrb[0].mxu0 %v3576
        %v4469 = vpop.f32.mrb[0].mxu0
        %v4470 = vadd.f32 0.0, %v4469
        %v4471 = vpop.f32.mrb[0].mxu0
        %v4472 = vadd.f32 0.0, %v4471
        %v4473 = vpop.f32.mrb[0].mxu0
        %v4474 = vadd.f32 0.0, %v4473
        %v4475 = vpop.f32.mrb[0].mxu0
        %v4476 = vadd.f32 0.0, %v4475
        %4477 = vdwg.mxu0
        %4478 = vmatprep.subr.bf16.mxu0 %v4160
        %4479 = vmatpush1.bf16.msra.mxu0 %v4159
        %4480 = vmatprep.subr.bf16.mxu0 %v4164
        %4481 = vmatpush1.bf16.msra.mxu0 %v4163
        %4482 = vmatprep.subr.bf16.mxu0 %v4168
        %4483 = vmatpush1.bf16.msra.mxu0 %v4167
        %4484 = vmatprep.subr.bf16.mxu0 %v4172
        %4485 = vmatpush1.bf16.msra.mxu0 %v4171
        %4486 = vmatprep.subr.bf16.mxu0 %v4176
        %4487 = vmatpush1.bf16.msra.mxu0 %v4175
        %4488 = vmatprep.subr.bf16.mxu0 %v4180
        %4489 = vmatpush1.bf16.msra.mxu0 %v4179
        %4490 = vmatprep.subr.bf16.mxu0 %v4184
        %4491 = vmatpush1.bf16.msra.mxu0 %v4183
        %4492 = vmatprep.subr.bf16.mxu0 %v4188
        %4493 = vmatpush1.bf16.msra.mxu0 %v4187
        %4494 = vmatprep.subr.bf16.mxu0 %v4192
        %4495 = vmatpush1.bf16.msra.mxu0 %v4191
        %4496 = vmatprep.subr.bf16.mxu0 %v4196
        %4497 = vmatpush1.bf16.msra.mxu0 %v4195
        %4498 = vmatprep.subr.bf16.mxu0 %v4200
        %4499 = vmatpush1.bf16.msra.mxu0 %v4199
        %4500 = vmatprep.subr.bf16.mxu0 %v4204
        %4501 = vmatpush1.bf16.msra.mxu0 %v4203
        %4502 = vmatprep.subr.bf16.mxu0 %v4208
        %4503 = vmatpush1.bf16.msra.mxu0 %v4207
        %4504 = vmatprep.subr.bf16.mxu0 %v4212
        %4505 = vmatpush1.bf16.msra.mxu0 %v4211
        %4506 = vmatprep.subr.bf16.mxu0 %v4216
        %4507 = vmatpush1.bf16.msra.mxu0 %v4215
        %4508 = vmatprep.subr.bf16.mxu0 %v4220
        %4509 = vmatpush1.bf16.msra.mxu0 %v4219
        %4510 = vmatprep.mubr.bf16.mxu0 %v3579
        %4511 = vmatmul.mubr.bf16.gmra.mrb[0].mxu0 %v3578
        %v4512 = vpop.f32.mrb[0].mxu0
        %v4513 = vadd.f32 %v4470, %v4512
        %v4514 = vpop.f32.mrb[0].mxu0
        %v4515 = vadd.f32 %v4472, %v4514
        %v4516 = vpop.f32.mrb[0].mxu0
        %v4517 = vadd.f32 %v4474, %v4516
        %v4518 = vpop.f32.mrb[0].mxu0
        %v4519 = vadd.f32 %v4476, %v4518
        %4520 = vdwg.mxu0
        %v4521 = vpack.c.bf16 %v4431, %v4427
        %v4522 = vpack.c.bf16 %v4433, %v4429
        %v4523 = vpack.c.bf16 %v4517, %v4513
        %v4524 = vpack.c.bf16 %v4519, %v4515
        %s4525 = scalar_lea.vmem %s4, 12
        %v4526 = vld [vmem:[%s4525] sm:$0xf]
        %v4529 = vunpack.c.l.s4 1966171168
        %v4530 = vunpack.c.0.s8 %v4529
        %v4531 = vlaneseq
        %v4532 = vshrl.u32 %v4531, 7
        %v4533 = vsub.s32 %v4530, %v4532
        %v4534 = vrot.slane %v4526, %v4533
        %v4535 = vcombine.high %v4534, %v4534
        %v4537 = vunpack.c.l.s4 1966171168
        %v4538 = vunpack.c.0.s8 %v4537
        %v4539 = vlaneseq
        %v4540 = vshrl.u32 %v4539, 7
        %v4541 = vsub.s32 %v4538, %v4540
        %v4542 = vrot.slane %v4534, %v4541
        %v4544 = vunpack.c.l.s4 1966171168
        %v4545 = vunpack.c.0.s8 %v4544
        %v4546 = vlaneseq
        %v4547 = vshrl.u32 %v4546, 7
        %v4548 = vsub.s32 %v4545, %v4547
        %v4549 = vrot.slane %v4535, %v4548
        %v4550 = vcombine.high %v4542, %v4542
        %v4551 = vcombine.high %v4549, %v4549
        %v4553 = vpack.i.b16 %v4542, %v4542
        %v4555 = vlaneseq
        %v4556 = vshrl.u32 %v4555, 7
        %v4557 = vsub.s32 0, %v4556
        %v4558 = vrot.slane %v4553, %v4557
        %v4560 = vpack.i.b16 %v4549, %v4549
        %v4562 = vlaneseq
        %v4563 = vshrl.u32 %v4562, 7
        %v4564 = vsub.s32 0, %v4563
        %v4565 = vrot.slane %v4560, %v4564
        %v4567 = vpack.i.b16 %v4550, %v4550
        %v4569 = vlaneseq
        %v4570 = vshrl.u32 %v4569, 7
        %v4571 = vsub.s32 0, %v4570
        %v4572 = vrot.slane %v4567, %v4571
        %v4574 = vpack.i.b16 %v4551, %v4551
        %v4576 = vlaneseq
        %v4577 = vshrl.u32 %v4576, 7
        %v4578 = vsub.s32 0, %v4577
        %v4579 = vrot.slane %v4574, %v4578
        %v4580 = vadd.bf16 %v4521, %v4558
        %v4581 = vadd.bf16 %v4522, %v4565
        %v4582 = vadd.bf16 %v4523, %v4572
        %v4583 = vadd.bf16 %v4524, %v4579
        %v4584 = vmax.bf16 %v4580, 0
        %v4585 = vmax.bf16 %v4581, 0
        %v4586 = vmax.bf16 %v4582, 0
        %v4587 = vmax.bf16 %v4583, 0
        %s4588 = scalar_lea.vmem [#allocation7], 4096
        %v4589 = vld [vmem:[%s4588] sm:$0xff]
        %v4590 = vld [vmem:[%s4588 + $0x8] sm:$0xff]
        %v4591 = vld [vmem:[%s4588 + $0x10] sm:$0xff]
        %v4592 = vld [vmem:[%s4588 + $0x18] sm:$0xff]
        %v4593 = vld [vmem:[%s4588 + $0x20] sm:$0xff]
        %v4594 = vld [vmem:[%s4588 + $0x28] sm:$0xff]
        %v4595 = vld [vmem:[%s4588 + $0x30] sm:$0xff]
        %v4596 = vld [vmem:[%s4588 + $0x38] sm:$0xff]
        %v4597 = vld [vmem:[%s4588 + $0x40] sm:$0xff]
        %v4598 = vld [vmem:[%s4588 + $0x48] sm:$0xff]
        %v4599 = vld [vmem:[%s4588 + $0x50] sm:$0xff]
        %v4600 = vld [vmem:[%s4588 + $0x58] sm:$0xff]
        %v4601 = vld [vmem:[%s4588 + $0x60] sm:$0xff]
        %v4602 = vld [vmem:[%s4588 + $0x68] sm:$0xff]
        %v4603 = vld [vmem:[%s4588 + $0x70] sm:$0xff]
        %v4604 = vld [vmem:[%s4588 + $0x78] sm:$0xff]
        %v4605 = vld [vmem:[%s4588 + $0x80] sm:$0xff]
        %v4606 = vld [vmem:[%s4588 + $0x88] sm:$0xff]
        %v4607 = vld [vmem:[%s4588 + $0x90] sm:$0xff]
        %v4608 = vld [vmem:[%s4588 + $0x98] sm:$0xff]
        %v4609 = vld [vmem:[%s4588 + $0xa0] sm:$0xff]
        %v4610 = vld [vmem:[%s4588 + $0xa8] sm:$0xff]
        %v4611 = vld [vmem:[%s4588 + $0xb0] sm:$0xff]
        %v4612 = vld [vmem:[%s4588 + $0xb8] sm:$0xff]
        %v4613 = vld [vmem:[%s4588 + $0xc0] sm:$0xff]
        %v4614 = vld [vmem:[%s4588 + $0xc8] sm:$0xff]
        %v4615 = vld [vmem:[%s4588 + $0xd0] sm:$0xff]
        %v4616 = vld [vmem:[%s4588 + $0xd8] sm:$0xff]
        %v4617 = vld [vmem:[%s4588 + $0xe0] sm:$0xff]
        %v4618 = vld [vmem:[%s4588 + $0xe8] sm:$0xff]
        %v4619 = vld [vmem:[%s4588 + $0xf0] sm:$0xff]
        %v4620 = vld [vmem:[%s4588 + $0xf8] sm:$0xff]
        %v4621 = vld [vmem:[%s4588 + $0x100] sm:$0xff]
        %v4622 = vld [vmem:[%s4588 + $0x108] sm:$0xff]
        %v4623 = vld [vmem:[%s4588 + $0x110] sm:$0xff]
        %v4624 = vld [vmem:[%s4588 + $0x118] sm:$0xff]
        %v4625 = vld [vmem:[%s4588 + $0x120] sm:$0xff]
        %v4626 = vld [vmem:[%s4588 + $0x128] sm:$0xff]
        %v4627 = vld [vmem:[%s4588 + $0x130] sm:$0xff]
        %v4628 = vld [vmem:[%s4588 + $0x138] sm:$0xff]
        %v4629 = vld [vmem:[%s4588 + $0x140] sm:$0xff]
        %v4630 = vld [vmem:[%s4588 + $0x148] sm:$0xff]
        %v4631 = vld [vmem:[%s4588 + $0x150] sm:$0xff]
        %v4632 = vld [vmem:[%s4588 + $0x158] sm:$0xff]
        %v4633 = vld [vmem:[%s4588 + $0x160] sm:$0xff]
        %v4634 = vld [vmem:[%s4588 + $0x168] sm:$0xff]
        %v4635 = vld [vmem:[%s4588 + $0x170] sm:$0xff]
        %v4636 = vld [vmem:[%s4588 + $0x178] sm:$0xff]
        %v4637 = vld [vmem:[%s4588 + $0x180] sm:$0xff]
        %v4638 = vld [vmem:[%s4588 + $0x188] sm:$0xff]
        %v4639 = vld [vmem:[%s4588 + $0x190] sm:$0xff]
        %v4640 = vld [vmem:[%s4588 + $0x198] sm:$0xff]
        %v4641 = vld [vmem:[%s4588 + $0x1a0] sm:$0xff]
        %v4642 = vld [vmem:[%s4588 + $0x1a8] sm:$0xff]
        %v4643 = vld [vmem:[%s4588 + $0x1b0] sm:$0xff]
        %v4644 = vld [vmem:[%s4588 + $0x1b8] sm:$0xff]
        %v4645 = vld [vmem:[%s4588 + $0x1c0] sm:$0xff]
        %v4646 = vld [vmem:[%s4588 + $0x1c8] sm:$0xff]
        %v4647 = vld [vmem:[%s4588 + $0x1d0] sm:$0xff]
        %v4648 = vld [vmem:[%s4588 + $0x1d8] sm:$0xff]
        %v4649 = vld [vmem:[%s4588 + $0x1e0] sm:$0xff]
        %v4650 = vld [vmem:[%s4588 + $0x1e8] sm:$0xff]
        %v4651 = vld [vmem:[%s4588 + $0x1f0] sm:$0xff]
        %v4652 = vld [vmem:[%s4588 + $0x1f8] sm:$0xff]
        %v4653 = vld [vmem:[%s4588 + $0x200] sm:$0xff]
        %v4654 = vld [vmem:[%s4588 + $0x208] sm:$0xff]
        %v4655 = vld [vmem:[%s4588 + $0x210] sm:$0xff]
        %v4656 = vld [vmem:[%s4588 + $0x218] sm:$0xff]
        %v4657 = vld [vmem:[%s4588 + $0x220] sm:$0xff]
        %v4658 = vld [vmem:[%s4588 + $0x228] sm:$0xff]
        %v4659 = vld [vmem:[%s4588 + $0x230] sm:$0xff]
        %v4660 = vld [vmem:[%s4588 + $0x238] sm:$0xff]
        %v4661 = vld [vmem:[%s4588 + $0x240] sm:$0xff]
        %v4662 = vld [vmem:[%s4588 + $0x248] sm:$0xff]
        %v4663 = vld [vmem:[%s4588 + $0x250] sm:$0xff]
        %v4664 = vld [vmem:[%s4588 + $0x258] sm:$0xff]
        %v4665 = vld [vmem:[%s4588 + $0x260] sm:$0xff]
        %v4666 = vld [vmem:[%s4588 + $0x268] sm:$0xff]
        %v4667 = vld [vmem:[%s4588 + $0x270] sm:$0xff]
        %v4668 = vld [vmem:[%s4588 + $0x278] sm:$0xff]
        %v4669 = vld [vmem:[%s4588 + $0x280] sm:$0xff]
        %v4670 = vld [vmem:[%s4588 + $0x288] sm:$0xff]
        %v4671 = vld [vmem:[%s4588 + $0x290] sm:$0xff]
        %v4672 = vld [vmem:[%s4588 + $0x298] sm:$0xff]
        %v4673 = vld [vmem:[%s4588 + $0x2a0] sm:$0xff]
        %v4674 = vld [vmem:[%s4588 + $0x2a8] sm:$0xff]
        %v4675 = vld [vmem:[%s4588 + $0x2b0] sm:$0xff]
        %v4676 = vld [vmem:[%s4588 + $0x2b8] sm:$0xff]
        %v4677 = vld [vmem:[%s4588 + $0x2c0] sm:$0xff]
        %v4678 = vld [vmem:[%s4588 + $0x2c8] sm:$0xff]
        %v4679 = vld [vmem:[%s4588 + $0x2d0] sm:$0xff]
        %v4680 = vld [vmem:[%s4588 + $0x2d8] sm:$0xff]
        %v4681 = vld [vmem:[%s4588 + $0x2e0] sm:$0xff]
        %v4682 = vld [vmem:[%s4588 + $0x2e8] sm:$0xff]
        %v4683 = vld [vmem:[%s4588 + $0x2f0] sm:$0xff]
        %v4684 = vld [vmem:[%s4588 + $0x2f8] sm:$0xff]
        %v4685 = vld [vmem:[%s4588 + $0x300] sm:$0xff]
        %v4686 = vld [vmem:[%s4588 + $0x308] sm:$0xff]
        %v4687 = vld [vmem:[%s4588 + $0x310] sm:$0xff]
        %v4688 = vld [vmem:[%s4588 + $0x318] sm:$0xff]
        %v4689 = vld [vmem:[%s4588 + $0x320] sm:$0xff]
        %v4690 = vld [vmem:[%s4588 + $0x328] sm:$0xff]
        %v4691 = vld [vmem:[%s4588 + $0x330] sm:$0xff]
        %v4692 = vld [vmem:[%s4588 + $0x338] sm:$0xff]
        %v4693 = vld [vmem:[%s4588 + $0x340] sm:$0xff]
        %v4694 = vld [vmem:[%s4588 + $0x348] sm:$0xff]
        %v4695 = vld [vmem:[%s4588 + $0x350] sm:$0xff]
        %v4696 = vld [vmem:[%s4588 + $0x358] sm:$0xff]
        %v4697 = vld [vmem:[%s4588 + $0x360] sm:$0xff]
        %v4698 = vld [vmem:[%s4588 + $0x368] sm:$0xff]
        %v4699 = vld [vmem:[%s4588 + $0x370] sm:$0xff]
        %v4700 = vld [vmem:[%s4588 + $0x378] sm:$0xff]
        %v4701 = vld [vmem:[%s4588 + $0x380] sm:$0xff]
        %v4702 = vld [vmem:[%s4588 + $0x388] sm:$0xff]
        %v4703 = vld [vmem:[%s4588 + $0x390] sm:$0xff]
        %v4704 = vld [vmem:[%s4588 + $0x398] sm:$0xff]
        %v4705 = vld [vmem:[%s4588 + $0x3a0] sm:$0xff]
        %v4706 = vld [vmem:[%s4588 + $0x3a8] sm:$0xff]
        %v4707 = vld [vmem:[%s4588 + $0x3b0] sm:$0xff]
        %v4708 = vld [vmem:[%s4588 + $0x3b8] sm:$0xff]
        %v4709 = vld [vmem:[%s4588 + $0x3c0] sm:$0xff]
        %v4710 = vld [vmem:[%s4588 + $0x3c8] sm:$0xff]
        %v4711 = vld [vmem:[%s4588 + $0x3d0] sm:$0xff]
        %v4712 = vld [vmem:[%s4588 + $0x3d8] sm:$0xff]
        %v4713 = vld [vmem:[%s4588 + $0x3e0] sm:$0xff]
        %v4714 = vld [vmem:[%s4588 + $0x3e8] sm:$0xff]
        %v4715 = vld [vmem:[%s4588 + $0x3f0] sm:$0xff]
        %v4716 = vld [vmem:[%s4588 + $0x3f8] sm:$0xff]
        %v4845 = vunpack.c.l.b16 %v4589
        %v4846 = vunpack.c.h.b16 %v4589
        %v4847 = vunpack.c.l.b16 %v4590
        %v4848 = vunpack.c.h.b16 %v4590
        %v4849 = vunpack.c.l.b16 %v4591
        %v4850 = vunpack.c.h.b16 %v4591
        %v4851 = vunpack.c.l.b16 %v4592
        %v4852 = vunpack.c.h.b16 %v4592
        %v4853 = vunpack.c.l.b16 %v4593
        %v4854 = vunpack.c.h.b16 %v4593
        %v4855 = vunpack.c.l.b16 %v4594
        %v4856 = vunpack.c.h.b16 %v4594
        %v4857 = vunpack.c.l.b16 %v4595
        %v4858 = vunpack.c.h.b16 %v4595
        %v4859 = vunpack.c.l.b16 %v4596
        %v4860 = vunpack.c.h.b16 %v4596
        %v4861 = vunpack.c.l.b16 %v4597
        %v4862 = vunpack.c.h.b16 %v4597
        %v4863 = vunpack.c.l.b16 %v4598
        %v4864 = vunpack.c.h.b16 %v4598
        %v4865 = vunpack.c.l.b16 %v4599
        %v4866 = vunpack.c.h.b16 %v4599
        %v4867 = vunpack.c.l.b16 %v4600
        %v4868 = vunpack.c.h.b16 %v4600
        %v4869 = vunpack.c.l.b16 %v4601
        %v4870 = vunpack.c.h.b16 %v4601
        %v4871 = vunpack.c.l.b16 %v4602
        %v4872 = vunpack.c.h.b16 %v4602
        %v4873 = vunpack.c.l.b16 %v4603
        %v4874 = vunpack.c.h.b16 %v4603
        %v4875 = vunpack.c.l.b16 %v4604
        %v4876 = vunpack.c.h.b16 %v4604
        %v4877 = vunpack.c.l.b16 %v4605
        %v4878 = vunpack.c.h.b16 %v4605
        %v4879 = vunpack.c.l.b16 %v4606
        %v4880 = vunpack.c.h.b16 %v4606
        %v4881 = vunpack.c.l.b16 %v4607
        %v4882 = vunpack.c.h.b16 %v4607
        %v4883 = vunpack.c.l.b16 %v4608
        %v4884 = vunpack.c.h.b16 %v4608
        %v4885 = vunpack.c.l.b16 %v4609
        %v4886 = vunpack.c.h.b16 %v4609
        %v4887 = vunpack.c.l.b16 %v4610
        %v4888 = vunpack.c.h.b16 %v4610
        %v4889 = vunpack.c.l.b16 %v4611
        %v4890 = vunpack.c.h.b16 %v4611
        %v4891 = vunpack.c.l.b16 %v4612
        %v4892 = vunpack.c.h.b16 %v4612
        %v4893 = vunpack.c.l.b16 %v4613
        %v4894 = vunpack.c.h.b16 %v4613
        %v4895 = vunpack.c.l.b16 %v4614
        %v4896 = vunpack.c.h.b16 %v4614
        %v4897 = vunpack.c.l.b16 %v4615
        %v4898 = vunpack.c.h.b16 %v4615
        %v4899 = vunpack.c.l.b16 %v4616
        %v4900 = vunpack.c.h.b16 %v4616
        %v4901 = vunpack.c.l.b16 %v4617
        %v4902 = vunpack.c.h.b16 %v4617
        %v4903 = vunpack.c.l.b16 %v4618
        %v4904 = vunpack.c.h.b16 %v4618
        %v4905 = vunpack.c.l.b16 %v4619
        %v4906 = vunpack.c.h.b16 %v4619
        %v4907 = vunpack.c.l.b16 %v4620
        %v4908 = vunpack.c.h.b16 %v4620
        %v4909 = vunpack.c.l.b16 %v4621
        %v4910 = vunpack.c.h.b16 %v4621
        %v4911 = vunpack.c.l.b16 %v4622
        %v4912 = vunpack.c.h.b16 %v4622
        %v4913 = vunpack.c.l.b16 %v4623
        %v4914 = vunpack.c.h.b16 %v4623
        %v4915 = vunpack.c.l.b16 %v4624
        %v4916 = vunpack.c.h.b16 %v4624
        %v4917 = vunpack.c.l.b16 %v4625
        %v4918 = vunpack.c.h.b16 %v4625
        %v4919 = vunpack.c.l.b16 %v4626
        %v4920 = vunpack.c.h.b16 %v4626
        %v4921 = vunpack.c.l.b16 %v4627
        %v4922 = vunpack.c.h.b16 %v4627
        %v4923 = vunpack.c.l.b16 %v4628
        %v4924 = vunpack.c.h.b16 %v4628
        %v4925 = vunpack.c.l.b16 %v4629
        %v4926 = vunpack.c.h.b16 %v4629
        %v4927 = vunpack.c.l.b16 %v4630
        %v4928 = vunpack.c.h.b16 %v4630
        %v4929 = vunpack.c.l.b16 %v4631
        %v4930 = vunpack.c.h.b16 %v4631
        %v4931 = vunpack.c.l.b16 %v4632
        %v4932 = vunpack.c.h.b16 %v4632
        %v4933 = vunpack.c.l.b16 %v4633
        %v4934 = vunpack.c.h.b16 %v4633
        %v4935 = vunpack.c.l.b16 %v4634
        %v4936 = vunpack.c.h.b16 %v4634
        %v4937 = vunpack.c.l.b16 %v4635
        %v4938 = vunpack.c.h.b16 %v4635
        %v4939 = vunpack.c.l.b16 %v4636
        %v4940 = vunpack.c.h.b16 %v4636
        %v4941 = vunpack.c.l.b16 %v4637
        %v4942 = vunpack.c.h.b16 %v4637
        %v4943 = vunpack.c.l.b16 %v4638
        %v4944 = vunpack.c.h.b16 %v4638
        %v4945 = vunpack.c.l.b16 %v4639
        %v4946 = vunpack.c.h.b16 %v4639
        %v4947 = vunpack.c.l.b16 %v4640
        %v4948 = vunpack.c.h.b16 %v4640
        %v4949 = vunpack.c.l.b16 %v4641
        %v4950 = vunpack.c.h.b16 %v4641
        %v4951 = vunpack.c.l.b16 %v4642
        %v4952 = vunpack.c.h.b16 %v4642
        %v4953 = vunpack.c.l.b16 %v4643
        %v4954 = vunpack.c.h.b16 %v4643
        %v4955 = vunpack.c.l.b16 %v4644
        %v4956 = vunpack.c.h.b16 %v4644
        %v4957 = vunpack.c.l.b16 %v4645
        %v4958 = vunpack.c.h.b16 %v4645
        %v4959 = vunpack.c.l.b16 %v4646
        %v4960 = vunpack.c.h.b16 %v4646
        %v4961 = vunpack.c.l.b16 %v4647
        %v4962 = vunpack.c.h.b16 %v4647
        %v4963 = vunpack.c.l.b16 %v4648
        %v4964 = vunpack.c.h.b16 %v4648
        %v4965 = vunpack.c.l.b16 %v4649
        %v4966 = vunpack.c.h.b16 %v4649
        %v4967 = vunpack.c.l.b16 %v4650
        %v4968 = vunpack.c.h.b16 %v4650
        %v4969 = vunpack.c.l.b16 %v4651
        %v4970 = vunpack.c.h.b16 %v4651
        %v4971 = vunpack.c.l.b16 %v4652
        %v4972 = vunpack.c.h.b16 %v4652
        %v4973 = vunpack.c.l.b16 %v4653
        %v4974 = vunpack.c.h.b16 %v4653
        %v4975 = vunpack.c.l.b16 %v4654
        %v4976 = vunpack.c.h.b16 %v4654
        %v4977 = vunpack.c.l.b16 %v4655
        %v4978 = vunpack.c.h.b16 %v4655
        %v4979 = vunpack.c.l.b16 %v4656
        %v4980 = vunpack.c.h.b16 %v4656
        %v4981 = vunpack.c.l.b16 %v4657
        %v4982 = vunpack.c.h.b16 %v4657
        %v4983 = vunpack.c.l.b16 %v4658
        %v4984 = vunpack.c.h.b16 %v4658
        %v4985 = vunpack.c.l.b16 %v4659
        %v4986 = vunpack.c.h.b16 %v4659
        %v4987 = vunpack.c.l.b16 %v4660
        %v4988 = vunpack.c.h.b16 %v4660
        %v4989 = vunpack.c.l.b16 %v4661
        %v4990 = vunpack.c.h.b16 %v4661
        %v4991 = vunpack.c.l.b16 %v4662
        %v4992 = vunpack.c.h.b16 %v4662
        %v4993 = vunpack.c.l.b16 %v4663
        %v4994 = vunpack.c.h.b16 %v4663
        %v4995 = vunpack.c.l.b16 %v4664
        %v4996 = vunpack.c.h.b16 %v4664
        %v4997 = vunpack.c.l.b16 %v4665
        %v4998 = vunpack.c.h.b16 %v4665
        %v4999 = vunpack.c.l.b16 %v4666
        %v5000 = vunpack.c.h.b16 %v4666
        %v5001 = vunpack.c.l.b16 %v4667
        %v5002 = vunpack.c.h.b16 %v4667
        %v5003 = vunpack.c.l.b16 %v4668
        %v5004 = vunpack.c.h.b16 %v4668
        %v5005 = vunpack.c.l.b16 %v4669
        %v5006 = vunpack.c.h.b16 %v4669
        %v5007 = vunpack.c.l.b16 %v4670
        %v5008 = vunpack.c.h.b16 %v4670
        %v5009 = vunpack.c.l.b16 %v4671
        %v5010 = vunpack.c.h.b16 %v4671
        %v5011 = vunpack.c.l.b16 %v4672
        %v5012 = vunpack.c.h.b16 %v4672
        %v5013 = vunpack.c.l.b16 %v4673
        %v5014 = vunpack.c.h.b16 %v4673
        %v5015 = vunpack.c.l.b16 %v4674
        %v5016 = vunpack.c.h.b16 %v4674
        %v5017 = vunpack.c.l.b16 %v4675
        %v5018 = vunpack.c.h.b16 %v4675
        %v5019 = vunpack.c.l.b16 %v4676
        %v5020 = vunpack.c.h.b16 %v4676
        %v5021 = vunpack.c.l.b16 %v4677
        %v5022 = vunpack.c.h.b16 %v4677
        %v5023 = vunpack.c.l.b16 %v4678
        %v5024 = vunpack.c.h.b16 %v4678
        %v5025 = vunpack.c.l.b16 %v4679
        %v5026 = vunpack.c.h.b16 %v4679
        %v5027 = vunpack.c.l.b16 %v4680
        %v5028 = vunpack.c.h.b16 %v4680
        %v5029 = vunpack.c.l.b16 %v4681
        %v5030 = vunpack.c.h.b16 %v4681
        %v5031 = vunpack.c.l.b16 %v4682
        %v5032 = vunpack.c.h.b16 %v4682
        %v5033 = vunpack.c.l.b16 %v4683
        %v5034 = vunpack.c.h.b16 %v4683
        %v5035 = vunpack.c.l.b16 %v4684
        %v5036 = vunpack.c.h.b16 %v4684
        %v5037 = vunpack.c.l.b16 %v4685
        %v5038 = vunpack.c.h.b16 %v4685
        %v5039 = vunpack.c.l.b16 %v4686
        %v5040 = vunpack.c.h.b16 %v4686
        %v5041 = vunpack.c.l.b16 %v4687
        %v5042 = vunpack.c.h.b16 %v4687
        %v5043 = vunpack.c.l.b16 %v4688
        %v5044 = vunpack.c.h.b16 %v4688
        %v5045 = vunpack.c.l.b16 %v4689
        %v5046 = vunpack.c.h.b16 %v4689
        %v5047 = vunpack.c.l.b16 %v4690
        %v5048 = vunpack.c.h.b16 %v4690
        %v5049 = vunpack.c.l.b16 %v4691
        %v5050 = vunpack.c.h.b16 %v4691
        %v5051 = vunpack.c.l.b16 %v4692
        %v5052 = vunpack.c.h.b16 %v4692
        %v5053 = vunpack.c.l.b16 %v4693
        %v5054 = vunpack.c.h.b16 %v4693
        %v5055 = vunpack.c.l.b16 %v4694
        %v5056 = vunpack.c.h.b16 %v4694
        %v5057 = vunpack.c.l.b16 %v4695
        %v5058 = vunpack.c.h.b16 %v4695
        %v5059 = vunpack.c.l.b16 %v4696
        %v5060 = vunpack.c.h.b16 %v4696
        %v5061 = vunpack.c.l.b16 %v4697
        %v5062 = vunpack.c.h.b16 %v4697
        %v5063 = vunpack.c.l.b16 %v4698
        %v5064 = vunpack.c.h.b16 %v4698
        %v5065 = vunpack.c.l.b16 %v4699
        %v5066 = vunpack.c.h.b16 %v4699
        %v5067 = vunpack.c.l.b16 %v4700
        %v5068 = vunpack.c.h.b16 %v4700
        %v5069 = vunpack.c.l.b16 %v4701
        %v5070 = vunpack.c.h.b16 %v4701
        %v5071 = vunpack.c.l.b16 %v4702
        %v5072 = vunpack.c.h.b16 %v4702
        %v5073 = vunpack.c.l.b16 %v4703
        %v5074 = vunpack.c.h.b16 %v4703
        %v5075 = vunpack.c.l.b16 %v4704
        %v5076 = vunpack.c.h.b16 %v4704
        %v5077 = vunpack.c.l.b16 %v4705
        %v5078 = vunpack.c.h.b16 %v4705
        %v5079 = vunpack.c.l.b16 %v4706
        %v5080 = vunpack.c.h.b16 %v4706
        %v5081 = vunpack.c.l.b16 %v4707
        %v5082 = vunpack.c.h.b16 %v4707
        %v5083 = vunpack.c.l.b16 %v4708
        %v5084 = vunpack.c.h.b16 %v4708
        %v5085 = vunpack.c.l.b16 %v4709
        %v5086 = vunpack.c.h.b16 %v4709
        %v5087 = vunpack.c.l.b16 %v4710
        %v5088 = vunpack.c.h.b16 %v4710
        %v5089 = vunpack.c.l.b16 %v4711
        %v5090 = vunpack.c.h.b16 %v4711
        %v5091 = vunpack.c.l.b16 %v4712
        %v5092 = vunpack.c.h.b16 %v4712
        %v5093 = vunpack.c.l.b16 %v4713
        %v5094 = vunpack.c.h.b16 %v4713
        %v5095 = vunpack.c.l.b16 %v4714
        %v5096 = vunpack.c.h.b16 %v4714
        %v5097 = vunpack.c.l.b16 %v4715
        %v5098 = vunpack.c.h.b16 %v4715
        %v5099 = vunpack.c.l.b16 %v4716
        %v5100 = vunpack.c.h.b16 %v4716
        %v5101 = vpack.c.b16 %v4849, %v4845
        %v5102 = vpack.c.b16 %v4850, %v4846
        %v5103 = vpack.c.b16 %v4851, %v4847
        %v5104 = vpack.c.b16 %v4852, %v4848
        %v5105 = vpack.c.b16 %v4857, %v4853
        %v5106 = vpack.c.b16 %v4858, %v4854
        %v5107 = vpack.c.b16 %v4859, %v4855
        %v5108 = vpack.c.b16 %v4860, %v4856
        %v5109 = vpack.c.b16 %v4865, %v4861
        %v5110 = vpack.c.b16 %v4866, %v4862
        %v5111 = vpack.c.b16 %v4867, %v4863
        %v5112 = vpack.c.b16 %v4868, %v4864
        %v5113 = vpack.c.b16 %v4873, %v4869
        %v5114 = vpack.c.b16 %v4874, %v4870
        %v5115 = vpack.c.b16 %v4875, %v4871
        %v5116 = vpack.c.b16 %v4876, %v4872
        %v5117 = vpack.c.b16 %v4881, %v4877
        %v5118 = vpack.c.b16 %v4882, %v4878
        %v5119 = vpack.c.b16 %v4883, %v4879
        %v5120 = vpack.c.b16 %v4884, %v4880
        %v5121 = vpack.c.b16 %v4889, %v4885
        %v5122 = vpack.c.b16 %v4890, %v4886
        %v5123 = vpack.c.b16 %v4891, %v4887
        %v5124 = vpack.c.b16 %v4892, %v4888
        %v5125 = vpack.c.b16 %v4897, %v4893
        %v5126 = vpack.c.b16 %v4898, %v4894
        %v5127 = vpack.c.b16 %v4899, %v4895
        %v5128 = vpack.c.b16 %v4900, %v4896
        %v5129 = vpack.c.b16 %v4905, %v4901
        %v5130 = vpack.c.b16 %v4906, %v4902
        %v5131 = vpack.c.b16 %v4907, %v4903
        %v5132 = vpack.c.b16 %v4908, %v4904
        %v5133 = vpack.c.b16 %v4913, %v4909
        %v5134 = vpack.c.b16 %v4914, %v4910
        %v5135 = vpack.c.b16 %v4915, %v4911
        %v5136 = vpack.c.b16 %v4916, %v4912
        %v5137 = vpack.c.b16 %v4921, %v4917
        %v5138 = vpack.c.b16 %v4922, %v4918
        %v5139 = vpack.c.b16 %v4923, %v4919
        %v5140 = vpack.c.b16 %v4924, %v4920
        %v5141 = vpack.c.b16 %v4929, %v4925
        %v5142 = vpack.c.b16 %v4930, %v4926
        %v5143 = vpack.c.b16 %v4931, %v4927
        %v5144 = vpack.c.b16 %v4932, %v4928
        %v5145 = vpack.c.b16 %v4937, %v4933
        %v5146 = vpack.c.b16 %v4938, %v4934
        %v5147 = vpack.c.b16 %v4939, %v4935
        %v5148 = vpack.c.b16 %v4940, %v4936
        %v5149 = vpack.c.b16 %v4945, %v4941
        %v5150 = vpack.c.b16 %v4946, %v4942
        %v5151 = vpack.c.b16 %v4947, %v4943
        %v5152 = vpack.c.b16 %v4948, %v4944
        %v5153 = vpack.c.b16 %v4953, %v4949
        %v5154 = vpack.c.b16 %v4954, %v4950
        %v5155 = vpack.c.b16 %v4955, %v4951
        %v5156 = vpack.c.b16 %v4956, %v4952
        %v5157 = vpack.c.b16 %v4961, %v4957
        %v5158 = vpack.c.b16 %v4962, %v4958
        %v5159 = vpack.c.b16 %v4963, %v4959
        %v5160 = vpack.c.b16 %v4964, %v4960
        %v5161 = vpack.c.b16 %v4969, %v4965
        %v5162 = vpack.c.b16 %v4970, %v4966
        %v5163 = vpack.c.b16 %v4971, %v4967
        %v5164 = vpack.c.b16 %v4972, %v4968
        %v5165 = vpack.c.b16 %v4977, %v4973
        %v5166 = vpack.c.b16 %v4978, %v4974
        %v5167 = vpack.c.b16 %v4979, %v4975
        %v5168 = vpack.c.b16 %v4980, %v4976
        %v5169 = vpack.c.b16 %v4985, %v4981
        %v5170 = vpack.c.b16 %v4986, %v4982
        %v5171 = vpack.c.b16 %v4987, %v4983
        %v5172 = vpack.c.b16 %v4988, %v4984
        %v5173 = vpack.c.b16 %v4993, %v4989
        %v5174 = vpack.c.b16 %v4994, %v4990
        %v5175 = vpack.c.b16 %v4995, %v4991
        %v5176 = vpack.c.b16 %v4996, %v4992
        %v5177 = vpack.c.b16 %v5001, %v4997
        %v5178 = vpack.c.b16 %v5002, %v4998
        %v5179 = vpack.c.b16 %v5003, %v4999
        %v5180 = vpack.c.b16 %v5004, %v5000
        %v5181 = vpack.c.b16 %v5009, %v5005
        %v5182 = vpack.c.b16 %v5010, %v5006
        %v5183 = vpack.c.b16 %v5011, %v5007
        %v5184 = vpack.c.b16 %v5012, %v5008
        %v5185 = vpack.c.b16 %v5017, %v5013
        %v5186 = vpack.c.b16 %v5018, %v5014
        %v5187 = vpack.c.b16 %v5019, %v5015
        %v5188 = vpack.c.b16 %v5020, %v5016
        %v5189 = vpack.c.b16 %v5025, %v5021
        %v5190 = vpack.c.b16 %v5026, %v5022
        %v5191 = vpack.c.b16 %v5027, %v5023
        %v5192 = vpack.c.b16 %v5028, %v5024
        %v5193 = vpack.c.b16 %v5033, %v5029
        %v5194 = vpack.c.b16 %v5034, %v5030
        %v5195 = vpack.c.b16 %v5035, %v5031
        %v5196 = vpack.c.b16 %v5036, %v5032
        %v5197 = vpack.c.b16 %v5041, %v5037
        %v5198 = vpack.c.b16 %v5042, %v5038
        %v5199 = vpack.c.b16 %v5043, %v5039
        %v5200 = vpack.c.b16 %v5044, %v5040
        %v5201 = vpack.c.b16 %v5049, %v5045
        %v5202 = vpack.c.b16 %v5050, %v5046
        %v5203 = vpack.c.b16 %v5051, %v5047
        %v5204 = vpack.c.b16 %v5052, %v5048
        %v5205 = vpack.c.b16 %v5057, %v5053
        %v5206 = vpack.c.b16 %v5058, %v5054
        %v5207 = vpack.c.b16 %v5059, %v5055
        %v5208 = vpack.c.b16 %v5060, %v5056
        %v5209 = vpack.c.b16 %v5065, %v5061
        %v5210 = vpack.c.b16 %v5066, %v5062
        %v5211 = vpack.c.b16 %v5067, %v5063
        %v5212 = vpack.c.b16 %v5068, %v5064
        %v5213 = vpack.c.b16 %v5073, %v5069
        %v5214 = vpack.c.b16 %v5074, %v5070
        %v5215 = vpack.c.b16 %v5075, %v5071
        %v5216 = vpack.c.b16 %v5076, %v5072
        %v5217 = vpack.c.b16 %v5081, %v5077
        %v5218 = vpack.c.b16 %v5082, %v5078
        %v5219 = vpack.c.b16 %v5083, %v5079
        %v5220 = vpack.c.b16 %v5084, %v5080
        %v5221 = vpack.c.b16 %v5089, %v5085
        %v5222 = vpack.c.b16 %v5090, %v5086
        %v5223 = vpack.c.b16 %v5091, %v5087
        %v5224 = vpack.c.b16 %v5092, %v5088
        %v5225 = vpack.c.b16 %v5097, %v5093
        %v5226 = vpack.c.b16 %v5098, %v5094
        %v5227 = vpack.c.b16 %v5099, %v5095
        %v5228 = vpack.c.b16 %v5100, %v5096
        %5357 = vmatprep.subr.bf16.mxu0 %v5102
        %5358 = vmatpush1.bf16.msra.mxu0 %v5101
        %5359 = vmatprep.subr.bf16.mxu0 %v5106
        %5360 = vmatpush1.bf16.msra.mxu0 %v5105
        %5361 = vmatprep.subr.bf16.mxu0 %v5110
        %5362 = vmatpush1.bf16.msra.mxu0 %v5109
        %5363 = vmatprep.subr.bf16.mxu0 %v5114
        %5364 = vmatpush1.bf16.msra.mxu0 %v5113
        %5365 = vmatprep.subr.bf16.mxu0 %v5118
        %5366 = vmatpush1.bf16.msra.mxu0 %v5117
        %5367 = vmatprep.subr.bf16.mxu0 %v5122
        %5368 = vmatpush1.bf16.msra.mxu0 %v5121
        %5369 = vmatprep.subr.bf16.mxu0 %v5126
        %5370 = vmatpush1.bf16.msra.mxu0 %v5125
        %5371 = vmatprep.subr.bf16.mxu0 %v5130
        %5372 = vmatpush1.bf16.msra.mxu0 %v5129
        %5373 = vmatprep.subr.bf16.mxu0 %v5134
        %5374 = vmatpush1.bf16.msra.mxu0 %v5133
        %5375 = vmatprep.subr.bf16.mxu0 %v5138
        %5376 = vmatpush1.bf16.msra.mxu0 %v5137
        %5377 = vmatprep.subr.bf16.mxu0 %v5142
        %5378 = vmatpush1.bf16.msra.mxu0 %v5141
        %5379 = vmatprep.subr.bf16.mxu0 %v5146
        %5380 = vmatpush1.bf16.msra.mxu0 %v5145
        %5381 = vmatprep.subr.bf16.mxu0 %v5150
        %5382 = vmatpush1.bf16.msra.mxu0 %v5149
        %5383 = vmatprep.subr.bf16.mxu0 %v5154
        %5384 = vmatpush1.bf16.msra.mxu0 %v5153
        %5385 = vmatprep.subr.bf16.mxu0 %v5158
        %5386 = vmatpush1.bf16.msra.mxu0 %v5157
        %5387 = vmatprep.subr.bf16.mxu0 %v5162
        %5388 = vmatpush1.bf16.msra.mxu0 %v5161
        %5389 = vmatprep.mubr.bf16.mxu0 %v4585
        %5390 = vmatmul.mubr.bf16.gmra.mrb[0].mxu0 %v4584
        %v5391 = vpop.f32.mrb[0].mxu0
        %v5392 = vadd.f32 0.0, %v5391
        %v5393 = vpop.f32.mrb[0].mxu0
        %v5394 = vadd.f32 0.0, %v5393
        %v5395 = vpop.f32.mrb[0].mxu0
        %v5396 = vadd.f32 0.0, %v5395
        %v5397 = vpop.f32.mrb[0].mxu0
        %v5398 = vadd.f32 0.0, %v5397
        %5399 = vdwg.mxu0
        %5400 = vmatprep.subr.bf16.mxu0 %v5166
        %5401 = vmatpush1.bf16.msra.mxu0 %v5165
        %5402 = vmatprep.subr.bf16.mxu0 %v5170
        %5403 = vmatpush1.bf16.msra.mxu0 %v5169
        %5404 = vmatprep.subr.bf16.mxu0 %v5174
        %5405 = vmatpush1.bf16.msra.mxu0 %v5173
        %5406 = vmatprep.subr.bf16.mxu0 %v5178
        %5407 = vmatpush1.bf16.msra.mxu0 %v5177
        %5408 = vmatprep.subr.bf16.mxu0 %v5182
        %5409 = vmatpush1.bf16.msra.mxu0 %v5181
        %5410 = vmatprep.subr.bf16.mxu0 %v5186
        %5411 = vmatpush1.bf16.msra.mxu0 %v5185
        %5412 = vmatprep.subr.bf16.mxu0 %v5190
        %5413 = vmatpush1.bf16.msra.mxu0 %v5189
        %5414 = vmatprep.subr.bf16.mxu0 %v5194
        %5415 = vmatpush1.bf16.msra.mxu0 %v5193
        %5416 = vmatprep.subr.bf16.mxu0 %v5198
        %5417 = vmatpush1.bf16.msra.mxu0 %v5197
        %5418 = vmatprep.subr.bf16.mxu0 %v5202
        %5419 = vmatpush1.bf16.msra.mxu0 %v5201
        %5420 = vmatprep.subr.bf16.mxu0 %v5206
        %5421 = vmatpush1.bf16.msra.mxu0 %v5205
        %5422 = vmatprep.subr.bf16.mxu0 %v5210
        %5423 = vmatpush1.bf16.msra.mxu0 %v5209
        %5424 = vmatprep.subr.bf16.mxu0 %v5214
        %5425 = vmatpush1.bf16.msra.mxu0 %v5213
        %5426 = vmatprep.subr.bf16.mxu0 %v5218
        %5427 = vmatpush1.bf16.msra.mxu0 %v5217
        %5428 = vmatprep.subr.bf16.mxu0 %v5222
        %5429 = vmatpush1.bf16.msra.mxu0 %v5221
        %5430 = vmatprep.subr.bf16.mxu0 %v5226
        %5431 = vmatpush1.bf16.msra.mxu0 %v5225
        %5432 = vmatprep.mubr.bf16.mxu0 %v4587
        %5433 = vmatmul.mubr.bf16.gmra.mrb[0].mxu0 %v4586
        %v5434 = vpop.f32.mrb[0].mxu0
        %v5435 = vadd.f32 %v5392, %v5434
        %v5436 = vpop.f32.mrb[0].mxu0
        %v5437 = vadd.f32 %v5394, %v5436
        %v5438 = vpop.f32.mrb[0].mxu0
        %v5439 = vadd.f32 %v5396, %v5438
        %v5440 = vpop.f32.mrb[0].mxu0
        %v5441 = vadd.f32 %v5398, %v5440
        %5442 = vdwg.mxu0
        %5443 = vmatprep.subr.bf16.mxu0 %v5104
        %5444 = vmatpush1.bf16.msra.mxu0 %v5103
        %5445 = vmatprep.subr.bf16.mxu0 %v5108
        %5446 = vmatpush1.bf16.msra.mxu0 %v5107
        %5447 = vmatprep.subr.bf16.mxu0 %v5112
        %5448 = vmatpush1.bf16.msra.mxu0 %v5111
        %5449 = vmatprep.subr.bf16.mxu0 %v5116
        %5450 = vmatpush1.bf16.msra.mxu0 %v5115
        %5451 = vmatprep.subr.bf16.mxu0 %v5120
        %5452 = vmatpush1.bf16.msra.mxu0 %v5119
        %5453 = vmatprep.subr.bf16.mxu0 %v5124
        %5454 = vmatpush1.bf16.msra.mxu0 %v5123
        %5455 = vmatprep.subr.bf16.mxu0 %v5128
        %5456 = vmatpush1.bf16.msra.mxu0 %v5127
        %5457 = vmatprep.subr.bf16.mxu0 %v5132
        %5458 = vmatpush1.bf16.msra.mxu0 %v5131
        %5459 = vmatprep.subr.bf16.mxu0 %v5136
        %5460 = vmatpush1.bf16.msra.mxu0 %v5135
        %5461 = vmatprep.subr.bf16.mxu0 %v5140
        %5462 = vmatpush1.bf16.msra.mxu0 %v5139
        %5463 = vmatprep.subr.bf16.mxu0 %v5144
        %5464 = vmatpush1.bf16.msra.mxu0 %v5143
        %5465 = vmatprep.subr.bf16.mxu0 %v5148
        %5466 = vmatpush1.bf16.msra.mxu0 %v5147
        %5467 = vmatprep.subr.bf16.mxu0 %v5152
        %5468 = vmatpush1.bf16.msra.mxu0 %v5151
        %5469 = vmatprep.subr.bf16.mxu0 %v5156
        %5470 = vmatpush1.bf16.msra.mxu0 %v5155
        %5471 = vmatprep.subr.bf16.mxu0 %v5160
        %5472 = vmatpush1.bf16.msra.mxu0 %v5159
        %5473 = vmatprep.subr.bf16.mxu0 %v5164
        %5474 = vmatpush1.bf16.msra.mxu0 %v5163
        %5475 = vmatprep.mubr.bf16.mxu0 %v4585
        %5476 = vmatmul.mubr.bf16.gmra.mrb[0].mxu0 %v4584
        %v5477 = vpop.f32.mrb[0].mxu0
        %v5478 = vadd.f32 0.0, %v5477
        %v5479 = vpop.f32.mrb[0].mxu0
        %v5480 = vadd.f32 0.0, %v5479
        %v5481 = vpop.f32.mrb[0].mxu0
        %v5482 = vadd.f32 0.0, %v5481
        %v5483 = vpop.f32.mrb[0].mxu0
        %v5484 = vadd.f32 0.0, %v5483
        %5485 = vdwg.mxu0
        %5486 = vmatprep.subr.bf16.mxu0 %v5168
        %5487 = vmatpush1.bf16.msra.mxu0 %v5167
        %5488 = vmatprep.subr.bf16.mxu0 %v5172
        %5489 = vmatpush1.bf16.msra.mxu0 %v5171
        %5490 = vmatprep.subr.bf16.mxu0 %v5176
        %5491 = vmatpush1.bf16.msra.mxu0 %v5175
        %5492 = vmatprep.subr.bf16.mxu0 %v5180
        %5493 = vmatpush1.bf16.msra.mxu0 %v5179
        %5494 = vmatprep.subr.bf16.mxu0 %v5184
        %5495 = vmatpush1.bf16.msra.mxu0 %v5183
        %5496 = vmatprep.subr.bf16.mxu0 %v5188
        %5497 = vmatpush1.bf16.msra.mxu0 %v5187
        %5498 = vmatprep.subr.bf16.mxu0 %v5192
        %5499 = vmatpush1.bf16.msra.mxu0 %v5191
        %5500 = vmatprep.subr.bf16.mxu0 %v5196
        %5501 = vmatpush1.bf16.msra.mxu0 %v5195
        %5502 = vmatprep.subr.bf16.mxu0 %v5200
        %5503 = vmatpush1.bf16.msra.mxu0 %v5199
        %5504 = vmatprep.subr.bf16.mxu0 %v5204
        %5505 = vmatpush1.bf16.msra.mxu0 %v5203
        %5506 = vmatprep.subr.bf16.mxu0 %v5208
        %5507 = vmatpush1.bf16.msra.mxu0 %v5207
        %5508 = vmatprep.subr.bf16.mxu0 %v5212
        %5509 = vmatpush1.bf16.msra.mxu0 %v5211
        %5510 = vmatprep.subr.bf16.mxu0 %v5216
        %5511 = vmatpush1.bf16.msra.mxu0 %v5215
        %5512 = vmatprep.subr.bf16.mxu0 %v5220
        %5513 = vmatpush1.bf16.msra.mxu0 %v5219
        %5514 = vmatprep.subr.bf16.mxu0 %v5224
        %5515 = vmatpush1.bf16.msra.mxu0 %v5223
        %5516 = vmatprep.subr.bf16.mxu0 %v5228
        %5517 = vmatpush1.bf16.msra.mxu0 %v5227
        %5518 = vmatprep.mubr.bf16.mxu0 %v4587
        %5519 = vmatmul.mubr.bf16.gmra.mrb[0].mxu0 %v4586
        %v5520 = vpop.f32.mrb[0].mxu0
        %v5521 = vadd.f32 %v5478, %v5520
        %v5522 = vpop.f32.mrb[0].mxu0
        %v5523 = vadd.f32 %v5480, %v5522
        %v5524 = vpop.f32.mrb[0].mxu0
        %v5525 = vadd.f32 %v5482, %v5524
        %v5526 = vpop.f32.mrb[0].mxu0
        %v5527 = vadd.f32 %v5484, %v5526
        %5528 = vdwg.mxu0
        %v5529 = vpack.c.bf16 %v5439, %v5435
        %v5530 = vpack.c.bf16 %v5441, %v5437
        %v5531 = vpack.c.bf16 %v5525, %v5521
        %v5532 = vpack.c.bf16 %v5527, %v5523
        %s5533 = scalar_lea.vmem %s4, 16
        %v5534 = vld [vmem:[%s5533] sm:$0xf]
        %v5537 = vunpack.c.l.s4 1966171168
        %v5538 = vunpack.c.0.s8 %v5537
        %v5539 = vlaneseq
        %v5540 = vshrl.u32 %v5539, 7
        %v5541 = vsub.s32 %v5538, %v5540
        %v5542 = vrot.slane %v5534, %v5541
        %v5543 = vcombine.high %v5542, %v5542
        %v5545 = vunpack.c.l.s4 1966171168
        %v5546 = vunpack.c.0.s8 %v5545
        %v5547 = vlaneseq
        %v5548 = vshrl.u32 %v5547, 7
        %v5549 = vsub.s32 %v5546, %v5548
        %v5550 = vrot.slane %v5542, %v5549
        %v5552 = vunpack.c.l.s4 1966171168
        %v5553 = vunpack.c.0.s8 %v5552
        %v5554 = vlaneseq
        %v5555 = vshrl.u32 %v5554, 7
        %v5556 = vsub.s32 %v5553, %v5555
        %v5557 = vrot.slane %v5543, %v5556
        %v5558 = vcombine.high %v5550, %v5550
        %v5559 = vcombine.high %v5557, %v5557
        %v5561 = vpack.i.b16 %v5550, %v5550
        %v5563 = vlaneseq
        %v5564 = vshrl.u32 %v5563, 7
        %v5565 = vsub.s32 0, %v5564
        %v5566 = vrot.slane %v5561, %v5565
        %v5568 = vpack.i.b16 %v5557, %v5557
        %v5570 = vlaneseq
        %v5571 = vshrl.u32 %v5570, 7
        %v5572 = vsub.s32 0, %v5571
        %v5573 = vrot.slane %v5568, %v5572
        %v5575 = vpack.i.b16 %v5558, %v5558
        %v5577 = vlaneseq
        %v5578 = vshrl.u32 %v5577, 7
        %v5579 = vsub.s32 0, %v5578
        %v5580 = vrot.slane %v5575, %v5579
        %v5582 = vpack.i.b16 %v5559, %v5559
        %v5584 = vlaneseq
        %v5585 = vshrl.u32 %v5584, 7
        %v5586 = vsub.s32 0, %v5585
        %v5587 = vrot.slane %v5582, %v5586
        %v5588 = vadd.bf16 %v5529, %v5566
        %v5589 = vadd.bf16 %v5530, %v5573
        %v5590 = vadd.bf16 %v5531, %v5580
        %v5591 = vadd.bf16 %v5532, %v5587
        %v5592 = vmax.bf16 %v5588, 0
        %v5593 = vmax.bf16 %v5589, 0
        %v5594 = vmax.bf16 %v5590, 0
        %v5595 = vmax.bf16 %v5591, 0
        %v5596 = vld [vmem:[#allocation8] sm:$0xf]
        %v5597 = vld [vmem:[#allocation8 + $0x4] sm:$0xf]
        %v5598 = vld [vmem:[#allocation8 + $0x8] sm:$0xf]
        %v5599 = vld [vmem:[#allocation8 + $0xc] sm:$0xf]
        %v5600 = vld [vmem:[#allocation8 + $0x10] sm:$0xf]
        %v5601 = vld [vmem:[#allocation8 + $0x14] sm:$0xf]
        %v5602 = vld [vmem:[#allocation8 + $0x18] sm:$0xf]
        %v5603 = vld [vmem:[#allocation8 + $0x1c] sm:$0xf]
        %v5604 = vld [vmem:[#allocation8 + $0x20] sm:$0xf]
        %v5605 = vld [vmem:[#allocation8 + $0x24] sm:$0xf]
        %v5606 = vld [vmem:[#allocation8 + $0x28] sm:$0xf]
        %v5607 = vld [vmem:[#allocation8 + $0x2c] sm:$0xf]
        %v5608 = vld [vmem:[#allocation8 + $0x30] sm:$0xf]
        %v5609 = vld [vmem:[#allocation8 + $0x34] sm:$0xf]
        %v5610 = vld [vmem:[#allocation8 + $0x38] sm:$0xf]
        %v5611 = vld [vmem:[#allocation8 + $0x3c] sm:$0xf]
        %v5612 = vld [vmem:[#allocation8 + $0x40] sm:$0xf]
        %v5613 = vld [vmem:[#allocation8 + $0x44] sm:$0xf]
        %v5614 = vld [vmem:[#allocation8 + $0x48] sm:$0xf]
        %v5615 = vld [vmem:[#allocation8 + $0x4c] sm:$0xf]
        %v5616 = vld [vmem:[#allocation8 + $0x50] sm:$0xf]
        %v5617 = vld [vmem:[#allocation8 + $0x54] sm:$0xf]
        %v5618 = vld [vmem:[#allocation8 + $0x58] sm:$0xf]
        %v5619 = vld [vmem:[#allocation8 + $0x5c] sm:$0xf]
        %v5620 = vld [vmem:[#allocation8 + $0x60] sm:$0xf]
        %v5621 = vld [vmem:[#allocation8 + $0x64] sm:$0xf]
        %v5622 = vld [vmem:[#allocation8 + $0x68] sm:$0xf]
        %v5623 = vld [vmem:[#allocation8 + $0x6c] sm:$0xf]
        %v5624 = vld [vmem:[#allocation8 + $0x70] sm:$0xf]
        %v5625 = vld [vmem:[#allocation8 + $0x74] sm:$0xf]
        %v5626 = vld [vmem:[#allocation8 + $0x78] sm:$0xf]
        %v5627 = vld [vmem:[#allocation8 + $0x7c] sm:$0xf]
        %v5628 = vld [vmem:[#allocation8 + $0x80] sm:$0xf]
        %v5629 = vld [vmem:[#allocation8 + $0x84] sm:$0xf]
        %v5630 = vld [vmem:[#allocation8 + $0x88] sm:$0xf]
        %v5631 = vld [vmem:[#allocation8 + $0x8c] sm:$0xf]
        %v5632 = vld [vmem:[#allocation8 + $0x90] sm:$0xf]
        %v5633 = vld [vmem:[#allocation8 + $0x94] sm:$0xf]
        %v5634 = vld [vmem:[#allocation8 + $0x98] sm:$0xf]
        %v5635 = vld [vmem:[#allocation8 + $0x9c] sm:$0xf]
        %v5636 = vld [vmem:[#allocation8 + $0xa0] sm:$0xf]
        %v5637 = vld [vmem:[#allocation8 + $0xa4] sm:$0xf]
        %v5638 = vld [vmem:[#allocation8 + $0xa8] sm:$0xf]
        %v5639 = vld [vmem:[#allocation8 + $0xac] sm:$0xf]
        %v5640 = vld [vmem:[#allocation8 + $0xb0] sm:$0xf]
        %v5641 = vld [vmem:[#allocation8 + $0xb4] sm:$0xf]
        %v5642 = vld [vmem:[#allocation8 + $0xb8] sm:$0xf]
        %v5643 = vld [vmem:[#allocation8 + $0xbc] sm:$0xf]
        %v5644 = vld [vmem:[#allocation8 + $0xc0] sm:$0xf]
        %v5645 = vld [vmem:[#allocation8 + $0xc4] sm:$0xf]
        %v5646 = vld [vmem:[#allocation8 + $0xc8] sm:$0xf]
        %v5647 = vld [vmem:[#allocation8 + $0xcc] sm:$0xf]
        %v5648 = vld [vmem:[#allocation8 + $0xd0] sm:$0xf]
        %v5649 = vld [vmem:[#allocation8 + $0xd4] sm:$0xf]
        %v5650 = vld [vmem:[#allocation8 + $0xd8] sm:$0xf]
        %v5651 = vld [vmem:[#allocation8 + $0xdc] sm:$0xf]
        %v5652 = vld [vmem:[#allocation8 + $0xe0] sm:$0xf]
        %v5653 = vld [vmem:[#allocation8 + $0xe4] sm:$0xf]
        %v5654 = vld [vmem:[#allocation8 + $0xe8] sm:$0xf]
        %v5655 = vld [vmem:[#allocation8 + $0xec] sm:$0xf]
        %v5656 = vld [vmem:[#allocation8 + $0xf0] sm:$0xf]
        %v5657 = vld [vmem:[#allocation8 + $0xf4] sm:$0xf]
        %v5658 = vld [vmem:[#allocation8 + $0xf8] sm:$0xf]
        %v5659 = vld [vmem:[#allocation8 + $0xfc] sm:$0xf]
        %v5660 = vld [vmem:[#allocation10] sm:$0x1]
        %v5662 = vlaneseq
        %v5663 = vshrl.u32 %v5662, 7
        %v5664 = vsub.s32 0, %v5663
        %v5665 = vrot.slane %v5660, %v5664
        %v5731 = vunpack.c.l.b16 %v5596
        %v5732 = vunpack.c.l.b16 %v5597
        %v5733 = vunpack.c.l.b16 %v5598
        %v5734 = vunpack.c.l.b16 %v5599
        %v5735 = vunpack.c.l.b16 %v5600
        %v5736 = vunpack.c.l.b16 %v5601
        %v5737 = vunpack.c.l.b16 %v5602
        %v5738 = vunpack.c.l.b16 %v5603
        %v5739 = vunpack.c.l.b16 %v5604
        %v5740 = vunpack.c.l.b16 %v5605
        %v5741 = vunpack.c.l.b16 %v5606
        %v5742 = vunpack.c.l.b16 %v5607
        %v5743 = vunpack.c.l.b16 %v5608
        %v5744 = vunpack.c.l.b16 %v5609
        %v5745 = vunpack.c.l.b16 %v5610
        %v5746 = vunpack.c.l.b16 %v5611
        %v5747 = vunpack.c.l.b16 %v5612
        %v5748 = vunpack.c.l.b16 %v5613
        %v5749 = vunpack.c.l.b16 %v5614
        %v5750 = vunpack.c.l.b16 %v5615
        %v5751 = vunpack.c.l.b16 %v5616
        %v5752 = vunpack.c.l.b16 %v5617
        %v5753 = vunpack.c.l.b16 %v5618
        %v5754 = vunpack.c.l.b16 %v5619
        %v5755 = vunpack.c.l.b16 %v5620
        %v5756 = vunpack.c.l.b16 %v5621
        %v5757 = vunpack.c.l.b16 %v5622
        %v5758 = vunpack.c.l.b16 %v5623
        %v5759 = vunpack.c.l.b16 %v5624
        %v5760 = vunpack.c.l.b16 %v5625
        %v5761 = vunpack.c.l.b16 %v5626
        %v5762 = vunpack.c.l.b16 %v5627
        %v5763 = vunpack.c.l.b16 %v5628
        %v5764 = vunpack.c.l.b16 %v5629
        %v5765 = vunpack.c.l.b16 %v5630
        %v5766 = vunpack.c.l.b16 %v5631
        %v5767 = vunpack.c.l.b16 %v5632
        %v5768 = vunpack.c.l.b16 %v5633
        %v5769 = vunpack.c.l.b16 %v5634
        %v5770 = vunpack.c.l.b16 %v5635
        %v5771 = vunpack.c.l.b16 %v5636
        %v5772 = vunpack.c.l.b16 %v5637
        %v5773 = vunpack.c.l.b16 %v5638
        %v5774 = vunpack.c.l.b16 %v5639
        %v5775 = vunpack.c.l.b16 %v5640
        %v5776 = vunpack.c.l.b16 %v5641
        %v5777 = vunpack.c.l.b16 %v5642
        %v5778 = vunpack.c.l.b16 %v5643
        %v5779 = vunpack.c.l.b16 %v5644
        %v5780 = vunpack.c.l.b16 %v5645
        %v5781 = vunpack.c.l.b16 %v5646
        %v5782 = vunpack.c.l.b16 %v5647
        %v5783 = vunpack.c.l.b16 %v5648
        %v5784 = vunpack.c.l.b16 %v5649
        %v5785 = vunpack.c.l.b16 %v5650
        %v5786 = vunpack.c.l.b16 %v5651
        %v5787 = vunpack.c.l.b16 %v5652
        %v5788 = vunpack.c.l.b16 %v5653
        %v5789 = vunpack.c.l.b16 %v5654
        %v5790 = vunpack.c.l.b16 %v5655
        %v5791 = vunpack.c.l.b16 %v5656
        %v5792 = vunpack.c.l.b16 %v5657
        %v5793 = vunpack.c.l.b16 %v5658
        %v5794 = vunpack.c.l.b16 %v5659
        %v5795 = vpack.c.b16 %v5732, %v5731
        %v5796 = vpack.c.b16 %v5734, %v5733
        %v5797 = vpack.c.b16 %v5736, %v5735
        %v5798 = vpack.c.b16 %v5738, %v5737
        %v5799 = vpack.c.b16 %v5740, %v5739
        %v5800 = vpack.c.b16 %v5742, %v5741
        %v5801 = vpack.c.b16 %v5744, %v5743
        %v5802 = vpack.c.b16 %v5746, %v5745
        %v5803 = vpack.c.b16 %v5748, %v5747
        %v5804 = vpack.c.b16 %v5750, %v5749
        %v5805 = vpack.c.b16 %v5752, %v5751
        %v5806 = vpack.c.b16 %v5754, %v5753
        %v5807 = vpack.c.b16 %v5756, %v5755
        %v5808 = vpack.c.b16 %v5758, %v5757
        %v5809 = vpack.c.b16 %v5760, %v5759
        %v5810 = vpack.c.b16 %v5762, %v5761
        %v5811 = vpack.c.b16 %v5764, %v5763
        %v5812 = vpack.c.b16 %v5766, %v5765
        %v5813 = vpack.c.b16 %v5768, %v5767
        %v5814 = vpack.c.b16 %v5770, %v5769
        %v5815 = vpack.c.b16 %v5772, %v5771
        %v5816 = vpack.c.b16 %v5774, %v5773
        %v5817 = vpack.c.b16 %v5776, %v5775
        %v5818 = vpack.c.b16 %v5778, %v5777
        %v5819 = vpack.c.b16 %v5780, %v5779
        %v5820 = vpack.c.b16 %v5782, %v5781
        %v5821 = vpack.c.b16 %v5784, %v5783
        %v5822 = vpack.c.b16 %v5786, %v5785
        %v5823 = vpack.c.b16 %v5788, %v5787
        %v5824 = vpack.c.b16 %v5790, %v5789
        %v5825 = vpack.c.b16 %v5792, %v5791
        %v5826 = vpack.c.b16 %v5794, %v5793
        %5859 = vmatprep.subr.bf16.mxu0 0
        %5860 = vmatpush1.bf16.msra.mxu0 %v5795
        %5861 = vmatprep.subr.bf16.mxu0 0
        %5862 = vmatpush1.bf16.msra.mxu0 %v5796
        %5863 = vmatprep.subr.bf16.mxu0 0
        %5864 = vmatpush1.bf16.msra.mxu0 %v5797
        %5865 = vmatprep.subr.bf16.mxu0 0
        %5866 = vmatpush1.bf16.msra.mxu0 %v5798
        %5867 = vmatprep.subr.bf16.mxu0 0
        %5868 = vmatpush1.bf16.msra.mxu0 %v5799
        %5869 = vmatprep.subr.bf16.mxu0 0
        %5870 = vmatpush1.bf16.msra.mxu0 %v5800
        %5871 = vmatprep.subr.bf16.mxu0 0
        %5872 = vmatpush1.bf16.msra.mxu0 %v5801
        %5873 = vmatprep.subr.bf16.mxu0 0
        %5874 = vmatpush1.bf16.msra.mxu0 %v5802
        %5875 = vmatprep.subr.bf16.mxu0 0
        %5876 = vmatpush1.bf16.msra.mxu0 %v5803
        %5877 = vmatprep.subr.bf16.mxu0 0
        %5878 = vmatpush1.bf16.msra.mxu0 %v5804
        %5879 = vmatprep.subr.bf16.mxu0 0
        %5880 = vmatpush1.bf16.msra.mxu0 %v5805
        %5881 = vmatprep.subr.bf16.mxu0 0
        %5882 = vmatpush1.bf16.msra.mxu0 %v5806
        %5883 = vmatprep.subr.bf16.mxu0 0
        %5884 = vmatpush1.bf16.msra.mxu0 %v5807
        %5885 = vmatprep.subr.bf16.mxu0 0
        %5886 = vmatpush1.bf16.msra.mxu0 %v5808
        %5887 = vmatprep.subr.bf16.mxu0 0
        %5888 = vmatpush1.bf16.msra.mxu0 %v5809
        %5889 = vmatprep.subr.bf16.mxu0 0
        %5890 = vmatpush1.bf16.msra.mxu0 %v5810
        %5891 = vmatprep.mubr.bf16.mxu0 %v5593
        %5892 = vmatmul.mubr.bf16.gmra.mrb[0].mxu0 %v5592
        %v5893 = vpop.f32.mrb[0].mxu0
        %v5894 = vadd.f32 %v5665, %v5893
        %v5895 = vpop.f32.mrb[0].mxu0
        %v5896 = vpop.f32.mrb[0].mxu0
        %v5897 = vadd.f32 %v5665, %v5896
        %v5898 = vpop.f32.mrb[0].mxu0
        %5899 = vdwg.mxu0
        %5900 = vmatprep.subr.bf16.mxu0 0
        %5901 = vmatpush1.bf16.msra.mxu0 %v5811
        %5902 = vmatprep.subr.bf16.mxu0 0
        %5903 = vmatpush1.bf16.msra.mxu0 %v5812
        %5904 = vmatprep.subr.bf16.mxu0 0
        %5905 = vmatpush1.bf16.msra.mxu0 %v5813
        %5906 = vmatprep.subr.bf16.mxu0 0
        %5907 = vmatpush1.bf16.msra.mxu0 %v5814
        %5908 = vmatprep.subr.bf16.mxu0 0
        %5909 = vmatpush1.bf16.msra.mxu0 %v5815
        %5910 = vmatprep.subr.bf16.mxu0 0
        %5911 = vmatpush1.bf16.msra.mxu0 %v5816
        %5912 = vmatprep.subr.bf16.mxu0 0
        %5913 = vmatpush1.bf16.msra.mxu0 %v5817
        %5914 = vmatprep.subr.bf16.mxu0 0
        %5915 = vmatpush1.bf16.msra.mxu0 %v5818
        %5916 = vmatprep.subr.bf16.mxu0 0
        %5917 = vmatpush1.bf16.msra.mxu0 %v5819
        %5918 = vmatprep.subr.bf16.mxu0 0
        %5919 = vmatpush1.bf16.msra.mxu0 %v5820
        %5920 = vmatprep.subr.bf16.mxu0 0
        %5921 = vmatpush1.bf16.msra.mxu0 %v5821
        %5922 = vmatprep.subr.bf16.mxu0 0
        %5923 = vmatpush1.bf16.msra.mxu0 %v5822
        %5924 = vmatprep.subr.bf16.mxu0 0
        %5925 = vmatpush1.bf16.msra.mxu0 %v5823
        %5926 = vmatprep.subr.bf16.mxu0 0
        %5927 = vmatpush1.bf16.msra.mxu0 %v5824
        %5928 = vmatprep.subr.bf16.mxu0 0
        %5929 = vmatpush1.bf16.msra.mxu0 %v5825
        %5930 = vmatprep.subr.bf16.mxu0 0
        %5931 = vmatpush1.bf16.msra.mxu0 %v5826
        %5932 = vmatprep.mubr.bf16.mxu0 %v5595
        %5933 = vmatmul.mubr.bf16.gmra.mrb[0].mxu0 %v5594
        %v5934 = vpop.f32.mrb[0].mxu0
        %v5935 = vadd.f32 %v5894, %v5934
        %v5936 = vpop.f32.mrb[0].mxu0
        %v5937 = vpop.f32.mrb[0].mxu0
        %v5938 = vadd.f32 %v5897, %v5937
        %v5939 = vpop.f32.mrb[0].mxu0
        %5940 = vdwg.mxu0
        %v5941 = vxor.u32 %v5935, 2147483648
        %v5942 = vxor.u32 %v5938, 2147483648
        %v5943 = vmul.f32 %v5941, 1.442695
        %v5944 = vpow.pop %v5943
        %v5945 = vmul.f32 %v5942, 1.442695
        %v5946 = vpow.pop %v5945
        %v5947 = vadd.f32 %v5944, 1.0
        %v5948 = vadd.f32 %v5946, 1.0
        %v5949 = vrcp.pop %v5947
        %v5950 = vmul.f32 1.0, %v5949
        %v5951 = vrcp.pop %v5948
        %v5952 = vmul.f32 1.0, %v5951
        %5953 = vst [vmem:[%s341] sm:$0xff] %v5950
        %5954 = vst [vmem:[%s341 + $0x8] sm:$0xff] %v5952
        %s5955 = sand.u32 %s184, 1
        %s5956 = scalar_lea.sflag [#allocation4], %s5955
        %s5957 = sand.u32 %s184, 1
        %s5958 = smul.addr %s5957, 16
        %s5959 = scalar_lea.vmem [#allocation11], %s5958
        // Predicated region
        $region69: #{tpu_custom_call.1} parent=47 // pred_check
          %p5960 = pneg %p194
        $region70: #{tpu_custom_call.1} parent=47 // pred_check_branch
          %5962 = sbr.rel (%p5960) target = $region72
        $region71: #{tpu_custom_call.1} parent=47 // pred_region
          %s5963 = smul.u32 2, %s24
          %s5965 = ssub.s32 256, 256
          %5966 = vsyncadd %s5956, %s5965
          %s5967 = smul.addr %s5963, 128
          %s5968 = scalar_lea.hbm %s7, %s5967
          %s5969 = sshll.u32 %s5959, 4
          %s5970 = int_to_ptr.vmem [resolvable:$true] %s5969
          %5975 = dma.vmem_to_hbm [thread:$0]  %s5970, 256, %s5968, %s5956, 128, 128, 8
        $region72: #{tpu_custom_call.1} parent=47 // pred_fallthru
          _
      $region48: #{tpu_custom_call.1} parent=5 // pred_fallthru
        _
      %p5976 = scmp.le.s32.totalorder 2, %s19
      // Predicated region
      $region73: #{tpu_custom_call.1} parent=5 // pred_check
        %p5977 = pneg %p5976
      $region74: #{tpu_custom_call.1} parent=5 // pred_check_branch
        %5979 = sbr.rel (%p5977) target = $region76
      $region75: #{tpu_custom_call.1} parent=5 // pred_region
        %s5980 = ssub.s32 %s19, 2
        // Predicated region
        $region77: #{tpu_custom_call.1} parent=75 // pred_check
          %p5981 = pneg %p200
        $region78: #{tpu_custom_call.1} parent=75 // pred_check_branch
          %5983 = sbr.rel (%p5981) target = $region80
        $region79: #{tpu_custom_call.1} parent=75 // pred_region
          %s5984 = sand.u32 %s185, 1
          %s5985 = scalar_lea.sflag [#allocation4], %s5984
          %s5986 = sand.u32 %s185, 1
          %s5987 = smul.addr %s5986, 16
          %s5988 = scalar_lea.vmem [#allocation11], %s5987
          %5989 = dma.done %s5985, 256
        $region80: #{tpu_custom_call.1} parent=75 // pred_fallthru
          _
      $region76: #{tpu_custom_call.1} parent=5 // pred_fallthru
        _
    $region6: #{tpu_custom_call.1} parent=1 // loop_footer
      %s23 = sadd.s32 1, %s19
    $region7: #{tpu_custom_call.1} parent=1 // loop_footer_branch
      %18 = sbr.rel target = $region3
    $region8: #{tpu_custom_call.1} parent=1 // loop_exit
      _
    %5990 = vsyncpa [#allocation3], 1
    %s5991 = scalar_lea.sflag [#allocation3], 1
    %5992 = vsyncpa %s5991, 1
    %5993 = vsyncpa [#allocation6], 1
    %5994 = vsyncpa [#allocation9], 1
    %5995 = vsyncpa [#allocation4], 1
    %s5996 = scalar_lea.sflag [#allocation4], 1
    %5997 = vsyncpa %s5996, 1

</llo_original>
